<compile_context>
chip_gen: v7x
topology: tpu7x:2x2x1
jax: 0.10.0
libtpu: 0.0.40
codegen_flags: <defaults>
</compile_context>

<pallas_src>
import math
import jax
import jax.numpy as jnp
from jax.experimental import pallas as pl
from jax.experimental.pallas import tpu as pltpu

D_IN = 1024     # LayerNorm / linear47 input features
D_HID = 4096    # linear47 output features
TK = 1024       # hidden-dim chunk per grid step (contiguous row slice of both weights)
N_CORE = 2      # split the hidden-dim reduction in two halves (v7x: one per TensorCore)
N_K = D_HID // (TK * N_CORE)   # K steps per half


def ffn_kernel(x1_ref, x2_ref, g_ref, beta_ref, w1_ref, b1_ref, w2_ref,
               o_ref, xn_ref):
    k = pl.program_id(1)

    # Fuse residual add + LayerNorm once per half; keep result resident in VMEM.
    @pl.when(k == 0)
    def _():
        x = x1_ref[...] + x2_ref[...]
        mu = jnp.mean(x, axis=-1, keepdims=True)
        xc = x - mu
        var = jnp.mean(xc * xc, axis=-1, keepdims=True)   # biased variance (PyTorch LayerNorm)
        inv = jax.lax.rsqrt(var + 1e-5)
        xn_ref[...] = xc * inv * g_ref[...] + beta_ref[...]
        o_ref[...] = jnp.zeros_like(o_ref)                # partial-output accumulator init

    # Hidden-dim chunk: h = GELU(xn @ W1_chunk.T + b1_chunk);  o += h @ W2_chunk
    # W1 chunk is stored (TK, D_IN): contract on the last dims of both operands.
    h = jax.lax.dot_general(
        xn_ref[...], w1_ref[...],
        dimension_numbers=(((1,), (1,)), ((), ())),
        preferred_element_type=jnp.float32) + b1_ref[...]
    h = 0.5 * h * (1.0 + jax.lax.erf(h * (1.0 / math.sqrt(2.0))))   # exact GELU
    # Dropout(p=0.0) is the identity -> skipped.
    o_ref[...] += jnp.dot(h, w2_ref[...], preferred_element_type=jnp.float32)


def fused_block(x533, x547, gamma, beta, w1, b1, w2, b2):
    """x533, x547: [B, H, W, 1024] f32.
    Weights in PyTorch Linear layout: w1 (4096, 1024), b1 (4096,), w2 (1024, 4096), b2 (1024,).
    Returns [B, H, W, 1024] f32."""
    B, H, W, C = x533.shape
    assert C == D_IN
    M = B * H * W
    x1 = x533.reshape(M, C)
    x2 = x547.reshape(M, C)
    g = gamma.reshape(1, C)
    bt = beta.reshape(1, C)
    b1r = b1.reshape(1, D_HID)
    # One-time layout op so the kernel's K-chunks of W2 are contiguous rows.
    w2k = w2.T                    # (D_HID, D_IN)

    partials = pl.pallas_call(
        ffn_kernel,
        out_shape=jax.ShapeDtypeStruct((N_CORE, M, C), jnp.float32),
        grid_spec=pltpu.PrefetchScalarGridSpec(
            num_scalar_prefetch=0,
            grid=(N_CORE, N_K),
            in_specs=[
                pl.BlockSpec((M, C), lambda c, k: (0, 0)),              # x533 (flattened)
                pl.BlockSpec((M, C), lambda c, k: (0, 0)),              # x547 (flattened)
                pl.BlockSpec((1, C), lambda c, k: (0, 0)),              # layernorm gamma
                pl.BlockSpec((1, C), lambda c, k: (0, 0)),              # layernorm beta
                pl.BlockSpec((TK, C), lambda c, k: (c * N_K + k, 0)),   # W1 row chunk (out,in)
                pl.BlockSpec((1, TK), lambda c, k: (0, c * N_K + k)),   # b1 chunk
                pl.BlockSpec((TK, C), lambda c, k: (c * N_K + k, 0)),   # W2^T row chunk
            ],
            out_specs=pl.BlockSpec((None, M, C), lambda c, k: (c, 0, 0)),  # per-half partial
            scratch_shapes=[
                pltpu.VMEM((M, C), jnp.float32),                        # normalized activations
            ],
        ),
        compiler_params=pltpu.CompilerParams(
            dimension_semantics=("parallel", "arbitrary"),
            vmem_limit_bytes=32 * 1024 * 1024,
        ),
    )(x1, x2, g, bt, w1, b1r, w2k)

    out = partials.sum(axis=0) + b2.reshape(1, C)
    return out.reshape(B, H, W, C)


def reference(x533, x547, gamma, beta, w1, b1, w2, b2):
    x = x533 + x547
    mu = jnp.mean(x, axis=-1, keepdims=True)
    var = jnp.mean((x - mu) ** 2, axis=-1, keepdims=True)
    xn = (x - mu) * jax.lax.rsqrt(var + 1e-5) * gamma + beta
    h = xn @ w1.T + b1
    h = 0.5 * h * (1.0 + jax.lax.erf(h / math.sqrt(2.0)))
    return h @ w2.T + b2


if __name__ == "__main__":
    key = jax.random.PRNGKey(0)
    k_x1, k_x2, k_g, k_b, k_w1, k_b1, k_w2, k_b2 = jax.random.split(key, 8)

    # Inputs match the module: [1, 7, 7, 1024]
    x533 = jax.random.normal(k_x1, (1, 7, 7, D_IN), dtype=jnp.float32)
    x547 = jax.random.normal(k_x2, (1, 7, 7, D_IN), dtype=jnp.float32)

    # Deterministic synthetic parameters (PyTorch layouts).
    gamma = 1.0 + 0.01 * jax.random.normal(k_g, (D_IN,), dtype=jnp.float32)
    beta = 0.01 * jax.random.normal(k_b, (D_IN,), dtype=jnp.float32)
    w1 = 0.02 * jax.random.normal(k_w1, (D_HID, D_IN), dtype=jnp.float32)   # Linear(1024->4096).weight
    b1 = 0.02 * jax.random.normal(k_b1, (D_HID,), dtype=jnp.float32)
    w2 = 0.02 * jax.random.normal(k_w2, (D_IN, D_HID), dtype=jnp.float32)   # Linear(4096->1024).weight
    b2 = 0.02 * jax.random.normal(k_b2, (D_IN,), dtype=jnp.float32)

    out = fused_block(x533, x547, gamma, beta, w1, b1, w2, b2)
    out = jax.block_until_ready(out)

    ref = reference(x533, x547, gamma, beta, w1, b1, w2, b2)
    assert out.shape == (1, 7, 7, D_IN)
    assert jnp.allclose(out, ref, atol=2e-4, rtol=2e-4), "mismatch vs reference"

    print("KERNEL_OK")
</pallas_src>

<mosaic_0001>
module attributes {stable_mosaic.version = 11 : i64} {
  func.func @ffn_kernel(%arg0: i32, %arg1: i32, %arg2: memref<49x1024xf32, #tpu.memory_space<vmem>>, %arg3: memref<49x1024xf32, #tpu.memory_space<vmem>>, %arg4: memref<1x1024xf32, #tpu.memory_space<vmem>>, %arg5: memref<1x1024xf32, #tpu.memory_space<vmem>>, %arg6: memref<1024x1024xf32, #tpu.memory_space<vmem>>, %arg7: memref<1x1024xf32, #tpu.memory_space<vmem>>, %arg8: memref<1024x1024xf32, #tpu.memory_space<vmem>>, %arg9: memref<1x49x1024xf32, #tpu.memory_space<vmem>>, %arg10: memref<49x1024xf32, #tpu.memory_space<vmem>>) attributes {dimension_semantics = [#tpu.dimension_semantics<parallel>, #tpu.dimension_semantics<arbitrary>], iteration_bounds = array<i64: 2, 2>, scalar_prefetch = 0 : i64, scratch_operands = 1 : i64, tpu.core_type = #tpu.core_type<tc>, window_params = [{pipeline_mode = #tpu.pipeline_mode<synchronous>, transform_indices = @transform_0, window_bounds = array<i64: 49, 1024>}, {pipeline_mode = #tpu.pipeline_mode<synchronous>, transform_indices = @transform_1, window_bounds = array<i64: 49, 1024>}, {pipeline_mode = #tpu.pipeline_mode<synchronous>, transform_indices = @transform_2, window_bounds = array<i64: 1, 1024>}, {pipeline_mode = #tpu.pipeline_mode<synchronous>, transform_indices = @transform_3, window_bounds = array<i64: 1, 1024>}, {transform_indices = @transform_4, window_bounds = array<i64: 1024, 1024>}, {transform_indices = @transform_5, window_bounds = array<i64: 1, 1024>}, {transform_indices = @transform_6, window_bounds = array<i64: 1024, 1024>}, {transform_indices = @transform_7, window_bounds = array<i64: 1, 49, 1024>}]} {
    %c0_i32 = arith.constant 0 : i32
    %0 = arith.cmpi eq, %arg1, %c0_i32 : i32
    %1 = arith.extui %0 : i1 to i32
    %c0_i32_0 = arith.constant 0 : i32
    %2 = arith.cmpi ne, %1, %c0_i32_0 : i32
    scf.if %2 {
      %c0_18 = arith.constant 0 : index
      %c0_19 = arith.constant 0 : index
      %25 = vector.load %arg2[%c0_18, %c0_19] : memref<49x1024xf32, #tpu.memory_space<vmem>>, vector<49x1024xf32>
      %c0_20 = arith.constant 0 : index
      %c0_21 = arith.constant 0 : index
      %26 = vector.load %arg3[%c0_20, %c0_21] : memref<49x1024xf32, #tpu.memory_space<vmem>>, vector<49x1024xf32>
      %27 = arith.addf %25, %26 : vector<49x1024xf32>
      %cst_22 = arith.constant dense<0.000000e+00> : vector<49xf32>
      %28 = vector.multi_reduction <add>, %27, %cst_22 [1] : vector<49x1024xf32> to vector<49xf32>
      %29 = vector.shape_cast %28 : vector<49xf32> to vector<49x1xf32>
      %cst_23 = arith.constant 1.024000e+03 : f32
      %30 = vector.broadcast %cst_23 : f32 to vector<49x1xf32>
      %31 = arith.divf %29, %30 : vector<49x1xf32>
      %32 = vector.broadcast %31 : vector<49x1xf32> to vector<49x1024xf32>
      %33 = arith.subf %27, %32 : vector<49x1024xf32>
      %34 = arith.mulf %33, %33 : vector<49x1024xf32>
      %cst_24 = arith.constant dense<0.000000e+00> : vector<49xf32>
      %35 = vector.multi_reduction <add>, %34, %cst_24 [1] : vector<49x1024xf32> to vector<49xf32>
      %36 = vector.shape_cast %35 : vector<49xf32> to vector<49x1xf32>
      %cst_25 = arith.constant 1.024000e+03 : f32
      %37 = vector.broadcast %cst_25 : f32 to vector<49x1xf32>
      %38 = arith.divf %36, %37 : vector<49x1xf32>
      %cst_26 = arith.constant 9.99999974E-6 : f32
      %39 = vector.broadcast %cst_26 : f32 to vector<49x1xf32>
      %40 = arith.addf %38, %39 : vector<49x1xf32>
      %41 = math.rsqrt %40 : vector<49x1xf32>
      %42 = vector.broadcast %41 : vector<49x1xf32> to vector<49x1024xf32>
      %43 = arith.mulf %33, %42 : vector<49x1024xf32>
      %c0_27 = arith.constant 0 : index
      %c0_28 = arith.constant 0 : index
      %44 = vector.load %arg4[%c0_27, %c0_28] : memref<1x1024xf32, #tpu.memory_space<vmem>>, vector<1x1024xf32>
      %45 = vector.broadcast %44 : vector<1x1024xf32> to vector<49x1024xf32>
      %46 = arith.mulf %43, %45 : vector<49x1024xf32>
      %c0_29 = arith.constant 0 : index
      %c0_30 = arith.constant 0 : index
      %47 = vector.load %arg5[%c0_29, %c0_30] : memref<1x1024xf32, #tpu.memory_space<vmem>>, vector<1x1024xf32>
      %48 = vector.broadcast %47 : vector<1x1024xf32> to vector<49x1024xf32>
      %49 = arith.addf %46, %48 : vector<49x1024xf32>
      %c0_31 = arith.constant 0 : index
      %c0_32 = arith.constant 0 : index
      %50 = vector.load %arg10[%c0_31, %c0_32] : memref<49x1024xf32, #tpu.memory_space<vmem>>, vector<49x1024xf32>
      tpu.vector_store %arg10[%c0_31, %c0_32], %49 {strides = array<i32>} : memref<49x1024xf32, #tpu.memory_space<vmem>>, vector<49x1024xf32>,
      %cst_33 = arith.constant 0.000000e+00 : f32
      %51 = vector.broadcast %cst_33 : f32 to vector<49x1024xf32>
      %c0_34 = arith.constant 0 : index
      %c0_35 = arith.constant 0 : index
      %c0_36 = arith.constant 0 : index
      %52 = vector.load %arg9[%c0_34, %c0_35, %c0_36] : memref<1x49x1024xf32, #tpu.memory_space<vmem>>, vector<1x49x1024xf32>
      %53 = vector.shape_cast %52 : vector<1x49x1024xf32> to vector<49x1024xf32>
      %54 = vector.shape_cast %51 : vector<49x1024xf32> to vector<1x49x1024xf32>
      tpu.vector_store %arg9[%c0_34, %c0_35, %c0_36], %54 {strides = array<i32>} : memref<1x49x1024xf32, #tpu.memory_space<vmem>>, vector<1x49x1024xf32>,
    } else {
    }
    %c0 = arith.constant 0 : index
    %c0_1 = arith.constant 0 : index
    %3 = vector.load %arg10[%c0, %c0_1] : memref<49x1024xf32, #tpu.memory_space<vmem>>, vector<49x1024xf32>
    %c0_2 = arith.constant 0 : index
    %c0_3 = arith.constant 0 : index
    %4 = vector.load %arg6[%c0_2, %c0_3] : memref<1024x1024xf32, #tpu.memory_space<vmem>>, vector<1024x1024xf32>
    %cst = arith.constant dense<0.000000e+00> : vector<49x1024xf32>
    %5 = tpu.matmul %3, %4, %cst {dimension_numbers = #tpu.dot_dimension_numbers<[1], [1], [0], [0], [0, 0, 1, 0], [], []>} : vector<49x1024xf32>, vector<1024x1024xf32>, vector<49x1024xf32> -> vector<49x1024xf32>
    %c0_4 = arith.constant 0 : index
    %c0_5 = arith.constant 0 : index
    %6 = vector.load %arg7[%c0_4, %c0_5] : memref<1x1024xf32, #tpu.memory_space<vmem>>, vector<1x1024xf32>
    %7 = vector.broadcast %6 : vector<1x1024xf32> to vector<49x1024xf32>
    %8 = arith.addf %5, %7 : vector<49x1024xf32>
    %cst_6 = arith.constant 5.000000e-01 : f32
    %9 = vector.broadcast %cst_6 : f32 to vector<49x1024xf32>
    %10 = arith.mulf %9, %8 : vector<49x1024xf32>
    %cst_7 = arith.constant 0.707106769 : f32
    %11 = vector.broadcast %cst_7 : f32 to vector<49x1024xf32>
    %12 = arith.mulf %8, %11 : vector<49x1024xf32>
    %13 = math.erf %12 : vector<49x1024xf32>
    %cst_8 = arith.constant 1.000000e+00 : f32
    %14 = vector.broadcast %cst_8 : f32 to vector<49x1024xf32>
    %15 = arith.addf %14, %13 : vector<49x1024xf32>
    %16 = arith.mulf %10, %15 : vector<49x1024xf32>
    %c0_9 = arith.constant 0 : index
    %c0_10 = arith.constant 0 : index
    %c0_11 = arith.constant 0 : index
    %17 = vector.load %arg9[%c0_9, %c0_10, %c0_11] : memref<1x49x1024xf32, #tpu.memory_space<vmem>>, vector<1x49x1024xf32>
    %18 = vector.shape_cast %17 : vector<1x49x1024xf32> to vector<49x1024xf32>
    %c0_12 = arith.constant 0 : index
    %c0_13 = arith.constant 0 : index
    %19 = vector.load %arg8[%c0_12, %c0_13] : memref<1024x1024xf32, #tpu.memory_space<vmem>>, vector<1024x1024xf32>
    %cst_14 = arith.constant dense<0.000000e+00> : vector<49x1024xf32>
    %20 = tpu.matmul %16, %19, %cst_14 {dimension_numbers = #tpu.dot_dimension_numbers<[1], [0], [0], [1], [0, 0, 1, 1], [], []>} : vector<49x1024xf32>, vector<1024x1024xf32>, vector<49x1024xf32> -> vector<49x1024xf32>
    %21 = arith.addf %18, %20 : vector<49x1024xf32>
    %c0_15 = arith.constant 0 : index
    %c0_16 = arith.constant 0 : index
    %c0_17 = arith.constant 0 : index
    %22 = vector.load %arg9[%c0_15, %c0_16, %c0_17] : memref<1x49x1024xf32, #tpu.memory_space<vmem>>, vector<1x49x1024xf32>
    %23 = vector.shape_cast %22 : vector<1x49x1024xf32> to vector<49x1024xf32>
    %24 = vector.shape_cast %21 : vector<49x1024xf32> to vector<1x49x1024xf32>
    tpu.vector_store %arg9[%c0_15, %c0_16, %c0_17], %24 {strides = array<i32>} : memref<1x49x1024xf32, #tpu.memory_space<vmem>>, vector<1x49x1024xf32>,
    return
  }
  func.func @transform_0(%arg0: i32, %arg1: i32) -> (i32, i32) {
    %c0_i32 = arith.constant 0 : i32
    %c0_i32_0 = arith.constant 0 : i32
    %c0_i32_1 = arith.constant 0 : i32
    return %c0_i32, %c0_i32_0 : i32, i32
  }
  func.func @transform_1(%arg0: i32, %arg1: i32) -> (i32, i32) {
    %c0_i32 = arith.constant 0 : i32
    %c0_i32_0 = arith.constant 0 : i32
    %c0_i32_1 = arith.constant 0 : i32
    return %c0_i32, %c0_i32_0 : i32, i32
  }
  func.func @transform_2(%arg0: i32, %arg1: i32) -> (i32, i32) {
    %c0_i32 = arith.constant 0 : i32
    %c0_i32_0 = arith.constant 0 : i32
    %c0_i32_1 = arith.constant 0 : i32
    return %c0_i32, %c0_i32_0 : i32, i32
  }
  func.func @transform_3(%arg0: i32, %arg1: i32) -> (i32, i32) {
    %c0_i32 = arith.constant 0 : i32
    %c0_i32_0 = arith.constant 0 : i32
    %c0_i32_1 = arith.constant 0 : i32
    return %c0_i32, %c0_i32_0 : i32, i32
  }
  func.func @transform_4(%arg0: i32, %arg1: i32) -> (i32, i32) {
    %c2_i32 = arith.constant 2 : i32
    %0 = arith.muli %arg0, %c2_i32 : i32
    %1 = arith.addi %0, %arg1 : i32
    %c0_i32 = arith.constant 0 : i32
    %c0_i32_0 = arith.constant 0 : i32
    return %1, %c0_i32 : i32, i32
  }
  func.func @transform_5(%arg0: i32, %arg1: i32) -> (i32, i32) {
    %c2_i32 = arith.constant 2 : i32
    %0 = arith.muli %arg0, %c2_i32 : i32
    %1 = arith.addi %0, %arg1 : i32
    %c0_i32 = arith.constant 0 : i32
    %c0_i32_0 = arith.constant 0 : i32
    return %c0_i32, %1 : i32, i32
  }
  func.func @transform_6(%arg0: i32, %arg1: i32) -> (i32, i32) {
    %c2_i32 = arith.constant 2 : i32
    %0 = arith.muli %arg0, %c2_i32 : i32
    %1 = arith.addi %0, %arg1 : i32
    %c0_i32 = arith.constant 0 : i32
    %c0_i32_0 = arith.constant 0 : i32
    return %1, %c0_i32 : i32, i32
  }
  func.func @transform_7(%arg0: i32, %arg1: i32) -> (i32, i32, i32) {
    %c0_i32 = arith.constant 0 : i32
    %c0_i32_0 = arith.constant 0 : i32
    %c0_i32_1 = arith.constant 0 : i32
    return %arg0, %c0_i32, %c0_i32_0 : i32, i32, i32
  }
}

</mosaic_0001>

<llo_original>
// kernel: tpu_custom_call.1
$region0: #{tpu_custom_call.1}
  #allocation0 [shape = 'u32[]', space=smem, size = 0x4, offset = 0x4, fixed_abs, tag = 'smem constant byte address 0x4 - core index']
  #allocation1 [shape = 'u32[144,128]{1,0:T(1,128)}', space=vmem, size = 0x12000, scoped, tag = 'internal scratch']
  #allocation2 [shape = 'f32[49,1024]{1,0:T(8,128)}', space=vmem, size = 0x38000, scoped, tag = 'scratch operand']
  %s0 = inlined_call_operand.hbm [shape: f32[49,1024], index: 0, kind: input, shape index: {}]
  %s1 = inlined_call_operand.hbm [shape: f32[49,1024], index: 1, kind: input, shape index: {}]
  %s2 = inlined_call_operand.hbm [shape: f32[1,1024], index: 2, kind: input, shape index: {}]
  %s3 = inlined_call_operand.hbm [shape: f32[1,1024], index: 3, kind: input, shape index: {}]
  %s4 = inlined_call_operand.hbm [shape: f32[4096,1024], index: 4, kind: input, shape index: {}]
  %s5 = inlined_call_operand.hbm [shape: f32[1,4096], index: 5, kind: input, shape index: {}]
  %s6 = inlined_call_operand.hbm [shape: f32[4096,1024], index: 6, kind: input, shape index: {}]
  %s7 = inlined_call_operand.vmem [shape: f32[2,49,1024], index: 7, kind: output, shape index: {}]
  %s8 = sld [smem:[#allocation0]]
  $region93: #{tpu_custom_call.1} parent=0
    _
  %s10 = ssub.s32 1, %s8
  %s11 = scalar_select 0, %s10, %s8
  $region1: #{tpu_custom_call.1} parent=0
    #allocation3 [shape = 'u8[229376]{0}', space=vmem, size = 0x38000, scoped, tag = 'input window, operand 0, single buffered']
    #allocation4 [shape = 's32[2]{0}', space=sflag, size = 0x8, scoped, tag = 'scoped memory for tpu_custom_call.1']
    #allocation5 [shape = 'u8[229376]{0}', space=vmem, size = 0x38000, scoped, tag = 'input window, operand 1, single buffered']
    #allocation6 [shape = 's32[1]{0}', space=sflag, size = 0x4, scoped, tag = 'scoped memory for tpu_custom_call.1']
    #allocation7 [shape = 'u8[4096]{0}', space=vmem, size = 0x1000, scoped, tag = 'input window, operand 2, single buffered']
    #allocation8 [shape = 'u8[4096]{0}', space=vmem, size = 0x1000, scoped, tag = 'input window, operand 3, single buffered']
    #allocation9 [shape = 's32[1]{0}', space=sflag, size = 0x4, scoped, tag = 'scoped memory for tpu_custom_call.1']
    #allocation10 [shape = 'u8[8388608]{0}', space=vmem, size = 0x800000, scoped, tag = 'input window, operand 4']
    #allocation11 [shape = 'u8[8192]{0}', space=vmem, size = 0x2000, scoped, tag = 'input window, operand 5']
    #allocation12 [shape = 'u8[8388608]{0}', space=vmem, size = 0x800000, scoped, tag = 'input window, operand 6']
    %12 = vsyncpa [#allocation4], 0
    %13 = vsyncpa [#allocation6], 0
    %14 = vsyncpa [#allocation9], 0
    loop: start=0, step=1, limit=6
    $region2: #{tpu_custom_call.1} parent=1 // loop_pre_header
      _
    $region3: #{tpu_custom_call.1} parent=1 // loop_header
      %s16 = sphi 0, %s20
      %p17 = scmp.ge.s32.totalorder %s16, 6
      %s23 = sphi 0, %s35
      %s24 = sphi 0, %s31
      %s25 = sphi 0, %s23
      %s26 = sphi 0, %s24
      %s27 = sphi 0, %s25
      %s28 = sphi 0, %s26
      %s36 = sphi 0, %s36
      %s38 = sphi 0, %s36
      %s39 = sphi 0, %s38
      %s53 = sphi 0, %s39
      %s57 = sphi 0, %s57
      %s59 = sphi 0, %s57
      %s60 = sphi 0, %s59
      %s74 = sphi 0, %s60
      %s78 = sphi 0, %s78
      %s80 = sphi 0, %s78
      %s81 = sphi 0, %s80
      %s95 = sphi 0, %s81
      %s99 = sphi 0, %s99
      %s101 = sphi 0, %s99
      %s102 = sphi 0, %s101
      %s116 = sphi 0, %s102
      %s126 = sphi 0, %s128
      %s129 = sphi 0, %s126
      %s130 = sphi 0, %s129
      %s146 = sphi 0, %s130
      %s156 = sphi 0, %s158
      %s159 = sphi 0, %s156
      %s160 = sphi 0, %s159
      %s176 = sphi 0, %s160
      %s186 = sphi 0, %s188
      %s189 = sphi 0, %s186
      %s190 = sphi 0, %s189
      %s206 = sphi 0, %s190
      %s212 = sphi 0, %s214
      %s215 = sphi 0, %s212
      %s216 = sphi 0, %s215
      %s232 = sphi 0, %s216
    $region4: #{tpu_custom_call.1} parent=1 // loop_header_branch
      %19 = sbr.rel (%p17) target = $region8
    $region5: #{tpu_custom_call.1} parent=1 // loop_body
      %s21 = ssub.s32 %s16, 1
      %s22 = ssub.s32 %s16, 2
      %s29 = sadd.s32 1, %s24
      %p30 = scmp.ge.s32.totalorder %s29, 2
      %s31 = scalar_select %p30, 0, %s29
      %s32 = sadd.s32 1, %s23
      %s33 = scalar_select %p30, %s32, %s23
      %p34 = scmp.ge.s32.totalorder %s33, 2
      %s35 = scalar_select %p34, 0, %s33
      %s37 = sadd.s32 %s36, 1
      %p40 = scmp.eq.s32.totalorder %s16, 3
      %p41 = scmp.ne.s32.totalorder %s36, %s38
      %p42 = scmp.eq.s32.totalorder %s16, 0
      %p43 = por %p41, %p42
      %p44 = scmp.ne.s32.totalorder %s36, %s38
      %p45 = scmp.eq.s32.totalorder %s21, 3
      %p46 = por %p44, %p45
      %p47 = scmp.ne.s32.totalorder %s38, %s39
      %p48 = scmp.eq.s32.totalorder %s21, 0
      %p49 = por %p47, %p48
      %p50 = scmp.ne.s32.totalorder %s38, %s39
      %p51 = scmp.eq.s32.totalorder %s22, 3
      %p52 = por %p50, %p51
      %p54 = scmp.ne.s32.totalorder %s39, %s53
      %p55 = scmp.eq.s32.totalorder %s22, 0
      %p56 = por %p54, %p55
      %s58 = sadd.s32 %s57, 1
      %p61 = scmp.eq.s32.totalorder %s16, 3
      %p62 = scmp.ne.s32.totalorder %s57, %s59
      %p63 = scmp.eq.s32.totalorder %s16, 0
      %p64 = por %p62, %p63
      %p65 = scmp.ne.s32.totalorder %s57, %s59
      %p66 = scmp.eq.s32.totalorder %s21, 3
      %p67 = por %p65, %p66
      %p68 = scmp.ne.s32.totalorder %s59, %s60
      %p69 = scmp.eq.s32.totalorder %s21, 0
      %p70 = por %p68, %p69
      %p71 = scmp.ne.s32.totalorder %s59, %s60
      %p72 = scmp.eq.s32.totalorder %s22, 3
      %p73 = por %p71, %p72
      %p75 = scmp.ne.s32.totalorder %s60, %s74
      %p76 = scmp.eq.s32.totalorder %s22, 0
      %p77 = por %p75, %p76
      %s79 = sadd.s32 %s78, 1
      %p82 = scmp.eq.s32.totalorder %s16, 3
      %p83 = scmp.ne.s32.totalorder %s78, %s80
      %p84 = scmp.eq.s32.totalorder %s16, 0
      %p85 = por %p83, %p84
      %p86 = scmp.ne.s32.totalorder %s78, %s80
      %p87 = scmp.eq.s32.totalorder %s21, 3
      %p88 = por %p86, %p87
      %p89 = scmp.ne.s32.totalorder %s80, %s81
      %p90 = scmp.eq.s32.totalorder %s21, 0
      %p91 = por %p89, %p90
      %p92 = scmp.ne.s32.totalorder %s80, %s81
      %p93 = scmp.eq.s32.totalorder %s22, 3
      %p94 = por %p92, %p93
      %p96 = scmp.ne.s32.totalorder %s81, %s95
      %p97 = scmp.eq.s32.totalorder %s22, 0
      %p98 = por %p96, %p97
      %s100 = sadd.s32 %s99, 1
      %p103 = scmp.eq.s32.totalorder %s16, 3
      %p104 = scmp.ne.s32.totalorder %s99, %s101
      %p105 = scmp.eq.s32.totalorder %s16, 0
      %p106 = por %p104, %p105
      %p107 = scmp.ne.s32.totalorder %s99, %s101
      %p108 = scmp.eq.s32.totalorder %s21, 3
      %p109 = por %p107, %p108
      %p110 = scmp.ne.s32.totalorder %s101, %s102
      %p111 = scmp.eq.s32.totalorder %s21, 0
      %p112 = por %p110, %p111
      %p113 = scmp.ne.s32.totalorder %s101, %s102
      %p114 = scmp.eq.s32.totalorder %s22, 3
      %p115 = por %p113, %p114
      %p117 = scmp.ne.s32.totalorder %s102, %s116
      %p118 = scmp.eq.s32.totalorder %s22, 0
      %p119 = por %p117, %p118
      %s120 = smul.u32 %s23, 2
      %s121 = sadd.s32 %s120, %s24
      %s122 = smul.u32 %s35, 2
      %s123 = sadd.s32 %s122, %s31
      %s124 = ssub.s32 %s121, %s123
      %p125 = scmp.eq.s32.totalorder %s124, 0
      %s127 = sadd.s32 %s126, 1
      %s128 = scalar_select %p125, %s126, %s127
      %p131 = pneg %p125
      %p132 = scmp.eq.s32.totalorder %s16, 3
      %p133 = por %p131, %p132
      %p134 = scmp.ne.s32.totalorder %s126, %s129
      %p135 = scmp.eq.s32.totalorder %s16, 0
      %p136 = por %p134, %p135
      %p137 = scmp.ne.s32.totalorder %s126, %s129
      %p138 = scmp.eq.s32.totalorder %s21, 3
      %p139 = por %p137, %p138
      %p140 = scmp.ne.s32.totalorder %s129, %s130
      %p141 = scmp.eq.s32.totalorder %s21, 0
      %p142 = por %p140, %p141
      %p143 = scmp.ne.s32.totalorder %s129, %s130
      %p144 = scmp.eq.s32.totalorder %s22, 3
      %p145 = por %p143, %p144
      %p147 = scmp.ne.s32.totalorder %s130, %s146
      %p148 = scmp.eq.s32.totalorder %s22, 0
      %p149 = por %p147, %p148
      %s150 = smul.u32 %s23, 2
      %s151 = sadd.s32 %s150, %s24
      %s152 = smul.u32 %s35, 2
      %s153 = sadd.s32 %s152, %s31
      %s154 = ssub.s32 %s151, %s153
      %p155 = scmp.eq.s32.totalorder %s154, 0
      %s157 = sadd.s32 %s156, 1
      %s158 = scalar_select %p155, %s156, %s157
      %p161 = pneg %p155
      %p162 = scmp.eq.s32.totalorder %s16, 3
      %p163 = por %p161, %p162
      %p164 = scmp.ne.s32.totalorder %s156, %s159
      %p165 = scmp.eq.s32.totalorder %s16, 0
      %p166 = por %p164, %p165
      %p167 = scmp.ne.s32.totalorder %s156, %s159
      %p168 = scmp.eq.s32.totalorder %s21, 3
      %p169 = por %p167, %p168
      %p170 = scmp.ne.s32.totalorder %s159, %s160
      %p171 = scmp.eq.s32.totalorder %s21, 0
      %p172 = por %p170, %p171
      %p173 = scmp.ne.s32.totalorder %s159, %s160
      %p174 = scmp.eq.s32.totalorder %s22, 3
      %p175 = por %p173, %p174
      %p177 = scmp.ne.s32.totalorder %s160, %s176
      %p178 = scmp.eq.s32.totalorder %s22, 0
      %p179 = por %p177, %p178
      %s180 = smul.u32 %s23, 2
      %s181 = sadd.s32 %s180, %s24
      %s182 = smul.u32 %s35, 2
      %s183 = sadd.s32 %s182, %s31
      %s184 = ssub.s32 %s181, %s183
      %p185 = scmp.eq.s32.totalorder %s184, 0
      %s187 = sadd.s32 %s186, 1
      %s188 = scalar_select %p185, %s186, %s187
      %p191 = pneg %p185
      %p192 = scmp.eq.s32.totalorder %s16, 3
      %p193 = por %p191, %p192
      %p194 = scmp.ne.s32.totalorder %s186, %s189
      %p195 = scmp.eq.s32.totalorder %s16, 0
      %p196 = por %p194, %p195
      %p197 = scmp.ne.s32.totalorder %s186, %s189
      %p198 = scmp.eq.s32.totalorder %s21, 3
      %p199 = por %p197, %p198
      %p200 = scmp.ne.s32.totalorder %s189, %s190
      %p201 = scmp.eq.s32.totalorder %s21, 0
      %p202 = por %p200, %p201
      %p203 = scmp.ne.s32.totalorder %s189, %s190
      %p204 = scmp.eq.s32.totalorder %s22, 3
      %p205 = por %p203, %p204
      %p207 = scmp.ne.s32.totalorder %s190, %s206
      %p208 = scmp.eq.s32.totalorder %s22, 0
      %p209 = por %p207, %p208
      %s210 = ssub.s32 %s23, %s35
      %p211 = scmp.eq.s32.totalorder %s210, 0
      %s213 = sadd.s32 %s212, 1
      %s214 = scalar_select %p211, %s212, %s213
      %p217 = pneg %p211
      %p218 = scmp.eq.s32.totalorder %s16, 3
      %p219 = por %p217, %p218
      %p220 = scmp.ne.s32.totalorder %s212, %s215
      %p221 = scmp.eq.s32.totalorder %s16, 0
      %p222 = por %p220, %p221
      %p223 = scmp.ne.s32.totalorder %s212, %s215
      %p224 = scmp.eq.s32.totalorder %s21, 3
      %p225 = por %p223, %p224
      %p226 = scmp.ne.s32.totalorder %s215, %s216
      %p227 = scmp.eq.s32.totalorder %s21, 0
      %p228 = por %p226, %p227
      %p229 = scmp.ne.s32.totalorder %s215, %s216
      %p230 = scmp.eq.s32.totalorder %s22, 3
      %p231 = por %p229, %p230
      %p233 = scmp.ne.s32.totalorder %s216, %s232
      %p234 = scmp.eq.s32.totalorder %s22, 0
      %p235 = por %p233, %p234
      %p236 = scmp.le.s32.totalorder 1, %s16
      %p237 = scmp.lt.s32.totalorder %s16, 5
      %p238 = pnand %p236, %p237
      %p239 = pneg %p238
      // Predicated region
      $region9: #{tpu_custom_call.1} parent=5 // pred_check
        _
      $region10: #{tpu_custom_call.1} parent=5 // pred_check_branch
        %241 = sbr.rel (%p238) target = $region12
      $region11: #{tpu_custom_call.1} parent=5 // pred_region
        %s242 = ssub.s32 %s16, 1
        // Predicated region
        $region13: #{tpu_custom_call.1} parent=11 // pred_check
          %p243 = pneg %p49
        $region14: #{tpu_custom_call.1} parent=11 // pred_check_branch
          %245 = sbr.rel (%p243) target = $region16
        $region15: #{tpu_custom_call.1} parent=11 // pred_region
          %s247 = ssub.s32 7168, 7168
          %248 = vsyncadd [#allocation4], %s247
          %s249 = sshll.u32 [#allocation3], 4
          %s250 = int_to_ptr.vmem [resolvable:$true] %s249
          %255 = dma.hbm_to_vmem [thread:$0]  %s0, 7168, %s250, [#allocation4], 1024, 1024, 64
        $region16: #{tpu_custom_call.1} parent=11 // pred_fallthru
          _
        // Predicated region
        $region17: #{tpu_custom_call.1} parent=11 // pred_check
          %p256 = pneg %p70
        $region18: #{tpu_custom_call.1} parent=11 // pred_check_branch
          %258 = sbr.rel (%p256) target = $region20
        $region19: #{tpu_custom_call.1} parent=11 // pred_region
          %s260 = ssub.s32 7168, 7168
          %261 = vsyncadd [#allocation6], %s260
          %s262 = sshll.u32 [#allocation5], 4
          %s263 = int_to_ptr.vmem [resolvable:$true] %s262
          %268 = dma.hbm_to_vmem [thread:$0]  %s1, 7168, %s263, [#allocation6], 1024, 1024, 64
        $region20: #{tpu_custom_call.1} parent=11 // pred_fallthru
          _
        // Predicated region
        $region21: #{tpu_custom_call.1} parent=11 // pred_check
          %p269 = pneg %p91
        $region22: #{tpu_custom_call.1} parent=11 // pred_check_branch
          %271 = sbr.rel (%p269) target = $region24
        $region23: #{tpu_custom_call.1} parent=11 // pred_region
          %s273 = ssub.s32 128, 128
          %274 = vsyncadd [#allocation6], %s273
          %s276 = sshll.u32 [#allocation7], 4
          %s277 = int_to_ptr.vmem [resolvable:$true] %s276
          %279 = dma.hbm_to_vmem [thread:$0]  %s2, 128, %s277, [#allocation6]
        $region24: #{tpu_custom_call.1} parent=11 // pred_fallthru
          _
        // Predicated region
        $region25: #{tpu_custom_call.1} parent=11 // pred_check
          %p280 = pneg %p112
        $region26: #{tpu_custom_call.1} parent=11 // pred_check_branch
          %282 = sbr.rel (%p280) target = $region28
        $region27: #{tpu_custom_call.1} parent=11 // pred_region
          %s284 = ssub.s32 128, 128
          %285 = vsyncadd [#allocation9], %s284
          %s287 = sshll.u32 [#allocation8], 4
          %s288 = int_to_ptr.vmem [resolvable:$true] %s287
          %290 = dma.hbm_to_vmem [thread:$0]  %s3, 128, %s288, [#allocation9]
        $region28: #{tpu_custom_call.1} parent=11 // pred_fallthru
          _
      $region12: #{tpu_custom_call.1} parent=5 // pred_fallthru
        _
      %p291 = scmp.lt.s32.totalorder %s16, 4
      // Predicated region
      $region29: #{tpu_custom_call.1} parent=5 // pred_check
        %p292 = pneg %p291
      $region30: #{tpu_custom_call.1} parent=5 // pred_check_branch
        %294 = sbr.rel (%p292) target = $region32
      $region31: #{tpu_custom_call.1} parent=5 // pred_region
        // Predicated region
        $region33: #{tpu_custom_call.1} parent=31 // pred_check
          %p295 = pneg %p136
        $region34: #{tpu_custom_call.1} parent=31 // pred_check_branch
          %297 = sbr.rel (%p295) target = $region36
        $region35: #{tpu_custom_call.1} parent=31 // pred_region
          %s298 = sand.u32 %s16, 1
          %s299 = scalar_lea.sflag [#allocation4], %s298
          %s300 = sand.u32 %s126, 1
          %s301 = smul.addr %s300, 8192
          %s302 = scalar_lea.vmem [#allocation10], %s301
          %s303 = smul.u32 %s23, 2
          %s304 = sadd.s32 %s303, %s24
          %s305 = smul.u32 128, %s304
          %s307 = ssub.s32 131072, 131072
          %308 = vsyncadd %s299, %s307
          %s309 = smul.addr %s305, 8
          %s310 = smul.addr %s309, 128
          %s311 = scalar_lea.hbm %s4, %s310
          %s312 = sshll.u32 %s302, 4
          %s313 = int_to_ptr.vmem [resolvable:$true] %s312
          %318 = dma.hbm_to_vmem [thread:$0]  %s311, 131072, %s313, %s299, 1024, 1024, 64
        $region36: #{tpu_custom_call.1} parent=31 // pred_fallthru
          _
        // Predicated region
        $region37: #{tpu_custom_call.1} parent=31 // pred_check
          %p319 = pneg %p166
        $region38: #{tpu_custom_call.1} parent=31 // pred_check_branch
          %321 = sbr.rel (%p319) target = $region40
        $region39: #{tpu_custom_call.1} parent=31 // pred_region
          %s322 = sand.u32 %s16, 1
          %s323 = scalar_lea.sflag [#allocation4], %s322
          %s324 = sand.u32 %s156, 1
          %s325 = smul.addr %s324, 8
          %s326 = scalar_lea.vmem [#allocation11], %s325
          %s327 = smul.u32 %s23, 2
          %s328 = sadd.s32 %s327, %s24
          %s329 = smul.u32 8, %s328
          %s331 = ssub.s32 128, 128
          %332 = vsyncadd %s323, %s331
          %s333 = smul.addr %s329, 16
          %s334 = scalar_lea.hbm %s5, %s333
          %s336 = sshll.u32 %s326, 4
          %s337 = int_to_ptr.vmem [resolvable:$true] %s336
          %339 = dma.hbm_to_vmem [thread:$0]  %s334, 128, %s337, %s323
        $region40: #{tpu_custom_call.1} parent=31 // pred_fallthru
          _
        // Predicated region
        $region41: #{tpu_custom_call.1} parent=31 // pred_check
          %p340 = pneg %p196
        $region42: #{tpu_custom_call.1} parent=31 // pred_check_branch
          %342 = sbr.rel (%p340) target = $region44
        $region43: #{tpu_custom_call.1} parent=31 // pred_region
          %s343 = sand.u32 %s16, 1
          %s344 = scalar_lea.sflag [#allocation4], %s343
          %s345 = sand.u32 %s186, 1
          %s346 = smul.addr %s345, 8192
          %s347 = scalar_lea.vmem [#allocation12], %s346
          %s348 = smul.u32 %s23, 2
          %s349 = sadd.s32 %s348, %s24
          %s350 = smul.u32 128, %s349
          %s352 = ssub.s32 131072, 131072
          %353 = vsyncadd %s344, %s352
          %s354 = smul.addr %s350, 8
          %s355 = smul.addr %s354, 128
          %s356 = scalar_lea.hbm %s6, %s355
          %s357 = sshll.u32 %s347, 4
          %s358 = int_to_ptr.vmem [resolvable:$true] %s357
          %363 = dma.hbm_to_vmem [thread:$0]  %s356, 131072, %s358, %s344, 1024, 1024, 64
        $region44: #{tpu_custom_call.1} parent=31 // pred_fallthru
          _
      $region32: #{tpu_custom_call.1} parent=5 // pred_fallthru
        _
      %p364 = scmp.le.s32.totalorder 1, %s16
      %p365 = scmp.lt.s32.totalorder %s16, 5
      %p366 = pnand %p364, %p365
      %p367 = pneg %p366
      // Predicated region
      $region45: #{tpu_custom_call.1} parent=5 // pred_check
        _
      $region46: #{tpu_custom_call.1} parent=5 // pred_check_branch
        %369 = sbr.rel (%p366) target = $region48
      $region47: #{tpu_custom_call.1} parent=5 // pred_region
        %s370 = ssub.s32 %s16, 1
        // Predicated region
        $region49: #{tpu_custom_call.1} parent=47 // pred_check
          %p371 = pneg %p49
        $region50: #{tpu_custom_call.1} parent=47 // pred_check_branch
          %373 = sbr.rel (%p371) target = $region52
        $region51: #{tpu_custom_call.1} parent=47 // pred_region
          %374 = dma.done [#allocation4], 7168
        $region52: #{tpu_custom_call.1} parent=47 // pred_fallthru
          _
        // Predicated region
        $region53: #{tpu_custom_call.1} parent=47 // pred_check
          %p375 = pneg %p70
        $region54: #{tpu_custom_call.1} parent=47 // pred_check_branch
          %377 = sbr.rel (%p375) target = $region56
        $region55: #{tpu_custom_call.1} parent=47 // pred_region
          %378 = dma.done [#allocation6], 7168
        $region56: #{tpu_custom_call.1} parent=47 // pred_fallthru
          _
        // Predicated region
        $region57: #{tpu_custom_call.1} parent=47 // pred_check
          %p379 = pneg %p91
        $region58: #{tpu_custom_call.1} parent=47 // pred_check_branch
          %381 = sbr.rel (%p379) target = $region60
        $region59: #{tpu_custom_call.1} parent=47 // pred_region
          %382 = dma.done [#allocation6], 128
        $region60: #{tpu_custom_call.1} parent=47 // pred_fallthru
          _
        // Predicated region
        $region61: #{tpu_custom_call.1} parent=47 // pred_check
          %p383 = pneg %p112
        $region62: #{tpu_custom_call.1} parent=47 // pred_check_branch
          %385 = sbr.rel (%p383) target = $region64
        $region63: #{tpu_custom_call.1} parent=47 // pred_region
          %386 = dma.done [#allocation9], 128
        $region64: #{tpu_custom_call.1} parent=47 // pred_fallthru
          _
        %s387 = sand.u32 %s21, 1
        %s388 = scalar_lea.sflag [#allocation4], %s387
        %s389 = sand.u32 %s129, 1
        %s390 = smul.addr %s389, 8192
        %s391 = scalar_lea.vmem [#allocation10], %s390
        // Predicated region
        $region65: #{tpu_custom_call.1} parent=47 // pred_check
          %p392 = pneg %p142
        $region66: #{tpu_custom_call.1} parent=47 // pred_check_branch
          %394 = sbr.rel (%p392) target = $region68
        $region67: #{tpu_custom_call.1} parent=47 // pred_region
          %395 = dma.done %s388, 131072
        $region68: #{tpu_custom_call.1} parent=47 // pred_fallthru
          _
        %s396 = sand.u32 %s21, 1
        %s397 = scalar_lea.sflag [#allocation4], %s396
        %s398 = sand.u32 %s159, 1
        %s399 = smul.addr %s398, 8
        %s400 = scalar_lea.vmem [#allocation11], %s399
        // Predicated region
        $region69: #{tpu_custom_call.1} parent=47 // pred_check
          %p401 = pneg %p172
        $region70: #{tpu_custom_call.1} parent=47 // pred_check_branch
          %403 = sbr.rel (%p401) target = $region72
        $region71: #{tpu_custom_call.1} parent=47 // pred_region
          %404 = dma.done %s397, 128
        $region72: #{tpu_custom_call.1} parent=47 // pred_fallthru
          _
        %s405 = sand.u32 %s21, 1
        %s406 = scalar_lea.sflag [#allocation4], %s405
        %s407 = sand.u32 %s189, 1
        %s408 = smul.addr %s407, 8192
        %s409 = scalar_lea.vmem [#allocation12], %s408
        // Predicated region
        $region73: #{tpu_custom_call.1} parent=47 // pred_check
          %p410 = pneg %p202
        $region74: #{tpu_custom_call.1} parent=47 // pred_check_branch
          %412 = sbr.rel (%p410) target = $region76
        $region75: #{tpu_custom_call.1} parent=47 // pred_region
          %413 = dma.done %s406, 131072
        $region76: #{tpu_custom_call.1} parent=47 // pred_fallthru
          _
        %p414 = pneg %p49
        %p415 = pneg %p46
        %p416 = pneg %p70
        %p417 = pneg %p67
        %p418 = pneg %p91
        %p419 = pneg %p88
        %p420 = pneg %p112
        %p421 = pneg %p109
        %s422 = sand.u32 %s21, 1
        %s423 = scalar_lea.sflag [#allocation4], %s422
        %s424 = sand.u32 %s129, 1
        %s425 = smul.addr %s424, 8192
        %s426 = scalar_lea.vmem [#allocation10], %s425
        %p427 = pneg %p142
        %p428 = pneg %p139
        %s429 = sand.u32 %s21, 1
        %s430 = scalar_lea.sflag [#allocation4], %s429
        %s431 = sand.u32 %s159, 1
        %s432 = smul.addr %s431, 8
        %s433 = scalar_lea.vmem [#allocation11], %s432
        %p434 = pneg %p172
        %p435 = pneg %p169
        %s436 = sand.u32 %s21, 1
        %s437 = scalar_lea.sflag [#allocation4], %s436
        %s438 = sand.u32 %s189, 1
        %s439 = smul.addr %s438, 8192
        %s440 = scalar_lea.vmem [#allocation12], %s439
        %p441 = pneg %p202
        %p442 = pneg %p199
        %p443 = pneg %p228
        %p444 = pneg %p225
        %p445 = scmp.lt.s32.totalorder %s25, 1
        %s446 = scalar_select %p445, %s25, 1
        %s447 = smul.addr %s446, 56
        %s448 = smul.addr %s447, 8
        %s449 = scalar_lea.vmem %s7, %s448
        %s450 = smul.u32 %s25, 2
        %s451 = sadd.s32 %s450, %s26
        %s452 = smul.u32 128, %s451
        %s453 = smul.u32 %s25, 2
        %s454 = sadd.s32 %s453, %s26
        %s455 = smul.u32 8, %s454
        %s456 = smul.u32 %s25, 2
        %s457 = sadd.s32 %s456, %s26
        %s458 = smul.u32 128, %s457
        %p459 = scmp.lt.s32.totalorder %s25, 1
        %s460 = scalar_select %p459, %s25, 1
        %s461 = smul.addr %s460, 56
        %s462 = smul.addr %s461, 8
        %s463 = scalar_lea.vmem %s7, %s462
        %p464 = scmp.eq.s32.totalorder %s26, 0
        // Predicated region
        $region77: #{tpu_custom_call.1} parent=47 // pred_check
          %p465 = pneg %p464
        $region78: #{tpu_custom_call.1} parent=47 // pred_check_branch
          %467 = sbr.rel (%p465) target = $region80
        $region79: #{tpu_custom_call.1} parent=47 // pred_region
          %v468 = vld [vmem:[#allocation3] sm:$0xff]
          %v469 = vld [vmem:[#allocation3 + $0x8] sm:$0xff]
          %v470 = vld [vmem:[#allocation3 + $0x10] sm:$0xff]
          %v471 = vld [vmem:[#allocation3 + $0x18] sm:$0xff]
          %v472 = vld [vmem:[#allocation3 + $0x20] sm:$0xff]
          %v473 = vld [vmem:[#allocation3 + $0x28] sm:$0xff]
          %v474 = vld [vmem:[#allocation3 + $0x30] sm:$0xff]
          %v475 = vld [vmem:[#allocation3 + $0x38] sm:$0xff]
          %v476 = vld [vmem:[#allocation3 + $0x40] sm:$0xff]
          %v477 = vld [vmem:[#allocation3 + $0x48] sm:$0xff]
          %v478 = vld [vmem:[#allocation3 + $0x50] sm:$0xff]
          %v479 = vld [vmem:[#allocation3 + $0x58] sm:$0xff]
          %v480 = vld [vmem:[#allocation3 + $0x60] sm:$0xff]
          %v481 = vld [vmem:[#allocation3 + $0x68] sm:$0xff]
          %v482 = vld [vmem:[#allocation3 + $0x70] sm:$0xff]
          %v483 = vld [vmem:[#allocation3 + $0x78] sm:$0xff]
          %v484 = vld [vmem:[#allocation3 + $0x80] sm:$0xff]
          %v485 = vld [vmem:[#allocation3 + $0x88] sm:$0xff]
          %v486 = vld [vmem:[#allocation3 + $0x90] sm:$0xff]
          %v487 = vld [vmem:[#allocation3 + $0x98] sm:$0xff]
          %v488 = vld [vmem:[#allocation3 + $0xa0] sm:$0xff]
          %v489 = vld [vmem:[#allocation3 + $0xa8] sm:$0xff]
          %v490 = vld [vmem:[#allocation3 + $0xb0] sm:$0xff]
          %v491 = vld [vmem:[#allocation3 + $0xb8] sm:$0xff]
          %v492 = vld [vmem:[#allocation3 + $0xc0] sm:$0xff]
          %v493 = vld [vmem:[#allocation3 + $0xc8] sm:$0xff]
          %v494 = vld [vmem:[#allocation3 + $0xd0] sm:$0xff]
          %v495 = vld [vmem:[#allocation3 + $0xd8] sm:$0xff]
          %v496 = vld [vmem:[#allocation3 + $0xe0] sm:$0xff]
          %v497 = vld [vmem:[#allocation3 + $0xe8] sm:$0xff]
          %v498 = vld [vmem:[#allocation3 + $0xf0] sm:$0xff]
          %v499 = vld [vmem:[#allocation3 + $0xf8] sm:$0xff]
          %v500 = vld [vmem:[#allocation3 + $0x100] sm:$0xff]
          %v501 = vld [vmem:[#allocation3 + $0x108] sm:$0xff]
          %v502 = vld [vmem:[#allocation3 + $0x110] sm:$0xff]
          %v503 = vld [vmem:[#allocation3 + $0x118] sm:$0xff]
          %v504 = vld [vmem:[#allocation3 + $0x120] sm:$0xff]
          %v505 = vld [vmem:[#allocation3 + $0x128] sm:$0xff]
          %v506 = vld [vmem:[#allocation3 + $0x130] sm:$0xff]
          %v507 = vld [vmem:[#allocation3 + $0x138] sm:$0xff]
          %v508 = vld [vmem:[#allocation3 + $0x140] sm:$0xff]
          %v509 = vld [vmem:[#allocation3 + $0x148] sm:$0xff]
          %v510 = vld [vmem:[#allocation3 + $0x150] sm:$0xff]
          %v511 = vld [vmem:[#allocation3 + $0x158] sm:$0xff]
          %v512 = vld [vmem:[#allocation3 + $0x160] sm:$0xff]
          %v513 = vld [vmem:[#allocation3 + $0x168] sm:$0xff]
          %v514 = vld [vmem:[#allocation3 + $0x170] sm:$0xff]
          %v515 = vld [vmem:[#allocation3 + $0x178] sm:$0xff]
          %v516 = vld [vmem:[#allocation3 + $0x180] sm:$0x1]
          %v517 = vld [vmem:[#allocation3 + $0x188] sm:$0x1]
          %v518 = vld [vmem:[#allocation3 + $0x190] sm:$0x1]
          %v519 = vld [vmem:[#allocation3 + $0x198] sm:$0x1]
          %v520 = vld [vmem:[#allocation3 + $0x1a0] sm:$0x1]
          %v521 = vld [vmem:[#allocation3 + $0x1a8] sm:$0x1]
          %v522 = vld [vmem:[#allocation3 + $0x1b0] sm:$0x1]
          %v523 = vld [vmem:[#allocation3 + $0x1b8] sm:$0x1]
          %v524 = vld [vmem:[#allocation5] sm:$0xff]
          %v525 = vld [vmem:[#allocation5 + $0x8] sm:$0xff]
          %v526 = vld [vmem:[#allocation5 + $0x10] sm:$0xff]
          %v527 = vld [vmem:[#allocation5 + $0x18] sm:$0xff]
          %v528 = vld [vmem:[#allocation5 + $0x20] sm:$0xff]
          %v529 = vld [vmem:[#allocation5 + $0x28] sm:$0xff]
          %v530 = vld [vmem:[#allocation5 + $0x30] sm:$0xff]
          %v531 = vld [vmem:[#allocation5 + $0x38] sm:$0xff]
          %v532 = vld [vmem:[#allocation5 + $0x40] sm:$0xff]
          %v533 = vld [vmem:[#allocation5 + $0x48] sm:$0xff]
          %v534 = vld [vmem:[#allocation5 + $0x50] sm:$0xff]
          %v535 = vld [vmem:[#allocation5 + $0x58] sm:$0xff]
          %v536 = vld [vmem:[#allocation5 + $0x60] sm:$0xff]
          %v537 = vld [vmem:[#allocation5 + $0x68] sm:$0xff]
          %v538 = vld [vmem:[#allocation5 + $0x70] sm:$0xff]
          %v539 = vld [vmem:[#allocation5 + $0x78] sm:$0xff]
          %v540 = vld [vmem:[#allocation5 + $0x80] sm:$0xff]
          %v541 = vld [vmem:[#allocation5 + $0x88] sm:$0xff]
          %v542 = vld [vmem:[#allocation5 + $0x90] sm:$0xff]
          %v543 = vld [vmem:[#allocation5 + $0x98] sm:$0xff]
          %v544 = vld [vmem:[#allocation5 + $0xa0] sm:$0xff]
          %v545 = vld [vmem:[#allocation5 + $0xa8] sm:$0xff]
          %v546 = vld [vmem:[#allocation5 + $0xb0] sm:$0xff]
          %v547 = vld [vmem:[#allocation5 + $0xb8] sm:$0xff]
          %v548 = vld [vmem:[#allocation5 + $0xc0] sm:$0xff]
          %v549 = vld [vmem:[#allocation5 + $0xc8] sm:$0xff]
          %v550 = vld [vmem:[#allocation5 + $0xd0] sm:$0xff]
          %v551 = vld [vmem:[#allocation5 + $0xd8] sm:$0xff]
          %v552 = vld [vmem:[#allocation5 + $0xe0] sm:$0xff]
          %v553 = vld [vmem:[#allocation5 + $0xe8] sm:$0xff]
          %v554 = vld [vmem:[#allocation5 + $0xf0] sm:$0xff]
          %v555 = vld [vmem:[#allocation5 + $0xf8] sm:$0xff]
          %v556 = vld [vmem:[#allocation5 + $0x100] sm:$0xff]
          %v557 = vld [vmem:[#allocation5 + $0x108] sm:$0xff]
          %v558 = vld [vmem:[#allocation5 + $0x110] sm:$0xff]
          %v559 = vld [vmem:[#allocation5 + $0x118] sm:$0xff]
          %v560 = vld [vmem:[#allocation5 + $0x120] sm:$0xff]
          %v561 = vld [vmem:[#allocation5 + $0x128] sm:$0xff]
          %v562 = vld [vmem:[#allocation5 + $0x130] sm:$0xff]
          %v563 = vld [vmem:[#allocation5 + $0x138] sm:$0xff]
          %v564 = vld [vmem:[#allocation5 + $0x140] sm:$0xff]
          %v565 = vld [vmem:[#allocation5 + $0x148] sm:$0xff]
          %v566 = vld [vmem:[#allocation5 + $0x150] sm:$0xff]
          %v567 = vld [vmem:[#allocation5 + $0x158] sm:$0xff]
          %v568 = vld [vmem:[#allocation5 + $0x160] sm:$0xff]
          %v569 = vld [vmem:[#allocation5 + $0x168] sm:$0xff]
          %v570 = vld [vmem:[#allocation5 + $0x170] sm:$0xff]
          %v571 = vld [vmem:[#allocation5 + $0x178] sm:$0xff]
          %v572 = vld [vmem:[#allocation5 + $0x180] sm:$0x1]
          %v573 = vld [vmem:[#allocation5 + $0x188] sm:$0x1]
          %v574 = vld [vmem:[#allocation5 + $0x190] sm:$0x1]
          %v575 = vld [vmem:[#allocation5 + $0x198] sm:$0x1]
          %v576 = vld [vmem:[#allocation5 + $0x1a0] sm:$0x1]
          %v577 = vld [vmem:[#allocation5 + $0x1a8] sm:$0x1]
          %v578 = vld [vmem:[#allocation5 + $0x1b0] sm:$0x1]
          %v579 = vld [vmem:[#allocation5 + $0x1b8] sm:$0x1]
          %v580 = vadd.f32 %v468, %v524
          %v581 = vadd.f32 %v469, %v525
          %v582 = vadd.f32 %v470, %v526
          %v583 = vadd.f32 %v471, %v527
          %v584 = vadd.f32 %v472, %v528
          %v585 = vadd.f32 %v473, %v529
          %v586 = vadd.f32 %v474, %v530
          %v587 = vadd.f32 %v475, %v531
          %v588 = vadd.f32 %v476, %v532
          %v589 = vadd.f32 %v477, %v533
          %v590 = vadd.f32 %v478, %v534
          %v591 = vadd.f32 %v479, %v535
          %v592 = vadd.f32 %v480, %v536
          %v593 = vadd.f32 %v481, %v537
          %v594 = vadd.f32 %v482, %v538
          %v595 = vadd.f32 %v483, %v539
          %v596 = vadd.f32 %v484, %v540
          %v597 = vadd.f32 %v485, %v541
          %v598 = vadd.f32 %v486, %v542
          %v599 = vadd.f32 %v487, %v543
          %v600 = vadd.f32 %v488, %v544
          %v601 = vadd.f32 %v489, %v545
          %v602 = vadd.f32 %v490, %v546
          %v603 = vadd.f32 %v491, %v547
          %v604 = vadd.f32 %v492, %v548
          %v605 = vadd.f32 %v493, %v549
          %v606 = vadd.f32 %v494, %v550
          %v607 = vadd.f32 %v495, %v551
          %v608 = vadd.f32 %v496, %v552
          %v609 = vadd.f32 %v497, %v553
          %v610 = vadd.f32 %v498, %v554
          %v611 = vadd.f32 %v499, %v555
          %v612 = vadd.f32 %v500, %v556
          %v613 = vadd.f32 %v501, %v557
          %v614 = vadd.f32 %v502, %v558
          %v615 = vadd.f32 %v503, %v559
          %v616 = vadd.f32 %v504, %v560
          %v617 = vadd.f32 %v505, %v561
          %v618 = vadd.f32 %v506, %v562
          %v619 = vadd.f32 %v507, %v563
          %v620 = vadd.f32 %v508, %v564
          %v621 = vadd.f32 %v509, %v565
          %v622 = vadd.f32 %v510, %v566
          %v623 = vadd.f32 %v511, %v567
          %v624 = vadd.f32 %v512, %v568
          %v625 = vadd.f32 %v513, %v569
          %v626 = vadd.f32 %v514, %v570
          %v627 = vadd.f32 %v515, %v571
          %v628 = vadd.f32 %v516, %v572
          %v629 = vadd.f32 %v517, %v573
          %v630 = vadd.f32 %v518, %v574
          %v631 = vadd.f32 %v519, %v575
          %v632 = vadd.f32 %v520, %v576
          %v633 = vadd.f32 %v521, %v577
          %v634 = vadd.f32 %v522, %v578
          %v635 = vadd.f32 %v523, %v579
          %v636 = vadd.f32 %v580, %v581
          %v637 = vadd.f32 %v636, %v582
          %v638 = vadd.f32 %v637, %v583
          %v639 = vadd.f32 %v638, %v584
          %v640 = vadd.f32 %v639, %v585
          %v641 = vadd.f32 %v640, %v586
          %v642 = vadd.f32 %v641, %v587
          %643 = vadd.xlane.f32.xlu0 %v642
          %v644 = vpop.xlane.xlu0 %643
          %v645 = vadd.f32 %v588, %v589
          %v646 = vadd.f32 %v645, %v590
          %v647 = vadd.f32 %v646, %v591
          %v648 = vadd.f32 %v647, %v592
          %v649 = vadd.f32 %v648, %v593
          %v650 = vadd.f32 %v649, %v594
          %v651 = vadd.f32 %v650, %v595
          %652 = vadd.xlane.f32.xlu0 %v651
          %v653 = vpop.xlane.xlu0 %652
          %v654 = vadd.f32 %v596, %v597
          %v655 = vadd.f32 %v654, %v598
          %v656 = vadd.f32 %v655, %v599
          %v657 = vadd.f32 %v656, %v600
          %v658 = vadd.f32 %v657, %v601
          %v659 = vadd.f32 %v658, %v602
          %v660 = vadd.f32 %v659, %v603
          %661 = vadd.xlane.f32.xlu0 %v660
          %v662 = vpop.xlane.xlu0 %661
          %v663 = vadd.f32 %v604, %v605
          %v664 = vadd.f32 %v663, %v606
          %v665 = vadd.f32 %v664, %v607
          %v666 = vadd.f32 %v665, %v608
          %v667 = vadd.f32 %v666, %v609
          %v668 = vadd.f32 %v667, %v610
          %v669 = vadd.f32 %v668, %v611
          %670 = vadd.xlane.f32.xlu0 %v669
          %v671 = vpop.xlane.xlu0 %670
          %v672 = vadd.f32 %v612, %v613
          %v673 = vadd.f32 %v672, %v614
          %v674 = vadd.f32 %v673, %v615
          %v675 = vadd.f32 %v674, %v616
          %v676 = vadd.f32 %v675, %v617
          %v677 = vadd.f32 %v676, %v618
          %v678 = vadd.f32 %v677, %v619
          %679 = vadd.xlane.f32.xlu0 %v678
          %v680 = vpop.xlane.xlu0 %679
          %v681 = vadd.f32 %v620, %v621
          %v682 = vadd.f32 %v681, %v622
          %v683 = vadd.f32 %v682, %v623
          %v684 = vadd.f32 %v683, %v624
          %v685 = vadd.f32 %v684, %v625
          %v686 = vadd.f32 %v685, %v626
          %v687 = vadd.f32 %v686, %v627
          %688 = vadd.xlane.f32.xlu0 %v687
          %v689 = vpop.xlane.xlu0 %688
          %vm690 = vcmask 1040384
          %v691 = vsel %vm690, %v628, 0.0
          %v692 = vsel %vm690, %v629, 0.0
          %v693 = vadd.f32 %v691, %v692
          %v694 = vsel %vm690, %v630, 0.0
          %v695 = vadd.f32 %v693, %v694
          %v696 = vsel %vm690, %v631, 0.0
          %v697 = vadd.f32 %v695, %v696
          %v698 = vsel %vm690, %v632, 0.0
          %v699 = vadd.f32 %v697, %v698
          %v700 = vsel %vm690, %v633, 0.0
          %v701 = vadd.f32 %v699, %v700
          %v702 = vsel %vm690, %v634, 0.0
          %v703 = vadd.f32 %v701, %v702
          %v704 = vsel %vm690, %v635, 0.0
          %v705 = vadd.f32 %v703, %v704
          %706 = vadd.xlane.f32.xlu0 %v705
          %v707 = vpop.xlane.xlu0 %706
          %v708 = vrcp.pop 1024.0
          %v709 = vmul.f32 %v644, %v708
          %v710 = vmul.f32 %v653, %v708
          %v711 = vmul.f32 %v662, %v708
          %v712 = vmul.f32 %v671, %v708
          %v713 = vmul.f32 %v680, %v708
          %v714 = vmul.f32 %v689, %v708
          %v715 = vmul.f32 %v707, %v708
          %v716 = vsub.f32 %v580, %v709
          %v717 = vsub.f32 %v581, %v709
          %v718 = vsub.f32 %v582, %v709
          %v719 = vsub.f32 %v583, %v709
          %v720 = vsub.f32 %v584, %v709
          %v721 = vsub.f32 %v585, %v709
          %v722 = vsub.f32 %v586, %v709
          %v723 = vsub.f32 %v587, %v709
          %v724 = vsub.f32 %v588, %v710
          %v725 = vsub.f32 %v589, %v710
          %v726 = vsub.f32 %v590, %v710
          %v727 = vsub.f32 %v591, %v710
          %v728 = vsub.f32 %v592, %v710
          %v729 = vsub.f32 %v593, %v710
          %v730 = vsub.f32 %v594, %v710
          %v731 = vsub.f32 %v595, %v710
          %v732 = vsub.f32 %v596, %v711
          %v733 = vsub.f32 %v597, %v711
          %v734 = vsub.f32 %v598, %v711
          %v735 = vsub.f32 %v599, %v711
          %v736 = vsub.f32 %v600, %v711
          %v737 = vsub.f32 %v601, %v711
          %v738 = vsub.f32 %v602, %v711
          %v739 = vsub.f32 %v603, %v711
          %v740 = vsub.f32 %v604, %v712
          %v741 = vsub.f32 %v605, %v712
          %v742 = vsub.f32 %v606, %v712
          %v743 = vsub.f32 %v607, %v712
          %v744 = vsub.f32 %v608, %v712
          %v745 = vsub.f32 %v609, %v712
          %v746 = vsub.f32 %v610, %v712
          %v747 = vsub.f32 %v611, %v712
          %v748 = vsub.f32 %v612, %v713
          %v749 = vsub.f32 %v613, %v713
          %v750 = vsub.f32 %v614, %v713
          %v751 = vsub.f32 %v615, %v713
          %v752 = vsub.f32 %v616, %v713
          %v753 = vsub.f32 %v617, %v713
          %v754 = vsub.f32 %v618, %v713
          %v755 = vsub.f32 %v619, %v713
          %v756 = vsub.f32 %v620, %v714
          %v757 = vsub.f32 %v621, %v714
          %v758 = vsub.f32 %v622, %v714
          %v759 = vsub.f32 %v623, %v714
          %v760 = vsub.f32 %v624, %v714
          %v761 = vsub.f32 %v625, %v714
          %v762 = vsub.f32 %v626, %v714
          %v763 = vsub.f32 %v627, %v714
          %v764 = vsub.f32 %v628, %v715
          %v765 = vsub.f32 %v629, %v715
          %v766 = vsub.f32 %v630, %v715
          %v767 = vsub.f32 %v631, %v715
          %v768 = vsub.f32 %v632, %v715
          %v769 = vsub.f32 %v633, %v715
          %v770 = vsub.f32 %v634, %v715
          %v771 = vsub.f32 %v635, %v715
          %v772 = vmul.f32 %v716, %v716
          %v773 = vmul.f32 %v717, %v717
          %v774 = vmul.f32 %v718, %v718
          %v775 = vmul.f32 %v719, %v719
          %v776 = vmul.f32 %v720, %v720
          %v777 = vmul.f32 %v721, %v721
          %v778 = vmul.f32 %v722, %v722
          %v779 = vmul.f32 %v723, %v723
          %v780 = vmul.f32 %v724, %v724
          %v781 = vmul.f32 %v725, %v725
          %v782 = vmul.f32 %v726, %v726
          %v783 = vmul.f32 %v727, %v727
          %v784 = vmul.f32 %v728, %v728
          %v785 = vmul.f32 %v729, %v729
          %v786 = vmul.f32 %v730, %v730
          %v787 = vmul.f32 %v731, %v731
          %v788 = vmul.f32 %v732, %v732
          %v789 = vmul.f32 %v733, %v733
          %v790 = vmul.f32 %v734, %v734
          %v791 = vmul.f32 %v735, %v735
          %v792 = vmul.f32 %v736, %v736
          %v793 = vmul.f32 %v737, %v737
          %v794 = vmul.f32 %v738, %v738
          %v795 = vmul.f32 %v739, %v739
          %v796 = vmul.f32 %v740, %v740
          %v797 = vmul.f32 %v741, %v741
          %v798 = vmul.f32 %v742, %v742
          %v799 = vmul.f32 %v743, %v743
          %v800 = vmul.f32 %v744, %v744
          %v801 = vmul.f32 %v745, %v745
          %v802 = vmul.f32 %v746, %v746
          %v803 = vmul.f32 %v747, %v747
          %v804 = vmul.f32 %v748, %v748
          %v805 = vmul.f32 %v749, %v749
          %v806 = vmul.f32 %v750, %v750
          %v807 = vmul.f32 %v751, %v751
          %v808 = vmul.f32 %v752, %v752
          %v809 = vmul.f32 %v753, %v753
          %v810 = vmul.f32 %v754, %v754
          %v811 = vmul.f32 %v755, %v755
          %v812 = vmul.f32 %v756, %v756
          %v813 = vmul.f32 %v757, %v757
          %v814 = vmul.f32 %v758, %v758
          %v815 = vmul.f32 %v759, %v759
          %v816 = vmul.f32 %v760, %v760
          %v817 = vmul.f32 %v761, %v761
          %v818 = vmul.f32 %v762, %v762
          %v819 = vmul.f32 %v763, %v763
          %v820 = vmul.f32 %v764, %v764
          %v821 = vmul.f32 %v765, %v765
          %v822 = vmul.f32 %v766, %v766
          %v823 = vmul.f32 %v767, %v767
          %v824 = vmul.f32 %v768, %v768
          %v825 = vmul.f32 %v769, %v769
          %v826 = vmul.f32 %v770, %v770
          %v827 = vmul.f32 %v771, %v771
          %v828 = vadd.f32 %v772, %v773
          %v829 = vadd.f32 %v828, %v774
          %v830 = vadd.f32 %v829, %v775
          %v831 = vadd.f32 %v830, %v776
          %v832 = vadd.f32 %v831, %v777
          %v833 = vadd.f32 %v832, %v778
          %v834 = vadd.f32 %v833, %v779
          %835 = vadd.xlane.f32.xlu0 %v834
          %v836 = vpop.xlane.xlu0 %835
          %v837 = vadd.f32 %v780, %v781
          %v838 = vadd.f32 %v837, %v782
          %v839 = vadd.f32 %v838, %v783
          %v840 = vadd.f32 %v839, %v784
          %v841 = vadd.f32 %v840, %v785
          %v842 = vadd.f32 %v841, %v786
          %v843 = vadd.f32 %v842, %v787
          %844 = vadd.xlane.f32.xlu0 %v843
          %v845 = vpop.xlane.xlu0 %844
          %v846 = vadd.f32 %v788, %v789
          %v847 = vadd.f32 %v846, %v790
          %v848 = vadd.f32 %v847, %v791
          %v849 = vadd.f32 %v848, %v792
          %v850 = vadd.f32 %v849, %v793
          %v851 = vadd.f32 %v850, %v794
          %v852 = vadd.f32 %v851, %v795
          %853 = vadd.xlane.f32.xlu0 %v852
          %v854 = vpop.xlane.xlu0 %853
          %v855 = vadd.f32 %v796, %v797
          %v856 = vadd.f32 %v855, %v798
          %v857 = vadd.f32 %v856, %v799
          %v858 = vadd.f32 %v857, %v800
          %v859 = vadd.f32 %v858, %v801
          %v860 = vadd.f32 %v859, %v802
          %v861 = vadd.f32 %v860, %v803
          %862 = vadd.xlane.f32.xlu0 %v861
          %v863 = vpop.xlane.xlu0 %862
          %v864 = vadd.f32 %v804, %v805
          %v865 = vadd.f32 %v864, %v806
          %v866 = vadd.f32 %v865, %v807
          %v867 = vadd.f32 %v866, %v808
          %v868 = vadd.f32 %v867, %v809
          %v869 = vadd.f32 %v868, %v810
          %v870 = vadd.f32 %v869, %v811
          %871 = vadd.xlane.f32.xlu0 %v870
          %v872 = vpop.xlane.xlu0 %871
          %v873 = vadd.f32 %v812, %v813
          %v874 = vadd.f32 %v873, %v814
          %v875 = vadd.f32 %v874, %v815
          %v876 = vadd.f32 %v875, %v816
          %v877 = vadd.f32 %v876, %v817
          %v878 = vadd.f32 %v877, %v818
          %v879 = vadd.f32 %v878, %v819
          %880 = vadd.xlane.f32.xlu0 %v879
          %v881 = vpop.xlane.xlu0 %880
          %v882 = vsel %vm690, %v820, 0.0
          %v883 = vsel %vm690, %v821, 0.0
          %v884 = vadd.f32 %v882, %v883
          %v885 = vsel %vm690, %v822, 0.0
          %v886 = vadd.f32 %v884, %v885
          %v887 = vsel %vm690, %v823, 0.0
          %v888 = vadd.f32 %v886, %v887
          %v889 = vsel %vm690, %v824, 0.0
          %v890 = vadd.f32 %v888, %v889
          %v891 = vsel %vm690, %v825, 0.0
          %v892 = vadd.f32 %v890, %v891
          %v893 = vsel %vm690, %v826, 0.0
          %v894 = vadd.f32 %v892, %v893
          %v895 = vsel %vm690, %v827, 0.0
          %v896 = vadd.f32 %v894, %v895
          %897 = vadd.xlane.f32.xlu0 %v896
          %v898 = vpop.xlane.xlu0 %897
          %v899 = vmul.f32 %v836, %v708
          %v900 = vmul.f32 %v845, %v708
          %v901 = vmul.f32 %v854, %v708
          %v902 = vmul.f32 %v863, %v708
          %v903 = vmul.f32 %v872, %v708
          %v904 = vmul.f32 %v881, %v708
          %v905 = vmul.f32 %v898, %v708
          %v906 = vadd.f32 %v899, 1e-05
          %v907 = vadd.f32 %v900, 1e-05
          %v908 = vadd.f32 %v901, 1e-05
          %v909 = vadd.f32 %v902, 1e-05
          %v910 = vadd.f32 %v903, 1e-05
          %v911 = vadd.f32 %v904, 1e-05
          %v912 = vadd.f32 %v905, 1e-05
          %v913 = vrsqrt.pop %v906
          %v914 = vrsqrt.pop %v907
          %v915 = vrsqrt.pop %v908
          %v916 = vrsqrt.pop %v909
          %v917 = vrsqrt.pop %v910
          %v918 = vrsqrt.pop %v911
          %v919 = vrsqrt.pop %v912
          %v920 = vmul.f32 %v716, %v913
          %v921 = vmul.f32 %v717, %v913
          %v922 = vmul.f32 %v718, %v913
          %v923 = vmul.f32 %v719, %v913
          %v924 = vmul.f32 %v720, %v913
          %v925 = vmul.f32 %v721, %v913
          %v926 = vmul.f32 %v722, %v913
          %v927 = vmul.f32 %v723, %v913
          %v928 = vmul.f32 %v724, %v914
          %v929 = vmul.f32 %v725, %v914
          %v930 = vmul.f32 %v726, %v914
          %v931 = vmul.f32 %v727, %v914
          %v932 = vmul.f32 %v728, %v914
          %v933 = vmul.f32 %v729, %v914
          %v934 = vmul.f32 %v730, %v914
          %v935 = vmul.f32 %v731, %v914
          %v936 = vmul.f32 %v732, %v915
          %v937 = vmul.f32 %v733, %v915
          %v938 = vmul.f32 %v734, %v915
          %v939 = vmul.f32 %v735, %v915
          %v940 = vmul.f32 %v736, %v915
          %v941 = vmul.f32 %v737, %v915
          %v942 = vmul.f32 %v738, %v915
          %v943 = vmul.f32 %v739, %v915
          %v944 = vmul.f32 %v740, %v916
          %v945 = vmul.f32 %v741, %v916
          %v946 = vmul.f32 %v742, %v916
          %v947 = vmul.f32 %v743, %v916
          %v948 = vmul.f32 %v744, %v916
          %v949 = vmul.f32 %v745, %v916
          %v950 = vmul.f32 %v746, %v916
          %v951 = vmul.f32 %v747, %v916
          %v952 = vmul.f32 %v748, %v917
          %v953 = vmul.f32 %v749, %v917
          %v954 = vmul.f32 %v750, %v917
          %v955 = vmul.f32 %v751, %v917
          %v956 = vmul.f32 %v752, %v917
          %v957 = vmul.f32 %v753, %v917
          %v958 = vmul.f32 %v754, %v917
          %v959 = vmul.f32 %v755, %v917
          %v960 = vmul.f32 %v756, %v918
          %v961 = vmul.f32 %v757, %v918
          %v962 = vmul.f32 %v758, %v918
          %v963 = vmul.f32 %v759, %v918
          %v964 = vmul.f32 %v760, %v918
          %v965 = vmul.f32 %v761, %v918
          %v966 = vmul.f32 %v762, %v918
          %v967 = vmul.f32 %v763, %v918
          %v968 = vmul.f32 %v764, %v919
          %v969 = vmul.f32 %v765, %v919
          %v970 = vmul.f32 %v766, %v919
          %v971 = vmul.f32 %v767, %v919
          %v972 = vmul.f32 %v768, %v919
          %v973 = vmul.f32 %v769, %v919
          %v974 = vmul.f32 %v770, %v919
          %v975 = vmul.f32 %v771, %v919
          %v976 = vld [vmem:[#allocation7] sm:$0xff]
          %v978 = vlaneseq
          %v979 = vshrl.u32 %v978, 7
          %v980 = vsub.s32 0, %v979
          %v981 = vrot.slane %v976, %v980
          %v982 = vlaneseq
          %v983 = vshrl.u32 %v982, 7
          %v984 = vsub.s32 1, %v983
          %v985 = vrot.slane %v976, %v984
          %v986 = vlaneseq
          %v987 = vshrl.u32 %v986, 7
          %v988 = vsub.s32 2, %v987
          %v989 = vrot.slane %v976, %v988
          %v990 = vlaneseq
          %v991 = vshrl.u32 %v990, 7
          %v992 = vsub.s32 3, %v991
          %v993 = vrot.slane %v976, %v992
          %v994 = vlaneseq
          %v995 = vshrl.u32 %v994, 7
          %v996 = vsub.s32 4, %v995
          %v997 = vrot.slane %v976, %v996
          %v998 = vlaneseq
          %v999 = vshrl.u32 %v998, 7
          %v1000 = vsub.s32 5, %v999
          %v1001 = vrot.slane %v976, %v1000
          %v1002 = vlaneseq
          %v1003 = vshrl.u32 %v1002, 7
          %v1004 = vsub.s32 6, %v1003
          %v1005 = vrot.slane %v976, %v1004
          %v1006 = vlaneseq
          %v1007 = vshrl.u32 %v1006, 7
          %v1008 = vsub.s32 7, %v1007
          %v1009 = vrot.slane %v976, %v1008
          %v1018 = vmul.f32 %v920, %v981
          %v1019 = vmul.f32 %v921, %v985
          %v1020 = vmul.f32 %v922, %v989
          %v1021 = vmul.f32 %v923, %v993
          %v1022 = vmul.f32 %v924, %v997
          %v1023 = vmul.f32 %v925, %v1001
          %v1024 = vmul.f32 %v926, %v1005
          %v1025 = vmul.f32 %v927, %v1009
          %v1026 = vmul.f32 %v928, %v981
          %v1027 = vmul.f32 %v929, %v985
          %v1028 = vmul.f32 %v930, %v989
          %v1029 = vmul.f32 %v931, %v993
          %v1030 = vmul.f32 %v932, %v997
          %v1031 = vmul.f32 %v933, %v1001
          %v1032 = vmul.f32 %v934, %v1005
          %v1033 = vmul.f32 %v935, %v1009
          %v1034 = vmul.f32 %v936, %v981
          %v1035 = vmul.f32 %v937, %v985
          %v1036 = vmul.f32 %v938, %v989
          %v1037 = vmul.f32 %v939, %v993
          %v1038 = vmul.f32 %v940, %v997
          %v1039 = vmul.f32 %v941, %v1001
          %v1040 = vmul.f32 %v942, %v1005
          %v1041 = vmul.f32 %v943, %v1009
          %v1042 = vmul.f32 %v944, %v981
          %v1043 = vmul.f32 %v945, %v985
          %v1044 = vmul.f32 %v946, %v989
          %v1045 = vmul.f32 %v947, %v993
          %v1046 = vmul.f32 %v948, %v997
          %v1047 = vmul.f32 %v949, %v1001
          %v1048 = vmul.f32 %v950, %v1005
          %v1049 = vmul.f32 %v951, %v1009
          %v1050 = vmul.f32 %v952, %v981
          %v1051 = vmul.f32 %v953, %v985
          %v1052 = vmul.f32 %v954, %v989
          %v1053 = vmul.f32 %v955, %v993
          %v1054 = vmul.f32 %v956, %v997
          %v1055 = vmul.f32 %v957, %v1001
          %v1056 = vmul.f32 %v958, %v1005
          %v1057 = vmul.f32 %v959, %v1009
          %v1058 = vmul.f32 %v960, %v981
          %v1059 = vmul.f32 %v961, %v985
          %v1060 = vmul.f32 %v962, %v989
          %v1061 = vmul.f32 %v963, %v993
          %v1062 = vmul.f32 %v964, %v997
          %v1063 = vmul.f32 %v965, %v1001
          %v1064 = vmul.f32 %v966, %v1005
          %v1065 = vmul.f32 %v967, %v1009
          %v1066 = vmul.f32 %v968, %v981
          %v1067 = vmul.f32 %v969, %v985
          %v1068 = vmul.f32 %v970, %v989
          %v1069 = vmul.f32 %v971, %v993
          %v1070 = vmul.f32 %v972, %v997
          %v1071 = vmul.f32 %v973, %v1001
          %v1072 = vmul.f32 %v974, %v1005
          %v1073 = vmul.f32 %v975, %v1009
          %v1074 = vld [vmem:[#allocation8] sm:$0xff]
          %v1076 = vlaneseq
          %v1077 = vshrl.u32 %v1076, 7
          %v1078 = vsub.s32 0, %v1077
          %v1079 = vrot.slane %v1074, %v1078
          %v1080 = vlaneseq
          %v1081 = vshrl.u32 %v1080, 7
          %v1082 = vsub.s32 1, %v1081
          %v1083 = vrot.slane %v1074, %v1082
          %v1084 = vlaneseq
          %v1085 = vshrl.u32 %v1084, 7
          %v1086 = vsub.s32 2, %v1085
          %v1087 = vrot.slane %v1074, %v1086
          %v1088 = vlaneseq
          %v1089 = vshrl.u32 %v1088, 7
          %v1090 = vsub.s32 3, %v1089
          %v1091 = vrot.slane %v1074, %v1090
          %v1092 = vlaneseq
          %v1093 = vshrl.u32 %v1092, 7
          %v1094 = vsub.s32 4, %v1093
          %v1095 = vrot.slane %v1074, %v1094
          %v1096 = vlaneseq
          %v1097 = vshrl.u32 %v1096, 7
          %v1098 = vsub.s32 5, %v1097
          %v1099 = vrot.slane %v1074, %v1098
          %v1100 = vlaneseq
          %v1101 = vshrl.u32 %v1100, 7
          %v1102 = vsub.s32 6, %v1101
          %v1103 = vrot.slane %v1074, %v1102
          %v1104 = vlaneseq
          %v1105 = vshrl.u32 %v1104, 7
          %v1106 = vsub.s32 7, %v1105
          %v1107 = vrot.slane %v1074, %v1106
          %v1116 = vadd.f32 %v1018, %v1079
          %v1117 = vadd.f32 %v1019, %v1083
          %v1118 = vadd.f32 %v1020, %v1087
          %v1119 = vadd.f32 %v1021, %v1091
          %v1120 = vadd.f32 %v1022, %v1095
          %v1121 = vadd.f32 %v1023, %v1099
          %v1122 = vadd.f32 %v1024, %v1103
          %v1123 = vadd.f32 %v1025, %v1107
          %v1124 = vadd.f32 %v1026, %v1079
          %v1125 = vadd.f32 %v1027, %v1083
          %v1126 = vadd.f32 %v1028, %v1087
          %v1127 = vadd.f32 %v1029, %v1091
          %v1128 = vadd.f32 %v1030, %v1095
          %v1129 = vadd.f32 %v1031, %v1099
          %v1130 = vadd.f32 %v1032, %v1103
          %v1131 = vadd.f32 %v1033, %v1107
          %v1132 = vadd.f32 %v1034, %v1079
          %v1133 = vadd.f32 %v1035, %v1083
          %v1134 = vadd.f32 %v1036, %v1087
          %v1135 = vadd.f32 %v1037, %v1091
          %v1136 = vadd.f32 %v1038, %v1095
          %v1137 = vadd.f32 %v1039, %v1099
          %v1138 = vadd.f32 %v1040, %v1103
          %v1139 = vadd.f32 %v1041, %v1107
          %v1140 = vadd.f32 %v1042, %v1079
          %v1141 = vadd.f32 %v1043, %v1083
          %v1142 = vadd.f32 %v1044, %v1087
          %v1143 = vadd.f32 %v1045, %v1091
          %v1144 = vadd.f32 %v1046, %v1095
          %v1145 = vadd.f32 %v1047, %v1099
          %v1146 = vadd.f32 %v1048, %v1103
          %v1147 = vadd.f32 %v1049, %v1107
          %v1148 = vadd.f32 %v1050, %v1079
          %v1149 = vadd.f32 %v1051, %v1083
          %v1150 = vadd.f32 %v1052, %v1087
          %v1151 = vadd.f32 %v1053, %v1091
          %v1152 = vadd.f32 %v1054, %v1095
          %v1153 = vadd.f32 %v1055, %v1099
          %v1154 = vadd.f32 %v1056, %v1103
          %v1155 = vadd.f32 %v1057, %v1107
          %v1156 = vadd.f32 %v1058, %v1079
          %v1157 = vadd.f32 %v1059, %v1083
          %v1158 = vadd.f32 %v1060, %v1087
          %v1159 = vadd.f32 %v1061, %v1091
          %v1160 = vadd.f32 %v1062, %v1095
          %v1161 = vadd.f32 %v1063, %v1099
          %v1162 = vadd.f32 %v1064, %v1103
          %v1163 = vadd.f32 %v1065, %v1107
          %v1164 = vadd.f32 %v1066, %v1079
          %v1165 = vadd.f32 %v1067, %v1083
          %v1166 = vadd.f32 %v1068, %v1087
          %v1167 = vadd.f32 %v1069, %v1091
          %v1168 = vadd.f32 %v1070, %v1095
          %v1169 = vadd.f32 %v1071, %v1099
          %v1170 = vadd.f32 %v1072, %v1103
          %v1171 = vadd.f32 %v1073, %v1107
          %1172 = vst [vmem:[#allocation2] sm:$0xff] %v1116
          %1173 = vst [vmem:[#allocation2 + $0x8] sm:$0xff] %v1117
          %1174 = vst [vmem:[#allocation2 + $0x10] sm:$0xff] %v1118
          %1175 = vst [vmem:[#allocation2 + $0x18] sm:$0xff] %v1119
          %1176 = vst [vmem:[#allocation2 + $0x20] sm:$0xff] %v1120
          %1177 = vst [vmem:[#allocation2 + $0x28] sm:$0xff] %v1121
          %1178 = vst [vmem:[#allocation2 + $0x30] sm:$0xff] %v1122
          %1179 = vst [vmem:[#allocation2 + $0x38] sm:$0xff] %v1123
          %1180 = vst [vmem:[#allocation2 + $0x40] sm:$0xff] %v1124
          %1181 = vst [vmem:[#allocation2 + $0x48] sm:$0xff] %v1125
          %1182 = vst [vmem:[#allocation2 + $0x50] sm:$0xff] %v1126
          %1183 = vst [vmem:[#allocation2 + $0x58] sm:$0xff] %v1127
          %1184 = vst [vmem:[#allocation2 + $0x60] sm:$0xff] %v1128
          %1185 = vst [vmem:[#allocation2 + $0x68] sm:$0xff] %v1129
          %1186 = vst [vmem:[#allocation2 + $0x70] sm:$0xff] %v1130
          %1187 = vst [vmem:[#allocation2 + $0x78] sm:$0xff] %v1131
          %1188 = vst [vmem:[#allocation2 + $0x80] sm:$0xff] %v1132
          %1189 = vst [vmem:[#allocation2 + $0x88] sm:$0xff] %v1133
          %1190 = vst [vmem:[#allocation2 + $0x90] sm:$0xff] %v1134
          %1191 = vst [vmem:[#allocation2 + $0x98] sm:$0xff] %v1135
          %1192 = vst [vmem:[#allocation2 + $0xa0] sm:$0xff] %v1136
          %1193 = vst [vmem:[#allocation2 + $0xa8] sm:$0xff] %v1137
          %1194 = vst [vmem:[#allocation2 + $0xb0] sm:$0xff] %v1138
          %1195 = vst [vmem:[#allocation2 + $0xb8] sm:$0xff] %v1139
          %1196 = vst [vmem:[#allocation2 + $0xc0] sm:$0xff] %v1140
          %1197 = vst [vmem:[#allocation2 + $0xc8] sm:$0xff] %v1141
          %1198 = vst [vmem:[#allocation2 + $0xd0] sm:$0xff] %v1142
          %1199 = vst [vmem:[#allocation2 + $0xd8] sm:$0xff] %v1143
          %1200 = vst [vmem:[#allocation2 + $0xe0] sm:$0xff] %v1144
          %1201 = vst [vmem:[#allocation2 + $0xe8] sm:$0xff] %v1145
          %1202 = vst [vmem:[#allocation2 + $0xf0] sm:$0xff] %v1146
          %1203 = vst [vmem:[#allocation2 + $0xf8] sm:$0xff] %v1147
          %1204 = vst [vmem:[#allocation2 + $0x100] sm:$0xff] %v1148
          %1205 = vst [vmem:[#allocation2 + $0x108] sm:$0xff] %v1149
          %1206 = vst [vmem:[#allocation2 + $0x110] sm:$0xff] %v1150
          %1207 = vst [vmem:[#allocation2 + $0x118] sm:$0xff] %v1151
          %1208 = vst [vmem:[#allocation2 + $0x120] sm:$0xff] %v1152
          %1209 = vst [vmem:[#allocation2 + $0x128] sm:$0xff] %v1153
          %1210 = vst [vmem:[#allocation2 + $0x130] sm:$0xff] %v1154
          %1211 = vst [vmem:[#allocation2 + $0x138] sm:$0xff] %v1155
          %1212 = vst [vmem:[#allocation2 + $0x140] sm:$0xff] %v1156
          %1213 = vst [vmem:[#allocation2 + $0x148] sm:$0xff] %v1157
          %1214 = vst [vmem:[#allocation2 + $0x150] sm:$0xff] %v1158
          %1215 = vst [vmem:[#allocation2 + $0x158] sm:$0xff] %v1159
          %1216 = vst [vmem:[#allocation2 + $0x160] sm:$0xff] %v1160
          %1217 = vst [vmem:[#allocation2 + $0x168] sm:$0xff] %v1161
          %1218 = vst [vmem:[#allocation2 + $0x170] sm:$0xff] %v1162
          %1219 = vst [vmem:[#allocation2 + $0x178] sm:$0xff] %v1163
          %1220 = vst [vmem:[#allocation2 + $0x180] sm:$0x1] %v1164
          %1221 = vst [vmem:[#allocation2 + $0x188] sm:$0x1] %v1165
          %1222 = vst [vmem:[#allocation2 + $0x190] sm:$0x1] %v1166
          %1223 = vst [vmem:[#allocation2 + $0x198] sm:$0x1] %v1167
          %1224 = vst [vmem:[#allocation2 + $0x1a0] sm:$0x1] %v1168
          %1225 = vst [vmem:[#allocation2 + $0x1a8] sm:$0x1] %v1169
          %1226 = vst [vmem:[#allocation2 + $0x1b0] sm:$0x1] %v1170
          %1227 = vst [vmem:[#allocation2 + $0x1b8] sm:$0x1] %v1171
          %1228 = vst [vmem:[%s463] sm:$0xff] 0.0
          %1229 = vst [vmem:[%s463 + $0x8] sm:$0xff] 0.0
          %1230 = vst [vmem:[%s463 + $0x10] sm:$0xff] 0.0
          %1231 = vst [vmem:[%s463 + $0x18] sm:$0xff] 0.0
          %1232 = vst [vmem:[%s463 + $0x20] sm:$0xff] 0.0
          %1233 = vst [vmem:[%s463 + $0x28] sm:$0xff] 0.0
          %1234 = vst [vmem:[%s463 + $0x30] sm:$0xff] 0.0
          %1235 = vst [vmem:[%s463 + $0x38] sm:$0xff] 0.0
          %1236 = vst [vmem:[%s463 + $0x40] sm:$0xff] 0.0
          %1237 = vst [vmem:[%s463 + $0x48] sm:$0xff] 0.0
          %1238 = vst [vmem:[%s463 + $0x50] sm:$0xff] 0.0
          %1239 = vst [vmem:[%s463 + $0x58] sm:$0xff] 0.0
          %1240 = vst [vmem:[%s463 + $0x60] sm:$0xff] 0.0
          %1241 = vst [vmem:[%s463 + $0x68] sm:$0xff] 0.0
          %1242 = vst [vmem:[%s463 + $0x70] sm:$0xff] 0.0
          %1243 = vst [vmem:[%s463 + $0x78] sm:$0xff] 0.0
          %1244 = vst [vmem:[%s463 + $0x80] sm:$0xff] 0.0
          %1245 = vst [vmem:[%s463 + $0x88] sm:$0xff] 0.0
          %1246 = vst [vmem:[%s463 + $0x90] sm:$0xff] 0.0
          %1247 = vst [vmem:[%s463 + $0x98] sm:$0xff] 0.0
          %1248 = vst [vmem:[%s463 + $0xa0] sm:$0xff] 0.0
          %1249 = vst [vmem:[%s463 + $0xa8] sm:$0xff] 0.0
          %1250 = vst [vmem:[%s463 + $0xb0] sm:$0xff] 0.0
          %1251 = vst [vmem:[%s463 + $0xb8] sm:$0xff] 0.0
          %1252 = vst [vmem:[%s463 + $0xc0] sm:$0xff] 0.0
          %1253 = vst [vmem:[%s463 + $0xc8] sm:$0xff] 0.0
          %1254 = vst [vmem:[%s463 + $0xd0] sm:$0xff] 0.0
          %1255 = vst [vmem:[%s463 + $0xd8] sm:$0xff] 0.0
          %1256 = vst [vmem:[%s463 + $0xe0] sm:$0xff] 0.0
          %1257 = vst [vmem:[%s463 + $0xe8] sm:$0xff] 0.0
          %1258 = vst [vmem:[%s463 + $0xf0] sm:$0xff] 0.0
          %1259 = vst [vmem:[%s463 + $0xf8] sm:$0xff] 0.0
          %1260 = vst [vmem:[%s463 + $0x100] sm:$0xff] 0.0
          %1261 = vst [vmem:[%s463 + $0x108] sm:$0xff] 0.0
          %1262 = vst [vmem:[%s463 + $0x110] sm:$0xff] 0.0
          %1263 = vst [vmem:[%s463 + $0x118] sm:$0xff] 0.0
          %1264 = vst [vmem:[%s463 + $0x120] sm:$0xff] 0.0
          %1265 = vst [vmem:[%s463 + $0x128] sm:$0xff] 0.0
          %1266 = vst [vmem:[%s463 + $0x130] sm:$0xff] 0.0
          %1267 = vst [vmem:[%s463 + $0x138] sm:$0xff] 0.0
          %1268 = vst [vmem:[%s463 + $0x140] sm:$0xff] 0.0
          %1269 = vst [vmem:[%s463 + $0x148] sm:$0xff] 0.0
          %1270 = vst [vmem:[%s463 + $0x150] sm:$0xff] 0.0
          %1271 = vst [vmem:[%s463 + $0x158] sm:$0xff] 0.0
          %1272 = vst [vmem:[%s463 + $0x160] sm:$0xff] 0.0
          %1273 = vst [vmem:[%s463 + $0x168] sm:$0xff] 0.0
          %1274 = vst [vmem:[%s463 + $0x170] sm:$0xff] 0.0
          %1275 = vst [vmem:[%s463 + $0x178] sm:$0xff] 0.0
          %1276 = vst [vmem:[%s463 + $0x180] sm:$0x1] 0.0
          %1277 = vst [vmem:[%s463 + $0x188] sm:$0x1] 0.0
          %1278 = vst [vmem:[%s463 + $0x190] sm:$0x1] 0.0
          %1279 = vst [vmem:[%s463 + $0x198] sm:$0x1] 0.0
          %1280 = vst [vmem:[%s463 + $0x1a0] sm:$0x1] 0.0
          %1281 = vst [vmem:[%s463 + $0x1a8] sm:$0x1] 0.0
          %1282 = vst [vmem:[%s463 + $0x1b0] sm:$0x1] 0.0
          %1283 = vst [vmem:[%s463 + $0x1b8] sm:$0x1] 0.0
        $region80: #{tpu_custom_call.1} parent=47 // pred_fallthru
          _
        %v1284 = vld [vmem:[#allocation2] sm:$0xff]
        %v1285 = vld [vmem:[#allocation2 + $0x8] sm:$0xff]
        %v1286 = vld [vmem:[#allocation2 + $0x10] sm:$0xff]
        %v1287 = vld [vmem:[#allocation2 + $0x18] sm:$0xff]
        %v1288 = vld [vmem:[#allocation2 + $0x20] sm:$0xff]
        %v1289 = vld [vmem:[#allocation2 + $0x28] sm:$0xff]
        %v1290 = vld [vmem:[#allocation2 + $0x30] sm:$0xff]
        %v1291 = vld [vmem:[#allocation2 + $0x38] sm:$0xff]
        %v1292 = vld [vmem:[#allocation2 + $0x40] sm:$0xff]
        %v1293 = vld [vmem:[#allocation2 + $0x48] sm:$0xff]
        %v1294 = vld [vmem:[#allocation2 + $0x50] sm:$0xff]
        %v1295 = vld [vmem:[#allocation2 + $0x58] sm:$0xff]
        %v1296 = vld [vmem:[#allocation2 + $0x60] sm:$0xff]
        %v1297 = vld [vmem:[#allocation2 + $0x68] sm:$0xff]
        %v1298 = vld [vmem:[#allocation2 + $0x70] sm:$0xff]
        %v1299 = vld [vmem:[#allocation2 + $0x78] sm:$0xff]
        %v1300 = vld [vmem:[#allocation2 + $0x80] sm:$0xff]
        %v1301 = vld [vmem:[#allocation2 + $0x88] sm:$0xff]
        %v1302 = vld [vmem:[#allocation2 + $0x90] sm:$0xff]
        %v1303 = vld [vmem:[#allocation2 + $0x98] sm:$0xff]
        %v1304 = vld [vmem:[#allocation2 + $0xa0] sm:$0xff]
        %v1305 = vld [vmem:[#allocation2 + $0xa8] sm:$0xff]
        %v1306 = vld [vmem:[#allocation2 + $0xb0] sm:$0xff]
        %v1307 = vld [vmem:[#allocation2 + $0xb8] sm:$0xff]
        %v1308 = vld [vmem:[#allocation2 + $0xc0] sm:$0xff]
        %v1309 = vld [vmem:[#allocation2 + $0xc8] sm:$0xff]
        %v1310 = vld [vmem:[#allocation2 + $0xd0] sm:$0xff]
        %v1311 = vld [vmem:[#allocation2 + $0xd8] sm:$0xff]
        %v1312 = vld [vmem:[#allocation2 + $0xe0] sm:$0xff]
        %v1313 = vld [vmem:[#allocation2 + $0xe8] sm:$0xff]
        %v1314 = vld [vmem:[#allocation2 + $0xf0] sm:$0xff]
        %v1315 = vld [vmem:[#allocation2 + $0xf8] sm:$0xff]
        %v1316 = vld [vmem:[#allocation2 + $0x100] sm:$0xff]
        %v1317 = vld [vmem:[#allocation2 + $0x108] sm:$0xff]
        %v1318 = vld [vmem:[#allocation2 + $0x110] sm:$0xff]
        %v1319 = vld [vmem:[#allocation2 + $0x118] sm:$0xff]
        %v1320 = vld [vmem:[#allocation2 + $0x120] sm:$0xff]
        %v1321 = vld [vmem:[#allocation2 + $0x128] sm:$0xff]
        %v1322 = vld [vmem:[#allocation2 + $0x130] sm:$0xff]
        %v1323 = vld [vmem:[#allocation2 + $0x138] sm:$0xff]
        %v1324 = vld [vmem:[#allocation2 + $0x140] sm:$0xff]
        %v1325 = vld [vmem:[#allocation2 + $0x148] sm:$0xff]
        %v1326 = vld [vmem:[#allocation2 + $0x150] sm:$0xff]
        %v1327 = vld [vmem:[#allocation2 + $0x158] sm:$0xff]
        %v1328 = vld [vmem:[#allocation2 + $0x160] sm:$0xff]
        %v1329 = vld [vmem:[#allocation2 + $0x168] sm:$0xff]
        %v1330 = vld [vmem:[#allocation2 + $0x170] sm:$0xff]
        %v1331 = vld [vmem:[#allocation2 + $0x178] sm:$0xff]
        %v1332 = vld [vmem:[#allocation2 + $0x180] sm:$0x1]
        %v1333 = vld [vmem:[#allocation2 + $0x188] sm:$0x1]
        %v1334 = vld [vmem:[#allocation2 + $0x190] sm:$0x1]
        %v1335 = vld [vmem:[#allocation2 + $0x198] sm:$0x1]
        %v1336 = vld [vmem:[#allocation2 + $0x1a0] sm:$0x1]
        %v1337 = vld [vmem:[#allocation2 + $0x1a8] sm:$0x1]
        %v1338 = vld [vmem:[#allocation2 + $0x1b0] sm:$0x1]
        %v1339 = vld [vmem:[#allocation2 + $0x1b8] sm:$0x1]
        %v1340 = vld [vmem:[%s391] sm:$0xff]
        %v1341 = vld [vmem:[%s391 + $0x8] sm:$0xff]
        %v1342 = vld [vmem:[%s391 + $0x10] sm:$0xff]
        %v1343 = vld [vmem:[%s391 + $0x18] sm:$0xff]
        %v1344 = vld [vmem:[%s391 + $0x20] sm:$0xff]
        %v1345 = vld [vmem:[%s391 + $0x28] sm:$0xff]
        %v1346 = vld [vmem:[%s391 + $0x30] sm:$0xff]
        %v1347 = vld [vmem:[%s391 + $0x38] sm:$0xff]
        %v1348 = vld [vmem:[%s391 + $0x40] sm:$0xff]
        %v1349 = vld [vmem:[%s391 + $0x48] sm:$0xff]
        %v1350 = vld [vmem:[%s391 + $0x50] sm:$0xff]
        %v1351 = vld [vmem:[%s391 + $0x58] sm:$0xff]
        %v1352 = vld [vmem:[%s391 + $0x60] sm:$0xff]
        %v1353 = vld [vmem:[%s391 + $0x68] sm:$0xff]
        %v1354 = vld [vmem:[%s391 + $0x70] sm:$0xff]
        %v1355 = vld [vmem:[%s391 + $0x78] sm:$0xff]
        %v1356 = vld [vmem:[%s391 + $0x80] sm:$0xff]
        %v1357 = vld [vmem:[%s391 + $0x88] sm:$0xff]
        %v1358 = vld [vmem:[%s391 + $0x90] sm:$0xff]
        %v1359 = vld [vmem:[%s391 + $0x98] sm:$0xff]
        %v1360 = vld [vmem:[%s391 + $0xa0] sm:$0xff]
        %v1361 = vld [vmem:[%s391 + $0xa8] sm:$0xff]
        %v1362 = vld [vmem:[%s391 + $0xb0] sm:$0xff]
        %v1363 = vld [vmem:[%s391 + $0xb8] sm:$0xff]
        %v1364 = vld [vmem:[%s391 + $0xc0] sm:$0xff]
        %v1365 = vld [vmem:[%s391 + $0xc8] sm:$0xff]
        %v1366 = vld [vmem:[%s391 + $0xd0] sm:$0xff]
        %v1367 = vld [vmem:[%s391 + $0xd8] sm:$0xff]
        %v1368 = vld [vmem:[%s391 + $0xe0] sm:$0xff]
        %v1369 = vld [vmem:[%s391 + $0xe8] sm:$0xff]
        %v1370 = vld [vmem:[%s391 + $0xf0] sm:$0xff]
        %v1371 = vld [vmem:[%s391 + $0xf8] sm:$0xff]
        %v1372 = vld [vmem:[%s391 + $0x100] sm:$0xff]
        %v1373 = vld [vmem:[%s391 + $0x108] sm:$0xff]
        %v1374 = vld [vmem:[%s391 + $0x110] sm:$0xff]
        %v1375 = vld [vmem:[%s391 + $0x118] sm:$0xff]
        %v1376 = vld [vmem:[%s391 + $0x120] sm:$0xff]
        %v1377 = vld [vmem:[%s391 + $0x128] sm:$0xff]
        %v1378 = vld [vmem:[%s391 + $0x130] sm:$0xff]
        %v1379 = vld [vmem:[%s391 + $0x138] sm:$0xff]
        %v1380 = vld [vmem:[%s391 + $0x140] sm:$0xff]
        %v1381 = vld [vmem:[%s391 + $0x148] sm:$0xff]
        %v1382 = vld [vmem:[%s391 + $0x150] sm:$0xff]
        %v1383 = vld [vmem:[%s391 + $0x158] sm:$0xff]
        %v1384 = vld [vmem:[%s391 + $0x160] sm:$0xff]
        %v1385 = vld [vmem:[%s391 + $0x168] sm:$0xff]
        %v1386 = vld [vmem:[%s391 + $0x170] sm:$0xff]
        %v1387 = vld [vmem:[%s391 + $0x178] sm:$0xff]
        %v1388 = vld [vmem:[%s391 + $0x180] sm:$0xff]
        %v1389 = vld [vmem:[%s391 + $0x188] sm:$0xff]
        %v1390 = vld [vmem:[%s391 + $0x190] sm:$0xff]
        %v1391 = vld [vmem:[%s391 + $0x198] sm:$0xff]
        %v1392 = vld [vmem:[%s391 + $0x1a0] sm:$0xff]
        %v1393 = vld [vmem:[%s391 + $0x1a8] sm:$0xff]
        %v1394 = vld [vmem:[%s391 + $0x1b0] sm:$0xff]
        %v1395 = vld [vmem:[%s391 + $0x1b8] sm:$0xff]
        %v1396 = vld [vmem:[%s391 + $0x1c0] sm:$0xff]
        %v1397 = vld [vmem:[%s391 + $0x1c8] sm:$0xff]
        %v1398 = vld [vmem:[%s391 + $0x1d0] sm:$0xff]
        %v1399 = vld [vmem:[%s391 + $0x1d8] sm:$0xff]
        %v1400 = vld [vmem:[%s391 + $0x1e0] sm:$0xff]
        %v1401 = vld [vmem:[%s391 + $0x1e8] sm:$0xff]
        %v1402 = vld [vmem:[%s391 + $0x1f0] sm:$0xff]
        %v1403 = vld [vmem:[%s391 + $0x1f8] sm:$0xff]
        %v1404 = vld [vmem:[%s391 + $0x200] sm:$0xff]
        %v1405 = vld [vmem:[%s391 + $0x208] sm:$0xff]
        %v1406 = vld [vmem:[%s391 + $0x210] sm:$0xff]
        %v1407 = vld [vmem:[%s391 + $0x218] sm:$0xff]
        %v1408 = vld [vmem:[%s391 + $0x220] sm:$0xff]
        %v1409 = vld [vmem:[%s391 + $0x228] sm:$0xff]
        %v1410 = vld [vmem:[%s391 + $0x230] sm:$0xff]
        %v1411 = vld [vmem:[%s391 + $0x238] sm:$0xff]
        %v1412 = vld [vmem:[%s391 + $0x240] sm:$0xff]
        %v1413 = vld [vmem:[%s391 + $0x248] sm:$0xff]
        %v1414 = vld [vmem:[%s391 + $0x250] sm:$0xff]
        %v1415 = vld [vmem:[%s391 + $0x258] sm:$0xff]
        %v1416 = vld [vmem:[%s391 + $0x260] sm:$0xff]
        %v1417 = vld [vmem:[%s391 + $0x268] sm:$0xff]
        %v1418 = vld [vmem:[%s391 + $0x270] sm:$0xff]
        %v1419 = vld [vmem:[%s391 + $0x278] sm:$0xff]
        %v1420 = vld [vmem:[%s391 + $0x280] sm:$0xff]
        %v1421 = vld [vmem:[%s391 + $0x288] sm:$0xff]
        %v1422 = vld [vmem:[%s391 + $0x290] sm:$0xff]
        %v1423 = vld [vmem:[%s391 + $0x298] sm:$0xff]
        %v1424 = vld [vmem:[%s391 + $0x2a0] sm:$0xff]
        %v1425 = vld [vmem:[%s391 + $0x2a8] sm:$0xff]
        %v1426 = vld [vmem:[%s391 + $0x2b0] sm:$0xff]
        %v1427 = vld [vmem:[%s391 + $0x2b8] sm:$0xff]
        %v1428 = vld [vmem:[%s391 + $0x2c0] sm:$0xff]
        %v1429 = vld [vmem:[%s391 + $0x2c8] sm:$0xff]
        %v1430 = vld [vmem:[%s391 + $0x2d0] sm:$0xff]
        %v1431 = vld [vmem:[%s391 + $0x2d8] sm:$0xff]
        %v1432 = vld [vmem:[%s391 + $0x2e0] sm:$0xff]
        %v1433 = vld [vmem:[%s391 + $0x2e8] sm:$0xff]
        %v1434 = vld [vmem:[%s391 + $0x2f0] sm:$0xff]
        %v1435 = vld [vmem:[%s391 + $0x2f8] sm:$0xff]
        %v1436 = vld [vmem:[%s391 + $0x300] sm:$0xff]
        %v1437 = vld [vmem:[%s391 + $0x308] sm:$0xff]
        %v1438 = vld [vmem:[%s391 + $0x310] sm:$0xff]
        %v1439 = vld [vmem:[%s391 + $0x318] sm:$0xff]
        %v1440 = vld [vmem:[%s391 + $0x320] sm:$0xff]
        %v1441 = vld [vmem:[%s391 + $0x328] sm:$0xff]
        %v1442 = vld [vmem:[%s391 + $0x330] sm:$0xff]
        %v1443 = vld [vmem:[%s391 + $0x338] sm:$0xff]
        %v1444 = vld [vmem:[%s391 + $0x340] sm:$0xff]
        %v1445 = vld [vmem:[%s391 + $0x348] sm:$0xff]
        %v1446 = vld [vmem:[%s391 + $0x350] sm:$0xff]
        %v1447 = vld [vmem:[%s391 + $0x358] sm:$0xff]
        %v1448 = vld [vmem:[%s391 + $0x360] sm:$0xff]
        %v1449 = vld [vmem:[%s391 + $0x368] sm:$0xff]
        %v1450 = vld [vmem:[%s391 + $0x370] sm:$0xff]
        %v1451 = vld [vmem:[%s391 + $0x378] sm:$0xff]
        %v1452 = vld [vmem:[%s391 + $0x380] sm:$0xff]
        %v1453 = vld [vmem:[%s391 + $0x388] sm:$0xff]
        %v1454 = vld [vmem:[%s391 + $0x390] sm:$0xff]
        %v1455 = vld [vmem:[%s391 + $0x398] sm:$0xff]
        %v1456 = vld [vmem:[%s391 + $0x3a0] sm:$0xff]
        %v1457 = vld [vmem:[%s391 + $0x3a8] sm:$0xff]
        %v1458 = vld [vmem:[%s391 + $0x3b0] sm:$0xff]
        %v1459 = vld [vmem:[%s391 + $0x3b8] sm:$0xff]
        %v1460 = vld [vmem:[%s391 + $0x3c0] sm:$0xff]
        %v1461 = vld [vmem:[%s391 + $0x3c8] sm:$0xff]
        %v1462 = vld [vmem:[%s391 + $0x3d0] sm:$0xff]
        %v1463 = vld [vmem:[%s391 + $0x3d8] sm:$0xff]
        %v1464 = vld [vmem:[%s391 + $0x3e0] sm:$0xff]
        %v1465 = vld [vmem:[%s391 + $0x3e8] sm:$0xff]
        %v1466 = vld [vmem:[%s391 + $0x3f0] sm:$0xff]
        %v1467 = vld [vmem:[%s391 + $0x3f8] sm:$0xff]
        %v1468 = vld [vmem:[%s391 + $0x400] sm:$0xff]
        %v1469 = vld [vmem:[%s391 + $0x408] sm:$0xff]
        %v1470 = vld [vmem:[%s391 + $0x410] sm:$0xff]
        %v1471 = vld [vmem:[%s391 + $0x418] sm:$0xff]
        %v1472 = vld [vmem:[%s391 + $0x420] sm:$0xff]
        %v1473 = vld [vmem:[%s391 + $0x428] sm:$0xff]
        %v1474 = vld [vmem:[%s391 + $0x430] sm:$0xff]
        %v1475 = vld [vmem:[%s391 + $0x438] sm:$0xff]
        %v1476 = vld [vmem:[%s391 + $0x440] sm:$0xff]
        %v1477 = vld [vmem:[%s391 + $0x448] sm:$0xff]
        %v1478 = vld [vmem:[%s391 + $0x450] sm:$0xff]
        %v1479 = vld [vmem:[%s391 + $0x458] sm:$0xff]
        %v1480 = vld [vmem:[%s391 + $0x460] sm:$0xff]
        %v1481 = vld [vmem:[%s391 + $0x468] sm:$0xff]
        %v1482 = vld [vmem:[%s391 + $0x470] sm:$0xff]
        %v1483 = vld [vmem:[%s391 + $0x478] sm:$0xff]
        %v1484 = vld [vmem:[%s391 + $0x480] sm:$0xff]
        %v1485 = vld [vmem:[%s391 + $0x488] sm:$0xff]
        %v1486 = vld [vmem:[%s391 + $0x490] sm:$0xff]
        %v1487 = vld [vmem:[%s391 + $0x498] sm:$0xff]
        %v1488 = vld [vmem:[%s391 + $0x4a0] sm:$0xff]
        %v1489 = vld [vmem:[%s391 + $0x4a8] sm:$0xff]
        %v1490 = vld [vmem:[%s391 + $0x4b0] sm:$0xff]
        %v1491 = vld [vmem:[%s391 + $0x4b8] sm:$0xff]
        %v1492 = vld [vmem:[%s391 + $0x4c0] sm:$0xff]
        %v1493 = vld [vmem:[%s391 + $0x4c8] sm:$0xff]
        %v1494 = vld [vmem:[%s391 + $0x4d0] sm:$0xff]
        %v1495 = vld [vmem:[%s391 + $0x4d8] sm:$0xff]
        %v1496 = vld [vmem:[%s391 + $0x4e0] sm:$0xff]
        %v1497 = vld [vmem:[%s391 + $0x4e8] sm:$0xff]
        %v1498 = vld [vmem:[%s391 + $0x4f0] sm:$0xff]
        %v1499 = vld [vmem:[%s391 + $0x4f8] sm:$0xff]
        %v1500 = vld [vmem:[%s391 + $0x500] sm:$0xff]
        %v1501 = vld [vmem:[%s391 + $0x508] sm:$0xff]
        %v1502 = vld [vmem:[%s391 + $0x510] sm:$0xff]
        %v1503 = vld [vmem:[%s391 + $0x518] sm:$0xff]
        %v1504 = vld [vmem:[%s391 + $0x520] sm:$0xff]
        %v1505 = vld [vmem:[%s391 + $0x528] sm:$0xff]
        %v1506 = vld [vmem:[%s391 + $0x530] sm:$0xff]
        %v1507 = vld [vmem:[%s391 + $0x538] sm:$0xff]
        %v1508 = vld [vmem:[%s391 + $0x540] sm:$0xff]
        %v1509 = vld [vmem:[%s391 + $0x548] sm:$0xff]
        %v1510 = vld [vmem:[%s391 + $0x550] sm:$0xff]
        %v1511 = vld [vmem:[%s391 + $0x558] sm:$0xff]
        %v1512 = vld [vmem:[%s391 + $0x560] sm:$0xff]
        %v1513 = vld [vmem:[%s391 + $0x568] sm:$0xff]
        %v1514 = vld [vmem:[%s391 + $0x570] sm:$0xff]
        %v1515 = vld [vmem:[%s391 + $0x578] sm:$0xff]
        %v1516 = vld [vmem:[%s391 + $0x580] sm:$0xff]
        %v1517 = vld [vmem:[%s391 + $0x588] sm:$0xff]
        %v1518 = vld [vmem:[%s391 + $0x590] sm:$0xff]
        %v1519 = vld [vmem:[%s391 + $0x598] sm:$0xff]
        %v1520 = vld [vmem:[%s391 + $0x5a0] sm:$0xff]
        %v1521 = vld [vmem:[%s391 + $0x5a8] sm:$0xff]
        %v1522 = vld [vmem:[%s391 + $0x5b0] sm:$0xff]
        %v1523 = vld [vmem:[%s391 + $0x5b8] sm:$0xff]
        %v1524 = vld [vmem:[%s391 + $0x5c0] sm:$0xff]
        %v1525 = vld [vmem:[%s391 + $0x5c8] sm:$0xff]
        %v1526 = vld [vmem:[%s391 + $0x5d0] sm:$0xff]
        %v1527 = vld [vmem:[%s391 + $0x5d8] sm:$0xff]
        %v1528 = vld [vmem:[%s391 + $0x5e0] sm:$0xff]
        %v1529 = vld [vmem:[%s391 + $0x5e8] sm:$0xff]
        %v1530 = vld [vmem:[%s391 + $0x5f0] sm:$0xff]
        %v1531 = vld [vmem:[%s391 + $0x5f8] sm:$0xff]
        %v1532 = vld [vmem:[%s391 + $0x600] sm:$0xff]
        %v1533 = vld [vmem:[%s391 + $0x608] sm:$0xff]
        %v1534 = vld [vmem:[%s391 + $0x610] sm:$0xff]
        %v1535 = vld [vmem:[%s391 + $0x618] sm:$0xff]
        %v1536 = vld [vmem:[%s391 + $0x620] sm:$0xff]
        %v1537 = vld [vmem:[%s391 + $0x628] sm:$0xff]
        %v1538 = vld [vmem:[%s391 + $0x630] sm:$0xff]
        %v1539 = vld [vmem:[%s391 + $0x638] sm:$0xff]
        %v1540 = vld [vmem:[%s391 + $0x640] sm:$0xff]
        %v1541 = vld [vmem:[%s391 + $0x648] sm:$0xff]
        %v1542 = vld [vmem:[%s391 + $0x650] sm:$0xff]
        %v1543 = vld [vmem:[%s391 + $0x658] sm:$0xff]
        %v1544 = vld [vmem:[%s391 + $0x660] sm:$0xff]
        %v1545 = vld [vmem:[%s391 + $0x668] sm:$0xff]
        %v1546 = vld [vmem:[%s391 + $0x670] sm:$0xff]
        %v1547 = vld [vmem:[%s391 + $0x678] sm:$0xff]
        %v1548 = vld [vmem:[%s391 + $0x680] sm:$0xff]
        %v1549 = vld [vmem:[%s391 + $0x688] sm:$0xff]
        %v1550 = vld [vmem:[%s391 + $0x690] sm:$0xff]
        %v1551 = vld [vmem:[%s391 + $0x698] sm:$0xff]
        %v1552 = vld [vmem:[%s391 + $0x6a0] sm:$0xff]
        %v1553 = vld [vmem:[%s391 + $0x6a8] sm:$0xff]
        %v1554 = vld [vmem:[%s391 + $0x6b0] sm:$0xff]
        %v1555 = vld [vmem:[%s391 + $0x6b8] sm:$0xff]
        %v1556 = vld [vmem:[%s391 + $0x6c0] sm:$0xff]
        %v1557 = vld [vmem:[%s391 + $0x6c8] sm:$0xff]
        %v1558 = vld [vmem:[%s391 + $0x6d0] sm:$0xff]
        %v1559 = vld [vmem:[%s391 + $0x6d8] sm:$0xff]
        %v1560 = vld [vmem:[%s391 + $0x6e0] sm:$0xff]
        %v1561 = vld [vmem:[%s391 + $0x6e8] sm:$0xff]
        %v1562 = vld [vmem:[%s391 + $0x6f0] sm:$0xff]
        %v1563 = vld [vmem:[%s391 + $0x6f8] sm:$0xff]
        %v1564 = vld [vmem:[%s391 + $0x700] sm:$0xff]
        %v1565 = vld [vmem:[%s391 + $0x708] sm:$0xff]
        %v1566 = vld [vmem:[%s391 + $0x710] sm:$0xff]
        %v1567 = vld [vmem:[%s391 + $0x718] sm:$0xff]
        %v1568 = vld [vmem:[%s391 + $0x720] sm:$0xff]
        %v1569 = vld [vmem:[%s391 + $0x728] sm:$0xff]
        %v1570 = vld [vmem:[%s391 + $0x730] sm:$0xff]
        %v1571 = vld [vmem:[%s391 + $0x738] sm:$0xff]
        %v1572 = vld [vmem:[%s391 + $0x740] sm:$0xff]
        %v1573 = vld [vmem:[%s391 + $0x748] sm:$0xff]
        %v1574 = vld [vmem:[%s391 + $0x750] sm:$0xff]
        %v1575 = vld [vmem:[%s391 + $0x758] sm:$0xff]
        %v1576 = vld [vmem:[%s391 + $0x760] sm:$0xff]
        %v1577 = vld [vmem:[%s391 + $0x768] sm:$0xff]
        %v1578 = vld [vmem:[%s391 + $0x770] sm:$0xff]
        %v1579 = vld [vmem:[%s391 + $0x778] sm:$0xff]
        %v1580 = vld [vmem:[%s391 + $0x780] sm:$0xff]
        %v1581 = vld [vmem:[%s391 + $0x788] sm:$0xff]
        %v1582 = vld [vmem:[%s391 + $0x790] sm:$0xff]
        %v1583 = vld [vmem:[%s391 + $0x798] sm:$0xff]
        %v1584 = vld [vmem:[%s391 + $0x7a0] sm:$0xff]
        %v1585 = vld [vmem:[%s391 + $0x7a8] sm:$0xff]
        %v1586 = vld [vmem:[%s391 + $0x7b0] sm:$0xff]
        %v1587 = vld [vmem:[%s391 + $0x7b8] sm:$0xff]
        %v1588 = vld [vmem:[%s391 + $0x7c0] sm:$0xff]
        %v1589 = vld [vmem:[%s391 + $0x7c8] sm:$0xff]
        %v1590 = vld [vmem:[%s391 + $0x7d0] sm:$0xff]
        %v1591 = vld [vmem:[%s391 + $0x7d8] sm:$0xff]
        %v1592 = vld [vmem:[%s391 + $0x7e0] sm:$0xff]
        %v1593 = vld [vmem:[%s391 + $0x7e8] sm:$0xff]
        %v1594 = vld [vmem:[%s391 + $0x7f0] sm:$0xff]
        %v1595 = vld [vmem:[%s391 + $0x7f8] sm:$0xff]
        %v1596 = vld [vmem:[%s391 + $0x800] sm:$0xff]
        %v1597 = vld [vmem:[%s391 + $0x808] sm:$0xff]
        %v1598 = vld [vmem:[%s391 + $0x810] sm:$0xff]
        %v1599 = vld [vmem:[%s391 + $0x818] sm:$0xff]
        %v1600 = vld [vmem:[%s391 + $0x820] sm:$0xff]
        %v1601 = vld [vmem:[%s391 + $0x828] sm:$0xff]
        %v1602 = vld [vmem:[%s391 + $0x830] sm:$0xff]
        %v1603 = vld [vmem:[%s391 + $0x838] sm:$0xff]
        %v1604 = vld [vmem:[%s391 + $0x840] sm:$0xff]
        %v1605 = vld [vmem:[%s391 + $0x848] sm:$0xff]
        %v1606 = vld [vmem:[%s391 + $0x850] sm:$0xff]
        %v1607 = vld [vmem:[%s391 + $0x858] sm:$0xff]
        %v1608 = vld [vmem:[%s391 + $0x860] sm:$0xff]
        %v1609 = vld [vmem:[%s391 + $0x868] sm:$0xff]
        %v1610 = vld [vmem:[%s391 + $0x870] sm:$0xff]
        %v1611 = vld [vmem:[%s391 + $0x878] sm:$0xff]
        %v1612 = vld [vmem:[%s391 + $0x880] sm:$0xff]
        %v1613 = vld [vmem:[%s391 + $0x888] sm:$0xff]
        %v1614 = vld [vmem:[%s391 + $0x890] sm:$0xff]
        %v1615 = vld [vmem:[%s391 + $0x898] sm:$0xff]
        %v1616 = vld [vmem:[%s391 + $0x8a0] sm:$0xff]
        %v1617 = vld [vmem:[%s391 + $0x8a8] sm:$0xff]
        %v1618 = vld [vmem:[%s391 + $0x8b0] sm:$0xff]
        %v1619 = vld [vmem:[%s391 + $0x8b8] sm:$0xff]
        %v1620 = vld [vmem:[%s391 + $0x8c0] sm:$0xff]
        %v1621 = vld [vmem:[%s391 + $0x8c8] sm:$0xff]
        %v1622 = vld [vmem:[%s391 + $0x8d0] sm:$0xff]
        %v1623 = vld [vmem:[%s391 + $0x8d8] sm:$0xff]
        %v1624 = vld [vmem:[%s391 + $0x8e0] sm:$0xff]
        %v1625 = vld [vmem:[%s391 + $0x8e8] sm:$0xff]
        %v1626 = vld [vmem:[%s391 + $0x8f0] sm:$0xff]
        %v1627 = vld [vmem:[%s391 + $0x8f8] sm:$0xff]
        %v1628 = vld [vmem:[%s391 + $0x900] sm:$0xff]
        %v1629 = vld [vmem:[%s391 + $0x908] sm:$0xff]
        %v1630 = vld [vmem:[%s391 + $0x910] sm:$0xff]
        %v1631 = vld [vmem:[%s391 + $0x918] sm:$0xff]
        %v1632 = vld [vmem:[%s391 + $0x920] sm:$0xff]
        %v1633 = vld [vmem:[%s391 + $0x928] sm:$0xff]
        %v1634 = vld [vmem:[%s391 + $0x930] sm:$0xff]
        %v1635 = vld [vmem:[%s391 + $0x938] sm:$0xff]
        %v1636 = vld [vmem:[%s391 + $0x940] sm:$0xff]
        %v1637 = vld [vmem:[%s391 + $0x948] sm:$0xff]
        %v1638 = vld [vmem:[%s391 + $0x950] sm:$0xff]
        %v1639 = vld [vmem:[%s391 + $0x958] sm:$0xff]
        %v1640 = vld [vmem:[%s391 + $0x960] sm:$0xff]
        %v1641 = vld [vmem:[%s391 + $0x968] sm:$0xff]
        %v1642 = vld [vmem:[%s391 + $0x970] sm:$0xff]
        %v1643 = vld [vmem:[%s391 + $0x978] sm:$0xff]
        %v1644 = vld [vmem:[%s391 + $0x980] sm:$0xff]
        %v1645 = vld [vmem:[%s391 + $0x988] sm:$0xff]
        %v1646 = vld [vmem:[%s391 + $0x990] sm:$0xff]
        %v1647 = vld [vmem:[%s391 + $0x998] sm:$0xff]
        %v1648 = vld [vmem:[%s391 + $0x9a0] sm:$0xff]
        %v1649 = vld [vmem:[%s391 + $0x9a8] sm:$0xff]
        %v1650 = vld [vmem:[%s391 + $0x9b0] sm:$0xff]
        %v1651 = vld [vmem:[%s391 + $0x9b8] sm:$0xff]
        %v1652 = vld [vmem:[%s391 + $0x9c0] sm:$0xff]
        %v1653 = vld [vmem:[%s391 + $0x9c8] sm:$0xff]
        %v1654 = vld [vmem:[%s391 + $0x9d0] sm:$0xff]
        %v1655 = vld [vmem:[%s391 + $0x9d8] sm:$0xff]
        %v1656 = vld [vmem:[%s391 + $0x9e0] sm:$0xff]
        %v1657 = vld [vmem:[%s391 + $0x9e8] sm:$0xff]
        %v1658 = vld [vmem:[%s391 + $0x9f0] sm:$0xff]
        %v1659 = vld [vmem:[%s391 + $0x9f8] sm:$0xff]
        %v1660 = vld [vmem:[%s391 + $0xa00] sm:$0xff]
        %v1661 = vld [vmem:[%s391 + $0xa08] sm:$0xff]
        %v1662 = vld [vmem:[%s391 + $0xa10] sm:$0xff]
        %v1663 = vld [vmem:[%s391 + $0xa18] sm:$0xff]
        %v1664 = vld [vmem:[%s391 + $0xa20] sm:$0xff]
        %v1665 = vld [vmem:[%s391 + $0xa28] sm:$0xff]
        %v1666 = vld [vmem:[%s391 + $0xa30] sm:$0xff]
        %v1667 = vld [vmem:[%s391 + $0xa38] sm:$0xff]
        %v1668 = vld [vmem:[%s391 + $0xa40] sm:$0xff]
        %v1669 = vld [vmem:[%s391 + $0xa48] sm:$0xff]
        %v1670 = vld [vmem:[%s391 + $0xa50] sm:$0xff]
        %v1671 = vld [vmem:[%s391 + $0xa58] sm:$0xff]
        %v1672 = vld [vmem:[%s391 + $0xa60] sm:$0xff]
        %v1673 = vld [vmem:[%s391 + $0xa68] sm:$0xff]
        %v1674 = vld [vmem:[%s391 + $0xa70] sm:$0xff]
        %v1675 = vld [vmem:[%s391 + $0xa78] sm:$0xff]
        %v1676 = vld [vmem:[%s391 + $0xa80] sm:$0xff]
        %v1677 = vld [vmem:[%s391 + $0xa88] sm:$0xff]
        %v1678 = vld [vmem:[%s391 + $0xa90] sm:$0xff]
        %v1679 = vld [vmem:[%s391 + $0xa98] sm:$0xff]
        %v1680 = vld [vmem:[%s391 + $0xaa0] sm:$0xff]
        %v1681 = vld [vmem:[%s391 + $0xaa8] sm:$0xff]
        %v1682 = vld [vmem:[%s391 + $0xab0] sm:$0xff]
        %v1683 = vld [vmem:[%s391 + $0xab8] sm:$0xff]
        %v1684 = vld [vmem:[%s391 + $0xac0] sm:$0xff]
        %v1685 = vld [vmem:[%s391 + $0xac8] sm:$0xff]
        %v1686 = vld [vmem:[%s391 + $0xad0] sm:$0xff]
        %v1687 = vld [vmem:[%s391 + $0xad8] sm:$0xff]
        %v1688 = vld [vmem:[%s391 + $0xae0] sm:$0xff]
        %v1689 = vld [vmem:[%s391 + $0xae8] sm:$0xff]
        %v1690 = vld [vmem:[%s391 + $0xaf0] sm:$0xff]
        %v1691 = vld [vmem:[%s391 + $0xaf8] sm:$0xff]
        %v1692 = vld [vmem:[%s391 + $0xb00] sm:$0xff]
        %v1693 = vld [vmem:[%s391 + $0xb08] sm:$0xff]
        %v1694 = vld [vmem:[%s391 + $0xb10] sm:$0xff]
        %v1695 = vld [vmem:[%s391 + $0xb18] sm:$0xff]
        %v1696 = vld [vmem:[%s391 + $0xb20] sm:$0xff]
        %v1697 = vld [vmem:[%s391 + $0xb28] sm:$0xff]
        %v1698 = vld [vmem:[%s391 + $0xb30] sm:$0xff]
        %v1699 = vld [vmem:[%s391 + $0xb38] sm:$0xff]
        %v1700 = vld [vmem:[%s391 + $0xb40] sm:$0xff]
        %v1701 = vld [vmem:[%s391 + $0xb48] sm:$0xff]
        %v1702 = vld [vmem:[%s391 + $0xb50] sm:$0xff]
        %v1703 = vld [vmem:[%s391 + $0xb58] sm:$0xff]
        %v1704 = vld [vmem:[%s391 + $0xb60] sm:$0xff]
        %v1705 = vld [vmem:[%s391 + $0xb68] sm:$0xff]
        %v1706 = vld [vmem:[%s391 + $0xb70] sm:$0xff]
        %v1707 = vld [vmem:[%s391 + $0xb78] sm:$0xff]
        %v1708 = vld [vmem:[%s391 + $0xb80] sm:$0xff]
        %v1709 = vld [vmem:[%s391 + $0xb88] sm:$0xff]
        %v1710 = vld [vmem:[%s391 + $0xb90] sm:$0xff]
        %v1711 = vld [vmem:[%s391 + $0xb98] sm:$0xff]
        %v1712 = vld [vmem:[%s391 + $0xba0] sm:$0xff]
        %v1713 = vld [vmem:[%s391 + $0xba8] sm:$0xff]
        %v1714 = vld [vmem:[%s391 + $0xbb0] sm:$0xff]
        %v1715 = vld [vmem:[%s391 + $0xbb8] sm:$0xff]
        %v1716 = vld [vmem:[%s391 + $0xbc0] sm:$0xff]
        %v1717 = vld [vmem:[%s391 + $0xbc8] sm:$0xff]
        %v1718 = vld [vmem:[%s391 + $0xbd0] sm:$0xff]
        %v1719 = vld [vmem:[%s391 + $0xbd8] sm:$0xff]
        %v1720 = vld [vmem:[%s391 + $0xbe0] sm:$0xff]
        %v1721 = vld [vmem:[%s391 + $0xbe8] sm:$0xff]
        %v1722 = vld [vmem:[%s391 + $0xbf0] sm:$0xff]
        %v1723 = vld [vmem:[%s391 + $0xbf8] sm:$0xff]
        %v1724 = vld [vmem:[%s391 + $0xc00] sm:$0xff]
        %v1725 = vld [vmem:[%s391 + $0xc08] sm:$0xff]
        %v1726 = vld [vmem:[%s391 + $0xc10] sm:$0xff]
        %v1727 = vld [vmem:[%s391 + $0xc18] sm:$0xff]
        %v1728 = vld [vmem:[%s391 + $0xc20] sm:$0xff]
        %v1729 = vld [vmem:[%s391 + $0xc28] sm:$0xff]
        %v1730 = vld [vmem:[%s391 + $0xc30] sm:$0xff]
        %v1731 = vld [vmem:[%s391 + $0xc38] sm:$0xff]
        %v1732 = vld [vmem:[%s391 + $0xc40] sm:$0xff]
        %v1733 = vld [vmem:[%s391 + $0xc48] sm:$0xff]
        %v1734 = vld [vmem:[%s391 + $0xc50] sm:$0xff]
        %v1735 = vld [vmem:[%s391 + $0xc58] sm:$0xff]
        %v1736 = vld [vmem:[%s391 + $0xc60] sm:$0xff]
        %v1737 = vld [vmem:[%s391 + $0xc68] sm:$0xff]
        %v1738 = vld [vmem:[%s391 + $0xc70] sm:$0xff]
        %v1739 = vld [vmem:[%s391 + $0xc78] sm:$0xff]
        %v1740 = vld [vmem:[%s391 + $0xc80] sm:$0xff]
        %v1741 = vld [vmem:[%s391 + $0xc88] sm:$0xff]
        %v1742 = vld [vmem:[%s391 + $0xc90] sm:$0xff]
        %v1743 = vld [vmem:[%s391 + $0xc98] sm:$0xff]
        %v1744 = vld [vmem:[%s391 + $0xca0] sm:$0xff]
        %v1745 = vld [vmem:[%s391 + $0xca8] sm:$0xff]
        %v1746 = vld [vmem:[%s391 + $0xcb0] sm:$0xff]
        %v1747 = vld [vmem:[%s391 + $0xcb8] sm:$0xff]
        %v1748 = vld [vmem:[%s391 + $0xcc0] sm:$0xff]
        %v1749 = vld [vmem:[%s391 + $0xcc8] sm:$0xff]
        %v1750 = vld [vmem:[%s391 + $0xcd0] sm:$0xff]
        %v1751 = vld [vmem:[%s391 + $0xcd8] sm:$0xff]
        %v1752 = vld [vmem:[%s391 + $0xce0] sm:$0xff]
        %v1753 = vld [vmem:[%s391 + $0xce8] sm:$0xff]
        %v1754 = vld [vmem:[%s391 + $0xcf0] sm:$0xff]
        %v1755 = vld [vmem:[%s391 + $0xcf8] sm:$0xff]
        %v1756 = vld [vmem:[%s391 + $0xd00] sm:$0xff]
        %v1757 = vld [vmem:[%s391 + $0xd08] sm:$0xff]
        %v1758 = vld [vmem:[%s391 + $0xd10] sm:$0xff]
        %v1759 = vld [vmem:[%s391 + $0xd18] sm:$0xff]
        %v1760 = vld [vmem:[%s391 + $0xd20] sm:$0xff]
        %v1761 = vld [vmem:[%s391 + $0xd28] sm:$0xff]
        %v1762 = vld [vmem:[%s391 + $0xd30] sm:$0xff]
        %v1763 = vld [vmem:[%s391 + $0xd38] sm:$0xff]
        %v1764 = vld [vmem:[%s391 + $0xd40] sm:$0xff]
        %v1765 = vld [vmem:[%s391 + $0xd48] sm:$0xff]
        %v1766 = vld [vmem:[%s391 + $0xd50] sm:$0xff]
        %v1767 = vld [vmem:[%s391 + $0xd58] sm:$0xff]
        %v1768 = vld [vmem:[%s391 + $0xd60] sm:$0xff]
        %v1769 = vld [vmem:[%s391 + $0xd68] sm:$0xff]
        %v1770 = vld [vmem:[%s391 + $0xd70] sm:$0xff]
        %v1771 = vld [vmem:[%s391 + $0xd78] sm:$0xff]
        %v1772 = vld [vmem:[%s391 + $0xd80] sm:$0xff]
        %v1773 = vld [vmem:[%s391 + $0xd88] sm:$0xff]
        %v1774 = vld [vmem:[%s391 + $0xd90] sm:$0xff]
        %v1775 = vld [vmem:[%s391 + $0xd98] sm:$0xff]
        %v1776 = vld [vmem:[%s391 + $0xda0] sm:$0xff]
        %v1777 = vld [vmem:[%s391 + $0xda8] sm:$0xff]
        %v1778 = vld [vmem:[%s391 + $0xdb0] sm:$0xff]
        %v1779 = vld [vmem:[%s391 + $0xdb8] sm:$0xff]
        %v1780 = vld [vmem:[%s391 + $0xdc0] sm:$0xff]
        %v1781 = vld [vmem:[%s391 + $0xdc8] sm:$0xff]
        %v1782 = vld [vmem:[%s391 + $0xdd0] sm:$0xff]
        %v1783 = vld [vmem:[%s391 + $0xdd8] sm:$0xff]
        %v1784 = vld [vmem:[%s391 + $0xde0] sm:$0xff]
        %v1785 = vld [vmem:[%s391 + $0xde8] sm:$0xff]
        %v1786 = vld [vmem:[%s391 + $0xdf0] sm:$0xff]
        %v1787 = vld [vmem:[%s391 + $0xdf8] sm:$0xff]
        %v1788 = vld [vmem:[%s391 + $0xe00] sm:$0xff]
        %v1789 = vld [vmem:[%s391 + $0xe08] sm:$0xff]
        %v1790 = vld [vmem:[%s391 + $0xe10] sm:$0xff]
        %v1791 = vld [vmem:[%s391 + $0xe18] sm:$0xff]
        %v1792 = vld [vmem:[%s391 + $0xe20] sm:$0xff]
        %v1793 = vld [vmem:[%s391 + $0xe28] sm:$0xff]
        %v1794 = vld [vmem:[%s391 + $0xe30] sm:$0xff]
        %v1795 = vld [vmem:[%s391 + $0xe38] sm:$0xff]
        %v1796 = vld [vmem:[%s391 + $0xe40] sm:$0xff]
        %v1797 = vld [vmem:[%s391 + $0xe48] sm:$0xff]
        %v1798 = vld [vmem:[%s391 + $0xe50] sm:$0xff]
        %v1799 = vld [vmem:[%s391 + $0xe58] sm:$0xff]
        %v1800 = vld [vmem:[%s391 + $0xe60] sm:$0xff]
        %v1801 = vld [vmem:[%s391 + $0xe68] sm:$0xff]
        %v1802 = vld [vmem:[%s391 + $0xe70] sm:$0xff]
        %v1803 = vld [vmem:[%s391 + $0xe78] sm:$0xff]
        %v1804 = vld [vmem:[%s391 + $0xe80] sm:$0xff]
        %v1805 = vld [vmem:[%s391 + $0xe88] sm:$0xff]
        %v1806 = vld [vmem:[%s391 + $0xe90] sm:$0xff]
        %v1807 = vld [vmem:[%s391 + $0xe98] sm:$0xff]
        %v1808 = vld [vmem:[%s391 + $0xea0] sm:$0xff]
        %v1809 = vld [vmem:[%s391 + $0xea8] sm:$0xff]
        %v1810 = vld [vmem:[%s391 + $0xeb0] sm:$0xff]
        %v1811 = vld [vmem:[%s391 + $0xeb8] sm:$0xff]
        %v1812 = vld [vmem:[%s391 + $0xec0] sm:$0xff]
        %v1813 = vld [vmem:[%s391 + $0xec8] sm:$0xff]
        %v1814 = vld [vmem:[%s391 + $0xed0] sm:$0xff]
        %v1815 = vld [vmem:[%s391 + $0xed8] sm:$0xff]
        %v1816 = vld [vmem:[%s391 + $0xee0] sm:$0xff]
        %v1817 = vld [vmem:[%s391 + $0xee8] sm:$0xff]
        %v1818 = vld [vmem:[%s391 + $0xef0] sm:$0xff]
        %v1819 = vld [vmem:[%s391 + $0xef8] sm:$0xff]
        %v1820 = vld [vmem:[%s391 + $0xf00] sm:$0xff]
        %v1821 = vld [vmem:[%s391 + $0xf08] sm:$0xff]
        %v1822 = vld [vmem:[%s391 + $0xf10] sm:$0xff]
        %v1823 = vld [vmem:[%s391 + $0xf18] sm:$0xff]
        %v1824 = vld [vmem:[%s391 + $0xf20] sm:$0xff]
        %v1825 = vld [vmem:[%s391 + $0xf28] sm:$0xff]
        %v1826 = vld [vmem:[%s391 + $0xf30] sm:$0xff]
        %v1827 = vld [vmem:[%s391 + $0xf38] sm:$0xff]
        %v1828 = vld [vmem:[%s391 + $0xf40] sm:$0xff]
        %v1829 = vld [vmem:[%s391 + $0xf48] sm:$0xff]
        %v1830 = vld [vmem:[%s391 + $0xf50] sm:$0xff]
        %v1831 = vld [vmem:[%s391 + $0xf58] sm:$0xff]
        %v1832 = vld [vmem:[%s391 + $0xf60] sm:$0xff]
        %v1833 = vld [vmem:[%s391 + $0xf68] sm:$0xff]
        %v1834 = vld [vmem:[%s391 + $0xf70] sm:$0xff]
        %v1835 = vld [vmem:[%s391 + $0xf78] sm:$0xff]
        %v1836 = vld [vmem:[%s391 + $0xf80] sm:$0xff]
        %v1837 = vld [vmem:[%s391 + $0xf88] sm:$0xff]
        %v1838 = vld [vmem:[%s391 + $0xf90] sm:$0xff]
        %v1839 = vld [vmem:[%s391 + $0xf98] sm:$0xff]
        %v1840 = vld [vmem:[%s391 + $0xfa0] sm:$0xff]
        %v1841 = vld [vmem:[%s391 + $0xfa8] sm:$0xff]
        %v1842 = vld [vmem:[%s391 + $0xfb0] sm:$0xff]
        %v1843 = vld [vmem:[%s391 + $0xfb8] sm:$0xff]
        %v1844 = vld [vmem:[%s391 + $0xfc0] sm:$0xff]
        %v1845 = vld [vmem:[%s391 + $0xfc8] sm:$0xff]
        %v1846 = vld [vmem:[%s391 + $0xfd0] sm:$0xff]
        %v1847 = vld [vmem:[%s391 + $0xfd8] sm:$0xff]
        %v1848 = vld [vmem:[%s391 + $0xfe0] sm:$0xff]
        %v1849 = vld [vmem:[%s391 + $0xfe8] sm:$0xff]
        %v1850 = vld [vmem:[%s391 + $0xff0] sm:$0xff]
        %v1851 = vld [vmem:[%s391 + $0xff8] sm:$0xff]
        %v1852 = vld [vmem:[%s391 + $0x1000] sm:$0xff]
        %v1853 = vld [vmem:[%s391 + $0x1008] sm:$0xff]
        %v1854 = vld [vmem:[%s391 + $0x1010] sm:$0xff]
        %v1855 = vld [vmem:[%s391 + $0x1018] sm:$0xff]
        %v1856 = vld [vmem:[%s391 + $0x1020] sm:$0xff]
        %v1857 = vld [vmem:[%s391 + $0x1028] sm:$0xff]
        %v1858 = vld [vmem:[%s391 + $0x1030] sm:$0xff]
        %v1859 = vld [vmem:[%s391 + $0x1038] sm:$0xff]
        %v1860 = vld [vmem:[%s391 + $0x1040] sm:$0xff]
        %v1861 = vld [vmem:[%s391 + $0x1048] sm:$0xff]
        %v1862 = vld [vmem:[%s391 + $0x1050] sm:$0xff]
        %v1863 = vld [vmem:[%s391 + $0x1058] sm:$0xff]
        %v1864 = vld [vmem:[%s391 + $0x1060] sm:$0xff]
        %v1865 = vld [vmem:[%s391 + $0x1068] sm:$0xff]
        %v1866 = vld [vmem:[%s391 + $0x1070] sm:$0xff]
        %v1867 = vld [vmem:[%s391 + $0x1078] sm:$0xff]
        %v1868 = vld [vmem:[%s391 + $0x1080] sm:$0xff]
        %v1869 = vld [vmem:[%s391 + $0x1088] sm:$0xff]
        %v1870 = vld [vmem:[%s391 + $0x1090] sm:$0xff]
        %v1871 = vld [vmem:[%s391 + $0x1098] sm:$0xff]
        %v1872 = vld [vmem:[%s391 + $0x10a0] sm:$0xff]
        %v1873 = vld [vmem:[%s391 + $0x10a8] sm:$0xff]
        %v1874 = vld [vmem:[%s391 + $0x10b0] sm:$0xff]
        %v1875 = vld [vmem:[%s391 + $0x10b8] sm:$0xff]
        %v1876 = vld [vmem:[%s391 + $0x10c0] sm:$0xff]
        %v1877 = vld [vmem:[%s391 + $0x10c8] sm:$0xff]
        %v1878 = vld [vmem:[%s391 + $0x10d0] sm:$0xff]
        %v1879 = vld [vmem:[%s391 + $0x10d8] sm:$0xff]
        %v1880 = vld [vmem:[%s391 + $0x10e0] sm:$0xff]
        %v1881 = vld [vmem:[%s391 + $0x10e8] sm:$0xff]
        %v1882 = vld [vmem:[%s391 + $0x10f0] sm:$0xff]
        %v1883 = vld [vmem:[%s391 + $0x10f8] sm:$0xff]
        %v1884 = vld [vmem:[%s391 + $0x1100] sm:$0xff]
        %v1885 = vld [vmem:[%s391 + $0x1108] sm:$0xff]
        %v1886 = vld [vmem:[%s391 + $0x1110] sm:$0xff]
        %v1887 = vld [vmem:[%s391 + $0x1118] sm:$0xff]
        %v1888 = vld [vmem:[%s391 + $0x1120] sm:$0xff]
        %v1889 = vld [vmem:[%s391 + $0x1128] sm:$0xff]
        %v1890 = vld [vmem:[%s391 + $0x1130] sm:$0xff]
        %v1891 = vld [vmem:[%s391 + $0x1138] sm:$0xff]
        %v1892 = vld [vmem:[%s391 + $0x1140] sm:$0xff]
        %v1893 = vld [vmem:[%s391 + $0x1148] sm:$0xff]
        %v1894 = vld [vmem:[%s391 + $0x1150] sm:$0xff]
        %v1895 = vld [vmem:[%s391 + $0x1158] sm:$0xff]
        %v1896 = vld [vmem:[%s391 + $0x1160] sm:$0xff]
        %v1897 = vld [vmem:[%s391 + $0x1168] sm:$0xff]
        %v1898 = vld [vmem:[%s391 + $0x1170] sm:$0xff]
        %v1899 = vld [vmem:[%s391 + $0x1178] sm:$0xff]
        %v1900 = vld [vmem:[%s391 + $0x1180] sm:$0xff]
        %v1901 = vld [vmem:[%s391 + $0x1188] sm:$0xff]
        %v1902 = vld [vmem:[%s391 + $0x1190] sm:$0xff]
        %v1903 = vld [vmem:[%s391 + $0x1198] sm:$0xff]
        %v1904 = vld [vmem:[%s391 + $0x11a0] sm:$0xff]
        %v1905 = vld [vmem:[%s391 + $0x11a8] sm:$0xff]
        %v1906 = vld [vmem:[%s391 + $0x11b0] sm:$0xff]
        %v1907 = vld [vmem:[%s391 + $0x11b8] sm:$0xff]
        %v1908 = vld [vmem:[%s391 + $0x11c0] sm:$0xff]
        %v1909 = vld [vmem:[%s391 + $0x11c8] sm:$0xff]
        %v1910 = vld [vmem:[%s391 + $0x11d0] sm:$0xff]
        %v1911 = vld [vmem:[%s391 + $0x11d8] sm:$0xff]
        %v1912 = vld [vmem:[%s391 + $0x11e0] sm:$0xff]
        %v1913 = vld [vmem:[%s391 + $0x11e8] sm:$0xff]
        %v1914 = vld [vmem:[%s391 + $0x11f0] sm:$0xff]
        %v1915 = vld [vmem:[%s391 + $0x11f8] sm:$0xff]
        %v1916 = vld [vmem:[%s391 + $0x1200] sm:$0xff]
        %v1917 = vld [vmem:[%s391 + $0x1208] sm:$0xff]
        %v1918 = vld [vmem:[%s391 + $0x1210] sm:$0xff]
        %v1919 = vld [vmem:[%s391 + $0x1218] sm:$0xff]
        %v1920 = vld [vmem:[%s391 + $0x1220] sm:$0xff]
        %v1921 = vld [vmem:[%s391 + $0x1228] sm:$0xff]
        %v1922 = vld [vmem:[%s391 + $0x1230] sm:$0xff]
        %v1923 = vld [vmem:[%s391 + $0x1238] sm:$0xff]
        %v1924 = vld [vmem:[%s391 + $0x1240] sm:$0xff]
        %v1925 = vld [vmem:[%s391 + $0x1248] sm:$0xff]
        %v1926 = vld [vmem:[%s391 + $0x1250] sm:$0xff]
        %v1927 = vld [vmem:[%s391 + $0x1258] sm:$0xff]
        %v1928 = vld [vmem:[%s391 + $0x1260] sm:$0xff]
        %v1929 = vld [vmem:[%s391 + $0x1268] sm:$0xff]
        %v1930 = vld [vmem:[%s391 + $0x1270] sm:$0xff]
        %v1931 = vld [vmem:[%s391 + $0x1278] sm:$0xff]
        %v1932 = vld [vmem:[%s391 + $0x1280] sm:$0xff]
        %v1933 = vld [vmem:[%s391 + $0x1288] sm:$0xff]
        %v1934 = vld [vmem:[%s391 + $0x1290] sm:$0xff]
        %v1935 = vld [vmem:[%s391 + $0x1298] sm:$0xff]
        %v1936 = vld [vmem:[%s391 + $0x12a0] sm:$0xff]
        %v1937 = vld [vmem:[%s391 + $0x12a8] sm:$0xff]
        %v1938 = vld [vmem:[%s391 + $0x12b0] sm:$0xff]
        %v1939 = vld [vmem:[%s391 + $0x12b8] sm:$0xff]
        %v1940 = vld [vmem:[%s391 + $0x12c0] sm:$0xff]
        %v1941 = vld [vmem:[%s391 + $0x12c8] sm:$0xff]
        %v1942 = vld [vmem:[%s391 + $0x12d0] sm:$0xff]
        %v1943 = vld [vmem:[%s391 + $0x12d8] sm:$0xff]
        %v1944 = vld [vmem:[%s391 + $0x12e0] sm:$0xff]
        %v1945 = vld [vmem:[%s391 + $0x12e8] sm:$0xff]
        %v1946 = vld [vmem:[%s391 + $0x12f0] sm:$0xff]
        %v1947 = vld [vmem:[%s391 + $0x12f8] sm:$0xff]
        %v1948 = vld [vmem:[%s391 + $0x1300] sm:$0xff]
        %v1949 = vld [vmem:[%s391 + $0x1308] sm:$0xff]
        %v1950 = vld [vmem:[%s391 + $0x1310] sm:$0xff]
        %v1951 = vld [vmem:[%s391 + $0x1318] sm:$0xff]
        %v1952 = vld [vmem:[%s391 + $0x1320] sm:$0xff]
        %v1953 = vld [vmem:[%s391 + $0x1328] sm:$0xff]
        %v1954 = vld [vmem:[%s391 + $0x1330] sm:$0xff]
        %v1955 = vld [vmem:[%s391 + $0x1338] sm:$0xff]
        %v1956 = vld [vmem:[%s391 + $0x1340] sm:$0xff]
        %v1957 = vld [vmem:[%s391 + $0x1348] sm:$0xff]
        %v1958 = vld [vmem:[%s391 + $0x1350] sm:$0xff]
        %v1959 = vld [vmem:[%s391 + $0x1358] sm:$0xff]
        %v1960 = vld [vmem:[%s391 + $0x1360] sm:$0xff]
        %v1961 = vld [vmem:[%s391 + $0x1368] sm:$0xff]
        %v1962 = vld [vmem:[%s391 + $0x1370] sm:$0xff]
        %v1963 = vld [vmem:[%s391 + $0x1378] sm:$0xff]
        %v1964 = vld [vmem:[%s391 + $0x1380] sm:$0xff]
        %v1965 = vld [vmem:[%s391 + $0x1388] sm:$0xff]
        %v1966 = vld [vmem:[%s391 + $0x1390] sm:$0xff]
        %v1967 = vld [vmem:[%s391 + $0x1398] sm:$0xff]
        %v1968 = vld [vmem:[%s391 + $0x13a0] sm:$0xff]
        %v1969 = vld [vmem:[%s391 + $0x13a8] sm:$0xff]
        %v1970 = vld [vmem:[%s391 + $0x13b0] sm:$0xff]
        %v1971 = vld [vmem:[%s391 + $0x13b8] sm:$0xff]
        %v1972 = vld [vmem:[%s391 + $0x13c0] sm:$0xff]
        %v1973 = vld [vmem:[%s391 + $0x13c8] sm:$0xff]
        %v1974 = vld [vmem:[%s391 + $0x13d0] sm:$0xff]
        %v1975 = vld [vmem:[%s391 + $0x13d8] sm:$0xff]
        %v1976 = vld [vmem:[%s391 + $0x13e0] sm:$0xff]
        %v1977 = vld [vmem:[%s391 + $0x13e8] sm:$0xff]
        %v1978 = vld [vmem:[%s391 + $0x13f0] sm:$0xff]
        %v1979 = vld [vmem:[%s391 + $0x13f8] sm:$0xff]
        %v1980 = vld [vmem:[%s391 + $0x1400] sm:$0xff]
        %v1981 = vld [vmem:[%s391 + $0x1408] sm:$0xff]
        %v1982 = vld [vmem:[%s391 + $0x1410] sm:$0xff]
        %v1983 = vld [vmem:[%s391 + $0x1418] sm:$0xff]
        %v1984 = vld [vmem:[%s391 + $0x1420] sm:$0xff]
        %v1985 = vld [vmem:[%s391 + $0x1428] sm:$0xff]
        %v1986 = vld [vmem:[%s391 + $0x1430] sm:$0xff]
        %v1987 = vld [vmem:[%s391 + $0x1438] sm:$0xff]
        %v1988 = vld [vmem:[%s391 + $0x1440] sm:$0xff]
        %v1989 = vld [vmem:[%s391 + $0x1448] sm:$0xff]
        %v1990 = vld [vmem:[%s391 + $0x1450] sm:$0xff]
        %v1991 = vld [vmem:[%s391 + $0x1458] sm:$0xff]
        %v1992 = vld [vmem:[%s391 + $0x1460] sm:$0xff]
        %v1993 = vld [vmem:[%s391 + $0x1468] sm:$0xff]
        %v1994 = vld [vmem:[%s391 + $0x1470] sm:$0xff]
        %v1995 = vld [vmem:[%s391 + $0x1478] sm:$0xff]
        %v1996 = vld [vmem:[%s391 + $0x1480] sm:$0xff]
        %v1997 = vld [vmem:[%s391 + $0x1488] sm:$0xff]
        %v1998 = vld [vmem:[%s391 + $0x1490] sm:$0xff]
        %v1999 = vld [vmem:[%s391 + $0x1498] sm:$0xff]
        %v2000 = vld [vmem:[%s391 + $0x14a0] sm:$0xff]
        %v2001 = vld [vmem:[%s391 + $0x14a8] sm:$0xff]
        %v2002 = vld [vmem:[%s391 + $0x14b0] sm:$0xff]
        %v2003 = vld [vmem:[%s391 + $0x14b8] sm:$0xff]
        %v2004 = vld [vmem:[%s391 + $0x14c0] sm:$0xff]
        %v2005 = vld [vmem:[%s391 + $0x14c8] sm:$0xff]
        %v2006 = vld [vmem:[%s391 + $0x14d0] sm:$0xff]
        %v2007 = vld [vmem:[%s391 + $0x14d8] sm:$0xff]
        %v2008 = vld [vmem:[%s391 + $0x14e0] sm:$0xff]
        %v2009 = vld [vmem:[%s391 + $0x14e8] sm:$0xff]
        %v2010 = vld [vmem:[%s391 + $0x14f0] sm:$0xff]
        %v2011 = vld [vmem:[%s391 + $0x14f8] sm:$0xff]
        %v2012 = vld [vmem:[%s391 + $0x1500] sm:$0xff]
        %v2013 = vld [vmem:[%s391 + $0x1508] sm:$0xff]
        %v2014 = vld [vmem:[%s391 + $0x1510] sm:$0xff]
        %v2015 = vld [vmem:[%s391 + $0x1518] sm:$0xff]
        %v2016 = vld [vmem:[%s391 + $0x1520] sm:$0xff]
        %v2017 = vld [vmem:[%s391 + $0x1528] sm:$0xff]
        %v2018 = vld [vmem:[%s391 + $0x1530] sm:$0xff]
        %v2019 = vld [vmem:[%s391 + $0x1538] sm:$0xff]
        %v2020 = vld [vmem:[%s391 + $0x1540] sm:$0xff]
        %v2021 = vld [vmem:[%s391 + $0x1548] sm:$0xff]
        %v2022 = vld [vmem:[%s391 + $0x1550] sm:$0xff]
        %v2023 = vld [vmem:[%s391 + $0x1558] sm:$0xff]
        %v2024 = vld [vmem:[%s391 + $0x1560] sm:$0xff]
        %v2025 = vld [vmem:[%s391 + $0x1568] sm:$0xff]
        %v2026 = vld [vmem:[%s391 + $0x1570] sm:$0xff]
        %v2027 = vld [vmem:[%s391 + $0x1578] sm:$0xff]
        %v2028 = vld [vmem:[%s391 + $0x1580] sm:$0xff]
        %v2029 = vld [vmem:[%s391 + $0x1588] sm:$0xff]
        %v2030 = vld [vmem:[%s391 + $0x1590] sm:$0xff]
        %v2031 = vld [vmem:[%s391 + $0x1598] sm:$0xff]
        %v2032 = vld [vmem:[%s391 + $0x15a0] sm:$0xff]
        %v2033 = vld [vmem:[%s391 + $0x15a8] sm:$0xff]
        %v2034 = vld [vmem:[%s391 + $0x15b0] sm:$0xff]
        %v2035 = vld [vmem:[%s391 + $0x15b8] sm:$0xff]
        %v2036 = vld [vmem:[%s391 + $0x15c0] sm:$0xff]
        %v2037 = vld [vmem:[%s391 + $0x15c8] sm:$0xff]
        %v2038 = vld [vmem:[%s391 + $0x15d0] sm:$0xff]
        %v2039 = vld [vmem:[%s391 + $0x15d8] sm:$0xff]
        %v2040 = vld [vmem:[%s391 + $0x15e0] sm:$0xff]
        %v2041 = vld [vmem:[%s391 + $0x15e8] sm:$0xff]
        %v2042 = vld [vmem:[%s391 + $0x15f0] sm:$0xff]
        %v2043 = vld [vmem:[%s391 + $0x15f8] sm:$0xff]
        %v2044 = vld [vmem:[%s391 + $0x1600] sm:$0xff]
        %v2045 = vld [vmem:[%s391 + $0x1608] sm:$0xff]
        %v2046 = vld [vmem:[%s391 + $0x1610] sm:$0xff]
        %v2047 = vld [vmem:[%s391 + $0x1618] sm:$0xff]
        %v2048 = vld [vmem:[%s391 + $0x1620] sm:$0xff]
        %v2049 = vld [vmem:[%s391 + $0x1628] sm:$0xff]
        %v2050 = vld [vmem:[%s391 + $0x1630] sm:$0xff]
        %v2051 = vld [vmem:[%s391 + $0x1638] sm:$0xff]
        %v2052 = vld [vmem:[%s391 + $0x1640] sm:$0xff]
        %v2053 = vld [vmem:[%s391 + $0x1648] sm:$0xff]
        %v2054 = vld [vmem:[%s391 + $0x1650] sm:$0xff]
        %v2055 = vld [vmem:[%s391 + $0x1658] sm:$0xff]
        %v2056 = vld [vmem:[%s391 + $0x1660] sm:$0xff]
        %v2057 = vld [vmem:[%s391 + $0x1668] sm:$0xff]
        %v2058 = vld [vmem:[%s391 + $0x1670] sm:$0xff]
        %v2059 = vld [vmem:[%s391 + $0x1678] sm:$0xff]
        %v2060 = vld [vmem:[%s391 + $0x1680] sm:$0xff]
        %v2061 = vld [vmem:[%s391 + $0x1688] sm:$0xff]
        %v2062 = vld [vmem:[%s391 + $0x1690] sm:$0xff]
        %v2063 = vld [vmem:[%s391 + $0x1698] sm:$0xff]
        %v2064 = vld [vmem:[%s391 + $0x16a0] sm:$0xff]
        %v2065 = vld [vmem:[%s391 + $0x16a8] sm:$0xff]
        %v2066 = vld [vmem:[%s391 + $0x16b0] sm:$0xff]
        %v2067 = vld [vmem:[%s391 + $0x16b8] sm:$0xff]
        %v2068 = vld [vmem:[%s391 + $0x16c0] sm:$0xff]
        %v2069 = vld [vmem:[%s391 + $0x16c8] sm:$0xff]
        %v2070 = vld [vmem:[%s391 + $0x16d0] sm:$0xff]
        %v2071 = vld [vmem:[%s391 + $0x16d8] sm:$0xff]
        %v2072 = vld [vmem:[%s391 + $0x16e0] sm:$0xff]
        %v2073 = vld [vmem:[%s391 + $0x16e8] sm:$0xff]
        %v2074 = vld [vmem:[%s391 + $0x16f0] sm:$0xff]
        %v2075 = vld [vmem:[%s391 + $0x16f8] sm:$0xff]
        %v2076 = vld [vmem:[%s391 + $0x1700] sm:$0xff]
        %v2077 = vld [vmem:[%s391 + $0x1708] sm:$0xff]
        %v2078 = vld [vmem:[%s391 + $0x1710] sm:$0xff]
        %v2079 = vld [vmem:[%s391 + $0x1718] sm:$0xff]
        %v2080 = vld [vmem:[%s391 + $0x1720] sm:$0xff]
        %v2081 = vld [vmem:[%s391 + $0x1728] sm:$0xff]
        %v2082 = vld [vmem:[%s391 + $0x1730] sm:$0xff]
        %v2083 = vld [vmem:[%s391 + $0x1738] sm:$0xff]
        %v2084 = vld [vmem:[%s391 + $0x1740] sm:$0xff]
        %v2085 = vld [vmem:[%s391 + $0x1748] sm:$0xff]
        %v2086 = vld [vmem:[%s391 + $0x1750] sm:$0xff]
        %v2087 = vld [vmem:[%s391 + $0x1758] sm:$0xff]
        %v2088 = vld [vmem:[%s391 + $0x1760] sm:$0xff]
        %v2089 = vld [vmem:[%s391 + $0x1768] sm:$0xff]
        %v2090 = vld [vmem:[%s391 + $0x1770] sm:$0xff]
        %v2091 = vld [vmem:[%s391 + $0x1778] sm:$0xff]
        %v2092 = vld [vmem:[%s391 + $0x1780] sm:$0xff]
        %v2093 = vld [vmem:[%s391 + $0x1788] sm:$0xff]
        %v2094 = vld [vmem:[%s391 + $0x1790] sm:$0xff]
        %v2095 = vld [vmem:[%s391 + $0x1798] sm:$0xff]
        %v2096 = vld [vmem:[%s391 + $0x17a0] sm:$0xff]
        %v2097 = vld [vmem:[%s391 + $0x17a8] sm:$0xff]
        %v2098 = vld [vmem:[%s391 + $0x17b0] sm:$0xff]
        %v2099 = vld [vmem:[%s391 + $0x17b8] sm:$0xff]
        %v2100 = vld [vmem:[%s391 + $0x17c0] sm:$0xff]
        %v2101 = vld [vmem:[%s391 + $0x17c8] sm:$0xff]
        %v2102 = vld [vmem:[%s391 + $0x17d0] sm:$0xff]
        %v2103 = vld [vmem:[%s391 + $0x17d8] sm:$0xff]
        %v2104 = vld [vmem:[%s391 + $0x17e0] sm:$0xff]
        %v2105 = vld [vmem:[%s391 + $0x17e8] sm:$0xff]
        %v2106 = vld [vmem:[%s391 + $0x17f0] sm:$0xff]
        %v2107 = vld [vmem:[%s391 + $0x17f8] sm:$0xff]
        %v2108 = vld [vmem:[%s391 + $0x1800] sm:$0xff]
        %v2109 = vld [vmem:[%s391 + $0x1808] sm:$0xff]
        %v2110 = vld [vmem:[%s391 + $0x1810] sm:$0xff]
        %v2111 = vld [vmem:[%s391 + $0x1818] sm:$0xff]
        %v2112 = vld [vmem:[%s391 + $0x1820] sm:$0xff]
        %v2113 = vld [vmem:[%s391 + $0x1828] sm:$0xff]
        %v2114 = vld [vmem:[%s391 + $0x1830] sm:$0xff]
        %v2115 = vld [vmem:[%s391 + $0x1838] sm:$0xff]
        %v2116 = vld [vmem:[%s391 + $0x1840] sm:$0xff]
        %v2117 = vld [vmem:[%s391 + $0x1848] sm:$0xff]
        %v2118 = vld [vmem:[%s391 + $0x1850] sm:$0xff]
        %v2119 = vld [vmem:[%s391 + $0x1858] sm:$0xff]
        %v2120 = vld [vmem:[%s391 + $0x1860] sm:$0xff]
        %v2121 = vld [vmem:[%s391 + $0x1868] sm:$0xff]
        %v2122 = vld [vmem:[%s391 + $0x1870] sm:$0xff]
        %v2123 = vld [vmem:[%s391 + $0x1878] sm:$0xff]
        %v2124 = vld [vmem:[%s391 + $0x1880] sm:$0xff]
        %v2125 = vld [vmem:[%s391 + $0x1888] sm:$0xff]
        %v2126 = vld [vmem:[%s391 + $0x1890] sm:$0xff]
        %v2127 = vld [vmem:[%s391 + $0x1898] sm:$0xff]
        %v2128 = vld [vmem:[%s391 + $0x18a0] sm:$0xff]
        %v2129 = vld [vmem:[%s391 + $0x18a8] sm:$0xff]
        %v2130 = vld [vmem:[%s391 + $0x18b0] sm:$0xff]
        %v2131 = vld [vmem:[%s391 + $0x18b8] sm:$0xff]
        %v2132 = vld [vmem:[%s391 + $0x18c0] sm:$0xff]
        %v2133 = vld [vmem:[%s391 + $0x18c8] sm:$0xff]
        %v2134 = vld [vmem:[%s391 + $0x18d0] sm:$0xff]
        %v2135 = vld [vmem:[%s391 + $0x18d8] sm:$0xff]
        %v2136 = vld [vmem:[%s391 + $0x18e0] sm:$0xff]
        %v2137 = vld [vmem:[%s391 + $0x18e8] sm:$0xff]
        %v2138 = vld [vmem:[%s391 + $0x18f0] sm:$0xff]
        %v2139 = vld [vmem:[%s391 + $0x18f8] sm:$0xff]
        %v2140 = vld [vmem:[%s391 + $0x1900] sm:$0xff]
        %v2141 = vld [vmem:[%s391 + $0x1908] sm:$0xff]
        %v2142 = vld [vmem:[%s391 + $0x1910] sm:$0xff]
        %v2143 = vld [vmem:[%s391 + $0x1918] sm:$0xff]
        %v2144 = vld [vmem:[%s391 + $0x1920] sm:$0xff]
        %v2145 = vld [vmem:[%s391 + $0x1928] sm:$0xff]
        %v2146 = vld [vmem:[%s391 + $0x1930] sm:$0xff]
        %v2147 = vld [vmem:[%s391 + $0x1938] sm:$0xff]
        %v2148 = vld [vmem:[%s391 + $0x1940] sm:$0xff]
        %v2149 = vld [vmem:[%s391 + $0x1948] sm:$0xff]
        %v2150 = vld [vmem:[%s391 + $0x1950] sm:$0xff]
        %v2151 = vld [vmem:[%s391 + $0x1958] sm:$0xff]
        %v2152 = vld [vmem:[%s391 + $0x1960] sm:$0xff]
        %v2153 = vld [vmem:[%s391 + $0x1968] sm:$0xff]
        %v2154 = vld [vmem:[%s391 + $0x1970] sm:$0xff]
        %v2155 = vld [vmem:[%s391 + $0x1978] sm:$0xff]
        %v2156 = vld [vmem:[%s391 + $0x1980] sm:$0xff]
        %v2157 = vld [vmem:[%s391 + $0x1988] sm:$0xff]
        %v2158 = vld [vmem:[%s391 + $0x1990] sm:$0xff]
        %v2159 = vld [vmem:[%s391 + $0x1998] sm:$0xff]
        %v2160 = vld [vmem:[%s391 + $0x19a0] sm:$0xff]
        %v2161 = vld [vmem:[%s391 + $0x19a8] sm:$0xff]
        %v2162 = vld [vmem:[%s391 + $0x19b0] sm:$0xff]
        %v2163 = vld [vmem:[%s391 + $0x19b8] sm:$0xff]
        %v2164 = vld [vmem:[%s391 + $0x19c0] sm:$0xff]
        %v2165 = vld [vmem:[%s391 + $0x19c8] sm:$0xff]
        %v2166 = vld [vmem:[%s391 + $0x19d0] sm:$0xff]
        %v2167 = vld [vmem:[%s391 + $0x19d8] sm:$0xff]
        %v2168 = vld [vmem:[%s391 + $0x19e0] sm:$0xff]
        %v2169 = vld [vmem:[%s391 + $0x19e8] sm:$0xff]
        %v2170 = vld [vmem:[%s391 + $0x19f0] sm:$0xff]
        %v2171 = vld [vmem:[%s391 + $0x19f8] sm:$0xff]
        %v2172 = vld [vmem:[%s391 + $0x1a00] sm:$0xff]
        %v2173 = vld [vmem:[%s391 + $0x1a08] sm:$0xff]
        %v2174 = vld [vmem:[%s391 + $0x1a10] sm:$0xff]
        %v2175 = vld [vmem:[%s391 + $0x1a18] sm:$0xff]
        %v2176 = vld [vmem:[%s391 + $0x1a20] sm:$0xff]
        %v2177 = vld [vmem:[%s391 + $0x1a28] sm:$0xff]
        %v2178 = vld [vmem:[%s391 + $0x1a30] sm:$0xff]
        %v2179 = vld [vmem:[%s391 + $0x1a38] sm:$0xff]
        %v2180 = vld [vmem:[%s391 + $0x1a40] sm:$0xff]
        %v2181 = vld [vmem:[%s391 + $0x1a48] sm:$0xff]
        %v2182 = vld [vmem:[%s391 + $0x1a50] sm:$0xff]
        %v2183 = vld [vmem:[%s391 + $0x1a58] sm:$0xff]
        %v2184 = vld [vmem:[%s391 + $0x1a60] sm:$0xff]
        %v2185 = vld [vmem:[%s391 + $0x1a68] sm:$0xff]
        %v2186 = vld [vmem:[%s391 + $0x1a70] sm:$0xff]
        %v2187 = vld [vmem:[%s391 + $0x1a78] sm:$0xff]
        %v2188 = vld [vmem:[%s391 + $0x1a80] sm:$0xff]
        %v2189 = vld [vmem:[%s391 + $0x1a88] sm:$0xff]
        %v2190 = vld [vmem:[%s391 + $0x1a90] sm:$0xff]
        %v2191 = vld [vmem:[%s391 + $0x1a98] sm:$0xff]
        %v2192 = vld [vmem:[%s391 + $0x1aa0] sm:$0xff]
        %v2193 = vld [vmem:[%s391 + $0x1aa8] sm:$0xff]
        %v2194 = vld [vmem:[%s391 + $0x1ab0] sm:$0xff]
        %v2195 = vld [vmem:[%s391 + $0x1ab8] sm:$0xff]
        %v2196 = vld [vmem:[%s391 + $0x1ac0] sm:$0xff]
        %v2197 = vld [vmem:[%s391 + $0x1ac8] sm:$0xff]
        %v2198 = vld [vmem:[%s391 + $0x1ad0] sm:$0xff]
        %v2199 = vld [vmem:[%s391 + $0x1ad8] sm:$0xff]
        %v2200 = vld [vmem:[%s391 + $0x1ae0] sm:$0xff]
        %v2201 = vld [vmem:[%s391 + $0x1ae8] sm:$0xff]
        %v2202 = vld [vmem:[%s391 + $0x1af0] sm:$0xff]
        %v2203 = vld [vmem:[%s391 + $0x1af8] sm:$0xff]
        %v2204 = vld [vmem:[%s391 + $0x1b00] sm:$0xff]
        %v2205 = vld [vmem:[%s391 + $0x1b08] sm:$0xff]
        %v2206 = vld [vmem:[%s391 + $0x1b10] sm:$0xff]
        %v2207 = vld [vmem:[%s391 + $0x1b18] sm:$0xff]
        %v2208 = vld [vmem:[%s391 + $0x1b20] sm:$0xff]
        %v2209 = vld [vmem:[%s391 + $0x1b28] sm:$0xff]
        %v2210 = vld [vmem:[%s391 + $0x1b30] sm:$0xff]
        %v2211 = vld [vmem:[%s391 + $0x1b38] sm:$0xff]
        %v2212 = vld [vmem:[%s391 + $0x1b40] sm:$0xff]
        %v2213 = vld [vmem:[%s391 + $0x1b48] sm:$0xff]
        %v2214 = vld [vmem:[%s391 + $0x1b50] sm:$0xff]
        %v2215 = vld [vmem:[%s391 + $0x1b58] sm:$0xff]
        %v2216 = vld [vmem:[%s391 + $0x1b60] sm:$0xff]
        %v2217 = vld [vmem:[%s391 + $0x1b68] sm:$0xff]
        %v2218 = vld [vmem:[%s391 + $0x1b70] sm:$0xff]
        %v2219 = vld [vmem:[%s391 + $0x1b78] sm:$0xff]
        %v2220 = vld [vmem:[%s391 + $0x1b80] sm:$0xff]
        %v2221 = vld [vmem:[%s391 + $0x1b88] sm:$0xff]
        %v2222 = vld [vmem:[%s391 + $0x1b90] sm:$0xff]
        %v2223 = vld [vmem:[%s391 + $0x1b98] sm:$0xff]
        %v2224 = vld [vmem:[%s391 + $0x1ba0] sm:$0xff]
        %v2225 = vld [vmem:[%s391 + $0x1ba8] sm:$0xff]
        %v2226 = vld [vmem:[%s391 + $0x1bb0] sm:$0xff]
        %v2227 = vld [vmem:[%s391 + $0x1bb8] sm:$0xff]
        %v2228 = vld [vmem:[%s391 + $0x1bc0] sm:$0xff]
        %v2229 = vld [vmem:[%s391 + $0x1bc8] sm:$0xff]
        %v2230 = vld [vmem:[%s391 + $0x1bd0] sm:$0xff]
        %v2231 = vld [vmem:[%s391 + $0x1bd8] sm:$0xff]
        %v2232 = vld [vmem:[%s391 + $0x1be0] sm:$0xff]
        %v2233 = vld [vmem:[%s391 + $0x1be8] sm:$0xff]
        %v2234 = vld [vmem:[%s391 + $0x1bf0] sm:$0xff]
        %v2235 = vld [vmem:[%s391 + $0x1bf8] sm:$0xff]
        %v2236 = vld [vmem:[%s391 + $0x1c00] sm:$0xff]
        %v2237 = vld [vmem:[%s391 + $0x1c08] sm:$0xff]
        %v2238 = vld [vmem:[%s391 + $0x1c10] sm:$0xff]
        %v2239 = vld [vmem:[%s391 + $0x1c18] sm:$0xff]
        %v2240 = vld [vmem:[%s391 + $0x1c20] sm:$0xff]
        %v2241 = vld [vmem:[%s391 + $0x1c28] sm:$0xff]
        %v2242 = vld [vmem:[%s391 + $0x1c30] sm:$0xff]
        %v2243 = vld [vmem:[%s391 + $0x1c38] sm:$0xff]
        %v2244 = vld [vmem:[%s391 + $0x1c40] sm:$0xff]
        %v2245 = vld [vmem:[%s391 + $0x1c48] sm:$0xff]
        %v2246 = vld [vmem:[%s391 + $0x1c50] sm:$0xff]
        %v2247 = vld [vmem:[%s391 + $0x1c58] sm:$0xff]
        %v2248 = vld [vmem:[%s391 + $0x1c60] sm:$0xff]
        %v2249 = vld [vmem:[%s391 + $0x1c68] sm:$0xff]
        %v2250 = vld [vmem:[%s391 + $0x1c70] sm:$0xff]
        %v2251 = vld [vmem:[%s391 + $0x1c78] sm:$0xff]
        %v2252 = vld [vmem:[%s391 + $0x1c80] sm:$0xff]
        %v2253 = vld [vmem:[%s391 + $0x1c88] sm:$0xff]
        %v2254 = vld [vmem:[%s391 + $0x1c90] sm:$0xff]
        %v2255 = vld [vmem:[%s391 + $0x1c98] sm:$0xff]
        %v2256 = vld [vmem:[%s391 + $0x1ca0] sm:$0xff]
        %v2257 = vld [vmem:[%s391 + $0x1ca8] sm:$0xff]
        %v2258 = vld [vmem:[%s391 + $0x1cb0] sm:$0xff]
        %v2259 = vld [vmem:[%s391 + $0x1cb8] sm:$0xff]
        %v2260 = vld [vmem:[%s391 + $0x1cc0] sm:$0xff]
        %v2261 = vld [vmem:[%s391 + $0x1cc8] sm:$0xff]
        %v2262 = vld [vmem:[%s391 + $0x1cd0] sm:$0xff]
        %v2263 = vld [vmem:[%s391 + $0x1cd8] sm:$0xff]
        %v2264 = vld [vmem:[%s391 + $0x1ce0] sm:$0xff]
        %v2265 = vld [vmem:[%s391 + $0x1ce8] sm:$0xff]
        %v2266 = vld [vmem:[%s391 + $0x1cf0] sm:$0xff]
        %v2267 = vld [vmem:[%s391 + $0x1cf8] sm:$0xff]
        %v2268 = vld [vmem:[%s391 + $0x1d00] sm:$0xff]
        %v2269 = vld [vmem:[%s391 + $0x1d08] sm:$0xff]
        %v2270 = vld [vmem:[%s391 + $0x1d10] sm:$0xff]
        %v2271 = vld [vmem:[%s391 + $0x1d18] sm:$0xff]
        %v2272 = vld [vmem:[%s391 + $0x1d20] sm:$0xff]
        %v2273 = vld [vmem:[%s391 + $0x1d28] sm:$0xff]
        %v2274 = vld [vmem:[%s391 + $0x1d30] sm:$0xff]
        %v2275 = vld [vmem:[%s391 + $0x1d38] sm:$0xff]
        %v2276 = vld [vmem:[%s391 + $0x1d40] sm:$0xff]
        %v2277 = vld [vmem:[%s391 + $0x1d48] sm:$0xff]
        %v2278 = vld [vmem:[%s391 + $0x1d50] sm:$0xff]
        %v2279 = vld [vmem:[%s391 + $0x1d58] sm:$0xff]
        %v2280 = vld [vmem:[%s391 + $0x1d60] sm:$0xff]
        %v2281 = vld [vmem:[%s391 + $0x1d68] sm:$0xff]
        %v2282 = vld [vmem:[%s391 + $0x1d70] sm:$0xff]
        %v2283 = vld [vmem:[%s391 + $0x1d78] sm:$0xff]
        %v2284 = vld [vmem:[%s391 + $0x1d80] sm:$0xff]
        %v2285 = vld [vmem:[%s391 + $0x1d88] sm:$0xff]
        %v2286 = vld [vmem:[%s391 + $0x1d90] sm:$0xff]
        %v2287 = vld [vmem:[%s391 + $0x1d98] sm:$0xff]
        %v2288 = vld [vmem:[%s391 + $0x1da0] sm:$0xff]
        %v2289 = vld [vmem:[%s391 + $0x1da8] sm:$0xff]
        %v2290 = vld [vmem:[%s391 + $0x1db0] sm:$0xff]
        %v2291 = vld [vmem:[%s391 + $0x1db8] sm:$0xff]
        %v2292 = vld [vmem:[%s391 + $0x1dc0] sm:$0xff]
        %v2293 = vld [vmem:[%s391 + $0x1dc8] sm:$0xff]
        %v2294 = vld [vmem:[%s391 + $0x1dd0] sm:$0xff]
        %v2295 = vld [vmem:[%s391 + $0x1dd8] sm:$0xff]
        %v2296 = vld [vmem:[%s391 + $0x1de0] sm:$0xff]
        %v2297 = vld [vmem:[%s391 + $0x1de8] sm:$0xff]
        %v2298 = vld [vmem:[%s391 + $0x1df0] sm:$0xff]
        %v2299 = vld [vmem:[%s391 + $0x1df8] sm:$0xff]
        %v2300 = vld [vmem:[%s391 + $0x1e00] sm:$0xff]
        %v2301 = vld [vmem:[%s391 + $0x1e08] sm:$0xff]
        %v2302 = vld [vmem:[%s391 + $0x1e10] sm:$0xff]
        %v2303 = vld [vmem:[%s391 + $0x1e18] sm:$0xff]
        %v2304 = vld [vmem:[%s391 + $0x1e20] sm:$0xff]
        %v2305 = vld [vmem:[%s391 + $0x1e28] sm:$0xff]
        %v2306 = vld [vmem:[%s391 + $0x1e30] sm:$0xff]
        %v2307 = vld [vmem:[%s391 + $0x1e38] sm:$0xff]
        %v2308 = vld [vmem:[%s391 + $0x1e40] sm:$0xff]
        %v2309 = vld [vmem:[%s391 + $0x1e48] sm:$0xff]
        %v2310 = vld [vmem:[%s391 + $0x1e50] sm:$0xff]
        %v2311 = vld [vmem:[%s391 + $0x1e58] sm:$0xff]
        %v2312 = vld [vmem:[%s391 + $0x1e60] sm:$0xff]
        %v2313 = vld [vmem:[%s391 + $0x1e68] sm:$0xff]
        %v2314 = vld [vmem:[%s391 + $0x1e70] sm:$0xff]
        %v2315 = vld [vmem:[%s391 + $0x1e78] sm:$0xff]
        %v2316 = vld [vmem:[%s391 + $0x1e80] sm:$0xff]
        %v2317 = vld [vmem:[%s391 + $0x1e88] sm:$0xff]
        %v2318 = vld [vmem:[%s391 + $0x1e90] sm:$0xff]
        %v2319 = vld [vmem:[%s391 + $0x1e98] sm:$0xff]
        %v2320 = vld [vmem:[%s391 + $0x1ea0] sm:$0xff]
        %v2321 = vld [vmem:[%s391 + $0x1ea8] sm:$0xff]
        %v2322 = vld [vmem:[%s391 + $0x1eb0] sm:$0xff]
        %v2323 = vld [vmem:[%s391 + $0x1eb8] sm:$0xff]
        %v2324 = vld [vmem:[%s391 + $0x1ec0] sm:$0xff]
        %v2325 = vld [vmem:[%s391 + $0x1ec8] sm:$0xff]
        %v2326 = vld [vmem:[%s391 + $0x1ed0] sm:$0xff]
        %v2327 = vld [vmem:[%s391 + $0x1ed8] sm:$0xff]
        %v2328 = vld [vmem:[%s391 + $0x1ee0] sm:$0xff]
        %v2329 = vld [vmem:[%s391 + $0x1ee8] sm:$0xff]
        %v2330 = vld [vmem:[%s391 + $0x1ef0] sm:$0xff]
        %v2331 = vld [vmem:[%s391 + $0x1ef8] sm:$0xff]
        %v2332 = vld [vmem:[%s391 + $0x1f00] sm:$0xff]
        %v2333 = vld [vmem:[%s391 + $0x1f08] sm:$0xff]
        %v2334 = vld [vmem:[%s391 + $0x1f10] sm:$0xff]
        %v2335 = vld [vmem:[%s391 + $0x1f18] sm:$0xff]
        %v2336 = vld [vmem:[%s391 + $0x1f20] sm:$0xff]
        %v2337 = vld [vmem:[%s391 + $0x1f28] sm:$0xff]
        %v2338 = vld [vmem:[%s391 + $0x1f30] sm:$0xff]
        %v2339 = vld [vmem:[%s391 + $0x1f38] sm:$0xff]
        %v2340 = vld [vmem:[%s391 + $0x1f40] sm:$0xff]
        %v2341 = vld [vmem:[%s391 + $0x1f48] sm:$0xff]
        %v2342 = vld [vmem:[%s391 + $0x1f50] sm:$0xff]
        %v2343 = vld [vmem:[%s391 + $0x1f58] sm:$0xff]
        %v2344 = vld [vmem:[%s391 + $0x1f60] sm:$0xff]
        %v2345 = vld [vmem:[%s391 + $0x1f68] sm:$0xff]
        %v2346 = vld [vmem:[%s391 + $0x1f70] sm:$0xff]
        %v2347 = vld [vmem:[%s391 + $0x1f78] sm:$0xff]
        %v2348 = vld [vmem:[%s391 + $0x1f80] sm:$0xff]
        %v2349 = vld [vmem:[%s391 + $0x1f88] sm:$0xff]
        %v2350 = vld [vmem:[%s391 + $0x1f90] sm:$0xff]
        %v2351 = vld [vmem:[%s391 + $0x1f98] sm:$0xff]
        %v2352 = vld [vmem:[%s391 + $0x1fa0] sm:$0xff]
        %v2353 = vld [vmem:[%s391 + $0x1fa8] sm:$0xff]
        %v2354 = vld [vmem:[%s391 + $0x1fb0] sm:$0xff]
        %v2355 = vld [vmem:[%s391 + $0x1fb8] sm:$0xff]
        %v2356 = vld [vmem:[%s391 + $0x1fc0] sm:$0xff]
        %v2357 = vld [vmem:[%s391 + $0x1fc8] sm:$0xff]
        %v2358 = vld [vmem:[%s391 + $0x1fd0] sm:$0xff]
        %v2359 = vld [vmem:[%s391 + $0x1fd8] sm:$0xff]
        %v2360 = vld [vmem:[%s391 + $0x1fe0] sm:$0xff]
        %v2361 = vld [vmem:[%s391 + $0x1fe8] sm:$0xff]
        %v2362 = vld [vmem:[%s391 + $0x1ff0] sm:$0xff]
        %v2363 = vld [vmem:[%s391 + $0x1ff8] sm:$0xff]
        %v2364 = vld [vmem:[%s400] sm:$0xff]
        %v2366 = vlaneseq
        %v2367 = vshrl.u32 %v2366, 7
        %v2368 = vsub.s32 0, %v2367
        %v2369 = vrot.slane %v2364, %v2368
        %v2370 = vlaneseq
        %v2371 = vshrl.u32 %v2370, 7
        %v2372 = vsub.s32 1, %v2371
        %v2373 = vrot.slane %v2364, %v2372
        %v2374 = vlaneseq
        %v2375 = vshrl.u32 %v2374, 7
        %v2376 = vsub.s32 2, %v2375
        %v2377 = vrot.slane %v2364, %v2376
        %v2378 = vlaneseq
        %v2379 = vshrl.u32 %v2378, 7
        %v2380 = vsub.s32 3, %v2379
        %v2381 = vrot.slane %v2364, %v2380
        %v2382 = vlaneseq
        %v2383 = vshrl.u32 %v2382, 7
        %v2384 = vsub.s32 4, %v2383
        %v2385 = vrot.slane %v2364, %v2384
        %v2386 = vlaneseq
        %v2387 = vshrl.u32 %v2386, 7
        %v2388 = vsub.s32 5, %v2387
        %v2389 = vrot.slane %v2364, %v2388
        %v2390 = vlaneseq
        %v2391 = vshrl.u32 %v2390, 7
        %v2392 = vsub.s32 6, %v2391
        %v2393 = vrot.slane %v2364, %v2392
        %v2394 = vlaneseq
        %v2395 = vshrl.u32 %v2394, 7
        %v2396 = vsub.s32 7, %v2395
        %v2397 = vrot.slane %v2364, %v2396
        %2406 = vmatprep.subr.mxu0 %v1341
        %2407 = vmatpush1.xpose.msra.mxu0 %v1340
        %2408 = vmatprep.subr.mxu0 %v1349
        %2409 = vmatpush1.xpose.msra.mxu0 %v1348
        %2410 = vmatprep.subr.mxu0 %v1357
        %2411 = vmatpush1.xpose.msra.mxu0 %v1356
        %2412 = vmatprep.subr.mxu0 %v1365
        %2413 = vmatpush1.xpose.msra.mxu0 %v1364
        %2414 = vmatprep.subr.mxu0 %v1373
        %2415 = vmatpush1.xpose.msra.mxu0 %v1372
        %2416 = vmatprep.subr.mxu0 %v1381
        %2417 = vmatpush1.xpose.msra.mxu0 %v1380
        %2418 = vmatprep.subr.mxu0 %v1389
        %2419 = vmatpush1.xpose.msra.mxu0 %v1388
        %2420 = vmatprep.subr.mxu0 %v1397
        %2421 = vmatpush1.xpose.msra.mxu0 %v1396
        %2422 = vmatprep.subr.mxu0 %v1405
        %2423 = vmatpush1.xpose.msra.mxu0 %v1404
        %2424 = vmatprep.subr.mxu0 %v1413
        %2425 = vmatpush1.xpose.msra.mxu0 %v1412
        %2426 = vmatprep.subr.mxu0 %v1421
        %2427 = vmatpush1.xpose.msra.mxu0 %v1420
        %2428 = vmatprep.subr.mxu0 %v1429
        %2429 = vmatpush1.xpose.msra.mxu0 %v1428
        %2430 = vmatprep.subr.mxu0 %v1437
        %2431 = vmatpush1.xpose.msra.mxu0 %v1436
        %2432 = vmatprep.subr.mxu0 %v1445
        %2433 = vmatpush1.xpose.msra.mxu0 %v1444
        %2434 = vmatprep.subr.mxu0 %v1453
        %2435 = vmatpush1.xpose.msra.mxu0 %v1452
        %2436 = vmatprep.subr.mxu0 %v1461
        %2437 = vmatpush1.xpose.msra.mxu0 %v1460
        %2438 = vmatprep.subr.mxu0 %v1469
        %2439 = vmatpush1.xpose.msra.mxu0 %v1468
        %2440 = vmatprep.subr.mxu0 %v1477
        %2441 = vmatpush1.xpose.msra.mxu0 %v1476
        %2442 = vmatprep.subr.mxu0 %v1485
        %2443 = vmatpush1.xpose.msra.mxu0 %v1484
        %2444 = vmatprep.subr.mxu0 %v1493
        %2445 = vmatpush1.xpose.msra.mxu0 %v1492
        %2446 = vmatprep.subr.mxu0 %v1501
        %2447 = vmatpush1.xpose.msra.mxu0 %v1500
        %2448 = vmatprep.subr.mxu0 %v1509
        %2449 = vmatpush1.xpose.msra.mxu0 %v1508
        %2450 = vmatprep.subr.mxu0 %v1517
        %2451 = vmatpush1.xpose.msra.mxu0 %v1516
        %2452 = vmatprep.subr.mxu0 %v1525
        %2453 = vmatpush1.xpose.msra.mxu0 %v1524
        %2454 = vmatprep.subr.mxu0 %v1533
        %2455 = vmatpush1.xpose.msra.mxu0 %v1532
        %2456 = vmatprep.subr.mxu0 %v1541
        %2457 = vmatpush1.xpose.msra.mxu0 %v1540
        %2458 = vmatprep.subr.mxu0 %v1549
        %2459 = vmatpush1.xpose.msra.mxu0 %v1548
        %2460 = vmatprep.subr.mxu0 %v1557
        %2461 = vmatpush1.xpose.msra.mxu0 %v1556
        %2462 = vmatprep.subr.mxu0 %v1565
        %2463 = vmatpush1.xpose.msra.mxu0 %v1564
        %2464 = vmatprep.subr.mxu0 %v1573
        %2465 = vmatpush1.xpose.msra.mxu0 %v1572
        %2466 = vmatprep.subr.mxu0 %v1581
        %2467 = vmatpush1.xpose.msra.mxu0 %v1580
        %2468 = vmatprep.subr.mxu0 %v1589
        %2469 = vmatpush1.xpose.msra.mxu0 %v1588
        %2470 = vmatprep.mubr.f32.mxu0 %v1285
        %2471 = vmatmul.mubr.f32.gmra.mrb[0].mxu0 %v1284
        %v2472 = vpop.f32.mrb[0].mxu0
        %v2473 = vadd.f32 %v2369, %v2472
        %v2474 = vpop.f32.mrb[0].mxu0
        %v2475 = vadd.f32 %v2373, %v2474
        %2476 = vmatprep.mubr.f32.mxu0 %v1293
        %2477 = vmatmul.mubr.f32.gmra.mrb[0].mxu0 %v1292
        %v2478 = vpop.f32.mrb[0].mxu0
        %v2479 = vadd.f32 %v2369, %v2478
        %v2480 = vpop.f32.mrb[0].mxu0
        %v2481 = vadd.f32 %v2373, %v2480
        %2482 = vmatprep.mubr.f32.mxu0 %v1301
        %2483 = vmatmul.mubr.f32.gmra.mrb[0].mxu0 %v1300
        %v2484 = vpop.f32.mrb[0].mxu0
        %v2485 = vadd.f32 %v2369, %v2484
        %v2486 = vpop.f32.mrb[0].mxu0
        %v2487 = vadd.f32 %v2373, %v2486
        %2488 = vmatprep.mubr.f32.mxu0 %v1309
        %2489 = vmatmul.mubr.f32.gmra.mrb[0].mxu0 %v1308
        %v2490 = vpop.f32.mrb[0].mxu0
        %v2491 = vadd.f32 %v2369, %v2490
        %v2492 = vpop.f32.mrb[0].mxu0
        %v2493 = vadd.f32 %v2373, %v2492
        %2494 = vmatprep.mubr.f32.mxu0 %v1317
        %2495 = vmatmul.mubr.f32.gmra.mrb[0].mxu0 %v1316
        %v2496 = vpop.f32.mrb[0].mxu0
        %v2497 = vadd.f32 %v2369, %v2496
        %v2498 = vpop.f32.mrb[0].mxu0
        %v2499 = vadd.f32 %v2373, %v2498
        %2500 = vmatprep.mubr.f32.mxu0 %v1325
        %2501 = vmatmul.mubr.f32.gmra.mrb[0].mxu0 %v1324
        %v2502 = vpop.f32.mrb[0].mxu0
        %v2503 = vadd.f32 %v2369, %v2502
        %v2504 = vpop.f32.mrb[0].mxu0
        %v2505 = vadd.f32 %v2373, %v2504
        %2506 = vmatprep.mubr.f32.mxu0 %v1333
        %2507 = vmatmul.mubr.f32.gmra.mrb[0].mxu0 %v1332
        %v2508 = vpop.f32.mrb[0].mxu0
        %v2509 = vadd.f32 %v2369, %v2508
        %v2510 = vpop.f32.mrb[0].mxu0
        %v2511 = vadd.f32 %v2373, %v2510
        %2512 = vdwg.mxu0
        %2513 = vmatprep.subr.mxu0 %v1343
        %2514 = vmatpush1.xpose.msra.mxu0 %v1342
        %2515 = vmatprep.subr.mxu0 %v1351
        %2516 = vmatpush1.xpose.msra.mxu0 %v1350
        %2517 = vmatprep.subr.mxu0 %v1359
        %2518 = vmatpush1.xpose.msra.mxu0 %v1358
        %2519 = vmatprep.subr.mxu0 %v1367
        %2520 = vmatpush1.xpose.msra.mxu0 %v1366
        %2521 = vmatprep.subr.mxu0 %v1375
        %2522 = vmatpush1.xpose.msra.mxu0 %v1374
        %2523 = vmatprep.subr.mxu0 %v1383
        %2524 = vmatpush1.xpose.msra.mxu0 %v1382
        %2525 = vmatprep.subr.mxu0 %v1391
        %2526 = vmatpush1.xpose.msra.mxu0 %v1390
        %2527 = vmatprep.subr.mxu0 %v1399
        %2528 = vmatpush1.xpose.msra.mxu0 %v1398
        %2529 = vmatprep.subr.mxu0 %v1407
        %2530 = vmatpush1.xpose.msra.mxu0 %v1406
        %2531 = vmatprep.subr.mxu0 %v1415
        %2532 = vmatpush1.xpose.msra.mxu0 %v1414
        %2533 = vmatprep.subr.mxu0 %v1423
        %2534 = vmatpush1.xpose.msra.mxu0 %v1422
        %2535 = vmatprep.subr.mxu0 %v1431
        %2536 = vmatpush1.xpose.msra.mxu0 %v1430
        %2537 = vmatprep.subr.mxu0 %v1439
        %2538 = vmatpush1.xpose.msra.mxu0 %v1438
        %2539 = vmatprep.subr.mxu0 %v1447
        %2540 = vmatpush1.xpose.msra.mxu0 %v1446
        %2541 = vmatprep.subr.mxu0 %v1455
        %2542 = vmatpush1.xpose.msra.mxu0 %v1454
        %2543 = vmatprep.subr.mxu0 %v1463
        %2544 = vmatpush1.xpose.msra.mxu0 %v1462
        %2545 = vmatprep.subr.mxu0 %v1471
        %2546 = vmatpush1.xpose.msra.mxu0 %v1470
        %2547 = vmatprep.subr.mxu0 %v1479
        %2548 = vmatpush1.xpose.msra.mxu0 %v1478
        %2549 = vmatprep.subr.mxu0 %v1487
        %2550 = vmatpush1.xpose.msra.mxu0 %v1486
        %2551 = vmatprep.subr.mxu0 %v1495
        %2552 = vmatpush1.xpose.msra.mxu0 %v1494
        %2553 = vmatprep.subr.mxu0 %v1503
        %2554 = vmatpush1.xpose.msra.mxu0 %v1502
        %2555 = vmatprep.subr.mxu0 %v1511
        %2556 = vmatpush1.xpose.msra.mxu0 %v1510
        %2557 = vmatprep.subr.mxu0 %v1519
        %2558 = vmatpush1.xpose.msra.mxu0 %v1518
        %2559 = vmatprep.subr.mxu0 %v1527
        %2560 = vmatpush1.xpose.msra.mxu0 %v1526
        %2561 = vmatprep.subr.mxu0 %v1535
        %2562 = vmatpush1.xpose.msra.mxu0 %v1534
        %2563 = vmatprep.subr.mxu0 %v1543
        %2564 = vmatpush1.xpose.msra.mxu0 %v1542
        %2565 = vmatprep.subr.mxu0 %v1551
        %2566 = vmatpush1.xpose.msra.mxu0 %v1550
        %2567 = vmatprep.subr.mxu0 %v1559
        %2568 = vmatpush1.xpose.msra.mxu0 %v1558
        %2569 = vmatprep.subr.mxu0 %v1567
        %2570 = vmatpush1.xpose.msra.mxu0 %v1566
        %2571 = vmatprep.subr.mxu0 %v1575
        %2572 = vmatpush1.xpose.msra.mxu0 %v1574
        %2573 = vmatprep.subr.mxu0 %v1583
        %2574 = vmatpush1.xpose.msra.mxu0 %v1582
        %2575 = vmatprep.subr.mxu0 %v1591
        %2576 = vmatpush1.xpose.msra.mxu0 %v1590
        %2577 = vmatprep.mubr.f32.mxu0 %v1287
        %2578 = vmatmul.mubr.f32.gmra.mrb[0].mxu0 %v1286
        %v2579 = vpop.f32.mrb[0].mxu0
        %v2580 = vadd.f32 %v2473, %v2579
        %v2581 = vpop.f32.mrb[0].mxu0
        %v2582 = vadd.f32 %v2475, %v2581
        %2583 = vmatprep.mubr.f32.mxu0 %v1295
        %2584 = vmatmul.mubr.f32.gmra.mrb[0].mxu0 %v1294
        %v2585 = vpop.f32.mrb[0].mxu0
        %v2586 = vadd.f32 %v2479, %v2585
        %v2587 = vpop.f32.mrb[0].mxu0
        %v2588 = vadd.f32 %v2481, %v2587
        %2589 = vmatprep.mubr.f32.mxu0 %v1303
        %2590 = vmatmul.mubr.f32.gmra.mrb[0].mxu0 %v1302
        %v2591 = vpop.f32.mrb[0].mxu0
        %v2592 = vadd.f32 %v2485, %v2591
        %v2593 = vpop.f32.mrb[0].mxu0
        %v2594 = vadd.f32 %v2487, %v2593
        %2595 = vmatprep.mubr.f32.mxu0 %v1311
        %2596 = vmatmul.mubr.f32.gmra.mrb[0].mxu0 %v1310
        %v2597 = vpop.f32.mrb[0].mxu0
        %v2598 = vadd.f32 %v2491, %v2597
        %v2599 = vpop.f32.mrb[0].mxu0
        %v2600 = vadd.f32 %v2493, %v2599
        %2601 = vmatprep.mubr.f32.mxu0 %v1319
        %2602 = vmatmul.mubr.f32.gmra.mrb[0].mxu0 %v1318
        %v2603 = vpop.f32.mrb[0].mxu0
        %v2604 = vadd.f32 %v2497, %v2603
        %v2605 = vpop.f32.mrb[0].mxu0
        %v2606 = vadd.f32 %v2499, %v2605
        %2607 = vmatprep.mubr.f32.mxu0 %v1327
        %2608 = vmatmul.mubr.f32.gmra.mrb[0].mxu0 %v1326
        %v2609 = vpop.f32.mrb[0].mxu0
        %v2610 = vadd.f32 %v2503, %v2609
        %v2611 = vpop.f32.mrb[0].mxu0
        %v2612 = vadd.f32 %v2505, %v2611
        %2613 = vmatprep.mubr.f32.mxu0 %v1335
        %2614 = vmatmul.mubr.f32.gmra.mrb[0].mxu0 %v1334
        %v2615 = vpop.f32.mrb[0].mxu0
        %v2616 = vadd.f32 %v2509, %v2615
        %v2617 = vpop.f32.mrb[0].mxu0
        %v2618 = vadd.f32 %v2511, %v2617
        %2619 = vdwg.mxu0
        %2620 = vmatprep.subr.mxu0 %v1345
        %2621 = vmatpush1.xpose.msra.mxu0 %v1344
        %2622 = vmatprep.subr.mxu0 %v1353
        %2623 = vmatpush1.xpose.msra.mxu0 %v1352
        %2624 = vmatprep.subr.mxu0 %v1361
        %2625 = vmatpush1.xpose.msra.mxu0 %v1360
        %2626 = vmatprep.subr.mxu0 %v1369
        %2627 = vmatpush1.xpose.msra.mxu0 %v1368
        %2628 = vmatprep.subr.mxu0 %v1377
        %2629 = vmatpush1.xpose.msra.mxu0 %v1376
        %2630 = vmatprep.subr.mxu0 %v1385
        %2631 = vmatpush1.xpose.msra.mxu0 %v1384
        %2632 = vmatprep.subr.mxu0 %v1393
        %2633 = vmatpush1.xpose.msra.mxu0 %v1392
        %2634 = vmatprep.subr.mxu0 %v1401
        %2635 = vmatpush1.xpose.msra.mxu0 %v1400
        %2636 = vmatprep.subr.mxu0 %v1409
        %2637 = vmatpush1.xpose.msra.mxu0 %v1408
        %2638 = vmatprep.subr.mxu0 %v1417
        %2639 = vmatpush1.xpose.msra.mxu0 %v1416
        %2640 = vmatprep.subr.mxu0 %v1425
        %2641 = vmatpush1.xpose.msra.mxu0 %v1424
        %2642 = vmatprep.subr.mxu0 %v1433
        %2643 = vmatpush1.xpose.msra.mxu0 %v1432
        %2644 = vmatprep.subr.mxu0 %v1441
        %2645 = vmatpush1.xpose.msra.mxu0 %v1440
        %2646 = vmatprep.subr.mxu0 %v1449
        %2647 = vmatpush1.xpose.msra.mxu0 %v1448
        %2648 = vmatprep.subr.mxu0 %v1457
        %2649 = vmatpush1.xpose.msra.mxu0 %v1456
        %2650 = vmatprep.subr.mxu0 %v1465
        %2651 = vmatpush1.xpose.msra.mxu0 %v1464
        %2652 = vmatprep.subr.mxu0 %v1473
        %2653 = vmatpush1.xpose.msra.mxu0 %v1472
        %2654 = vmatprep.subr.mxu0 %v1481
        %2655 = vmatpush1.xpose.msra.mxu0 %v1480
        %2656 = vmatprep.subr.mxu0 %v1489
        %2657 = vmatpush1.xpose.msra.mxu0 %v1488
        %2658 = vmatprep.subr.mxu0 %v1497
        %2659 = vmatpush1.xpose.msra.mxu0 %v1496
        %2660 = vmatprep.subr.mxu0 %v1505
        %2661 = vmatpush1.xpose.msra.mxu0 %v1504
        %2662 = vmatprep.subr.mxu0 %v1513
        %2663 = vmatpush1.xpose.msra.mxu0 %v1512
        %2664 = vmatprep.subr.mxu0 %v1521
        %2665 = vmatpush1.xpose.msra.mxu0 %v1520
        %2666 = vmatprep.subr.mxu0 %v1529
        %2667 = vmatpush1.xpose.msra.mxu0 %v1528
        %2668 = vmatprep.subr.mxu0 %v1537
        %2669 = vmatpush1.xpose.msra.mxu0 %v1536
        %2670 = vmatprep.subr.mxu0 %v1545
        %2671 = vmatpush1.xpose.msra.mxu0 %v1544
        %2672 = vmatprep.subr.mxu0 %v1553
        %2673 = vmatpush1.xpose.msra.mxu0 %v1552
        %2674 = vmatprep.subr.mxu0 %v1561
        %2675 = vmatpush1.xpose.msra.mxu0 %v1560
        %2676 = vmatprep.subr.mxu0 %v1569
        %2677 = vmatpush1.xpose.msra.mxu0 %v1568
        %2678 = vmatprep.subr.mxu0 %v1577
        %2679 = vmatpush1.xpose.msra.mxu0 %v1576
        %2680 = vmatprep.subr.mxu0 %v1585
        %2681 = vmatpush1.xpose.msra.mxu0 %v1584
        %2682 = vmatprep.subr.mxu0 %v1593
        %2683 = vmatpush1.xpose.msra.mxu0 %v1592
        %2684 = vmatprep.mubr.f32.mxu0 %v1289
        %2685 = vmatmul.mubr.f32.gmra.mrb[0].mxu0 %v1288
        %v2686 = vpop.f32.mrb[0].mxu0
        %v2687 = vadd.f32 %v2580, %v2686
        %v2688 = vpop.f32.mrb[0].mxu0
        %v2689 = vadd.f32 %v2582, %v2688
        %2690 = vmatprep.mubr.f32.mxu0 %v1297
        %2691 = vmatmul.mubr.f32.gmra.mrb[0].mxu0 %v1296
        %v2692 = vpop.f32.mrb[0].mxu0
        %v2693 = vadd.f32 %v2586, %v2692
        %v2694 = vpop.f32.mrb[0].mxu0
        %v2695 = vadd.f32 %v2588, %v2694
        %2696 = vmatprep.mubr.f32.mxu0 %v1305
        %2697 = vmatmul.mubr.f32.gmra.mrb[0].mxu0 %v1304
        %v2698 = vpop.f32.mrb[0].mxu0
        %v2699 = vadd.f32 %v2592, %v2698
        %v2700 = vpop.f32.mrb[0].mxu0
        %v2701 = vadd.f32 %v2594, %v2700
        %2702 = vmatprep.mubr.f32.mxu0 %v1313
        %2703 = vmatmul.mubr.f32.gmra.mrb[0].mxu0 %v1312
        %v2704 = vpop.f32.mrb[0].mxu0
        %v2705 = vadd.f32 %v2598, %v2704
        %v2706 = vpop.f32.mrb[0].mxu0
        %v2707 = vadd.f32 %v2600, %v2706
        %2708 = vmatprep.mubr.f32.mxu0 %v1321
        %2709 = vmatmul.mubr.f32.gmra.mrb[0].mxu0 %v1320
        %v2710 = vpop.f32.mrb[0].mxu0
        %v2711 = vadd.f32 %v2604, %v2710
        %v2712 = vpop.f32.mrb[0].mxu0
        %v2713 = vadd.f32 %v2606, %v2712
        %2714 = vmatprep.mubr.f32.mxu0 %v1329
        %2715 = vmatmul.mubr.f32.gmra.mrb[0].mxu0 %v1328
        %v2716 = vpop.f32.mrb[0].mxu0
        %v2717 = vadd.f32 %v2610, %v2716
        %v2718 = vpop.f32.mrb[0].mxu0
        %v2719 = vadd.f32 %v2612, %v2718
        %2720 = vmatprep.mubr.f32.mxu0 %v1337
        %2721 = vmatmul.mubr.f32.gmra.mrb[0].mxu0 %v1336
        %v2722 = vpop.f32.mrb[0].mxu0
        %v2723 = vadd.f32 %v2616, %v2722
        %v2724 = vpop.f32.mrb[0].mxu0
        %v2725 = vadd.f32 %v2618, %v2724
        %2726 = vdwg.mxu0
        %2727 = vmatprep.subr.mxu0 %v1347
        %2728 = vmatpush1.xpose.msra.mxu0 %v1346
        %2729 = vmatprep.subr.mxu0 %v1355
        %2730 = vmatpush1.xpose.msra.mxu0 %v1354
        %2731 = vmatprep.subr.mxu0 %v1363
        %2732 = vmatpush1.xpose.msra.mxu0 %v1362
        %2733 = vmatprep.subr.mxu0 %v1371
        %2734 = vmatpush1.xpose.msra.mxu0 %v1370
        %2735 = vmatprep.subr.mxu0 %v1379
        %2736 = vmatpush1.xpose.msra.mxu0 %v1378
        %2737 = vmatprep.subr.mxu0 %v1387
        %2738 = vmatpush1.xpose.msra.mxu0 %v1386
        %2739 = vmatprep.subr.mxu0 %v1395
        %2740 = vmatpush1.xpose.msra.mxu0 %v1394
        %2741 = vmatprep.subr.mxu0 %v1403
        %2742 = vmatpush1.xpose.msra.mxu0 %v1402
        %2743 = vmatprep.subr.mxu0 %v1411
        %2744 = vmatpush1.xpose.msra.mxu0 %v1410
        %2745 = vmatprep.subr.mxu0 %v1419
        %2746 = vmatpush1.xpose.msra.mxu0 %v1418
        %2747 = vmatprep.subr.mxu0 %v1427
        %2748 = vmatpush1.xpose.msra.mxu0 %v1426
        %2749 = vmatprep.subr.mxu0 %v1435
        %2750 = vmatpush1.xpose.msra.mxu0 %v1434
        %2751 = vmatprep.subr.mxu0 %v1443
        %2752 = vmatpush1.xpose.msra.mxu0 %v1442
        %2753 = vmatprep.subr.mxu0 %v1451
        %2754 = vmatpush1.xpose.msra.mxu0 %v1450
        %2755 = vmatprep.subr.mxu0 %v1459
        %2756 = vmatpush1.xpose.msra.mxu0 %v1458
        %2757 = vmatprep.subr.mxu0 %v1467
        %2758 = vmatpush1.xpose.msra.mxu0 %v1466
        %2759 = vmatprep.subr.mxu0 %v1475
        %2760 = vmatpush1.xpose.msra.mxu0 %v1474
        %2761 = vmatprep.subr.mxu0 %v1483
        %2762 = vmatpush1.xpose.msra.mxu0 %v1482
        %2763 = vmatprep.subr.mxu0 %v1491
        %2764 = vmatpush1.xpose.msra.mxu0 %v1490
        %2765 = vmatprep.subr.mxu0 %v1499
        %2766 = vmatpush1.xpose.msra.mxu0 %v1498
        %2767 = vmatprep.subr.mxu0 %v1507
        %2768 = vmatpush1.xpose.msra.mxu0 %v1506
        %2769 = vmatprep.subr.mxu0 %v1515
        %2770 = vmatpush1.xpose.msra.mxu0 %v1514
        %2771 = vmatprep.subr.mxu0 %v1523
        %2772 = vmatpush1.xpose.msra.mxu0 %v1522
        %2773 = vmatprep.subr.mxu0 %v1531
        %2774 = vmatpush1.xpose.msra.mxu0 %v1530
        %2775 = vmatprep.subr.mxu0 %v1539
        %2776 = vmatpush1.xpose.msra.mxu0 %v1538
        %2777 = vmatprep.subr.mxu0 %v1547
        %2778 = vmatpush1.xpose.msra.mxu0 %v1546
        %2779 = vmatprep.subr.mxu0 %v1555
        %2780 = vmatpush1.xpose.msra.mxu0 %v1554
        %2781 = vmatprep.subr.mxu0 %v1563
        %2782 = vmatpush1.xpose.msra.mxu0 %v1562
        %2783 = vmatprep.subr.mxu0 %v1571
        %2784 = vmatpush1.xpose.msra.mxu0 %v1570
        %2785 = vmatprep.subr.mxu0 %v1579
        %2786 = vmatpush1.xpose.msra.mxu0 %v1578
        %2787 = vmatprep.subr.mxu0 %v1587
        %2788 = vmatpush1.xpose.msra.mxu0 %v1586
        %2789 = vmatprep.subr.mxu0 %v1595
        %2790 = vmatpush1.xpose.msra.mxu0 %v1594
        %2791 = vmatprep.mubr.f32.mxu0 %v1291
        %2792 = vmatmul.mubr.f32.gmra.mrb[0].mxu0 %v1290
        %v2793 = vpop.f32.mrb[0].mxu0
        %v2794 = vadd.f32 %v2687, %v2793
        %v2795 = vpop.f32.mrb[0].mxu0
        %v2796 = vadd.f32 %v2689, %v2795
        %2797 = vmatprep.mubr.f32.mxu0 %v1299
        %2798 = vmatmul.mubr.f32.gmra.mrb[0].mxu0 %v1298
        %v2799 = vpop.f32.mrb[0].mxu0
        %v2800 = vadd.f32 %v2693, %v2799
        %v2801 = vpop.f32.mrb[0].mxu0
        %v2802 = vadd.f32 %v2695, %v2801
        %2803 = vmatprep.mubr.f32.mxu0 %v1307
        %2804 = vmatmul.mubr.f32.gmra.mrb[0].mxu0 %v1306
        %v2805 = vpop.f32.mrb[0].mxu0
        %v2806 = vadd.f32 %v2699, %v2805
        %v2807 = vpop.f32.mrb[0].mxu0
        %v2808 = vadd.f32 %v2701, %v2807
        %2809 = vmatprep.mubr.f32.mxu0 %v1315
        %2810 = vmatmul.mubr.f32.gmra.mrb[0].mxu0 %v1314
        %v2811 = vpop.f32.mrb[0].mxu0
        %v2812 = vadd.f32 %v2705, %v2811
        %v2813 = vpop.f32.mrb[0].mxu0
        %v2814 = vadd.f32 %v2707, %v2813
        %2815 = vmatprep.mubr.f32.mxu0 %v1323
        %2816 = vmatmul.mubr.f32.gmra.mrb[0].mxu0 %v1322
        %v2817 = vpop.f32.mrb[0].mxu0
        %v2818 = vadd.f32 %v2711, %v2817
        %v2819 = vpop.f32.mrb[0].mxu0
        %v2820 = vadd.f32 %v2713, %v2819
        %2821 = vmatprep.mubr.f32.mxu0 %v1331
        %2822 = vmatmul.mubr.f32.gmra.mrb[0].mxu0 %v1330
        %v2823 = vpop.f32.mrb[0].mxu0
        %v2824 = vadd.f32 %v2717, %v2823
        %v2825 = vpop.f32.mrb[0].mxu0
        %v2826 = vadd.f32 %v2719, %v2825
        %2827 = vmatprep.mubr.f32.mxu0 %v1339
        %2828 = vmatmul.mubr.f32.gmra.mrb[0].mxu0 %v1338
        %v2829 = vpop.f32.mrb[0].mxu0
        %v2830 = vadd.f32 %v2723, %v2829
        %v2831 = vpop.f32.mrb[0].mxu0
        %v2832 = vadd.f32 %v2725, %v2831
        %2833 = vdwg.mxu0
        %2834 = vmatprep.subr.mxu0 %v1597
        %2835 = vmatpush1.xpose.msra.mxu0 %v1596
        %2836 = vmatprep.subr.mxu0 %v1605
        %2837 = vmatpush1.xpose.msra.mxu0 %v1604
        %2838 = vmatprep.subr.mxu0 %v1613
        %2839 = vmatpush1.xpose.msra.mxu0 %v1612
        %2840 = vmatprep.subr.mxu0 %v1621
        %2841 = vmatpush1.xpose.msra.mxu0 %v1620
        %2842 = vmatprep.subr.mxu0 %v1629
        %2843 = vmatpush1.xpose.msra.mxu0 %v1628
        %2844 = vmatprep.subr.mxu0 %v1637
        %2845 = vmatpush1.xpose.msra.mxu0 %v1636
        %2846 = vmatprep.subr.mxu0 %v1645
        %2847 = vmatpush1.xpose.msra.mxu0 %v1644
        %2848 = vmatprep.subr.mxu0 %v1653
        %2849 = vmatpush1.xpose.msra.mxu0 %v1652
        %2850 = vmatprep.subr.mxu0 %v1661
        %2851 = vmatpush1.xpose.msra.mxu0 %v1660
        %2852 = vmatprep.subr.mxu0 %v1669
        %2853 = vmatpush1.xpose.msra.mxu0 %v1668
        %2854 = vmatprep.subr.mxu0 %v1677
        %2855 = vmatpush1.xpose.msra.mxu0 %v1676
        %2856 = vmatprep.subr.mxu0 %v1685
        %2857 = vmatpush1.xpose.msra.mxu0 %v1684
        %2858 = vmatprep.subr.mxu0 %v1693
        %2859 = vmatpush1.xpose.msra.mxu0 %v1692
        %2860 = vmatprep.subr.mxu0 %v1701
        %2861 = vmatpush1.xpose.msra.mxu0 %v1700
        %2862 = vmatprep.subr.mxu0 %v1709
        %2863 = vmatpush1.xpose.msra.mxu0 %v1708
        %2864 = vmatprep.subr.mxu0 %v1717
        %2865 = vmatpush1.xpose.msra.mxu0 %v1716
        %2866 = vmatprep.subr.mxu0 %v1725
        %2867 = vmatpush1.xpose.msra.mxu0 %v1724
        %2868 = vmatprep.subr.mxu0 %v1733
        %2869 = vmatpush1.xpose.msra.mxu0 %v1732
        %2870 = vmatprep.subr.mxu0 %v1741
        %2871 = vmatpush1.xpose.msra.mxu0 %v1740
        %2872 = vmatprep.subr.mxu0 %v1749
        %2873 = vmatpush1.xpose.msra.mxu0 %v1748
        %2874 = vmatprep.subr.mxu0 %v1757
        %2875 = vmatpush1.xpose.msra.mxu0 %v1756
        %2876 = vmatprep.subr.mxu0 %v1765
        %2877 = vmatpush1.xpose.msra.mxu0 %v1764
        %2878 = vmatprep.subr.mxu0 %v1773
        %2879 = vmatpush1.xpose.msra.mxu0 %v1772
        %2880 = vmatprep.subr.mxu0 %v1781
        %2881 = vmatpush1.xpose.msra.mxu0 %v1780
        %2882 = vmatprep.subr.mxu0 %v1789
        %2883 = vmatpush1.xpose.msra.mxu0 %v1788
        %2884 = vmatprep.subr.mxu0 %v1797
        %2885 = vmatpush1.xpose.msra.mxu0 %v1796
        %2886 = vmatprep.subr.mxu0 %v1805
        %2887 = vmatpush1.xpose.msra.mxu0 %v1804
        %2888 = vmatprep.subr.mxu0 %v1813
        %2889 = vmatpush1.xpose.msra.mxu0 %v1812
        %2890 = vmatprep.subr.mxu0 %v1821
        %2891 = vmatpush1.xpose.msra.mxu0 %v1820
        %2892 = vmatprep.subr.mxu0 %v1829
        %2893 = vmatpush1.xpose.msra.mxu0 %v1828
        %2894 = vmatprep.subr.mxu0 %v1837
        %2895 = vmatpush1.xpose.msra.mxu0 %v1836
        %2896 = vmatprep.subr.mxu0 %v1845
        %2897 = vmatpush1.xpose.msra.mxu0 %v1844
        %2898 = vmatprep.mubr.f32.mxu0 %v1285
        %2899 = vmatmul.mubr.f32.gmra.mrb[0].mxu0 %v1284
        %v2900 = vpop.f32.mrb[0].mxu0
        %v2901 = vadd.f32 %v2377, %v2900
        %v2902 = vpop.f32.mrb[0].mxu0
        %v2903 = vadd.f32 %v2381, %v2902
        %2904 = vmatprep.mubr.f32.mxu0 %v1293
        %2905 = vmatmul.mubr.f32.gmra.mrb[0].mxu0 %v1292
        %v2906 = vpop.f32.mrb[0].mxu0
        %v2907 = vadd.f32 %v2377, %v2906
        %v2908 = vpop.f32.mrb[0].mxu0
        %v2909 = vadd.f32 %v2381, %v2908
        %2910 = vmatprep.mubr.f32.mxu0 %v1301
        %2911 = vmatmul.mubr.f32.gmra.mrb[0].mxu0 %v1300
        %v2912 = vpop.f32.mrb[0].mxu0
        %v2913 = vadd.f32 %v2377, %v2912
        %v2914 = vpop.f32.mrb[0].mxu0
        %v2915 = vadd.f32 %v2381, %v2914
        %2916 = vmatprep.mubr.f32.mxu0 %v1309
        %2917 = vmatmul.mubr.f32.gmra.mrb[0].mxu0 %v1308
        %v2918 = vpop.f32.mrb[0].mxu0
        %v2919 = vadd.f32 %v2377, %v2918
        %v2920 = vpop.f32.mrb[0].mxu0
        %v2921 = vadd.f32 %v2381, %v2920
        %2922 = vmatprep.mubr.f32.mxu0 %v1317
        %2923 = vmatmul.mubr.f32.gmra.mrb[0].mxu0 %v1316
        %v2924 = vpop.f32.mrb[0].mxu0
        %v2925 = vadd.f32 %v2377, %v2924
        %v2926 = vpop.f32.mrb[0].mxu0
        %v2927 = vadd.f32 %v2381, %v2926
        %2928 = vmatprep.mubr.f32.mxu0 %v1325
        %2929 = vmatmul.mubr.f32.gmra.mrb[0].mxu0 %v1324
        %v2930 = vpop.f32.mrb[0].mxu0
        %v2931 = vadd.f32 %v2377, %v2930
        %v2932 = vpop.f32.mrb[0].mxu0
        %v2933 = vadd.f32 %v2381, %v2932
        %2934 = vmatprep.mubr.f32.mxu0 %v1333
        %2935 = vmatmul.mubr.f32.gmra.mrb[0].mxu0 %v1332
        %v2936 = vpop.f32.mrb[0].mxu0
        %v2937 = vadd.f32 %v2377, %v2936
        %v2938 = vpop.f32.mrb[0].mxu0
        %v2939 = vadd.f32 %v2381, %v2938
        %2940 = vdwg.mxu0
        %2941 = vmatprep.subr.mxu0 %v1599
        %2942 = vmatpush1.xpose.msra.mxu0 %v1598
        %2943 = vmatprep.subr.mxu0 %v1607
        %2944 = vmatpush1.xpose.msra.mxu0 %v1606
        %2945 = vmatprep.subr.mxu0 %v1615
        %2946 = vmatpush1.xpose.msra.mxu0 %v1614
        %2947 = vmatprep.subr.mxu0 %v1623
        %2948 = vmatpush1.xpose.msra.mxu0 %v1622
        %2949 = vmatprep.subr.mxu0 %v1631
        %2950 = vmatpush1.xpose.msra.mxu0 %v1630
        %2951 = vmatprep.subr.mxu0 %v1639
        %2952 = vmatpush1.xpose.msra.mxu0 %v1638
        %2953 = vmatprep.subr.mxu0 %v1647
        %2954 = vmatpush1.xpose.msra.mxu0 %v1646
        %2955 = vmatprep.subr.mxu0 %v1655
        %2956 = vmatpush1.xpose.msra.mxu0 %v1654
        %2957 = vmatprep.subr.mxu0 %v1663
        %2958 = vmatpush1.xpose.msra.mxu0 %v1662
        %2959 = vmatprep.subr.mxu0 %v1671
        %2960 = vmatpush1.xpose.msra.mxu0 %v1670
        %2961 = vmatprep.subr.mxu0 %v1679
        %2962 = vmatpush1.xpose.msra.mxu0 %v1678
        %2963 = vmatprep.subr.mxu0 %v1687
        %2964 = vmatpush1.xpose.msra.mxu0 %v1686
        %2965 = vmatprep.subr.mxu0 %v1695
        %2966 = vmatpush1.xpose.msra.mxu0 %v1694
        %2967 = vmatprep.subr.mxu0 %v1703
        %2968 = vmatpush1.xpose.msra.mxu0 %v1702
        %2969 = vmatprep.subr.mxu0 %v1711
        %2970 = vmatpush1.xpose.msra.mxu0 %v1710
        %2971 = vmatprep.subr.mxu0 %v1719
        %2972 = vmatpush1.xpose.msra.mxu0 %v1718
        %2973 = vmatprep.subr.mxu0 %v1727
        %2974 = vmatpush1.xpose.msra.mxu0 %v1726
        %2975 = vmatprep.subr.mxu0 %v1735
        %2976 = vmatpush1.xpose.msra.mxu0 %v1734
        %2977 = vmatprep.subr.mxu0 %v1743
        %2978 = vmatpush1.xpose.msra.mxu0 %v1742
        %2979 = vmatprep.subr.mxu0 %v1751
        %2980 = vmatpush1.xpose.msra.mxu0 %v1750
        %2981 = vmatprep.subr.mxu0 %v1759
        %2982 = vmatpush1.xpose.msra.mxu0 %v1758
        %2983 = vmatprep.subr.mxu0 %v1767
        %2984 = vmatpush1.xpose.msra.mxu0 %v1766
        %2985 = vmatprep.subr.mxu0 %v1775
        %2986 = vmatpush1.xpose.msra.mxu0 %v1774
        %2987 = vmatprep.subr.mxu0 %v1783
        %2988 = vmatpush1.xpose.msra.mxu0 %v1782
        %2989 = vmatprep.subr.mxu0 %v1791
        %2990 = vmatpush1.xpose.msra.mxu0 %v1790
        %2991 = vmatprep.subr.mxu0 %v1799
        %2992 = vmatpush1.xpose.msra.mxu0 %v1798
        %2993 = vmatprep.subr.mxu0 %v1807
        %2994 = vmatpush1.xpose.msra.mxu0 %v1806
        %2995 = vmatprep.subr.mxu0 %v1815
        %2996 = vmatpush1.xpose.msra.mxu0 %v1814
        %2997 = vmatprep.subr.mxu0 %v1823
        %2998 = vmatpush1.xpose.msra.mxu0 %v1822
        %2999 = vmatprep.subr.mxu0 %v1831
        %3000 = vmatpush1.xpose.msra.mxu0 %v1830
        %3001 = vmatprep.subr.mxu0 %v1839
        %3002 = vmatpush1.xpose.msra.mxu0 %v1838
        %3003 = vmatprep.subr.mxu0 %v1847
        %3004 = vmatpush1.xpose.msra.mxu0 %v1846
        %3005 = vmatprep.mubr.f32.mxu0 %v1287
        %3006 = vmatmul.mubr.f32.gmra.mrb[0].mxu0 %v1286
        %v3007 = vpop.f32.mrb[0].mxu0
        %v3008 = vadd.f32 %v2901, %v3007
        %v3009 = vpop.f32.mrb[0].mxu0
        %v3010 = vadd.f32 %v2903, %v3009
        %3011 = vmatprep.mubr.f32.mxu0 %v1295
        %3012 = vmatmul.mubr.f32.gmra.mrb[0].mxu0 %v1294
        %v3013 = vpop.f32.mrb[0].mxu0
        %v3014 = vadd.f32 %v2907, %v3013
        %v3015 = vpop.f32.mrb[0].mxu0
        %v3016 = vadd.f32 %v2909, %v3015
        %3017 = vmatprep.mubr.f32.mxu0 %v1303
        %3018 = vmatmul.mubr.f32.gmra.mrb[0].mxu0 %v1302
        %v3019 = vpop.f32.mrb[0].mxu0
        %v3020 = vadd.f32 %v2913, %v3019
        %v3021 = vpop.f32.mrb[0].mxu0
        %v3022 = vadd.f32 %v2915, %v3021
        %3023 = vmatprep.mubr.f32.mxu0 %v1311
        %3024 = vmatmul.mubr.f32.gmra.mrb[0].mxu0 %v1310
        %v3025 = vpop.f32.mrb[0].mxu0
        %v3026 = vadd.f32 %v2919, %v3025
        %v3027 = vpop.f32.mrb[0].mxu0
        %v3028 = vadd.f32 %v2921, %v3027
        %3029 = vmatprep.mubr.f32.mxu0 %v1319
        %3030 = vmatmul.mubr.f32.gmra.mrb[0].mxu0 %v1318
        %v3031 = vpop.f32.mrb[0].mxu0
        %v3032 = vadd.f32 %v2925, %v3031
        %v3033 = vpop.f32.mrb[0].mxu0
        %v3034 = vadd.f32 %v2927, %v3033
        %3035 = vmatprep.mubr.f32.mxu0 %v1327
        %3036 = vmatmul.mubr.f32.gmra.mrb[0].mxu0 %v1326
        %v3037 = vpop.f32.mrb[0].mxu0
        %v3038 = vadd.f32 %v2931, %v3037
        %v3039 = vpop.f32.mrb[0].mxu0
        %v3040 = vadd.f32 %v2933, %v3039
        %3041 = vmatprep.mubr.f32.mxu0 %v1335
        %3042 = vmatmul.mubr.f32.gmra.mrb[0].mxu0 %v1334
        %v3043 = vpop.f32.mrb[0].mxu0
        %v3044 = vadd.f32 %v2937, %v3043
        %v3045 = vpop.f32.mrb[0].mxu0
        %v3046 = vadd.f32 %v2939, %v3045
        %3047 = vdwg.mxu0
        %3048 = vmatprep.subr.mxu0 %v1601
        %3049 = vmatpush1.xpose.msra.mxu0 %v1600
        %3050 = vmatprep.subr.mxu0 %v1609
        %3051 = vmatpush1.xpose.msra.mxu0 %v1608
        %3052 = vmatprep.subr.mxu0 %v1617
        %3053 = vmatpush1.xpose.msra.mxu0 %v1616
        %3054 = vmatprep.subr.mxu0 %v1625
        %3055 = vmatpush1.xpose.msra.mxu0 %v1624
        %3056 = vmatprep.subr.mxu0 %v1633
        %3057 = vmatpush1.xpose.msra.mxu0 %v1632
        %3058 = vmatprep.subr.mxu0 %v1641
        %3059 = vmatpush1.xpose.msra.mxu0 %v1640
        %3060 = vmatprep.subr.mxu0 %v1649
        %3061 = vmatpush1.xpose.msra.mxu0 %v1648
        %3062 = vmatprep.subr.mxu0 %v1657
        %3063 = vmatpush1.xpose.msra.mxu0 %v1656
        %3064 = vmatprep.subr.mxu0 %v1665
        %3065 = vmatpush1.xpose.msra.mxu0 %v1664
        %3066 = vmatprep.subr.mxu0 %v1673
        %3067 = vmatpush1.xpose.msra.mxu0 %v1672
        %3068 = vmatprep.subr.mxu0 %v1681
        %3069 = vmatpush1.xpose.msra.mxu0 %v1680
        %3070 = vmatprep.subr.mxu0 %v1689
        %3071 = vmatpush1.xpose.msra.mxu0 %v1688
        %3072 = vmatprep.subr.mxu0 %v1697
        %3073 = vmatpush1.xpose.msra.mxu0 %v1696
        %3074 = vmatprep.subr.mxu0 %v1705
        %3075 = vmatpush1.xpose.msra.mxu0 %v1704
        %3076 = vmatprep.subr.mxu0 %v1713
        %3077 = vmatpush1.xpose.msra.mxu0 %v1712
        %3078 = vmatprep.subr.mxu0 %v1721
        %3079 = vmatpush1.xpose.msra.mxu0 %v1720
        %3080 = vmatprep.subr.mxu0 %v1729
        %3081 = vmatpush1.xpose.msra.mxu0 %v1728
        %3082 = vmatprep.subr.mxu0 %v1737
        %3083 = vmatpush1.xpose.msra.mxu0 %v1736
        %3084 = vmatprep.subr.mxu0 %v1745
        %3085 = vmatpush1.xpose.msra.mxu0 %v1744
        %3086 = vmatprep.subr.mxu0 %v1753
        %3087 = vmatpush1.xpose.msra.mxu0 %v1752
        %3088 = vmatprep.subr.mxu0 %v1761
        %3089 = vmatpush1.xpose.msra.mxu0 %v1760
        %3090 = vmatprep.subr.mxu0 %v1769
        %3091 = vmatpush1.xpose.msra.mxu0 %v1768
        %3092 = vmatprep.subr.mxu0 %v1777
        %3093 = vmatpush1.xpose.msra.mxu0 %v1776
        %3094 = vmatprep.subr.mxu0 %v1785
        %3095 = vmatpush1.xpose.msra.mxu0 %v1784
        %3096 = vmatprep.subr.mxu0 %v1793
        %3097 = vmatpush1.xpose.msra.mxu0 %v1792
        %3098 = vmatprep.subr.mxu0 %v1801
        %3099 = vmatpush1.xpose.msra.mxu0 %v1800
        %3100 = vmatprep.subr.mxu0 %v1809
        %3101 = vmatpush1.xpose.msra.mxu0 %v1808
        %3102 = vmatprep.subr.mxu0 %v1817
        %3103 = vmatpush1.xpose.msra.mxu0 %v1816
        %3104 = vmatprep.subr.mxu0 %v1825
        %3105 = vmatpush1.xpose.msra.mxu0 %v1824
        %3106 = vmatprep.subr.mxu0 %v1833
        %3107 = vmatpush1.xpose.msra.mxu0 %v1832
        %3108 = vmatprep.subr.mxu0 %v1841
        %3109 = vmatpush1.xpose.msra.mxu0 %v1840
        %3110 = vmatprep.subr.mxu0 %v1849
        %3111 = vmatpush1.xpose.msra.mxu0 %v1848
        %3112 = vmatprep.mubr.f32.mxu0 %v1289
        %3113 = vmatmul.mubr.f32.gmra.mrb[0].mxu0 %v1288
        %v3114 = vpop.f32.mrb[0].mxu0
        %v3115 = vadd.f32 %v3008, %v3114
        %v3116 = vpop.f32.mrb[0].mxu0
        %v3117 = vadd.f32 %v3010, %v3116
        %3118 = vmatprep.mubr.f32.mxu0 %v1297
        %3119 = vmatmul.mubr.f32.gmra.mrb[0].mxu0 %v1296
        %v3120 = vpop.f32.mrb[0].mxu0
        %v3121 = vadd.f32 %v3014, %v3120
        %v3122 = vpop.f32.mrb[0].mxu0
        %v3123 = vadd.f32 %v3016, %v3122
        %3124 = vmatprep.mubr.f32.mxu0 %v1305
        %3125 = vmatmul.mubr.f32.gmra.mrb[0].mxu0 %v1304
        %v3126 = vpop.f32.mrb[0].mxu0
        %v3127 = vadd.f32 %v3020, %v3126
        %v3128 = vpop.f32.mrb[0].mxu0
        %v3129 = vadd.f32 %v3022, %v3128
        %3130 = vmatprep.mubr.f32.mxu0 %v1313
        %3131 = vmatmul.mubr.f32.gmra.mrb[0].mxu0 %v1312
        %v3132 = vpop.f32.mrb[0].mxu0
        %v3133 = vadd.f32 %v3026, %v3132
        %v3134 = vpop.f32.mrb[0].mxu0
        %v3135 = vadd.f32 %v3028, %v3134
        %3136 = vmatprep.mubr.f32.mxu0 %v1321
        %3137 = vmatmul.mubr.f32.gmra.mrb[0].mxu0 %v1320
        %v3138 = vpop.f32.mrb[0].mxu0
        %v3139 = vadd.f32 %v3032, %v3138
        %v3140 = vpop.f32.mrb[0].mxu0
        %v3141 = vadd.f32 %v3034, %v3140
        %3142 = vmatprep.mubr.f32.mxu0 %v1329
        %3143 = vmatmul.mubr.f32.gmra.mrb[0].mxu0 %v1328
        %v3144 = vpop.f32.mrb[0].mxu0
        %v3145 = vadd.f32 %v3038, %v3144
        %v3146 = vpop.f32.mrb[0].mxu0
        %v3147 = vadd.f32 %v3040, %v3146
        %3148 = vmatprep.mubr.f32.mxu0 %v1337
        %3149 = vmatmul.mubr.f32.gmra.mrb[0].mxu0 %v1336
        %v3150 = vpop.f32.mrb[0].mxu0
        %v3151 = vadd.f32 %v3044, %v3150
        %v3152 = vpop.f32.mrb[0].mxu0
        %v3153 = vadd.f32 %v3046, %v3152
        %3154 = vdwg.mxu0
        %3155 = vmatprep.subr.mxu0 %v1603
        %3156 = vmatpush1.xpose.msra.mxu0 %v1602
        %3157 = vmatprep.subr.mxu0 %v1611
        %3158 = vmatpush1.xpose.msra.mxu0 %v1610
        %3159 = vmatprep.subr.mxu0 %v1619
        %3160 = vmatpush1.xpose.msra.mxu0 %v1618
        %3161 = vmatprep.subr.mxu0 %v1627
        %3162 = vmatpush1.xpose.msra.mxu0 %v1626
        %3163 = vmatprep.subr.mxu0 %v1635
        %3164 = vmatpush1.xpose.msra.mxu0 %v1634
        %3165 = vmatprep.subr.mxu0 %v1643
        %3166 = vmatpush1.xpose.msra.mxu0 %v1642
        %3167 = vmatprep.subr.mxu0 %v1651
        %3168 = vmatpush1.xpose.msra.mxu0 %v1650
        %3169 = vmatprep.subr.mxu0 %v1659
        %3170 = vmatpush1.xpose.msra.mxu0 %v1658
        %3171 = vmatprep.subr.mxu0 %v1667
        %3172 = vmatpush1.xpose.msra.mxu0 %v1666
        %3173 = vmatprep.subr.mxu0 %v1675
        %3174 = vmatpush1.xpose.msra.mxu0 %v1674
        %3175 = vmatprep.subr.mxu0 %v1683
        %3176 = vmatpush1.xpose.msra.mxu0 %v1682
        %3177 = vmatprep.subr.mxu0 %v1691
        %3178 = vmatpush1.xpose.msra.mxu0 %v1690
        %3179 = vmatprep.subr.mxu0 %v1699
        %3180 = vmatpush1.xpose.msra.mxu0 %v1698
        %3181 = vmatprep.subr.mxu0 %v1707
        %3182 = vmatpush1.xpose.msra.mxu0 %v1706
        %3183 = vmatprep.subr.mxu0 %v1715
        %3184 = vmatpush1.xpose.msra.mxu0 %v1714
        %3185 = vmatprep.subr.mxu0 %v1723
        %3186 = vmatpush1.xpose.msra.mxu0 %v1722
        %3187 = vmatprep.subr.mxu0 %v1731
        %3188 = vmatpush1.xpose.msra.mxu0 %v1730
        %3189 = vmatprep.subr.mxu0 %v1739
        %3190 = vmatpush1.xpose.msra.mxu0 %v1738
        %3191 = vmatprep.subr.mxu0 %v1747
        %3192 = vmatpush1.xpose.msra.mxu0 %v1746
        %3193 = vmatprep.subr.mxu0 %v1755
        %3194 = vmatpush1.xpose.msra.mxu0 %v1754
        %3195 = vmatprep.subr.mxu0 %v1763
        %3196 = vmatpush1.xpose.msra.mxu0 %v1762
        %3197 = vmatprep.subr.mxu0 %v1771
        %3198 = vmatpush1.xpose.msra.mxu0 %v1770
        %3199 = vmatprep.subr.mxu0 %v1779
        %3200 = vmatpush1.xpose.msra.mxu0 %v1778
        %3201 = vmatprep.subr.mxu0 %v1787
        %3202 = vmatpush1.xpose.msra.mxu0 %v1786
        %3203 = vmatprep.subr.mxu0 %v1795
        %3204 = vmatpush1.xpose.msra.mxu0 %v1794
        %3205 = vmatprep.subr.mxu0 %v1803
        %3206 = vmatpush1.xpose.msra.mxu0 %v1802
        %3207 = vmatprep.subr.mxu0 %v1811
        %3208 = vmatpush1.xpose.msra.mxu0 %v1810
        %3209 = vmatprep.subr.mxu0 %v1819
        %3210 = vmatpush1.xpose.msra.mxu0 %v1818
        %3211 = vmatprep.subr.mxu0 %v1827
        %3212 = vmatpush1.xpose.msra.mxu0 %v1826
        %3213 = vmatprep.subr.mxu0 %v1835
        %3214 = vmatpush1.xpose.msra.mxu0 %v1834
        %3215 = vmatprep.subr.mxu0 %v1843
        %3216 = vmatpush1.xpose.msra.mxu0 %v1842
        %3217 = vmatprep.subr.mxu0 %v1851
        %3218 = vmatpush1.xpose.msra.mxu0 %v1850
        %3219 = vmatprep.mubr.f32.mxu0 %v1291
        %3220 = vmatmul.mubr.f32.gmra.mrb[0].mxu0 %v1290
        %v3221 = vpop.f32.mrb[0].mxu0
        %v3222 = vadd.f32 %v3115, %v3221
        %v3223 = vpop.f32.mrb[0].mxu0
        %v3224 = vadd.f32 %v3117, %v3223
        %3225 = vmatprep.mubr.f32.mxu0 %v1299
        %3226 = vmatmul.mubr.f32.gmra.mrb[0].mxu0 %v1298
        %v3227 = vpop.f32.mrb[0].mxu0
        %v3228 = vadd.f32 %v3121, %v3227
        %v3229 = vpop.f32.mrb[0].mxu0
        %v3230 = vadd.f32 %v3123, %v3229
        %3231 = vmatprep.mubr.f32.mxu0 %v1307
        %3232 = vmatmul.mubr.f32.gmra.mrb[0].mxu0 %v1306
        %v3233 = vpop.f32.mrb[0].mxu0
        %v3234 = vadd.f32 %v3127, %v3233
        %v3235 = vpop.f32.mrb[0].mxu0
        %v3236 = vadd.f32 %v3129, %v3235
        %3237 = vmatprep.mubr.f32.mxu0 %v1315
        %3238 = vmatmul.mubr.f32.gmra.mrb[0].mxu0 %v1314
        %v3239 = vpop.f32.mrb[0].mxu0
        %v3240 = vadd.f32 %v3133, %v3239
        %v3241 = vpop.f32.mrb[0].mxu0
        %v3242 = vadd.f32 %v3135, %v3241
        %3243 = vmatprep.mubr.f32.mxu0 %v1323
        %3244 = vmatmul.mubr.f32.gmra.mrb[0].mxu0 %v1322
        %v3245 = vpop.f32.mrb[0].mxu0
        %v3246 = vadd.f32 %v3139, %v3245
        %v3247 = vpop.f32.mrb[0].mxu0
        %v3248 = vadd.f32 %v3141, %v3247
        %3249 = vmatprep.mubr.f32.mxu0 %v1331
        %3250 = vmatmul.mubr.f32.gmra.mrb[0].mxu0 %v1330
        %v3251 = vpop.f32.mrb[0].mxu0
        %v3252 = vadd.f32 %v3145, %v3251
        %v3253 = vpop.f32.mrb[0].mxu0
        %v3254 = vadd.f32 %v3147, %v3253
        %3255 = vmatprep.mubr.f32.mxu0 %v1339
        %3256 = vmatmul.mubr.f32.gmra.mrb[0].mxu0 %v1338
        %v3257 = vpop.f32.mrb[0].mxu0
        %v3258 = vadd.f32 %v3151, %v3257
        %v3259 = vpop.f32.mrb[0].mxu0
        %v3260 = vadd.f32 %v3153, %v3259
        %3261 = vdwg.mxu0
        %3262 = vmatprep.subr.mxu0 %v1853
        %3263 = vmatpush1.xpose.msra.mxu0 %v1852
        %3264 = vmatprep.subr.mxu0 %v1861
        %3265 = vmatpush1.xpose.msra.mxu0 %v1860
        %3266 = vmatprep.subr.mxu0 %v1869
        %3267 = vmatpush1.xpose.msra.mxu0 %v1868
        %3268 = vmatprep.subr.mxu0 %v1877
        %3269 = vmatpush1.xpose.msra.mxu0 %v1876
        %3270 = vmatprep.subr.mxu0 %v1885
        %3271 = vmatpush1.xpose.msra.mxu0 %v1884
        %3272 = vmatprep.subr.mxu0 %v1893
        %3273 = vmatpush1.xpose.msra.mxu0 %v1892
        %3274 = vmatprep.subr.mxu0 %v1901
        %3275 = vmatpush1.xpose.msra.mxu0 %v1900
        %3276 = vmatprep.subr.mxu0 %v1909
        %3277 = vmatpush1.xpose.msra.mxu0 %v1908
        %3278 = vmatprep.subr.mxu0 %v1917
        %3279 = vmatpush1.xpose.msra.mxu0 %v1916
        %3280 = vmatprep.subr.mxu0 %v1925
        %3281 = vmatpush1.xpose.msra.mxu0 %v1924
        %3282 = vmatprep.subr.mxu0 %v1933
        %3283 = vmatpush1.xpose.msra.mxu0 %v1932
        %3284 = vmatprep.subr.mxu0 %v1941
        %3285 = vmatpush1.xpose.msra.mxu0 %v1940
        %3286 = vmatprep.subr.mxu0 %v1949
        %3287 = vmatpush1.xpose.msra.mxu0 %v1948
        %3288 = vmatprep.subr.mxu0 %v1957
        %3289 = vmatpush1.xpose.msra.mxu0 %v1956
        %3290 = vmatprep.subr.mxu0 %v1965
        %3291 = vmatpush1.xpose.msra.mxu0 %v1964
        %3292 = vmatprep.subr.mxu0 %v1973
        %3293 = vmatpush1.xpose.msra.mxu0 %v1972
        %3294 = vmatprep.subr.mxu0 %v1981
        %3295 = vmatpush1.xpose.msra.mxu0 %v1980
        %3296 = vmatprep.subr.mxu0 %v1989
        %3297 = vmatpush1.xpose.msra.mxu0 %v1988
        %3298 = vmatprep.subr.mxu0 %v1997
        %3299 = vmatpush1.xpose.msra.mxu0 %v1996
        %3300 = vmatprep.subr.mxu0 %v2005
        %3301 = vmatpush1.xpose.msra.mxu0 %v2004
        %3302 = vmatprep.subr.mxu0 %v2013
        %3303 = vmatpush1.xpose.msra.mxu0 %v2012
        %3304 = vmatprep.subr.mxu0 %v2021
        %3305 = vmatpush1.xpose.msra.mxu0 %v2020
        %3306 = vmatprep.subr.mxu0 %v2029
        %3307 = vmatpush1.xpose.msra.mxu0 %v2028
        %3308 = vmatprep.subr.mxu0 %v2037
        %3309 = vmatpush1.xpose.msra.mxu0 %v2036
        %3310 = vmatprep.subr.mxu0 %v2045
        %3311 = vmatpush1.xpose.msra.mxu0 %v2044
        %3312 = vmatprep.subr.mxu0 %v2053
        %3313 = vmatpush1.xpose.msra.mxu0 %v2052
        %3314 = vmatprep.subr.mxu0 %v2061
        %3315 = vmatpush1.xpose.msra.mxu0 %v2060
        %3316 = vmatprep.subr.mxu0 %v2069
        %3317 = vmatpush1.xpose.msra.mxu0 %v2068
        %3318 = vmatprep.subr.mxu0 %v2077
        %3319 = vmatpush1.xpose.msra.mxu0 %v2076
        %3320 = vmatprep.subr.mxu0 %v2085
        %3321 = vmatpush1.xpose.msra.mxu0 %v2084
        %3322 = vmatprep.subr.mxu0 %v2093
        %3323 = vmatpush1.xpose.msra.mxu0 %v2092
        %3324 = vmatprep.subr.mxu0 %v2101
        %3325 = vmatpush1.xpose.msra.mxu0 %v2100
        %3326 = vmatprep.mubr.f32.mxu0 %v1285
        %3327 = vmatmul.mubr.f32.gmra.mrb[0].mxu0 %v1284
        %v3328 = vpop.f32.mrb[0].mxu0
        %v3329 = vadd.f32 %v2385, %v3328
        %v3330 = vpop.f32.mrb[0].mxu0
        %v3331 = vadd.f32 %v2389, %v3330
        %3332 = vmatprep.mubr.f32.mxu0 %v1293
        %3333 = vmatmul.mubr.f32.gmra.mrb[0].mxu0 %v1292
        %v3334 = vpop.f32.mrb[0].mxu0
        %v3335 = vadd.f32 %v2385, %v3334
        %v3336 = vpop.f32.mrb[0].mxu0
        %v3337 = vadd.f32 %v2389, %v3336
        %3338 = vmatprep.mubr.f32.mxu0 %v1301
        %3339 = vmatmul.mubr.f32.gmra.mrb[0].mxu0 %v1300
        %v3340 = vpop.f32.mrb[0].mxu0
        %v3341 = vadd.f32 %v2385, %v3340
        %v3342 = vpop.f32.mrb[0].mxu0
        %v3343 = vadd.f32 %v2389, %v3342
        %3344 = vmatprep.mubr.f32.mxu0 %v1309
        %3345 = vmatmul.mubr.f32.gmra.mrb[0].mxu0 %v1308
        %v3346 = vpop.f32.mrb[0].mxu0
        %v3347 = vadd.f32 %v2385, %v3346
        %v3348 = vpop.f32.mrb[0].mxu0
        %v3349 = vadd.f32 %v2389, %v3348
        %3350 = vmatprep.mubr.f32.mxu0 %v1317
        %3351 = vmatmul.mubr.f32.gmra.mrb[0].mxu0 %v1316
        %v3352 = vpop.f32.mrb[0].mxu0
        %v3353 = vadd.f32 %v2385, %v3352
        %v3354 = vpop.f32.mrb[0].mxu0
        %v3355 = vadd.f32 %v2389, %v3354
        %3356 = vmatprep.mubr.f32.mxu0 %v1325
        %3357 = vmatmul.mubr.f32.gmra.mrb[0].mxu0 %v1324
        %v3358 = vpop.f32.mrb[0].mxu0
        %v3359 = vadd.f32 %v2385, %v3358
        %v3360 = vpop.f32.mrb[0].mxu0
        %v3361 = vadd.f32 %v2389, %v3360
        %3362 = vmatprep.mubr.f32.mxu0 %v1333
        %3363 = vmatmul.mubr.f32.gmra.mrb[0].mxu0 %v1332
        %v3364 = vpop.f32.mrb[0].mxu0
        %v3365 = vadd.f32 %v2385, %v3364
        %v3366 = vpop.f32.mrb[0].mxu0
        %v3367 = vadd.f32 %v2389, %v3366
        %3368 = vdwg.mxu0
        %3369 = vmatprep.subr.mxu0 %v1855
        %3370 = vmatpush1.xpose.msra.mxu0 %v1854
        %3371 = vmatprep.subr.mxu0 %v1863
        %3372 = vmatpush1.xpose.msra.mxu0 %v1862
        %3373 = vmatprep.subr.mxu0 %v1871
        %3374 = vmatpush1.xpose.msra.mxu0 %v1870
        %3375 = vmatprep.subr.mxu0 %v1879
        %3376 = vmatpush1.xpose.msra.mxu0 %v1878
        %3377 = vmatprep.subr.mxu0 %v1887
        %3378 = vmatpush1.xpose.msra.mxu0 %v1886
        %3379 = vmatprep.subr.mxu0 %v1895
        %3380 = vmatpush1.xpose.msra.mxu0 %v1894
        %3381 = vmatprep.subr.mxu0 %v1903
        %3382 = vmatpush1.xpose.msra.mxu0 %v1902
        %3383 = vmatprep.subr.mxu0 %v1911
        %3384 = vmatpush1.xpose.msra.mxu0 %v1910
        %3385 = vmatprep.subr.mxu0 %v1919
        %3386 = vmatpush1.xpose.msra.mxu0 %v1918
        %3387 = vmatprep.subr.mxu0 %v1927
        %3388 = vmatpush1.xpose.msra.mxu0 %v1926
        %3389 = vmatprep.subr.mxu0 %v1935
        %3390 = vmatpush1.xpose.msra.mxu0 %v1934
        %3391 = vmatprep.subr.mxu0 %v1943
        %3392 = vmatpush1.xpose.msra.mxu0 %v1942
        %3393 = vmatprep.subr.mxu0 %v1951
        %3394 = vmatpush1.xpose.msra.mxu0 %v1950
        %3395 = vmatprep.subr.mxu0 %v1959
        %3396 = vmatpush1.xpose.msra.mxu0 %v1958
        %3397 = vmatprep.subr.mxu0 %v1967
        %3398 = vmatpush1.xpose.msra.mxu0 %v1966
        %3399 = vmatprep.subr.mxu0 %v1975
        %3400 = vmatpush1.xpose.msra.mxu0 %v1974
        %3401 = vmatprep.subr.mxu0 %v1983
        %3402 = vmatpush1.xpose.msra.mxu0 %v1982
        %3403 = vmatprep.subr.mxu0 %v1991
        %3404 = vmatpush1.xpose.msra.mxu0 %v1990
        %3405 = vmatprep.subr.mxu0 %v1999
        %3406 = vmatpush1.xpose.msra.mxu0 %v1998
        %3407 = vmatprep.subr.mxu0 %v2007
        %3408 = vmatpush1.xpose.msra.mxu0 %v2006
        %3409 = vmatprep.subr.mxu0 %v2015
        %3410 = vmatpush1.xpose.msra.mxu0 %v2014
        %3411 = vmatprep.subr.mxu0 %v2023
        %3412 = vmatpush1.xpose.msra.mxu0 %v2022
        %3413 = vmatprep.subr.mxu0 %v2031
        %3414 = vmatpush1.xpose.msra.mxu0 %v2030
        %3415 = vmatprep.subr.mxu0 %v2039
        %3416 = vmatpush1.xpose.msra.mxu0 %v2038
        %3417 = vmatprep.subr.mxu0 %v2047
        %3418 = vmatpush1.xpose.msra.mxu0 %v2046
        %3419 = vmatprep.subr.mxu0 %v2055
        %3420 = vmatpush1.xpose.msra.mxu0 %v2054
        %3421 = vmatprep.subr.mxu0 %v2063
        %3422 = vmatpush1.xpose.msra.mxu0 %v2062
        %3423 = vmatprep.subr.mxu0 %v2071
        %3424 = vmatpush1.xpose.msra.mxu0 %v2070
        %3425 = vmatprep.subr.mxu0 %v2079
        %3426 = vmatpush1.xpose.msra.mxu0 %v2078
        %3427 = vmatprep.subr.mxu0 %v2087
        %3428 = vmatpush1.xpose.msra.mxu0 %v2086
        %3429 = vmatprep.subr.mxu0 %v2095
        %3430 = vmatpush1.xpose.msra.mxu0 %v2094
        %3431 = vmatprep.subr.mxu0 %v2103
        %3432 = vmatpush1.xpose.msra.mxu0 %v2102
        %3433 = vmatprep.mubr.f32.mxu0 %v1287
        %3434 = vmatmul.mubr.f32.gmra.mrb[0].mxu0 %v1286
        %v3435 = vpop.f32.mrb[0].mxu0
        %v3436 = vadd.f32 %v3329, %v3435
        %v3437 = vpop.f32.mrb[0].mxu0
        %v3438 = vadd.f32 %v3331, %v3437
        %3439 = vmatprep.mubr.f32.mxu0 %v1295
        %3440 = vmatmul.mubr.f32.gmra.mrb[0].mxu0 %v1294
        %v3441 = vpop.f32.mrb[0].mxu0
        %v3442 = vadd.f32 %v3335, %v3441
        %v3443 = vpop.f32.mrb[0].mxu0
        %v3444 = vadd.f32 %v3337, %v3443
        %3445 = vmatprep.mubr.f32.mxu0 %v1303
        %3446 = vmatmul.mubr.f32.gmra.mrb[0].mxu0 %v1302
        %v3447 = vpop.f32.mrb[0].mxu0
        %v3448 = vadd.f32 %v3341, %v3447
        %v3449 = vpop.f32.mrb[0].mxu0
        %v3450 = vadd.f32 %v3343, %v3449
        %3451 = vmatprep.mubr.f32.mxu0 %v1311
        %3452 = vmatmul.mubr.f32.gmra.mrb[0].mxu0 %v1310
        %v3453 = vpop.f32.mrb[0].mxu0
        %v3454 = vadd.f32 %v3347, %v3453
        %v3455 = vpop.f32.mrb[0].mxu0
        %v3456 = vadd.f32 %v3349, %v3455
        %3457 = vmatprep.mubr.f32.mxu0 %v1319
        %3458 = vmatmul.mubr.f32.gmra.mrb[0].mxu0 %v1318
        %v3459 = vpop.f32.mrb[0].mxu0
        %v3460 = vadd.f32 %v3353, %v3459
        %v3461 = vpop.f32.mrb[0].mxu0
        %v3462 = vadd.f32 %v3355, %v3461
        %3463 = vmatprep.mubr.f32.mxu0 %v1327
        %3464 = vmatmul.mubr.f32.gmra.mrb[0].mxu0 %v1326
        %v3465 = vpop.f32.mrb[0].mxu0
        %v3466 = vadd.f32 %v3359, %v3465
        %v3467 = vpop.f32.mrb[0].mxu0
        %v3468 = vadd.f32 %v3361, %v3467
        %3469 = vmatprep.mubr.f32.mxu0 %v1335
        %3470 = vmatmul.mubr.f32.gmra.mrb[0].mxu0 %v1334
        %v3471 = vpop.f32.mrb[0].mxu0
        %v3472 = vadd.f32 %v3365, %v3471
        %v3473 = vpop.f32.mrb[0].mxu0
        %v3474 = vadd.f32 %v3367, %v3473
        %3475 = vdwg.mxu0
        %3476 = vmatprep.subr.mxu0 %v1857
        %3477 = vmatpush1.xpose.msra.mxu0 %v1856
        %3478 = vmatprep.subr.mxu0 %v1865
        %3479 = vmatpush1.xpose.msra.mxu0 %v1864
        %3480 = vmatprep.subr.mxu0 %v1873
        %3481 = vmatpush1.xpose.msra.mxu0 %v1872
        %3482 = vmatprep.subr.mxu0 %v1881
        %3483 = vmatpush1.xpose.msra.mxu0 %v1880
        %3484 = vmatprep.subr.mxu0 %v1889
        %3485 = vmatpush1.xpose.msra.mxu0 %v1888
        %3486 = vmatprep.subr.mxu0 %v1897
        %3487 = vmatpush1.xpose.msra.mxu0 %v1896
        %3488 = vmatprep.subr.mxu0 %v1905
        %3489 = vmatpush1.xpose.msra.mxu0 %v1904
        %3490 = vmatprep.subr.mxu0 %v1913
        %3491 = vmatpush1.xpose.msra.mxu0 %v1912
        %3492 = vmatprep.subr.mxu0 %v1921
        %3493 = vmatpush1.xpose.msra.mxu0 %v1920
        %3494 = vmatprep.subr.mxu0 %v1929
        %3495 = vmatpush1.xpose.msra.mxu0 %v1928
        %3496 = vmatprep.subr.mxu0 %v1937
        %3497 = vmatpush1.xpose.msra.mxu0 %v1936
        %3498 = vmatprep.subr.mxu0 %v1945
        %3499 = vmatpush1.xpose.msra.mxu0 %v1944
        %3500 = vmatprep.subr.mxu0 %v1953
        %3501 = vmatpush1.xpose.msra.mxu0 %v1952
        %3502 = vmatprep.subr.mxu0 %v1961
        %3503 = vmatpush1.xpose.msra.mxu0 %v1960
        %3504 = vmatprep.subr.mxu0 %v1969
        %3505 = vmatpush1.xpose.msra.mxu0 %v1968
        %3506 = vmatprep.subr.mxu0 %v1977
        %3507 = vmatpush1.xpose.msra.mxu0 %v1976
        %3508 = vmatprep.subr.mxu0 %v1985
        %3509 = vmatpush1.xpose.msra.mxu0 %v1984
        %3510 = vmatprep.subr.mxu0 %v1993
        %3511 = vmatpush1.xpose.msra.mxu0 %v1992
        %3512 = vmatprep.subr.mxu0 %v2001
        %3513 = vmatpush1.xpose.msra.mxu0 %v2000
        %3514 = vmatprep.subr.mxu0 %v2009
        %3515 = vmatpush1.xpose.msra.mxu0 %v2008
        %3516 = vmatprep.subr.mxu0 %v2017
        %3517 = vmatpush1.xpose.msra.mxu0 %v2016
        %3518 = vmatprep.subr.mxu0 %v2025
        %3519 = vmatpush1.xpose.msra.mxu0 %v2024
        %3520 = vmatprep.subr.mxu0 %v2033
        %3521 = vmatpush1.xpose.msra.mxu0 %v2032
        %3522 = vmatprep.subr.mxu0 %v2041
        %3523 = vmatpush1.xpose.msra.mxu0 %v2040
        %3524 = vmatprep.subr.mxu0 %v2049
        %3525 = vmatpush1.xpose.msra.mxu0 %v2048
        %3526 = vmatprep.subr.mxu0 %v2057
        %3527 = vmatpush1.xpose.msra.mxu0 %v2056
        %3528 = vmatprep.subr.mxu0 %v2065
        %3529 = vmatpush1.xpose.msra.mxu0 %v2064
        %3530 = vmatprep.subr.mxu0 %v2073
        %3531 = vmatpush1.xpose.msra.mxu0 %v2072
        %3532 = vmatprep.subr.mxu0 %v2081
        %3533 = vmatpush1.xpose.msra.mxu0 %v2080
        %3534 = vmatprep.subr.mxu0 %v2089
        %3535 = vmatpush1.xpose.msra.mxu0 %v2088
        %3536 = vmatprep.subr.mxu0 %v2097
        %3537 = vmatpush1.xpose.msra.mxu0 %v2096
        %3538 = vmatprep.subr.mxu0 %v2105
        %3539 = vmatpush1.xpose.msra.mxu0 %v2104
        %3540 = vmatprep.mubr.f32.mxu0 %v1289
        %3541 = vmatmul.mubr.f32.gmra.mrb[0].mxu0 %v1288
        %v3542 = vpop.f32.mrb[0].mxu0
        %v3543 = vadd.f32 %v3436, %v3542
        %v3544 = vpop.f32.mrb[0].mxu0
        %v3545 = vadd.f32 %v3438, %v3544
        %3546 = vmatprep.mubr.f32.mxu0 %v1297
        %3547 = vmatmul.mubr.f32.gmra.mrb[0].mxu0 %v1296
        %v3548 = vpop.f32.mrb[0].mxu0
        %v3549 = vadd.f32 %v3442, %v3548
        %v3550 = vpop.f32.mrb[0].mxu0
        %v3551 = vadd.f32 %v3444, %v3550
        %3552 = vmatprep.mubr.f32.mxu0 %v1305
        %3553 = vmatmul.mubr.f32.gmra.mrb[0].mxu0 %v1304
        %v3554 = vpop.f32.mrb[0].mxu0
        %v3555 = vadd.f32 %v3448, %v3554
        %v3556 = vpop.f32.mrb[0].mxu0
        %v3557 = vadd.f32 %v3450, %v3556
        %3558 = vmatprep.mubr.f32.mxu0 %v1313
        %3559 = vmatmul.mubr.f32.gmra.mrb[0].mxu0 %v1312
        %v3560 = vpop.f32.mrb[0].mxu0
        %v3561 = vadd.f32 %v3454, %v3560
        %v3562 = vpop.f32.mrb[0].mxu0
        %v3563 = vadd.f32 %v3456, %v3562
        %3564 = vmatprep.mubr.f32.mxu0 %v1321
        %3565 = vmatmul.mubr.f32.gmra.mrb[0].mxu0 %v1320
        %v3566 = vpop.f32.mrb[0].mxu0
        %v3567 = vadd.f32 %v3460, %v3566
        %v3568 = vpop.f32.mrb[0].mxu0
        %v3569 = vadd.f32 %v3462, %v3568
        %3570 = vmatprep.mubr.f32.mxu0 %v1329
        %3571 = vmatmul.mubr.f32.gmra.mrb[0].mxu0 %v1328
        %v3572 = vpop.f32.mrb[0].mxu0
        %v3573 = vadd.f32 %v3466, %v3572
        %v3574 = vpop.f32.mrb[0].mxu0
        %v3575 = vadd.f32 %v3468, %v3574
        %3576 = vmatprep.mubr.f32.mxu0 %v1337
        %3577 = vmatmul.mubr.f32.gmra.mrb[0].mxu0 %v1336
        %v3578 = vpop.f32.mrb[0].mxu0
        %v3579 = vadd.f32 %v3472, %v3578
        %v3580 = vpop.f32.mrb[0].mxu0
        %v3581 = vadd.f32 %v3474, %v3580
        %3582 = vdwg.mxu0
        %3583 = vmatprep.subr.mxu0 %v1859
        %3584 = vmatpush1.xpose.msra.mxu0 %v1858
        %3585 = vmatprep.subr.mxu0 %v1867
        %3586 = vmatpush1.xpose.msra.mxu0 %v1866
        %3587 = vmatprep.subr.mxu0 %v1875
        %3588 = vmatpush1.xpose.msra.mxu0 %v1874
        %3589 = vmatprep.subr.mxu0 %v1883
        %3590 = vmatpush1.xpose.msra.mxu0 %v1882
        %3591 = vmatprep.subr.mxu0 %v1891
        %3592 = vmatpush1.xpose.msra.mxu0 %v1890
        %3593 = vmatprep.subr.mxu0 %v1899
        %3594 = vmatpush1.xpose.msra.mxu0 %v1898
        %3595 = vmatprep.subr.mxu0 %v1907
        %3596 = vmatpush1.xpose.msra.mxu0 %v1906
        %3597 = vmatprep.subr.mxu0 %v1915
        %3598 = vmatpush1.xpose.msra.mxu0 %v1914
        %3599 = vmatprep.subr.mxu0 %v1923
        %3600 = vmatpush1.xpose.msra.mxu0 %v1922
        %3601 = vmatprep.subr.mxu0 %v1931
        %3602 = vmatpush1.xpose.msra.mxu0 %v1930
        %3603 = vmatprep.subr.mxu0 %v1939
        %3604 = vmatpush1.xpose.msra.mxu0 %v1938
        %3605 = vmatprep.subr.mxu0 %v1947
        %3606 = vmatpush1.xpose.msra.mxu0 %v1946
        %3607 = vmatprep.subr.mxu0 %v1955
        %3608 = vmatpush1.xpose.msra.mxu0 %v1954
        %3609 = vmatprep.subr.mxu0 %v1963
        %3610 = vmatpush1.xpose.msra.mxu0 %v1962
        %3611 = vmatprep.subr.mxu0 %v1971
        %3612 = vmatpush1.xpose.msra.mxu0 %v1970
        %3613 = vmatprep.subr.mxu0 %v1979
        %3614 = vmatpush1.xpose.msra.mxu0 %v1978
        %3615 = vmatprep.subr.mxu0 %v1987
        %3616 = vmatpush1.xpose.msra.mxu0 %v1986
        %3617 = vmatprep.subr.mxu0 %v1995
        %3618 = vmatpush1.xpose.msra.mxu0 %v1994
        %3619 = vmatprep.subr.mxu0 %v2003
        %3620 = vmatpush1.xpose.msra.mxu0 %v2002
        %3621 = vmatprep.subr.mxu0 %v2011
        %3622 = vmatpush1.xpose.msra.mxu0 %v2010
        %3623 = vmatprep.subr.mxu0 %v2019
        %3624 = vmatpush1.xpose.msra.mxu0 %v2018
        %3625 = vmatprep.subr.mxu0 %v2027
        %3626 = vmatpush1.xpose.msra.mxu0 %v2026
        %3627 = vmatprep.subr.mxu0 %v2035
        %3628 = vmatpush1.xpose.msra.mxu0 %v2034
        %3629 = vmatprep.subr.mxu0 %v2043
        %3630 = vmatpush1.xpose.msra.mxu0 %v2042
        %3631 = vmatprep.subr.mxu0 %v2051
        %3632 = vmatpush1.xpose.msra.mxu0 %v2050
        %3633 = vmatprep.subr.mxu0 %v2059
        %3634 = vmatpush1.xpose.msra.mxu0 %v2058
        %3635 = vmatprep.subr.mxu0 %v2067
        %3636 = vmatpush1.xpose.msra.mxu0 %v2066
        %3637 = vmatprep.subr.mxu0 %v2075
        %3638 = vmatpush1.xpose.msra.mxu0 %v2074
        %3639 = vmatprep.subr.mxu0 %v2083
        %3640 = vmatpush1.xpose.msra.mxu0 %v2082
        %3641 = vmatprep.subr.mxu0 %v2091
        %3642 = vmatpush1.xpose.msra.mxu0 %v2090
        %3643 = vmatprep.subr.mxu0 %v2099
        %3644 = vmatpush1.xpose.msra.mxu0 %v2098
        %3645 = vmatprep.subr.mxu0 %v2107
        %3646 = vmatpush1.xpose.msra.mxu0 %v2106
        %3647 = vmatprep.mubr.f32.mxu0 %v1291
        %3648 = vmatmul.mubr.f32.gmra.mrb[0].mxu0 %v1290
        %v3649 = vpop.f32.mrb[0].mxu0
        %v3650 = vadd.f32 %v3543, %v3649
        %v3651 = vpop.f32.mrb[0].mxu0
        %v3652 = vadd.f32 %v3545, %v3651
        %3653 = vmatprep.mubr.f32.mxu0 %v1299
        %3654 = vmatmul.mubr.f32.gmra.mrb[0].mxu0 %v1298
        %v3655 = vpop.f32.mrb[0].mxu0
        %v3656 = vadd.f32 %v3549, %v3655
        %v3657 = vpop.f32.mrb[0].mxu0
        %v3658 = vadd.f32 %v3551, %v3657
        %3659 = vmatprep.mubr.f32.mxu0 %v1307
        %3660 = vmatmul.mubr.f32.gmra.mrb[0].mxu0 %v1306
        %v3661 = vpop.f32.mrb[0].mxu0
        %v3662 = vadd.f32 %v3555, %v3661
        %v3663 = vpop.f32.mrb[0].mxu0
        %v3664 = vadd.f32 %v3557, %v3663
        %3665 = vmatprep.mubr.f32.mxu0 %v1315
        %3666 = vmatmul.mubr.f32.gmra.mrb[0].mxu0 %v1314
        %v3667 = vpop.f32.mrb[0].mxu0
        %v3668 = vadd.f32 %v3561, %v3667
        %v3669 = vpop.f32.mrb[0].mxu0
        %v3670 = vadd.f32 %v3563, %v3669
        %3671 = vmatprep.mubr.f32.mxu0 %v1323
        %3672 = vmatmul.mubr.f32.gmra.mrb[0].mxu0 %v1322
        %v3673 = vpop.f32.mrb[0].mxu0
        %v3674 = vadd.f32 %v3567, %v3673
        %v3675 = vpop.f32.mrb[0].mxu0
        %v3676 = vadd.f32 %v3569, %v3675
        %3677 = vmatprep.mubr.f32.mxu0 %v1331
        %3678 = vmatmul.mubr.f32.gmra.mrb[0].mxu0 %v1330
        %v3679 = vpop.f32.mrb[0].mxu0
        %v3680 = vadd.f32 %v3573, %v3679
        %v3681 = vpop.f32.mrb[0].mxu0
        %v3682 = vadd.f32 %v3575, %v3681
        %3683 = vmatprep.mubr.f32.mxu0 %v1339
        %3684 = vmatmul.mubr.f32.gmra.mrb[0].mxu0 %v1338
        %v3685 = vpop.f32.mrb[0].mxu0
        %v3686 = vadd.f32 %v3579, %v3685
        %v3687 = vpop.f32.mrb[0].mxu0
        %v3688 = vadd.f32 %v3581, %v3687
        %3689 = vdwg.mxu0
        %3690 = vmatprep.subr.mxu0 %v2109
        %3691 = vmatpush1.xpose.msra.mxu0 %v2108
        %3692 = vmatprep.subr.mxu0 %v2117
        %3693 = vmatpush1.xpose.msra.mxu0 %v2116
        %3694 = vmatprep.subr.mxu0 %v2125
        %3695 = vmatpush1.xpose.msra.mxu0 %v2124
        %3696 = vmatprep.subr.mxu0 %v2133
        %3697 = vmatpush1.xpose.msra.mxu0 %v2132
        %3698 = vmatprep.subr.mxu0 %v2141
        %3699 = vmatpush1.xpose.msra.mxu0 %v2140
        %3700 = vmatprep.subr.mxu0 %v2149
        %3701 = vmatpush1.xpose.msra.mxu0 %v2148
        %3702 = vmatprep.subr.mxu0 %v2157
        %3703 = vmatpush1.xpose.msra.mxu0 %v2156
        %3704 = vmatprep.subr.mxu0 %v2165
        %3705 = vmatpush1.xpose.msra.mxu0 %v2164
        %3706 = vmatprep.subr.mxu0 %v2173
        %3707 = vmatpush1.xpose.msra.mxu0 %v2172
        %3708 = vmatprep.subr.mxu0 %v2181
        %3709 = vmatpush1.xpose.msra.mxu0 %v2180
        %3710 = vmatprep.subr.mxu0 %v2189
        %3711 = vmatpush1.xpose.msra.mxu0 %v2188
        %3712 = vmatprep.subr.mxu0 %v2197
        %3713 = vmatpush1.xpose.msra.mxu0 %v2196
        %3714 = vmatprep.subr.mxu0 %v2205
        %3715 = vmatpush1.xpose.msra.mxu0 %v2204
        %3716 = vmatprep.subr.mxu0 %v2213
        %3717 = vmatpush1.xpose.msra.mxu0 %v2212
        %3718 = vmatprep.subr.mxu0 %v2221
        %3719 = vmatpush1.xpose.msra.mxu0 %v2220
        %3720 = vmatprep.subr.mxu0 %v2229
        %3721 = vmatpush1.xpose.msra.mxu0 %v2228
        %3722 = vmatprep.subr.mxu0 %v2237
        %3723 = vmatpush1.xpose.msra.mxu0 %v2236
        %3724 = vmatprep.subr.mxu0 %v2245
        %3725 = vmatpush1.xpose.msra.mxu0 %v2244
        %3726 = vmatprep.subr.mxu0 %v2253
        %3727 = vmatpush1.xpose.msra.mxu0 %v2252
        %3728 = vmatprep.subr.mxu0 %v2261
        %3729 = vmatpush1.xpose.msra.mxu0 %v2260
        %3730 = vmatprep.subr.mxu0 %v2269
        %3731 = vmatpush1.xpose.msra.mxu0 %v2268
        %3732 = vmatprep.subr.mxu0 %v2277
        %3733 = vmatpush1.xpose.msra.mxu0 %v2276
        %3734 = vmatprep.subr.mxu0 %v2285
        %3735 = vmatpush1.xpose.msra.mxu0 %v2284
        %3736 = vmatprep.subr.mxu0 %v2293
        %3737 = vmatpush1.xpose.msra.mxu0 %v2292
        %3738 = vmatprep.subr.mxu0 %v2301
        %3739 = vmatpush1.xpose.msra.mxu0 %v2300
        %3740 = vmatprep.subr.mxu0 %v2309
        %3741 = vmatpush1.xpose.msra.mxu0 %v2308
        %3742 = vmatprep.subr.mxu0 %v2317
        %3743 = vmatpush1.xpose.msra.mxu0 %v2316
        %3744 = vmatprep.subr.mxu0 %v2325
        %3745 = vmatpush1.xpose.msra.mxu0 %v2324
        %3746 = vmatprep.subr.mxu0 %v2333
        %3747 = vmatpush1.xpose.msra.mxu0 %v2332
        %3748 = vmatprep.subr.mxu0 %v2341
        %3749 = vmatpush1.xpose.msra.mxu0 %v2340
        %3750 = vmatprep.subr.mxu0 %v2349
        %3751 = vmatpush1.xpose.msra.mxu0 %v2348
        %3752 = vmatprep.subr.mxu0 %v2357
        %3753 = vmatpush1.xpose.msra.mxu0 %v2356
        %3754 = vmatprep.mubr.f32.mxu0 %v1285
        %3755 = vmatmul.mubr.f32.gmra.mrb[0].mxu0 %v1284
        %v3756 = vpop.f32.mrb[0].mxu0
        %v3757 = vadd.f32 %v2393, %v3756
        %v3758 = vpop.f32.mrb[0].mxu0
        %v3759 = vadd.f32 %v2397, %v3758
        %3760 = vmatprep.mubr.f32.mxu0 %v1293
        %3761 = vmatmul.mubr.f32.gmra.mrb[0].mxu0 %v1292
        %v3762 = vpop.f32.mrb[0].mxu0
        %v3763 = vadd.f32 %v2393, %v3762
        %v3764 = vpop.f32.mrb[0].mxu0
        %v3765 = vadd.f32 %v2397, %v3764
        %3766 = vmatprep.mubr.f32.mxu0 %v1301
        %3767 = vmatmul.mubr.f32.gmra.mrb[0].mxu0 %v1300
        %v3768 = vpop.f32.mrb[0].mxu0
        %v3769 = vadd.f32 %v2393, %v3768
        %v3770 = vpop.f32.mrb[0].mxu0
        %v3771 = vadd.f32 %v2397, %v3770
        %3772 = vmatprep.mubr.f32.mxu0 %v1309
        %3773 = vmatmul.mubr.f32.gmra.mrb[0].mxu0 %v1308
        %v3774 = vpop.f32.mrb[0].mxu0
        %v3775 = vadd.f32 %v2393, %v3774
        %v3776 = vpop.f32.mrb[0].mxu0
        %v3777 = vadd.f32 %v2397, %v3776
        %3778 = vmatprep.mubr.f32.mxu0 %v1317
        %3779 = vmatmul.mubr.f32.gmra.mrb[0].mxu0 %v1316
        %v3780 = vpop.f32.mrb[0].mxu0
        %v3781 = vadd.f32 %v2393, %v3780
        %v3782 = vpop.f32.mrb[0].mxu0
        %v3783 = vadd.f32 %v2397, %v3782
        %3784 = vmatprep.mubr.f32.mxu0 %v1325
        %3785 = vmatmul.mubr.f32.gmra.mrb[0].mxu0 %v1324
        %v3786 = vpop.f32.mrb[0].mxu0
        %v3787 = vadd.f32 %v2393, %v3786
        %v3788 = vpop.f32.mrb[0].mxu0
        %v3789 = vadd.f32 %v2397, %v3788
        %3790 = vmatprep.mubr.f32.mxu0 %v1333
        %3791 = vmatmul.mubr.f32.gmra.mrb[0].mxu0 %v1332
        %v3792 = vpop.f32.mrb[0].mxu0
        %v3793 = vadd.f32 %v2393, %v3792
        %v3794 = vpop.f32.mrb[0].mxu0
        %v3795 = vadd.f32 %v2397, %v3794
        %3796 = vdwg.mxu0
        %3797 = vmatprep.subr.mxu0 %v2111
        %3798 = vmatpush1.xpose.msra.mxu0 %v2110
        %3799 = vmatprep.subr.mxu0 %v2119
        %3800 = vmatpush1.xpose.msra.mxu0 %v2118
        %3801 = vmatprep.subr.mxu0 %v2127
        %3802 = vmatpush1.xpose.msra.mxu0 %v2126
        %3803 = vmatprep.subr.mxu0 %v2135
        %3804 = vmatpush1.xpose.msra.mxu0 %v2134
        %3805 = vmatprep.subr.mxu0 %v2143
        %3806 = vmatpush1.xpose.msra.mxu0 %v2142
        %3807 = vmatprep.subr.mxu0 %v2151
        %3808 = vmatpush1.xpose.msra.mxu0 %v2150
        %3809 = vmatprep.subr.mxu0 %v2159
        %3810 = vmatpush1.xpose.msra.mxu0 %v2158
        %3811 = vmatprep.subr.mxu0 %v2167
        %3812 = vmatpush1.xpose.msra.mxu0 %v2166
        %3813 = vmatprep.subr.mxu0 %v2175
        %3814 = vmatpush1.xpose.msra.mxu0 %v2174
        %3815 = vmatprep.subr.mxu0 %v2183
        %3816 = vmatpush1.xpose.msra.mxu0 %v2182
        %3817 = vmatprep.subr.mxu0 %v2191
        %3818 = vmatpush1.xpose.msra.mxu0 %v2190
        %3819 = vmatprep.subr.mxu0 %v2199
        %3820 = vmatpush1.xpose.msra.mxu0 %v2198
        %3821 = vmatprep.subr.mxu0 %v2207
        %3822 = vmatpush1.xpose.msra.mxu0 %v2206
        %3823 = vmatprep.subr.mxu0 %v2215
        %3824 = vmatpush1.xpose.msra.mxu0 %v2214
        %3825 = vmatprep.subr.mxu0 %v2223
        %3826 = vmatpush1.xpose.msra.mxu0 %v2222
        %3827 = vmatprep.subr.mxu0 %v2231
        %3828 = vmatpush1.xpose.msra.mxu0 %v2230
        %3829 = vmatprep.subr.mxu0 %v2239
        %3830 = vmatpush1.xpose.msra.mxu0 %v2238
        %3831 = vmatprep.subr.mxu0 %v2247
        %3832 = vmatpush1.xpose.msra.mxu0 %v2246
        %3833 = vmatprep.subr.mxu0 %v2255
        %3834 = vmatpush1.xpose.msra.mxu0 %v2254
        %3835 = vmatprep.subr.mxu0 %v2263
        %3836 = vmatpush1.xpose.msra.mxu0 %v2262
        %3837 = vmatprep.subr.mxu0 %v2271
        %3838 = vmatpush1.xpose.msra.mxu0 %v2270
        %3839 = vmatprep.subr.mxu0 %v2279
        %3840 = vmatpush1.xpose.msra.mxu0 %v2278
        %3841 = vmatprep.subr.mxu0 %v2287
        %3842 = vmatpush1.xpose.msra.mxu0 %v2286
        %3843 = vmatprep.subr.mxu0 %v2295
        %3844 = vmatpush1.xpose.msra.mxu0 %v2294
        %3845 = vmatprep.subr.mxu0 %v2303
        %3846 = vmatpush1.xpose.msra.mxu0 %v2302
        %3847 = vmatprep.subr.mxu0 %v2311
        %3848 = vmatpush1.xpose.msra.mxu0 %v2310
        %3849 = vmatprep.subr.mxu0 %v2319
        %3850 = vmatpush1.xpose.msra.mxu0 %v2318
        %3851 = vmatprep.subr.mxu0 %v2327
        %3852 = vmatpush1.xpose.msra.mxu0 %v2326
        %3853 = vmatprep.subr.mxu0 %v2335
        %3854 = vmatpush1.xpose.msra.mxu0 %v2334
        %3855 = vmatprep.subr.mxu0 %v2343
        %3856 = vmatpush1.xpose.msra.mxu0 %v2342
        %3857 = vmatprep.subr.mxu0 %v2351
        %3858 = vmatpush1.xpose.msra.mxu0 %v2350
        %3859 = vmatprep.subr.mxu0 %v2359
        %3860 = vmatpush1.xpose.msra.mxu0 %v2358
        %3861 = vmatprep.mubr.f32.mxu0 %v1287
        %3862 = vmatmul.mubr.f32.gmra.mrb[0].mxu0 %v1286
        %v3863 = vpop.f32.mrb[0].mxu0
        %v3864 = vadd.f32 %v3757, %v3863
        %v3865 = vpop.f32.mrb[0].mxu0
        %v3866 = vadd.f32 %v3759, %v3865
        %3867 = vmatprep.mubr.f32.mxu0 %v1295
        %3868 = vmatmul.mubr.f32.gmra.mrb[0].mxu0 %v1294
        %v3869 = vpop.f32.mrb[0].mxu0
        %v3870 = vadd.f32 %v3763, %v3869
        %v3871 = vpop.f32.mrb[0].mxu0
        %v3872 = vadd.f32 %v3765, %v3871
        %3873 = vmatprep.mubr.f32.mxu0 %v1303
        %3874 = vmatmul.mubr.f32.gmra.mrb[0].mxu0 %v1302
        %v3875 = vpop.f32.mrb[0].mxu0
        %v3876 = vadd.f32 %v3769, %v3875
        %v3877 = vpop.f32.mrb[0].mxu0
        %v3878 = vadd.f32 %v3771, %v3877
        %3879 = vmatprep.mubr.f32.mxu0 %v1311
        %3880 = vmatmul.mubr.f32.gmra.mrb[0].mxu0 %v1310
        %v3881 = vpop.f32.mrb[0].mxu0
        %v3882 = vadd.f32 %v3775, %v3881
        %v3883 = vpop.f32.mrb[0].mxu0
        %v3884 = vadd.f32 %v3777, %v3883
        %3885 = vmatprep.mubr.f32.mxu0 %v1319
        %3886 = vmatmul.mubr.f32.gmra.mrb[0].mxu0 %v1318
        %v3887 = vpop.f32.mrb[0].mxu0
        %v3888 = vadd.f32 %v3781, %v3887
        %v3889 = vpop.f32.mrb[0].mxu0
        %v3890 = vadd.f32 %v3783, %v3889
        %3891 = vmatprep.mubr.f32.mxu0 %v1327
        %3892 = vmatmul.mubr.f32.gmra.mrb[0].mxu0 %v1326
        %v3893 = vpop.f32.mrb[0].mxu0
        %v3894 = vadd.f32 %v3787, %v3893
        %v3895 = vpop.f32.mrb[0].mxu0
        %v3896 = vadd.f32 %v3789, %v3895
        %3897 = vmatprep.mubr.f32.mxu0 %v1335
        %3898 = vmatmul.mubr.f32.gmra.mrb[0].mxu0 %v1334
        %v3899 = vpop.f32.mrb[0].mxu0
        %v3900 = vadd.f32 %v3793, %v3899
        %v3901 = vpop.f32.mrb[0].mxu0
        %v3902 = vadd.f32 %v3795, %v3901
        %3903 = vdwg.mxu0
        %3904 = vmatprep.subr.mxu0 %v2113
        %3905 = vmatpush1.xpose.msra.mxu0 %v2112
        %3906 = vmatprep.subr.mxu0 %v2121
        %3907 = vmatpush1.xpose.msra.mxu0 %v2120
        %3908 = vmatprep.subr.mxu0 %v2129
        %3909 = vmatpush1.xpose.msra.mxu0 %v2128
        %3910 = vmatprep.subr.mxu0 %v2137
        %3911 = vmatpush1.xpose.msra.mxu0 %v2136
        %3912 = vmatprep.subr.mxu0 %v2145
        %3913 = vmatpush1.xpose.msra.mxu0 %v2144
        %3914 = vmatprep.subr.mxu0 %v2153
        %3915 = vmatpush1.xpose.msra.mxu0 %v2152
        %3916 = vmatprep.subr.mxu0 %v2161
        %3917 = vmatpush1.xpose.msra.mxu0 %v2160
        %3918 = vmatprep.subr.mxu0 %v2169
        %3919 = vmatpush1.xpose.msra.mxu0 %v2168
        %3920 = vmatprep.subr.mxu0 %v2177
        %3921 = vmatpush1.xpose.msra.mxu0 %v2176
        %3922 = vmatprep.subr.mxu0 %v2185
        %3923 = vmatpush1.xpose.msra.mxu0 %v2184
        %3924 = vmatprep.subr.mxu0 %v2193
        %3925 = vmatpush1.xpose.msra.mxu0 %v2192
        %3926 = vmatprep.subr.mxu0 %v2201
        %3927 = vmatpush1.xpose.msra.mxu0 %v2200
        %3928 = vmatprep.subr.mxu0 %v2209
        %3929 = vmatpush1.xpose.msra.mxu0 %v2208
        %3930 = vmatprep.subr.mxu0 %v2217
        %3931 = vmatpush1.xpose.msra.mxu0 %v2216
        %3932 = vmatprep.subr.mxu0 %v2225
        %3933 = vmatpush1.xpose.msra.mxu0 %v2224
        %3934 = vmatprep.subr.mxu0 %v2233
        %3935 = vmatpush1.xpose.msra.mxu0 %v2232
        %3936 = vmatprep.subr.mxu0 %v2241
        %3937 = vmatpush1.xpose.msra.mxu0 %v2240
        %3938 = vmatprep.subr.mxu0 %v2249
        %3939 = vmatpush1.xpose.msra.mxu0 %v2248
        %3940 = vmatprep.subr.mxu0 %v2257
        %3941 = vmatpush1.xpose.msra.mxu0 %v2256
        %3942 = vmatprep.subr.mxu0 %v2265
        %3943 = vmatpush1.xpose.msra.mxu0 %v2264
        %3944 = vmatprep.subr.mxu0 %v2273
        %3945 = vmatpush1.xpose.msra.mxu0 %v2272
        %3946 = vmatprep.subr.mxu0 %v2281
        %3947 = vmatpush1.xpose.msra.mxu0 %v2280
        %3948 = vmatprep.subr.mxu0 %v2289
        %3949 = vmatpush1.xpose.msra.mxu0 %v2288
        %3950 = vmatprep.subr.mxu0 %v2297
        %3951 = vmatpush1.xpose.msra.mxu0 %v2296
        %3952 = vmatprep.subr.mxu0 %v2305
        %3953 = vmatpush1.xpose.msra.mxu0 %v2304
        %3954 = vmatprep.subr.mxu0 %v2313
        %3955 = vmatpush1.xpose.msra.mxu0 %v2312
        %3956 = vmatprep.subr.mxu0 %v2321
        %3957 = vmatpush1.xpose.msra.mxu0 %v2320
        %3958 = vmatprep.subr.mxu0 %v2329
        %3959 = vmatpush1.xpose.msra.mxu0 %v2328
        %3960 = vmatprep.subr.mxu0 %v2337
        %3961 = vmatpush1.xpose.msra.mxu0 %v2336
        %3962 = vmatprep.subr.mxu0 %v2345
        %3963 = vmatpush1.xpose.msra.mxu0 %v2344
        %3964 = vmatprep.subr.mxu0 %v2353
        %3965 = vmatpush1.xpose.msra.mxu0 %v2352
        %3966 = vmatprep.subr.mxu0 %v2361
        %3967 = vmatpush1.xpose.msra.mxu0 %v2360
        %3968 = vmatprep.mubr.f32.mxu0 %v1289
        %3969 = vmatmul.mubr.f32.gmra.mrb[0].mxu0 %v1288
        %v3970 = vpop.f32.mrb[0].mxu0
        %v3971 = vadd.f32 %v3864, %v3970
        %v3972 = vpop.f32.mrb[0].mxu0
        %v3973 = vadd.f32 %v3866, %v3972
        %3974 = vmatprep.mubr.f32.mxu0 %v1297
        %3975 = vmatmul.mubr.f32.gmra.mrb[0].mxu0 %v1296
        %v3976 = vpop.f32.mrb[0].mxu0
        %v3977 = vadd.f32 %v3870, %v3976
        %v3978 = vpop.f32.mrb[0].mxu0
        %v3979 = vadd.f32 %v3872, %v3978
        %3980 = vmatprep.mubr.f32.mxu0 %v1305
        %3981 = vmatmul.mubr.f32.gmra.mrb[0].mxu0 %v1304
        %v3982 = vpop.f32.mrb[0].mxu0
        %v3983 = vadd.f32 %v3876, %v3982
        %v3984 = vpop.f32.mrb[0].mxu0
        %v3985 = vadd.f32 %v3878, %v3984
        %3986 = vmatprep.mubr.f32.mxu0 %v1313
        %3987 = vmatmul.mubr.f32.gmra.mrb[0].mxu0 %v1312
        %v3988 = vpop.f32.mrb[0].mxu0
        %v3989 = vadd.f32 %v3882, %v3988
        %v3990 = vpop.f32.mrb[0].mxu0
        %v3991 = vadd.f32 %v3884, %v3990
        %3992 = vmatprep.mubr.f32.mxu0 %v1321
        %3993 = vmatmul.mubr.f32.gmra.mrb[0].mxu0 %v1320
        %v3994 = vpop.f32.mrb[0].mxu0
        %v3995 = vadd.f32 %v3888, %v3994
        %v3996 = vpop.f32.mrb[0].mxu0
        %v3997 = vadd.f32 %v3890, %v3996
        %3998 = vmatprep.mubr.f32.mxu0 %v1329
        %3999 = vmatmul.mubr.f32.gmra.mrb[0].mxu0 %v1328
        %v4000 = vpop.f32.mrb[0].mxu0
        %v4001 = vadd.f32 %v3894, %v4000
        %v4002 = vpop.f32.mrb[0].mxu0
        %v4003 = vadd.f32 %v3896, %v4002
        %4004 = vmatprep.mubr.f32.mxu0 %v1337
        %4005 = vmatmul.mubr.f32.gmra.mrb[0].mxu0 %v1336
        %v4006 = vpop.f32.mrb[0].mxu0
        %v4007 = vadd.f32 %v3900, %v4006
        %v4008 = vpop.f32.mrb[0].mxu0
        %v4009 = vadd.f32 %v3902, %v4008
        %4010 = vdwg.mxu0
        %4011 = vmatprep.subr.mxu0 %v2115
        %4012 = vmatpush1.xpose.msra.mxu0 %v2114
        %4013 = vmatprep.subr.mxu0 %v2123
        %4014 = vmatpush1.xpose.msra.mxu0 %v2122
        %4015 = vmatprep.subr.mxu0 %v2131
        %4016 = vmatpush1.xpose.msra.mxu0 %v2130
        %4017 = vmatprep.subr.mxu0 %v2139
        %4018 = vmatpush1.xpose.msra.mxu0 %v2138
        %4019 = vmatprep.subr.mxu0 %v2147
        %4020 = vmatpush1.xpose.msra.mxu0 %v2146
        %4021 = vmatprep.subr.mxu0 %v2155
        %4022 = vmatpush1.xpose.msra.mxu0 %v2154
        %4023 = vmatprep.subr.mxu0 %v2163
        %4024 = vmatpush1.xpose.msra.mxu0 %v2162
        %4025 = vmatprep.subr.mxu0 %v2171
        %4026 = vmatpush1.xpose.msra.mxu0 %v2170
        %4027 = vmatprep.subr.mxu0 %v2179
        %4028 = vmatpush1.xpose.msra.mxu0 %v2178
        %4029 = vmatprep.subr.mxu0 %v2187
        %4030 = vmatpush1.xpose.msra.mxu0 %v2186
        %4031 = vmatprep.subr.mxu0 %v2195
        %4032 = vmatpush1.xpose.msra.mxu0 %v2194
        %4033 = vmatprep.subr.mxu0 %v2203
        %4034 = vmatpush1.xpose.msra.mxu0 %v2202
        %4035 = vmatprep.subr.mxu0 %v2211
        %4036 = vmatpush1.xpose.msra.mxu0 %v2210
        %4037 = vmatprep.subr.mxu0 %v2219
        %4038 = vmatpush1.xpose.msra.mxu0 %v2218
        %4039 = vmatprep.subr.mxu0 %v2227
        %4040 = vmatpush1.xpose.msra.mxu0 %v2226
        %4041 = vmatprep.subr.mxu0 %v2235
        %4042 = vmatpush1.xpose.msra.mxu0 %v2234
        %4043 = vmatprep.subr.mxu0 %v2243
        %4044 = vmatpush1.xpose.msra.mxu0 %v2242
        %4045 = vmatprep.subr.mxu0 %v2251
        %4046 = vmatpush1.xpose.msra.mxu0 %v2250
        %4047 = vmatprep.subr.mxu0 %v2259
        %4048 = vmatpush1.xpose.msra.mxu0 %v2258
        %4049 = vmatprep.subr.mxu0 %v2267
        %4050 = vmatpush1.xpose.msra.mxu0 %v2266
        %4051 = vmatprep.subr.mxu0 %v2275
        %4052 = vmatpush1.xpose.msra.mxu0 %v2274
        %4053 = vmatprep.subr.mxu0 %v2283
        %4054 = vmatpush1.xpose.msra.mxu0 %v2282
        %4055 = vmatprep.subr.mxu0 %v2291
        %4056 = vmatpush1.xpose.msra.mxu0 %v2290
        %4057 = vmatprep.subr.mxu0 %v2299
        %4058 = vmatpush1.xpose.msra.mxu0 %v2298
        %4059 = vmatprep.subr.mxu0 %v2307
        %4060 = vmatpush1.xpose.msra.mxu0 %v2306
        %4061 = vmatprep.subr.mxu0 %v2315
        %4062 = vmatpush1.xpose.msra.mxu0 %v2314
        %4063 = vmatprep.subr.mxu0 %v2323
        %4064 = vmatpush1.xpose.msra.mxu0 %v2322
        %4065 = vmatprep.subr.mxu0 %v2331
        %4066 = vmatpush1.xpose.msra.mxu0 %v2330
        %4067 = vmatprep.subr.mxu0 %v2339
        %4068 = vmatpush1.xpose.msra.mxu0 %v2338
        %4069 = vmatprep.subr.mxu0 %v2347
        %4070 = vmatpush1.xpose.msra.mxu0 %v2346
        %4071 = vmatprep.subr.mxu0 %v2355
        %4072 = vmatpush1.xpose.msra.mxu0 %v2354
        %4073 = vmatprep.subr.mxu0 %v2363
        %4074 = vmatpush1.xpose.msra.mxu0 %v2362
        %4075 = vmatprep.mubr.f32.mxu0 %v1291
        %4076 = vmatmul.mubr.f32.gmra.mrb[0].mxu0 %v1290
        %v4077 = vpop.f32.mrb[0].mxu0
        %v4078 = vadd.f32 %v3971, %v4077
        %v4079 = vpop.f32.mrb[0].mxu0
        %v4080 = vadd.f32 %v3973, %v4079
        %4081 = vmatprep.mubr.f32.mxu0 %v1299
        %4082 = vmatmul.mubr.f32.gmra.mrb[0].mxu0 %v1298
        %v4083 = vpop.f32.mrb[0].mxu0
        %v4084 = vadd.f32 %v3977, %v4083
        %v4085 = vpop.f32.mrb[0].mxu0
        %v4086 = vadd.f32 %v3979, %v4085
        %4087 = vmatprep.mubr.f32.mxu0 %v1307
        %4088 = vmatmul.mubr.f32.gmra.mrb[0].mxu0 %v1306
        %v4089 = vpop.f32.mrb[0].mxu0
        %v4090 = vadd.f32 %v3983, %v4089
        %v4091 = vpop.f32.mrb[0].mxu0
        %v4092 = vadd.f32 %v3985, %v4091
        %4093 = vmatprep.mubr.f32.mxu0 %v1315
        %4094 = vmatmul.mubr.f32.gmra.mrb[0].mxu0 %v1314
        %v4095 = vpop.f32.mrb[0].mxu0
        %v4096 = vadd.f32 %v3989, %v4095
        %v4097 = vpop.f32.mrb[0].mxu0
        %v4098 = vadd.f32 %v3991, %v4097
        %4099 = vmatprep.mubr.f32.mxu0 %v1323
        %4100 = vmatmul.mubr.f32.gmra.mrb[0].mxu0 %v1322
        %v4101 = vpop.f32.mrb[0].mxu0
        %v4102 = vadd.f32 %v3995, %v4101
        %v4103 = vpop.f32.mrb[0].mxu0
        %v4104 = vadd.f32 %v3997, %v4103
        %4105 = vmatprep.mubr.f32.mxu0 %v1331
        %4106 = vmatmul.mubr.f32.gmra.mrb[0].mxu0 %v1330
        %v4107 = vpop.f32.mrb[0].mxu0
        %v4108 = vadd.f32 %v4001, %v4107
        %v4109 = vpop.f32.mrb[0].mxu0
        %v4110 = vadd.f32 %v4003, %v4109
        %4111 = vmatprep.mubr.f32.mxu0 %v1339
        %4112 = vmatmul.mubr.f32.gmra.mrb[0].mxu0 %v1338
        %v4113 = vpop.f32.mrb[0].mxu0
        %v4114 = vadd.f32 %v4007, %v4113
        %v4115 = vpop.f32.mrb[0].mxu0
        %v4116 = vadd.f32 %v4009, %v4115
        %4117 = vdwg.mxu0
        %v4118 = vmul.f32 %v2794, 0.5
        %v4119 = vmul.f32 %v2796, 0.5
        %v4120 = vmul.f32 %v3222, 0.5
        %v4121 = vmul.f32 %v3224, 0.5
        %v4122 = vmul.f32 %v3650, 0.5
        %v4123 = vmul.f32 %v3652, 0.5
        %v4124 = vmul.f32 %v4078, 0.5
        %v4125 = vmul.f32 %v4080, 0.5
        %v4126 = vmul.f32 %v2800, 0.5
        %v4127 = vmul.f32 %v2802, 0.5
        %v4128 = vmul.f32 %v3228, 0.5
        %v4129 = vmul.f32 %v3230, 0.5
        %v4130 = vmul.f32 %v3656, 0.5
        %v4131 = vmul.f32 %v3658, 0.5
        %v4132 = vmul.f32 %v4084, 0.5
        %v4133 = vmul.f32 %v4086, 0.5
        %v4134 = vmul.f32 %v2806, 0.5
        %v4135 = vmul.f32 %v2808, 0.5
        %v4136 = vmul.f32 %v3234, 0.5
        %v4137 = vmul.f32 %v3236, 0.5
        %v4138 = vmul.f32 %v3662, 0.5
        %v4139 = vmul.f32 %v3664, 0.5
        %v4140 = vmul.f32 %v4090, 0.5
        %v4141 = vmul.f32 %v4092, 0.5
        %v4142 = vmul.f32 %v2812, 0.5
        %v4143 = vmul.f32 %v2814, 0.5
        %v4144 = vmul.f32 %v3240, 0.5
        %v4145 = vmul.f32 %v3242, 0.5
        %v4146 = vmul.f32 %v3668, 0.5
        %v4147 = vmul.f32 %v3670, 0.5
        %v4148 = vmul.f32 %v4096, 0.5
        %v4149 = vmul.f32 %v4098, 0.5
        %v4150 = vmul.f32 %v2818, 0.5
        %v4151 = vmul.f32 %v2820, 0.5
        %v4152 = vmul.f32 %v3246, 0.5
        %v4153 = vmul.f32 %v3248, 0.5
        %v4154 = vmul.f32 %v3674, 0.5
        %v4155 = vmul.f32 %v3676, 0.5
        %v4156 = vmul.f32 %v4102, 0.5
        %v4157 = vmul.f32 %v4104, 0.5
        %v4158 = vmul.f32 %v2824, 0.5
        %v4159 = vmul.f32 %v2826, 0.5
        %v4160 = vmul.f32 %v3252, 0.5
        %v4161 = vmul.f32 %v3254, 0.5
        %v4162 = vmul.f32 %v3680, 0.5
        %v4163 = vmul.f32 %v3682, 0.5
        %v4164 = vmul.f32 %v4108, 0.5
        %v4165 = vmul.f32 %v4110, 0.5
        %v4166 = vmul.f32 %v2830, 0.5
        %v4167 = vmul.f32 %v2832, 0.5
        %v4168 = vmul.f32 %v3258, 0.5
        %v4169 = vmul.f32 %v3260, 0.5
        %v4170 = vmul.f32 %v3686, 0.5
        %v4171 = vmul.f32 %v3688, 0.5
        %v4172 = vmul.f32 %v4114, 0.5
        %v4173 = vmul.f32 %v4116, 0.5
        %v4174 = vmul.f32 %v2794, 0.70710677
        %v4175 = vmul.f32 %v2796, 0.70710677
        %v4176 = vmul.f32 %v3222, 0.70710677
        %v4177 = vmul.f32 %v3224, 0.70710677
        %v4178 = vmul.f32 %v3650, 0.70710677
        %v4179 = vmul.f32 %v3652, 0.70710677
        %v4180 = vmul.f32 %v4078, 0.70710677
        %v4181 = vmul.f32 %v4080, 0.70710677
        %v4182 = vmul.f32 %v2800, 0.70710677
        %v4183 = vmul.f32 %v2802, 0.70710677
        %v4184 = vmul.f32 %v3228, 0.70710677
        %v4185 = vmul.f32 %v3230, 0.70710677
        %v4186 = vmul.f32 %v3656, 0.70710677
        %v4187 = vmul.f32 %v3658, 0.70710677
        %v4188 = vmul.f32 %v4084, 0.70710677
        %v4189 = vmul.f32 %v4086, 0.70710677
        %v4190 = vmul.f32 %v2806, 0.70710677
        %v4191 = vmul.f32 %v2808, 0.70710677
        %v4192 = vmul.f32 %v3234, 0.70710677
        %v4193 = vmul.f32 %v3236, 0.70710677
        %v4194 = vmul.f32 %v3662, 0.70710677
        %v4195 = vmul.f32 %v3664, 0.70710677
        %v4196 = vmul.f32 %v4090, 0.70710677
        %v4197 = vmul.f32 %v4092, 0.70710677
        %v4198 = vmul.f32 %v2812, 0.70710677
        %v4199 = vmul.f32 %v2814, 0.70710677
        %v4200 = vmul.f32 %v3240, 0.70710677
        %v4201 = vmul.f32 %v3242, 0.70710677
        %v4202 = vmul.f32 %v3668, 0.70710677
        %v4203 = vmul.f32 %v3670, 0.70710677
        %v4204 = vmul.f32 %v4096, 0.70710677
        %v4205 = vmul.f32 %v4098, 0.70710677
        %v4206 = vmul.f32 %v2818, 0.70710677
        %v4207 = vmul.f32 %v2820, 0.70710677
        %v4208 = vmul.f32 %v3246, 0.70710677
        %v4209 = vmul.f32 %v3248, 0.70710677
        %v4210 = vmul.f32 %v3674, 0.70710677
        %v4211 = vmul.f32 %v3676, 0.70710677
        %v4212 = vmul.f32 %v4102, 0.70710677
        %v4213 = vmul.f32 %v4104, 0.70710677
        %v4214 = vmul.f32 %v2824, 0.70710677
        %v4215 = vmul.f32 %v2826, 0.70710677
        %v4216 = vmul.f32 %v3252, 0.70710677
        %v4217 = vmul.f32 %v3254, 0.70710677
        %v4218 = vmul.f32 %v3680, 0.70710677
        %v4219 = vmul.f32 %v3682, 0.70710677
        %v4220 = vmul.f32 %v4108, 0.70710677
        %v4221 = vmul.f32 %v4110, 0.70710677
        %v4222 = vmul.f32 %v2830, 0.70710677
        %v4223 = vmul.f32 %v2832, 0.70710677
        %v4224 = vmul.f32 %v3258, 0.70710677
        %v4225 = vmul.f32 %v3260, 0.70710677
        %v4226 = vmul.f32 %v3686, 0.70710677
        %v4227 = vmul.f32 %v3688, 0.70710677
        %v4228 = vmul.f32 %v4114, 0.70710677
        %v4229 = vmul.f32 %v4116, 0.70710677
        %v4230 = verf.f32.pop %v4174
        %v4231 = verf.f32.pop %v4175
        %v4232 = verf.f32.pop %v4176
        %v4233 = verf.f32.pop %v4177
        %v4234 = verf.f32.pop %v4178
        %v4235 = verf.f32.pop %v4179
        %v4236 = verf.f32.pop %v4180
        %v4237 = verf.f32.pop %v4181
        %v4238 = verf.f32.pop %v4182
        %v4239 = verf.f32.pop %v4183
        %v4240 = verf.f32.pop %v4184
        %v4241 = verf.f32.pop %v4185
        %v4242 = verf.f32.pop %v4186
        %v4243 = verf.f32.pop %v4187
        %v4244 = verf.f32.pop %v4188
        %v4245 = verf.f32.pop %v4189
        %v4246 = verf.f32.pop %v4190
        %v4247 = verf.f32.pop %v4191
        %v4248 = verf.f32.pop %v4192
        %v4249 = verf.f32.pop %v4193
        %v4250 = verf.f32.pop %v4194
        %v4251 = verf.f32.pop %v4195
        %v4252 = verf.f32.pop %v4196
        %v4253 = verf.f32.pop %v4197
        %v4254 = verf.f32.pop %v4198
        %v4255 = verf.f32.pop %v4199
        %v4256 = verf.f32.pop %v4200
        %v4257 = verf.f32.pop %v4201
        %v4258 = verf.f32.pop %v4202
        %v4259 = verf.f32.pop %v4203
        %v4260 = verf.f32.pop %v4204
        %v4261 = verf.f32.pop %v4205
        %v4262 = verf.f32.pop %v4206
        %v4263 = verf.f32.pop %v4207
        %v4264 = verf.f32.pop %v4208
        %v4265 = verf.f32.pop %v4209
        %v4266 = verf.f32.pop %v4210
        %v4267 = verf.f32.pop %v4211
        %v4268 = verf.f32.pop %v4212
        %v4269 = verf.f32.pop %v4213
        %v4270 = verf.f32.pop %v4214
        %v4271 = verf.f32.pop %v4215
        %v4272 = verf.f32.pop %v4216
        %v4273 = verf.f32.pop %v4217
        %v4274 = verf.f32.pop %v4218
        %v4275 = verf.f32.pop %v4219
        %v4276 = verf.f32.pop %v4220
        %v4277 = verf.f32.pop %v4221
        %v4278 = verf.f32.pop %v4222
        %v4279 = verf.f32.pop %v4223
        %v4280 = verf.f32.pop %v4224
        %v4281 = verf.f32.pop %v4225
        %v4282 = verf.f32.pop %v4226
        %v4283 = verf.f32.pop %v4227
        %v4284 = verf.f32.pop %v4228
        %v4285 = verf.f32.pop %v4229
        %v4286 = vadd.f32 %v4230, 1.0
        %v4287 = vadd.f32 %v4231, 1.0
        %v4288 = vadd.f32 %v4232, 1.0
        %v4289 = vadd.f32 %v4233, 1.0
        %v4290 = vadd.f32 %v4234, 1.0
        %v4291 = vadd.f32 %v4235, 1.0
        %v4292 = vadd.f32 %v4236, 1.0
        %v4293 = vadd.f32 %v4237, 1.0
        %v4294 = vadd.f32 %v4238, 1.0
        %v4295 = vadd.f32 %v4239, 1.0
        %v4296 = vadd.f32 %v4240, 1.0
        %v4297 = vadd.f32 %v4241, 1.0
        %v4298 = vadd.f32 %v4242, 1.0
        %v4299 = vadd.f32 %v4243, 1.0
        %v4300 = vadd.f32 %v4244, 1.0
        %v4301 = vadd.f32 %v4245, 1.0
        %v4302 = vadd.f32 %v4246, 1.0
        %v4303 = vadd.f32 %v4247, 1.0
        %v4304 = vadd.f32 %v4248, 1.0
        %v4305 = vadd.f32 %v4249, 1.0
        %v4306 = vadd.f32 %v4250, 1.0
        %v4307 = vadd.f32 %v4251, 1.0
        %v4308 = vadd.f32 %v4252, 1.0
        %v4309 = vadd.f32 %v4253, 1.0
        %v4310 = vadd.f32 %v4254, 1.0
        %v4311 = vadd.f32 %v4255, 1.0
        %v4312 = vadd.f32 %v4256, 1.0
        %v4313 = vadd.f32 %v4257, 1.0
        %v4314 = vadd.f32 %v4258, 1.0
        %v4315 = vadd.f32 %v4259, 1.0
        %v4316 = vadd.f32 %v4260, 1.0
        %v4317 = vadd.f32 %v4261, 1.0
        %v4318 = vadd.f32 %v4262, 1.0
        %v4319 = vadd.f32 %v4263, 1.0
        %v4320 = vadd.f32 %v4264, 1.0
        %v4321 = vadd.f32 %v4265, 1.0
        %v4322 = vadd.f32 %v4266, 1.0
        %v4323 = vadd.f32 %v4267, 1.0
        %v4324 = vadd.f32 %v4268, 1.0
        %v4325 = vadd.f32 %v4269, 1.0
        %v4326 = vadd.f32 %v4270, 1.0
        %v4327 = vadd.f32 %v4271, 1.0
        %v4328 = vadd.f32 %v4272, 1.0
        %v4329 = vadd.f32 %v4273, 1.0
        %v4330 = vadd.f32 %v4274, 1.0
        %v4331 = vadd.f32 %v4275, 1.0
        %v4332 = vadd.f32 %v4276, 1.0
        %v4333 = vadd.f32 %v4277, 1.0
        %v4334 = vadd.f32 %v4278, 1.0
        %v4335 = vadd.f32 %v4279, 1.0
        %v4336 = vadd.f32 %v4280, 1.0
        %v4337 = vadd.f32 %v4281, 1.0
        %v4338 = vadd.f32 %v4282, 1.0
        %v4339 = vadd.f32 %v4283, 1.0
        %v4340 = vadd.f32 %v4284, 1.0
        %v4341 = vadd.f32 %v4285, 1.0
        %v4342 = vmul.f32 %v4118, %v4286
        %v4343 = vmul.f32 %v4119, %v4287
        %v4344 = vmul.f32 %v4120, %v4288
        %v4345 = vmul.f32 %v4121, %v4289
        %v4346 = vmul.f32 %v4122, %v4290
        %v4347 = vmul.f32 %v4123, %v4291
        %v4348 = vmul.f32 %v4124, %v4292
        %v4349 = vmul.f32 %v4125, %v4293
        %v4350 = vmul.f32 %v4126, %v4294
        %v4351 = vmul.f32 %v4127, %v4295
        %v4352 = vmul.f32 %v4128, %v4296
        %v4353 = vmul.f32 %v4129, %v4297
        %v4354 = vmul.f32 %v4130, %v4298
        %v4355 = vmul.f32 %v4131, %v4299
        %v4356 = vmul.f32 %v4132, %v4300
        %v4357 = vmul.f32 %v4133, %v4301
        %v4358 = vmul.f32 %v4134, %v4302
        %v4359 = vmul.f32 %v4135, %v4303
        %v4360 = vmul.f32 %v4136, %v4304
        %v4361 = vmul.f32 %v4137, %v4305
        %v4362 = vmul.f32 %v4138, %v4306
        %v4363 = vmul.f32 %v4139, %v4307
        %v4364 = vmul.f32 %v4140, %v4308
        %v4365 = vmul.f32 %v4141, %v4309
        %v4366 = vmul.f32 %v4142, %v4310
        %v4367 = vmul.f32 %v4143, %v4311
        %v4368 = vmul.f32 %v4144, %v4312
        %v4369 = vmul.f32 %v4145, %v4313
        %v4370 = vmul.f32 %v4146, %v4314
        %v4371 = vmul.f32 %v4147, %v4315
        %v4372 = vmul.f32 %v4148, %v4316
        %v4373 = vmul.f32 %v4149, %v4317
        %v4374 = vmul.f32 %v4150, %v4318
        %v4375 = vmul.f32 %v4151, %v4319
        %v4376 = vmul.f32 %v4152, %v4320
        %v4377 = vmul.f32 %v4153, %v4321
        %v4378 = vmul.f32 %v4154, %v4322
        %v4379 = vmul.f32 %v4155, %v4323
        %v4380 = vmul.f32 %v4156, %v4324
        %v4381 = vmul.f32 %v4157, %v4325
        %v4382 = vmul.f32 %v4158, %v4326
        %v4383 = vmul.f32 %v4159, %v4327
        %v4384 = vmul.f32 %v4160, %v4328
        %v4385 = vmul.f32 %v4161, %v4329
        %v4386 = vmul.f32 %v4162, %v4330
        %v4387 = vmul.f32 %v4163, %v4331
        %v4388 = vmul.f32 %v4164, %v4332
        %v4389 = vmul.f32 %v4165, %v4333
        %v4390 = vmul.f32 %v4166, %v4334
        %v4391 = vmul.f32 %v4167, %v4335
        %v4392 = vmul.f32 %v4168, %v4336
        %v4393 = vmul.f32 %v4169, %v4337
        %v4394 = vmul.f32 %v4170, %v4338
        %v4395 = vmul.f32 %v4171, %v4339
        %v4396 = vmul.f32 %v4172, %v4340
        %v4397 = vmul.f32 %v4173, %v4341
        %v4398 = vld [vmem:[%s463] sm:$0xff]
        %v4399 = vld [vmem:[%s463 + $0x8] sm:$0xff]
        %v4400 = vld [vmem:[%s463 + $0x10] sm:$0xff]
        %v4401 = vld [vmem:[%s463 + $0x18] sm:$0xff]
        %v4402 = vld [vmem:[%s463 + $0x20] sm:$0xff]
        %v4403 = vld [vmem:[%s463 + $0x28] sm:$0xff]
        %v4404 = vld [vmem:[%s463 + $0x30] sm:$0xff]
        %v4405 = vld [vmem:[%s463 + $0x38] sm:$0xff]
        %v4406 = vld [vmem:[%s463 + $0x40] sm:$0xff]
        %v4407 = vld [vmem:[%s463 + $0x48] sm:$0xff]
        %v4408 = vld [vmem:[%s463 + $0x50] sm:$0xff]
        %v4409 = vld [vmem:[%s463 + $0x58] sm:$0xff]
        %v4410 = vld [vmem:[%s463 + $0x60] sm:$0xff]
        %v4411 = vld [vmem:[%s463 + $0x68] sm:$0xff]
        %v4412 = vld [vmem:[%s463 + $0x70] sm:$0xff]
        %v4413 = vld [vmem:[%s463 + $0x78] sm:$0xff]
        %v4414 = vld [vmem:[%s463 + $0x80] sm:$0xff]
        %v4415 = vld [vmem:[%s463 + $0x88] sm:$0xff]
        %v4416 = vld [vmem:[%s463 + $0x90] sm:$0xff]
        %v4417 = vld [vmem:[%s463 + $0x98] sm:$0xff]
        %v4418 = vld [vmem:[%s463 + $0xa0] sm:$0xff]
        %v4419 = vld [vmem:[%s463 + $0xa8] sm:$0xff]
        %v4420 = vld [vmem:[%s463 + $0xb0] sm:$0xff]
        %v4421 = vld [vmem:[%s463 + $0xb8] sm:$0xff]
        %v4422 = vld [vmem:[%s463 + $0xc0] sm:$0xff]
        %v4423 = vld [vmem:[%s463 + $0xc8] sm:$0xff]
        %v4424 = vld [vmem:[%s463 + $0xd0] sm:$0xff]
        %v4425 = vld [vmem:[%s463 + $0xd8] sm:$0xff]
        %v4426 = vld [vmem:[%s463 + $0xe0] sm:$0xff]
        %v4427 = vld [vmem:[%s463 + $0xe8] sm:$0xff]
        %v4428 = vld [vmem:[%s463 + $0xf0] sm:$0xff]
        %v4429 = vld [vmem:[%s463 + $0xf8] sm:$0xff]
        %v4430 = vld [vmem:[%s463 + $0x100] sm:$0xff]
        %v4431 = vld [vmem:[%s463 + $0x108] sm:$0xff]
        %v4432 = vld [vmem:[%s463 + $0x110] sm:$0xff]
        %v4433 = vld [vmem:[%s463 + $0x118] sm:$0xff]
        %v4434 = vld [vmem:[%s463 + $0x120] sm:$0xff]
        %v4435 = vld [vmem:[%s463 + $0x128] sm:$0xff]
        %v4436 = vld [vmem:[%s463 + $0x130] sm:$0xff]
        %v4437 = vld [vmem:[%s463 + $0x138] sm:$0xff]
        %v4438 = vld [vmem:[%s463 + $0x140] sm:$0xff]
        %v4439 = vld [vmem:[%s463 + $0x148] sm:$0xff]
        %v4440 = vld [vmem:[%s463 + $0x150] sm:$0xff]
        %v4441 = vld [vmem:[%s463 + $0x158] sm:$0xff]
        %v4442 = vld [vmem:[%s463 + $0x160] sm:$0xff]
        %v4443 = vld [vmem:[%s463 + $0x168] sm:$0xff]
        %v4444 = vld [vmem:[%s463 + $0x170] sm:$0xff]
        %v4445 = vld [vmem:[%s463 + $0x178] sm:$0xff]
        %v4446 = vld [vmem:[%s463 + $0x180] sm:$0x1]
        %v4447 = vld [vmem:[%s463 + $0x188] sm:$0x1]
        %v4448 = vld [vmem:[%s463 + $0x190] sm:$0x1]
        %v4449 = vld [vmem:[%s463 + $0x198] sm:$0x1]
        %v4450 = vld [vmem:[%s463 + $0x1a0] sm:$0x1]
        %v4451 = vld [vmem:[%s463 + $0x1a8] sm:$0x1]
        %v4452 = vld [vmem:[%s463 + $0x1b0] sm:$0x1]
        %v4453 = vld [vmem:[%s463 + $0x1b8] sm:$0x1]
        %v4454 = vld [vmem:[%s409] sm:$0xff]
        %v4455 = vld [vmem:[%s409 + $0x8] sm:$0xff]
        %v4456 = vld [vmem:[%s409 + $0x10] sm:$0xff]
        %v4457 = vld [vmem:[%s409 + $0x18] sm:$0xff]
        %v4458 = vld [vmem:[%s409 + $0x20] sm:$0xff]
        %v4459 = vld [vmem:[%s409 + $0x28] sm:$0xff]
        %v4460 = vld [vmem:[%s409 + $0x30] sm:$0xff]
        %v4461 = vld [vmem:[%s409 + $0x38] sm:$0xff]
        %v4462 = vld [vmem:[%s409 + $0x40] sm:$0xff]
        %v4463 = vld [vmem:[%s409 + $0x48] sm:$0xff]
        %v4464 = vld [vmem:[%s409 + $0x50] sm:$0xff]
        %v4465 = vld [vmem:[%s409 + $0x58] sm:$0xff]
        %v4466 = vld [vmem:[%s409 + $0x60] sm:$0xff]
        %v4467 = vld [vmem:[%s409 + $0x68] sm:$0xff]
        %v4468 = vld [vmem:[%s409 + $0x70] sm:$0xff]
        %v4469 = vld [vmem:[%s409 + $0x78] sm:$0xff]
        %v4470 = vld [vmem:[%s409 + $0x80] sm:$0xff]
        %v4471 = vld [vmem:[%s409 + $0x88] sm:$0xff]
        %v4472 = vld [vmem:[%s409 + $0x90] sm:$0xff]
        %v4473 = vld [vmem:[%s409 + $0x98] sm:$0xff]
        %v4474 = vld [vmem:[%s409 + $0xa0] sm:$0xff]
        %v4475 = vld [vmem:[%s409 + $0xa8] sm:$0xff]
        %v4476 = vld [vmem:[%s409 + $0xb0] sm:$0xff]
        %v4477 = vld [vmem:[%s409 + $0xb8] sm:$0xff]
        %v4478 = vld [vmem:[%s409 + $0xc0] sm:$0xff]
        %v4479 = vld [vmem:[%s409 + $0xc8] sm:$0xff]
        %v4480 = vld [vmem:[%s409 + $0xd0] sm:$0xff]
        %v4481 = vld [vmem:[%s409 + $0xd8] sm:$0xff]
        %v4482 = vld [vmem:[%s409 + $0xe0] sm:$0xff]
        %v4483 = vld [vmem:[%s409 + $0xe8] sm:$0xff]
        %v4484 = vld [vmem:[%s409 + $0xf0] sm:$0xff]
        %v4485 = vld [vmem:[%s409 + $0xf8] sm:$0xff]
        %v4486 = vld [vmem:[%s409 + $0x100] sm:$0xff]
        %v4487 = vld [vmem:[%s409 + $0x108] sm:$0xff]
        %v4488 = vld [vmem:[%s409 + $0x110] sm:$0xff]
        %v4489 = vld [vmem:[%s409 + $0x118] sm:$0xff]
        %v4490 = vld [vmem:[%s409 + $0x120] sm:$0xff]
        %v4491 = vld [vmem:[%s409 + $0x128] sm:$0xff]
        %v4492 = vld [vmem:[%s409 + $0x130] sm:$0xff]
        %v4493 = vld [vmem:[%s409 + $0x138] sm:$0xff]
        %v4494 = vld [vmem:[%s409 + $0x140] sm:$0xff]
        %v4495 = vld [vmem:[%s409 + $0x148] sm:$0xff]
        %v4496 = vld [vmem:[%s409 + $0x150] sm:$0xff]
        %v4497 = vld [vmem:[%s409 + $0x158] sm:$0xff]
        %v4498 = vld [vmem:[%s409 + $0x160] sm:$0xff]
        %v4499 = vld [vmem:[%s409 + $0x168] sm:$0xff]
        %v4500 = vld [vmem:[%s409 + $0x170] sm:$0xff]
        %v4501 = vld [vmem:[%s409 + $0x178] sm:$0xff]
        %v4502 = vld [vmem:[%s409 + $0x180] sm:$0xff]
        %v4503 = vld [vmem:[%s409 + $0x188] sm:$0xff]
        %v4504 = vld [vmem:[%s409 + $0x190] sm:$0xff]
        %v4505 = vld [vmem:[%s409 + $0x198] sm:$0xff]
        %v4506 = vld [vmem:[%s409 + $0x1a0] sm:$0xff]
        %v4507 = vld [vmem:[%s409 + $0x1a8] sm:$0xff]
        %v4508 = vld [vmem:[%s409 + $0x1b0] sm:$0xff]
        %v4509 = vld [vmem:[%s409 + $0x1b8] sm:$0xff]
        %v4510 = vld [vmem:[%s409 + $0x1c0] sm:$0xff]
        %v4511 = vld [vmem:[%s409 + $0x1c8] sm:$0xff]
        %v4512 = vld [vmem:[%s409 + $0x1d0] sm:$0xff]
        %v4513 = vld [vmem:[%s409 + $0x1d8] sm:$0xff]
        %v4514 = vld [vmem:[%s409 + $0x1e0] sm:$0xff]
        %v4515 = vld [vmem:[%s409 + $0x1e8] sm:$0xff]
        %v4516 = vld [vmem:[%s409 + $0x1f0] sm:$0xff]
        %v4517 = vld [vmem:[%s409 + $0x1f8] sm:$0xff]
        %v4518 = vld [vmem:[%s409 + $0x200] sm:$0xff]
        %v4519 = vld [vmem:[%s409 + $0x208] sm:$0xff]
        %v4520 = vld [vmem:[%s409 + $0x210] sm:$0xff]
        %v4521 = vld [vmem:[%s409 + $0x218] sm:$0xff]
        %v4522 = vld [vmem:[%s409 + $0x220] sm:$0xff]
        %v4523 = vld [vmem:[%s409 + $0x228] sm:$0xff]
        %v4524 = vld [vmem:[%s409 + $0x230] sm:$0xff]
        %v4525 = vld [vmem:[%s409 + $0x238] sm:$0xff]
        %v4526 = vld [vmem:[%s409 + $0x240] sm:$0xff]
        %v4527 = vld [vmem:[%s409 + $0x248] sm:$0xff]
        %v4528 = vld [vmem:[%s409 + $0x250] sm:$0xff]
        %v4529 = vld [vmem:[%s409 + $0x258] sm:$0xff]
        %v4530 = vld [vmem:[%s409 + $0x260] sm:$0xff]
        %v4531 = vld [vmem:[%s409 + $0x268] sm:$0xff]
        %v4532 = vld [vmem:[%s409 + $0x270] sm:$0xff]
        %v4533 = vld [vmem:[%s409 + $0x278] sm:$0xff]
        %v4534 = vld [vmem:[%s409 + $0x280] sm:$0xff]
        %v4535 = vld [vmem:[%s409 + $0x288] sm:$0xff]
        %v4536 = vld [vmem:[%s409 + $0x290] sm:$0xff]
        %v4537 = vld [vmem:[%s409 + $0x298] sm:$0xff]
        %v4538 = vld [vmem:[%s409 + $0x2a0] sm:$0xff]
        %v4539 = vld [vmem:[%s409 + $0x2a8] sm:$0xff]
        %v4540 = vld [vmem:[%s409 + $0x2b0] sm:$0xff]
        %v4541 = vld [vmem:[%s409 + $0x2b8] sm:$0xff]
        %v4542 = vld [vmem:[%s409 + $0x2c0] sm:$0xff]
        %v4543 = vld [vmem:[%s409 + $0x2c8] sm:$0xff]
        %v4544 = vld [vmem:[%s409 + $0x2d0] sm:$0xff]
        %v4545 = vld [vmem:[%s409 + $0x2d8] sm:$0xff]
        %v4546 = vld [vmem:[%s409 + $0x2e0] sm:$0xff]
        %v4547 = vld [vmem:[%s409 + $0x2e8] sm:$0xff]
        %v4548 = vld [vmem:[%s409 + $0x2f0] sm:$0xff]
        %v4549 = vld [vmem:[%s409 + $0x2f8] sm:$0xff]
        %v4550 = vld [vmem:[%s409 + $0x300] sm:$0xff]
        %v4551 = vld [vmem:[%s409 + $0x308] sm:$0xff]
        %v4552 = vld [vmem:[%s409 + $0x310] sm:$0xff]
        %v4553 = vld [vmem:[%s409 + $0x318] sm:$0xff]
        %v4554 = vld [vmem:[%s409 + $0x320] sm:$0xff]
        %v4555 = vld [vmem:[%s409 + $0x328] sm:$0xff]
        %v4556 = vld [vmem:[%s409 + $0x330] sm:$0xff]
        %v4557 = vld [vmem:[%s409 + $0x338] sm:$0xff]
        %v4558 = vld [vmem:[%s409 + $0x340] sm:$0xff]
        %v4559 = vld [vmem:[%s409 + $0x348] sm:$0xff]
        %v4560 = vld [vmem:[%s409 + $0x350] sm:$0xff]
        %v4561 = vld [vmem:[%s409 + $0x358] sm:$0xff]
        %v4562 = vld [vmem:[%s409 + $0x360] sm:$0xff]
        %v4563 = vld [vmem:[%s409 + $0x368] sm:$0xff]
        %v4564 = vld [vmem:[%s409 + $0x370] sm:$0xff]
        %v4565 = vld [vmem:[%s409 + $0x378] sm:$0xff]
        %v4566 = vld [vmem:[%s409 + $0x380] sm:$0xff]
        %v4567 = vld [vmem:[%s409 + $0x388] sm:$0xff]
        %v4568 = vld [vmem:[%s409 + $0x390] sm:$0xff]
        %v4569 = vld [vmem:[%s409 + $0x398] sm:$0xff]
        %v4570 = vld [vmem:[%s409 + $0x3a0] sm:$0xff]
        %v4571 = vld [vmem:[%s409 + $0x3a8] sm:$0xff]
        %v4572 = vld [vmem:[%s409 + $0x3b0] sm:$0xff]
        %v4573 = vld [vmem:[%s409 + $0x3b8] sm:$0xff]
        %v4574 = vld [vmem:[%s409 + $0x3c0] sm:$0xff]
        %v4575 = vld [vmem:[%s409 + $0x3c8] sm:$0xff]
        %v4576 = vld [vmem:[%s409 + $0x3d0] sm:$0xff]
        %v4577 = vld [vmem:[%s409 + $0x3d8] sm:$0xff]
        %v4578 = vld [vmem:[%s409 + $0x3e0] sm:$0xff]
        %v4579 = vld [vmem:[%s409 + $0x3e8] sm:$0xff]
        %v4580 = vld [vmem:[%s409 + $0x3f0] sm:$0xff]
        %v4581 = vld [vmem:[%s409 + $0x3f8] sm:$0xff]
        %v4582 = vld [vmem:[%s409 + $0x400] sm:$0xff]
        %v4583 = vld [vmem:[%s409 + $0x408] sm:$0xff]
        %v4584 = vld [vmem:[%s409 + $0x410] sm:$0xff]
        %v4585 = vld [vmem:[%s409 + $0x418] sm:$0xff]
        %v4586 = vld [vmem:[%s409 + $0x420] sm:$0xff]
        %v4587 = vld [vmem:[%s409 + $0x428] sm:$0xff]
        %v4588 = vld [vmem:[%s409 + $0x430] sm:$0xff]
        %v4589 = vld [vmem:[%s409 + $0x438] sm:$0xff]
        %v4590 = vld [vmem:[%s409 + $0x440] sm:$0xff]
        %v4591 = vld [vmem:[%s409 + $0x448] sm:$0xff]
        %v4592 = vld [vmem:[%s409 + $0x450] sm:$0xff]
        %v4593 = vld [vmem:[%s409 + $0x458] sm:$0xff]
        %v4594 = vld [vmem:[%s409 + $0x460] sm:$0xff]
        %v4595 = vld [vmem:[%s409 + $0x468] sm:$0xff]
        %v4596 = vld [vmem:[%s409 + $0x470] sm:$0xff]
        %v4597 = vld [vmem:[%s409 + $0x478] sm:$0xff]
        %v4598 = vld [vmem:[%s409 + $0x480] sm:$0xff]
        %v4599 = vld [vmem:[%s409 + $0x488] sm:$0xff]
        %v4600 = vld [vmem:[%s409 + $0x490] sm:$0xff]
        %v4601 = vld [vmem:[%s409 + $0x498] sm:$0xff]
        %v4602 = vld [vmem:[%s409 + $0x4a0] sm:$0xff]
        %v4603 = vld [vmem:[%s409 + $0x4a8] sm:$0xff]
        %v4604 = vld [vmem:[%s409 + $0x4b0] sm:$0xff]
        %v4605 = vld [vmem:[%s409 + $0x4b8] sm:$0xff]
        %v4606 = vld [vmem:[%s409 + $0x4c0] sm:$0xff]
        %v4607 = vld [vmem:[%s409 + $0x4c8] sm:$0xff]
        %v4608 = vld [vmem:[%s409 + $0x4d0] sm:$0xff]
        %v4609 = vld [vmem:[%s409 + $0x4d8] sm:$0xff]
        %v4610 = vld [vmem:[%s409 + $0x4e0] sm:$0xff]
        %v4611 = vld [vmem:[%s409 + $0x4e8] sm:$0xff]
        %v4612 = vld [vmem:[%s409 + $0x4f0] sm:$0xff]
        %v4613 = vld [vmem:[%s409 + $0x4f8] sm:$0xff]
        %v4614 = vld [vmem:[%s409 + $0x500] sm:$0xff]
        %v4615 = vld [vmem:[%s409 + $0x508] sm:$0xff]
        %v4616 = vld [vmem:[%s409 + $0x510] sm:$0xff]
        %v4617 = vld [vmem:[%s409 + $0x518] sm:$0xff]
        %v4618 = vld [vmem:[%s409 + $0x520] sm:$0xff]
        %v4619 = vld [vmem:[%s409 + $0x528] sm:$0xff]
        %v4620 = vld [vmem:[%s409 + $0x530] sm:$0xff]
        %v4621 = vld [vmem:[%s409 + $0x538] sm:$0xff]
        %v4622 = vld [vmem:[%s409 + $0x540] sm:$0xff]
        %v4623 = vld [vmem:[%s409 + $0x548] sm:$0xff]
        %v4624 = vld [vmem:[%s409 + $0x550] sm:$0xff]
        %v4625 = vld [vmem:[%s409 + $0x558] sm:$0xff]
        %v4626 = vld [vmem:[%s409 + $0x560] sm:$0xff]
        %v4627 = vld [vmem:[%s409 + $0x568] sm:$0xff]
        %v4628 = vld [vmem:[%s409 + $0x570] sm:$0xff]
        %v4629 = vld [vmem:[%s409 + $0x578] sm:$0xff]
        %v4630 = vld [vmem:[%s409 + $0x580] sm:$0xff]
        %v4631 = vld [vmem:[%s409 + $0x588] sm:$0xff]
        %v4632 = vld [vmem:[%s409 + $0x590] sm:$0xff]
        %v4633 = vld [vmem:[%s409 + $0x598] sm:$0xff]
        %v4634 = vld [vmem:[%s409 + $0x5a0] sm:$0xff]
        %v4635 = vld [vmem:[%s409 + $0x5a8] sm:$0xff]
        %v4636 = vld [vmem:[%s409 + $0x5b0] sm:$0xff]
        %v4637 = vld [vmem:[%s409 + $0x5b8] sm:$0xff]
        %v4638 = vld [vmem:[%s409 + $0x5c0] sm:$0xff]
        %v4639 = vld [vmem:[%s409 + $0x5c8] sm:$0xff]
        %v4640 = vld [vmem:[%s409 + $0x5d0] sm:$0xff]
        %v4641 = vld [vmem:[%s409 + $0x5d8] sm:$0xff]
        %v4642 = vld [vmem:[%s409 + $0x5e0] sm:$0xff]
        %v4643 = vld [vmem:[%s409 + $0x5e8] sm:$0xff]
        %v4644 = vld [vmem:[%s409 + $0x5f0] sm:$0xff]
        %v4645 = vld [vmem:[%s409 + $0x5f8] sm:$0xff]
        %v4646 = vld [vmem:[%s409 + $0x600] sm:$0xff]
        %v4647 = vld [vmem:[%s409 + $0x608] sm:$0xff]
        %v4648 = vld [vmem:[%s409 + $0x610] sm:$0xff]
        %v4649 = vld [vmem:[%s409 + $0x618] sm:$0xff]
        %v4650 = vld [vmem:[%s409 + $0x620] sm:$0xff]
        %v4651 = vld [vmem:[%s409 + $0x628] sm:$0xff]
        %v4652 = vld [vmem:[%s409 + $0x630] sm:$0xff]
        %v4653 = vld [vmem:[%s409 + $0x638] sm:$0xff]
        %v4654 = vld [vmem:[%s409 + $0x640] sm:$0xff]
        %v4655 = vld [vmem:[%s409 + $0x648] sm:$0xff]
        %v4656 = vld [vmem:[%s409 + $0x650] sm:$0xff]
        %v4657 = vld [vmem:[%s409 + $0x658] sm:$0xff]
        %v4658 = vld [vmem:[%s409 + $0x660] sm:$0xff]
        %v4659 = vld [vmem:[%s409 + $0x668] sm:$0xff]
        %v4660 = vld [vmem:[%s409 + $0x670] sm:$0xff]
        %v4661 = vld [vmem:[%s409 + $0x678] sm:$0xff]
        %v4662 = vld [vmem:[%s409 + $0x680] sm:$0xff]
        %v4663 = vld [vmem:[%s409 + $0x688] sm:$0xff]
        %v4664 = vld [vmem:[%s409 + $0x690] sm:$0xff]
        %v4665 = vld [vmem:[%s409 + $0x698] sm:$0xff]
        %v4666 = vld [vmem:[%s409 + $0x6a0] sm:$0xff]
        %v4667 = vld [vmem:[%s409 + $0x6a8] sm:$0xff]
        %v4668 = vld [vmem:[%s409 + $0x6b0] sm:$0xff]
        %v4669 = vld [vmem:[%s409 + $0x6b8] sm:$0xff]
        %v4670 = vld [vmem:[%s409 + $0x6c0] sm:$0xff]
        %v4671 = vld [vmem:[%s409 + $0x6c8] sm:$0xff]
        %v4672 = vld [vmem:[%s409 + $0x6d0] sm:$0xff]
        %v4673 = vld [vmem:[%s409 + $0x6d8] sm:$0xff]
        %v4674 = vld [vmem:[%s409 + $0x6e0] sm:$0xff]
        %v4675 = vld [vmem:[%s409 + $0x6e8] sm:$0xff]
        %v4676 = vld [vmem:[%s409 + $0x6f0] sm:$0xff]
        %v4677 = vld [vmem:[%s409 + $0x6f8] sm:$0xff]
        %v4678 = vld [vmem:[%s409 + $0x700] sm:$0xff]
        %v4679 = vld [vmem:[%s409 + $0x708] sm:$0xff]
        %v4680 = vld [vmem:[%s409 + $0x710] sm:$0xff]
        %v4681 = vld [vmem:[%s409 + $0x718] sm:$0xff]
        %v4682 = vld [vmem:[%s409 + $0x720] sm:$0xff]
        %v4683 = vld [vmem:[%s409 + $0x728] sm:$0xff]
        %v4684 = vld [vmem:[%s409 + $0x730] sm:$0xff]
        %v4685 = vld [vmem:[%s409 + $0x738] sm:$0xff]
        %v4686 = vld [vmem:[%s409 + $0x740] sm:$0xff]
        %v4687 = vld [vmem:[%s409 + $0x748] sm:$0xff]
        %v4688 = vld [vmem:[%s409 + $0x750] sm:$0xff]
        %v4689 = vld [vmem:[%s409 + $0x758] sm:$0xff]
        %v4690 = vld [vmem:[%s409 + $0x760] sm:$0xff]
        %v4691 = vld [vmem:[%s409 + $0x768] sm:$0xff]
        %v4692 = vld [vmem:[%s409 + $0x770] sm:$0xff]
        %v4693 = vld [vmem:[%s409 + $0x778] sm:$0xff]
        %v4694 = vld [vmem:[%s409 + $0x780] sm:$0xff]
        %v4695 = vld [vmem:[%s409 + $0x788] sm:$0xff]
        %v4696 = vld [vmem:[%s409 + $0x790] sm:$0xff]
        %v4697 = vld [vmem:[%s409 + $0x798] sm:$0xff]
        %v4698 = vld [vmem:[%s409 + $0x7a0] sm:$0xff]
        %v4699 = vld [vmem:[%s409 + $0x7a8] sm:$0xff]
        %v4700 = vld [vmem:[%s409 + $0x7b0] sm:$0xff]
        %v4701 = vld [vmem:[%s409 + $0x7b8] sm:$0xff]
        %v4702 = vld [vmem:[%s409 + $0x7c0] sm:$0xff]
        %v4703 = vld [vmem:[%s409 + $0x7c8] sm:$0xff]
        %v4704 = vld [vmem:[%s409 + $0x7d0] sm:$0xff]
        %v4705 = vld [vmem:[%s409 + $0x7d8] sm:$0xff]
        %v4706 = vld [vmem:[%s409 + $0x7e0] sm:$0xff]
        %v4707 = vld [vmem:[%s409 + $0x7e8] sm:$0xff]
        %v4708 = vld [vmem:[%s409 + $0x7f0] sm:$0xff]
        %v4709 = vld [vmem:[%s409 + $0x7f8] sm:$0xff]
        %v4710 = vld [vmem:[%s409 + $0x800] sm:$0xff]
        %v4711 = vld [vmem:[%s409 + $0x808] sm:$0xff]
        %v4712 = vld [vmem:[%s409 + $0x810] sm:$0xff]
        %v4713 = vld [vmem:[%s409 + $0x818] sm:$0xff]
        %v4714 = vld [vmem:[%s409 + $0x820] sm:$0xff]
        %v4715 = vld [vmem:[%s409 + $0x828] sm:$0xff]
        %v4716 = vld [vmem:[%s409 + $0x830] sm:$0xff]
        %v4717 = vld [vmem:[%s409 + $0x838] sm:$0xff]
        %v4718 = vld [vmem:[%s409 + $0x840] sm:$0xff]
        %v4719 = vld [vmem:[%s409 + $0x848] sm:$0xff]
        %v4720 = vld [vmem:[%s409 + $0x850] sm:$0xff]
        %v4721 = vld [vmem:[%s409 + $0x858] sm:$0xff]
        %v4722 = vld [vmem:[%s409 + $0x860] sm:$0xff]
        %v4723 = vld [vmem:[%s409 + $0x868] sm:$0xff]
        %v4724 = vld [vmem:[%s409 + $0x870] sm:$0xff]
        %v4725 = vld [vmem:[%s409 + $0x878] sm:$0xff]
        %v4726 = vld [vmem:[%s409 + $0x880] sm:$0xff]
        %v4727 = vld [vmem:[%s409 + $0x888] sm:$0xff]
        %v4728 = vld [vmem:[%s409 + $0x890] sm:$0xff]
        %v4729 = vld [vmem:[%s409 + $0x898] sm:$0xff]
        %v4730 = vld [vmem:[%s409 + $0x8a0] sm:$0xff]
        %v4731 = vld [vmem:[%s409 + $0x8a8] sm:$0xff]
        %v4732 = vld [vmem:[%s409 + $0x8b0] sm:$0xff]
        %v4733 = vld [vmem:[%s409 + $0x8b8] sm:$0xff]
        %v4734 = vld [vmem:[%s409 + $0x8c0] sm:$0xff]
        %v4735 = vld [vmem:[%s409 + $0x8c8] sm:$0xff]
        %v4736 = vld [vmem:[%s409 + $0x8d0] sm:$0xff]
        %v4737 = vld [vmem:[%s409 + $0x8d8] sm:$0xff]
        %v4738 = vld [vmem:[%s409 + $0x8e0] sm:$0xff]
        %v4739 = vld [vmem:[%s409 + $0x8e8] sm:$0xff]
        %v4740 = vld [vmem:[%s409 + $0x8f0] sm:$0xff]
        %v4741 = vld [vmem:[%s409 + $0x8f8] sm:$0xff]
        %v4742 = vld [vmem:[%s409 + $0x900] sm:$0xff]
        %v4743 = vld [vmem:[%s409 + $0x908] sm:$0xff]
        %v4744 = vld [vmem:[%s409 + $0x910] sm:$0xff]
        %v4745 = vld [vmem:[%s409 + $0x918] sm:$0xff]
        %v4746 = vld [vmem:[%s409 + $0x920] sm:$0xff]
        %v4747 = vld [vmem:[%s409 + $0x928] sm:$0xff]
        %v4748 = vld [vmem:[%s409 + $0x930] sm:$0xff]
        %v4749 = vld [vmem:[%s409 + $0x938] sm:$0xff]
        %v4750 = vld [vmem:[%s409 + $0x940] sm:$0xff]
        %v4751 = vld [vmem:[%s409 + $0x948] sm:$0xff]
        %v4752 = vld [vmem:[%s409 + $0x950] sm:$0xff]
        %v4753 = vld [vmem:[%s409 + $0x958] sm:$0xff]
        %v4754 = vld [vmem:[%s409 + $0x960] sm:$0xff]
        %v4755 = vld [vmem:[%s409 + $0x968] sm:$0xff]
        %v4756 = vld [vmem:[%s409 + $0x970] sm:$0xff]
        %v4757 = vld [vmem:[%s409 + $0x978] sm:$0xff]
        %v4758 = vld [vmem:[%s409 + $0x980] sm:$0xff]
        %v4759 = vld [vmem:[%s409 + $0x988] sm:$0xff]
        %v4760 = vld [vmem:[%s409 + $0x990] sm:$0xff]
        %v4761 = vld [vmem:[%s409 + $0x998] sm:$0xff]
        %v4762 = vld [vmem:[%s409 + $0x9a0] sm:$0xff]
        %v4763 = vld [vmem:[%s409 + $0x9a8] sm:$0xff]
        %v4764 = vld [vmem:[%s409 + $0x9b0] sm:$0xff]
        %v4765 = vld [vmem:[%s409 + $0x9b8] sm:$0xff]
        %v4766 = vld [vmem:[%s409 + $0x9c0] sm:$0xff]
        %v4767 = vld [vmem:[%s409 + $0x9c8] sm:$0xff]
        %v4768 = vld [vmem:[%s409 + $0x9d0] sm:$0xff]
        %v4769 = vld [vmem:[%s409 + $0x9d8] sm:$0xff]
        %v4770 = vld [vmem:[%s409 + $0x9e0] sm:$0xff]
        %v4771 = vld [vmem:[%s409 + $0x9e8] sm:$0xff]
        %v4772 = vld [vmem:[%s409 + $0x9f0] sm:$0xff]
        %v4773 = vld [vmem:[%s409 + $0x9f8] sm:$0xff]
        %v4774 = vld [vmem:[%s409 + $0xa00] sm:$0xff]
        %v4775 = vld [vmem:[%s409 + $0xa08] sm:$0xff]
        %v4776 = vld [vmem:[%s409 + $0xa10] sm:$0xff]
        %v4777 = vld [vmem:[%s409 + $0xa18] sm:$0xff]
        %v4778 = vld [vmem:[%s409 + $0xa20] sm:$0xff]
        %v4779 = vld [vmem:[%s409 + $0xa28] sm:$0xff]
        %v4780 = vld [vmem:[%s409 + $0xa30] sm:$0xff]
        %v4781 = vld [vmem:[%s409 + $0xa38] sm:$0xff]
        %v4782 = vld [vmem:[%s409 + $0xa40] sm:$0xff]
        %v4783 = vld [vmem:[%s409 + $0xa48] sm:$0xff]
        %v4784 = vld [vmem:[%s409 + $0xa50] sm:$0xff]
        %v4785 = vld [vmem:[%s409 + $0xa58] sm:$0xff]
        %v4786 = vld [vmem:[%s409 + $0xa60] sm:$0xff]
        %v4787 = vld [vmem:[%s409 + $0xa68] sm:$0xff]
        %v4788 = vld [vmem:[%s409 + $0xa70] sm:$0xff]
        %v4789 = vld [vmem:[%s409 + $0xa78] sm:$0xff]
        %v4790 = vld [vmem:[%s409 + $0xa80] sm:$0xff]
        %v4791 = vld [vmem:[%s409 + $0xa88] sm:$0xff]
        %v4792 = vld [vmem:[%s409 + $0xa90] sm:$0xff]
        %v4793 = vld [vmem:[%s409 + $0xa98] sm:$0xff]
        %v4794 = vld [vmem:[%s409 + $0xaa0] sm:$0xff]
        %v4795 = vld [vmem:[%s409 + $0xaa8] sm:$0xff]
        %v4796 = vld [vmem:[%s409 + $0xab0] sm:$0xff]
        %v4797 = vld [vmem:[%s409 + $0xab8] sm:$0xff]
        %v4798 = vld [vmem:[%s409 + $0xac0] sm:$0xff]
        %v4799 = vld [vmem:[%s409 + $0xac8] sm:$0xff]
        %v4800 = vld [vmem:[%s409 + $0xad0] sm:$0xff]
        %v4801 = vld [vmem:[%s409 + $0xad8] sm:$0xff]
        %v4802 = vld [vmem:[%s409 + $0xae0] sm:$0xff]
        %v4803 = vld [vmem:[%s409 + $0xae8] sm:$0xff]
        %v4804 = vld [vmem:[%s409 + $0xaf0] sm:$0xff]
        %v4805 = vld [vmem:[%s409 + $0xaf8] sm:$0xff]
        %v4806 = vld [vmem:[%s409 + $0xb00] sm:$0xff]
        %v4807 = vld [vmem:[%s409 + $0xb08] sm:$0xff]
        %v4808 = vld [vmem:[%s409 + $0xb10] sm:$0xff]
        %v4809 = vld [vmem:[%s409 + $0xb18] sm:$0xff]
        %v4810 = vld [vmem:[%s409 + $0xb20] sm:$0xff]
        %v4811 = vld [vmem:[%s409 + $0xb28] sm:$0xff]
        %v4812 = vld [vmem:[%s409 + $0xb30] sm:$0xff]
        %v4813 = vld [vmem:[%s409 + $0xb38] sm:$0xff]
        %v4814 = vld [vmem:[%s409 + $0xb40] sm:$0xff]
        %v4815 = vld [vmem:[%s409 + $0xb48] sm:$0xff]
        %v4816 = vld [vmem:[%s409 + $0xb50] sm:$0xff]
        %v4817 = vld [vmem:[%s409 + $0xb58] sm:$0xff]
        %v4818 = vld [vmem:[%s409 + $0xb60] sm:$0xff]
        %v4819 = vld [vmem:[%s409 + $0xb68] sm:$0xff]
        %v4820 = vld [vmem:[%s409 + $0xb70] sm:$0xff]
        %v4821 = vld [vmem:[%s409 + $0xb78] sm:$0xff]
        %v4822 = vld [vmem:[%s409 + $0xb80] sm:$0xff]
        %v4823 = vld [vmem:[%s409 + $0xb88] sm:$0xff]
        %v4824 = vld [vmem:[%s409 + $0xb90] sm:$0xff]
        %v4825 = vld [vmem:[%s409 + $0xb98] sm:$0xff]
        %v4826 = vld [vmem:[%s409 + $0xba0] sm:$0xff]
        %v4827 = vld [vmem:[%s409 + $0xba8] sm:$0xff]
        %v4828 = vld [vmem:[%s409 + $0xbb0] sm:$0xff]
        %v4829 = vld [vmem:[%s409 + $0xbb8] sm:$0xff]
        %v4830 = vld [vmem:[%s409 + $0xbc0] sm:$0xff]
        %v4831 = vld [vmem:[%s409 + $0xbc8] sm:$0xff]
        %v4832 = vld [vmem:[%s409 + $0xbd0] sm:$0xff]
        %v4833 = vld [vmem:[%s409 + $0xbd8] sm:$0xff]
        %v4834 = vld [vmem:[%s409 + $0xbe0] sm:$0xff]
        %v4835 = vld [vmem:[%s409 + $0xbe8] sm:$0xff]
        %v4836 = vld [vmem:[%s409 + $0xbf0] sm:$0xff]
        %v4837 = vld [vmem:[%s409 + $0xbf8] sm:$0xff]
        %v4838 = vld [vmem:[%s409 + $0xc00] sm:$0xff]
        %v4839 = vld [vmem:[%s409 + $0xc08] sm:$0xff]
        %v4840 = vld [vmem:[%s409 + $0xc10] sm:$0xff]
        %v4841 = vld [vmem:[%s409 + $0xc18] sm:$0xff]
        %v4842 = vld [vmem:[%s409 + $0xc20] sm:$0xff]
        %v4843 = vld [vmem:[%s409 + $0xc28] sm:$0xff]
        %v4844 = vld [vmem:[%s409 + $0xc30] sm:$0xff]
        %v4845 = vld [vmem:[%s409 + $0xc38] sm:$0xff]
        %v4846 = vld [vmem:[%s409 + $0xc40] sm:$0xff]
        %v4847 = vld [vmem:[%s409 + $0xc48] sm:$0xff]
        %v4848 = vld [vmem:[%s409 + $0xc50] sm:$0xff]
        %v4849 = vld [vmem:[%s409 + $0xc58] sm:$0xff]
        %v4850 = vld [vmem:[%s409 + $0xc60] sm:$0xff]
        %v4851 = vld [vmem:[%s409 + $0xc68] sm:$0xff]
        %v4852 = vld [vmem:[%s409 + $0xc70] sm:$0xff]
        %v4853 = vld [vmem:[%s409 + $0xc78] sm:$0xff]
        %v4854 = vld [vmem:[%s409 + $0xc80] sm:$0xff]
        %v4855 = vld [vmem:[%s409 + $0xc88] sm:$0xff]
        %v4856 = vld [vmem:[%s409 + $0xc90] sm:$0xff]
        %v4857 = vld [vmem:[%s409 + $0xc98] sm:$0xff]
        %v4858 = vld [vmem:[%s409 + $0xca0] sm:$0xff]
        %v4859 = vld [vmem:[%s409 + $0xca8] sm:$0xff]
        %v4860 = vld [vmem:[%s409 + $0xcb0] sm:$0xff]
        %v4861 = vld [vmem:[%s409 + $0xcb8] sm:$0xff]
        %v4862 = vld [vmem:[%s409 + $0xcc0] sm:$0xff]
        %v4863 = vld [vmem:[%s409 + $0xcc8] sm:$0xff]
        %v4864 = vld [vmem:[%s409 + $0xcd0] sm:$0xff]
        %v4865 = vld [vmem:[%s409 + $0xcd8] sm:$0xff]
        %v4866 = vld [vmem:[%s409 + $0xce0] sm:$0xff]
        %v4867 = vld [vmem:[%s409 + $0xce8] sm:$0xff]
        %v4868 = vld [vmem:[%s409 + $0xcf0] sm:$0xff]
        %v4869 = vld [vmem:[%s409 + $0xcf8] sm:$0xff]
        %v4870 = vld [vmem:[%s409 + $0xd00] sm:$0xff]
        %v4871 = vld [vmem:[%s409 + $0xd08] sm:$0xff]
        %v4872 = vld [vmem:[%s409 + $0xd10] sm:$0xff]
        %v4873 = vld [vmem:[%s409 + $0xd18] sm:$0xff]
        %v4874 = vld [vmem:[%s409 + $0xd20] sm:$0xff]
        %v4875 = vld [vmem:[%s409 + $0xd28] sm:$0xff]
        %v4876 = vld [vmem:[%s409 + $0xd30] sm:$0xff]
        %v4877 = vld [vmem:[%s409 + $0xd38] sm:$0xff]
        %v4878 = vld [vmem:[%s409 + $0xd40] sm:$0xff]
        %v4879 = vld [vmem:[%s409 + $0xd48] sm:$0xff]
        %v4880 = vld [vmem:[%s409 + $0xd50] sm:$0xff]
        %v4881 = vld [vmem:[%s409 + $0xd58] sm:$0xff]
        %v4882 = vld [vmem:[%s409 + $0xd60] sm:$0xff]
        %v4883 = vld [vmem:[%s409 + $0xd68] sm:$0xff]
        %v4884 = vld [vmem:[%s409 + $0xd70] sm:$0xff]
        %v4885 = vld [vmem:[%s409 + $0xd78] sm:$0xff]
        %v4886 = vld [vmem:[%s409 + $0xd80] sm:$0xff]
        %v4887 = vld [vmem:[%s409 + $0xd88] sm:$0xff]
        %v4888 = vld [vmem:[%s409 + $0xd90] sm:$0xff]
        %v4889 = vld [vmem:[%s409 + $0xd98] sm:$0xff]
        %v4890 = vld [vmem:[%s409 + $0xda0] sm:$0xff]
        %v4891 = vld [vmem:[%s409 + $0xda8] sm:$0xff]
        %v4892 = vld [vmem:[%s409 + $0xdb0] sm:$0xff]
        %v4893 = vld [vmem:[%s409 + $0xdb8] sm:$0xff]
        %v4894 = vld [vmem:[%s409 + $0xdc0] sm:$0xff]
        %v4895 = vld [vmem:[%s409 + $0xdc8] sm:$0xff]
        %v4896 = vld [vmem:[%s409 + $0xdd0] sm:$0xff]
        %v4897 = vld [vmem:[%s409 + $0xdd8] sm:$0xff]
        %v4898 = vld [vmem:[%s409 + $0xde0] sm:$0xff]
        %v4899 = vld [vmem:[%s409 + $0xde8] sm:$0xff]
        %v4900 = vld [vmem:[%s409 + $0xdf0] sm:$0xff]
        %v4901 = vld [vmem:[%s409 + $0xdf8] sm:$0xff]
        %v4902 = vld [vmem:[%s409 + $0xe00] sm:$0xff]
        %v4903 = vld [vmem:[%s409 + $0xe08] sm:$0xff]
        %v4904 = vld [vmem:[%s409 + $0xe10] sm:$0xff]
        %v4905 = vld [vmem:[%s409 + $0xe18] sm:$0xff]
        %v4906 = vld [vmem:[%s409 + $0xe20] sm:$0xff]
        %v4907 = vld [vmem:[%s409 + $0xe28] sm:$0xff]
        %v4908 = vld [vmem:[%s409 + $0xe30] sm:$0xff]
        %v4909 = vld [vmem:[%s409 + $0xe38] sm:$0xff]
        %v4910 = vld [vmem:[%s409 + $0xe40] sm:$0xff]
        %v4911 = vld [vmem:[%s409 + $0xe48] sm:$0xff]
        %v4912 = vld [vmem:[%s409 + $0xe50] sm:$0xff]
        %v4913 = vld [vmem:[%s409 + $0xe58] sm:$0xff]
        %v4914 = vld [vmem:[%s409 + $0xe60] sm:$0xff]
        %v4915 = vld [vmem:[%s409 + $0xe68] sm:$0xff]
        %v4916 = vld [vmem:[%s409 + $0xe70] sm:$0xff]
        %v4917 = vld [vmem:[%s409 + $0xe78] sm:$0xff]
        %v4918 = vld [vmem:[%s409 + $0xe80] sm:$0xff]
        %v4919 = vld [vmem:[%s409 + $0xe88] sm:$0xff]
        %v4920 = vld [vmem:[%s409 + $0xe90] sm:$0xff]
        %v4921 = vld [vmem:[%s409 + $0xe98] sm:$0xff]
        %v4922 = vld [vmem:[%s409 + $0xea0] sm:$0xff]
        %v4923 = vld [vmem:[%s409 + $0xea8] sm:$0xff]
        %v4924 = vld [vmem:[%s409 + $0xeb0] sm:$0xff]
        %v4925 = vld [vmem:[%s409 + $0xeb8] sm:$0xff]
        %v4926 = vld [vmem:[%s409 + $0xec0] sm:$0xff]
        %v4927 = vld [vmem:[%s409 + $0xec8] sm:$0xff]
        %v4928 = vld [vmem:[%s409 + $0xed0] sm:$0xff]
        %v4929 = vld [vmem:[%s409 + $0xed8] sm:$0xff]
        %v4930 = vld [vmem:[%s409 + $0xee0] sm:$0xff]
        %v4931 = vld [vmem:[%s409 + $0xee8] sm:$0xff]
        %v4932 = vld [vmem:[%s409 + $0xef0] sm:$0xff]
        %v4933 = vld [vmem:[%s409 + $0xef8] sm:$0xff]
        %v4934 = vld [vmem:[%s409 + $0xf00] sm:$0xff]
        %v4935 = vld [vmem:[%s409 + $0xf08] sm:$0xff]
        %v4936 = vld [vmem:[%s409 + $0xf10] sm:$0xff]
        %v4937 = vld [vmem:[%s409 + $0xf18] sm:$0xff]
        %v4938 = vld [vmem:[%s409 + $0xf20] sm:$0xff]
        %v4939 = vld [vmem:[%s409 + $0xf28] sm:$0xff]
        %v4940 = vld [vmem:[%s409 + $0xf30] sm:$0xff]
        %v4941 = vld [vmem:[%s409 + $0xf38] sm:$0xff]
        %v4942 = vld [vmem:[%s409 + $0xf40] sm:$0xff]
        %v4943 = vld [vmem:[%s409 + $0xf48] sm:$0xff]
        %v4944 = vld [vmem:[%s409 + $0xf50] sm:$0xff]
        %v4945 = vld [vmem:[%s409 + $0xf58] sm:$0xff]
        %v4946 = vld [vmem:[%s409 + $0xf60] sm:$0xff]
        %v4947 = vld [vmem:[%s409 + $0xf68] sm:$0xff]
        %v4948 = vld [vmem:[%s409 + $0xf70] sm:$0xff]
        %v4949 = vld [vmem:[%s409 + $0xf78] sm:$0xff]
        %v4950 = vld [vmem:[%s409 + $0xf80] sm:$0xff]
        %v4951 = vld [vmem:[%s409 + $0xf88] sm:$0xff]
        %v4952 = vld [vmem:[%s409 + $0xf90] sm:$0xff]
        %v4953 = vld [vmem:[%s409 + $0xf98] sm:$0xff]
        %v4954 = vld [vmem:[%s409 + $0xfa0] sm:$0xff]
        %v4955 = vld [vmem:[%s409 + $0xfa8] sm:$0xff]
        %v4956 = vld [vmem:[%s409 + $0xfb0] sm:$0xff]
        %v4957 = vld [vmem:[%s409 + $0xfb8] sm:$0xff]
        %v4958 = vld [vmem:[%s409 + $0xfc0] sm:$0xff]
        %v4959 = vld [vmem:[%s409 + $0xfc8] sm:$0xff]
        %v4960 = vld [vmem:[%s409 + $0xfd0] sm:$0xff]
        %v4961 = vld [vmem:[%s409 + $0xfd8] sm:$0xff]
        %v4962 = vld [vmem:[%s409 + $0xfe0] sm:$0xff]
        %v4963 = vld [vmem:[%s409 + $0xfe8] sm:$0xff]
        %v4964 = vld [vmem:[%s409 + $0xff0] sm:$0xff]
        %v4965 = vld [vmem:[%s409 + $0xff8] sm:$0xff]
        %v4966 = vld [vmem:[%s409 + $0x1000] sm:$0xff]
        %v4967 = vld [vmem:[%s409 + $0x1008] sm:$0xff]
        %v4968 = vld [vmem:[%s409 + $0x1010] sm:$0xff]
        %v4969 = vld [vmem:[%s409 + $0x1018] sm:$0xff]
        %v4970 = vld [vmem:[%s409 + $0x1020] sm:$0xff]
        %v4971 = vld [vmem:[%s409 + $0x1028] sm:$0xff]
        %v4972 = vld [vmem:[%s409 + $0x1030] sm:$0xff]
        %v4973 = vld [vmem:[%s409 + $0x1038] sm:$0xff]
        %v4974 = vld [vmem:[%s409 + $0x1040] sm:$0xff]
        %v4975 = vld [vmem:[%s409 + $0x1048] sm:$0xff]
        %v4976 = vld [vmem:[%s409 + $0x1050] sm:$0xff]
        %v4977 = vld [vmem:[%s409 + $0x1058] sm:$0xff]
        %v4978 = vld [vmem:[%s409 + $0x1060] sm:$0xff]
        %v4979 = vld [vmem:[%s409 + $0x1068] sm:$0xff]
        %v4980 = vld [vmem:[%s409 + $0x1070] sm:$0xff]
        %v4981 = vld [vmem:[%s409 + $0x1078] sm:$0xff]
        %v4982 = vld [vmem:[%s409 + $0x1080] sm:$0xff]
        %v4983 = vld [vmem:[%s409 + $0x1088] sm:$0xff]
        %v4984 = vld [vmem:[%s409 + $0x1090] sm:$0xff]
        %v4985 = vld [vmem:[%s409 + $0x1098] sm:$0xff]
        %v4986 = vld [vmem:[%s409 + $0x10a0] sm:$0xff]
        %v4987 = vld [vmem:[%s409 + $0x10a8] sm:$0xff]
        %v4988 = vld [vmem:[%s409 + $0x10b0] sm:$0xff]
        %v4989 = vld [vmem:[%s409 + $0x10b8] sm:$0xff]
        %v4990 = vld [vmem:[%s409 + $0x10c0] sm:$0xff]
        %v4991 = vld [vmem:[%s409 + $0x10c8] sm:$0xff]
        %v4992 = vld [vmem:[%s409 + $0x10d0] sm:$0xff]
        %v4993 = vld [vmem:[%s409 + $0x10d8] sm:$0xff]
        %v4994 = vld [vmem:[%s409 + $0x10e0] sm:$0xff]
        %v4995 = vld [vmem:[%s409 + $0x10e8] sm:$0xff]
        %v4996 = vld [vmem:[%s409 + $0x10f0] sm:$0xff]
        %v4997 = vld [vmem:[%s409 + $0x10f8] sm:$0xff]
        %v4998 = vld [vmem:[%s409 + $0x1100] sm:$0xff]
        %v4999 = vld [vmem:[%s409 + $0x1108] sm:$0xff]
        %v5000 = vld [vmem:[%s409 + $0x1110] sm:$0xff]
        %v5001 = vld [vmem:[%s409 + $0x1118] sm:$0xff]
        %v5002 = vld [vmem:[%s409 + $0x1120] sm:$0xff]
        %v5003 = vld [vmem:[%s409 + $0x1128] sm:$0xff]
        %v5004 = vld [vmem:[%s409 + $0x1130] sm:$0xff]
        %v5005 = vld [vmem:[%s409 + $0x1138] sm:$0xff]
        %v5006 = vld [vmem:[%s409 + $0x1140] sm:$0xff]
        %v5007 = vld [vmem:[%s409 + $0x1148] sm:$0xff]
        %v5008 = vld [vmem:[%s409 + $0x1150] sm:$0xff]
        %v5009 = vld [vmem:[%s409 + $0x1158] sm:$0xff]
        %v5010 = vld [vmem:[%s409 + $0x1160] sm:$0xff]
        %v5011 = vld [vmem:[%s409 + $0x1168] sm:$0xff]
        %v5012 = vld [vmem:[%s409 + $0x1170] sm:$0xff]
        %v5013 = vld [vmem:[%s409 + $0x1178] sm:$0xff]
        %v5014 = vld [vmem:[%s409 + $0x1180] sm:$0xff]
        %v5015 = vld [vmem:[%s409 + $0x1188] sm:$0xff]
        %v5016 = vld [vmem:[%s409 + $0x1190] sm:$0xff]
        %v5017 = vld [vmem:[%s409 + $0x1198] sm:$0xff]
        %v5018 = vld [vmem:[%s409 + $0x11a0] sm:$0xff]
        %v5019 = vld [vmem:[%s409 + $0x11a8] sm:$0xff]
        %v5020 = vld [vmem:[%s409 + $0x11b0] sm:$0xff]
        %v5021 = vld [vmem:[%s409 + $0x11b8] sm:$0xff]
        %v5022 = vld [vmem:[%s409 + $0x11c0] sm:$0xff]
        %v5023 = vld [vmem:[%s409 + $0x11c8] sm:$0xff]
        %v5024 = vld [vmem:[%s409 + $0x11d0] sm:$0xff]
        %v5025 = vld [vmem:[%s409 + $0x11d8] sm:$0xff]
        %v5026 = vld [vmem:[%s409 + $0x11e0] sm:$0xff]
        %v5027 = vld [vmem:[%s409 + $0x11e8] sm:$0xff]
        %v5028 = vld [vmem:[%s409 + $0x11f0] sm:$0xff]
        %v5029 = vld [vmem:[%s409 + $0x11f8] sm:$0xff]
        %v5030 = vld [vmem:[%s409 + $0x1200] sm:$0xff]
        %v5031 = vld [vmem:[%s409 + $0x1208] sm:$0xff]
        %v5032 = vld [vmem:[%s409 + $0x1210] sm:$0xff]
        %v5033 = vld [vmem:[%s409 + $0x1218] sm:$0xff]
        %v5034 = vld [vmem:[%s409 + $0x1220] sm:$0xff]
        %v5035 = vld [vmem:[%s409 + $0x1228] sm:$0xff]
        %v5036 = vld [vmem:[%s409 + $0x1230] sm:$0xff]
        %v5037 = vld [vmem:[%s409 + $0x1238] sm:$0xff]
        %v5038 = vld [vmem:[%s409 + $0x1240] sm:$0xff]
        %v5039 = vld [vmem:[%s409 + $0x1248] sm:$0xff]
        %v5040 = vld [vmem:[%s409 + $0x1250] sm:$0xff]
        %v5041 = vld [vmem:[%s409 + $0x1258] sm:$0xff]
        %v5042 = vld [vmem:[%s409 + $0x1260] sm:$0xff]
        %v5043 = vld [vmem:[%s409 + $0x1268] sm:$0xff]
        %v5044 = vld [vmem:[%s409 + $0x1270] sm:$0xff]
        %v5045 = vld [vmem:[%s409 + $0x1278] sm:$0xff]
        %v5046 = vld [vmem:[%s409 + $0x1280] sm:$0xff]
        %v5047 = vld [vmem:[%s409 + $0x1288] sm:$0xff]
        %v5048 = vld [vmem:[%s409 + $0x1290] sm:$0xff]
        %v5049 = vld [vmem:[%s409 + $0x1298] sm:$0xff]
        %v5050 = vld [vmem:[%s409 + $0x12a0] sm:$0xff]
        %v5051 = vld [vmem:[%s409 + $0x12a8] sm:$0xff]
        %v5052 = vld [vmem:[%s409 + $0x12b0] sm:$0xff]
        %v5053 = vld [vmem:[%s409 + $0x12b8] sm:$0xff]
        %v5054 = vld [vmem:[%s409 + $0x12c0] sm:$0xff]
        %v5055 = vld [vmem:[%s409 + $0x12c8] sm:$0xff]
        %v5056 = vld [vmem:[%s409 + $0x12d0] sm:$0xff]
        %v5057 = vld [vmem:[%s409 + $0x12d8] sm:$0xff]
        %v5058 = vld [vmem:[%s409 + $0x12e0] sm:$0xff]
        %v5059 = vld [vmem:[%s409 + $0x12e8] sm:$0xff]
        %v5060 = vld [vmem:[%s409 + $0x12f0] sm:$0xff]
        %v5061 = vld [vmem:[%s409 + $0x12f8] sm:$0xff]
        %v5062 = vld [vmem:[%s409 + $0x1300] sm:$0xff]
        %v5063 = vld [vmem:[%s409 + $0x1308] sm:$0xff]
        %v5064 = vld [vmem:[%s409 + $0x1310] sm:$0xff]
        %v5065 = vld [vmem:[%s409 + $0x1318] sm:$0xff]
        %v5066 = vld [vmem:[%s409 + $0x1320] sm:$0xff]
        %v5067 = vld [vmem:[%s409 + $0x1328] sm:$0xff]
        %v5068 = vld [vmem:[%s409 + $0x1330] sm:$0xff]
        %v5069 = vld [vmem:[%s409 + $0x1338] sm:$0xff]
        %v5070 = vld [vmem:[%s409 + $0x1340] sm:$0xff]
        %v5071 = vld [vmem:[%s409 + $0x1348] sm:$0xff]
        %v5072 = vld [vmem:[%s409 + $0x1350] sm:$0xff]
        %v5073 = vld [vmem:[%s409 + $0x1358] sm:$0xff]
        %v5074 = vld [vmem:[%s409 + $0x1360] sm:$0xff]
        %v5075 = vld [vmem:[%s409 + $0x1368] sm:$0xff]
        %v5076 = vld [vmem:[%s409 + $0x1370] sm:$0xff]
        %v5077 = vld [vmem:[%s409 + $0x1378] sm:$0xff]
        %v5078 = vld [vmem:[%s409 + $0x1380] sm:$0xff]
        %v5079 = vld [vmem:[%s409 + $0x1388] sm:$0xff]
        %v5080 = vld [vmem:[%s409 + $0x1390] sm:$0xff]
        %v5081 = vld [vmem:[%s409 + $0x1398] sm:$0xff]
        %v5082 = vld [vmem:[%s409 + $0x13a0] sm:$0xff]
        %v5083 = vld [vmem:[%s409 + $0x13a8] sm:$0xff]
        %v5084 = vld [vmem:[%s409 + $0x13b0] sm:$0xff]
        %v5085 = vld [vmem:[%s409 + $0x13b8] sm:$0xff]
        %v5086 = vld [vmem:[%s409 + $0x13c0] sm:$0xff]
        %v5087 = vld [vmem:[%s409 + $0x13c8] sm:$0xff]
        %v5088 = vld [vmem:[%s409 + $0x13d0] sm:$0xff]
        %v5089 = vld [vmem:[%s409 + $0x13d8] sm:$0xff]
        %v5090 = vld [vmem:[%s409 + $0x13e0] sm:$0xff]
        %v5091 = vld [vmem:[%s409 + $0x13e8] sm:$0xff]
        %v5092 = vld [vmem:[%s409 + $0x13f0] sm:$0xff]
        %v5093 = vld [vmem:[%s409 + $0x13f8] sm:$0xff]
        %v5094 = vld [vmem:[%s409 + $0x1400] sm:$0xff]
        %v5095 = vld [vmem:[%s409 + $0x1408] sm:$0xff]
        %v5096 = vld [vmem:[%s409 + $0x1410] sm:$0xff]
        %v5097 = vld [vmem:[%s409 + $0x1418] sm:$0xff]
        %v5098 = vld [vmem:[%s409 + $0x1420] sm:$0xff]
        %v5099 = vld [vmem:[%s409 + $0x1428] sm:$0xff]
        %v5100 = vld [vmem:[%s409 + $0x1430] sm:$0xff]
        %v5101 = vld [vmem:[%s409 + $0x1438] sm:$0xff]
        %v5102 = vld [vmem:[%s409 + $0x1440] sm:$0xff]
        %v5103 = vld [vmem:[%s409 + $0x1448] sm:$0xff]
        %v5104 = vld [vmem:[%s409 + $0x1450] sm:$0xff]
        %v5105 = vld [vmem:[%s409 + $0x1458] sm:$0xff]
        %v5106 = vld [vmem:[%s409 + $0x1460] sm:$0xff]
        %v5107 = vld [vmem:[%s409 + $0x1468] sm:$0xff]
        %v5108 = vld [vmem:[%s409 + $0x1470] sm:$0xff]
        %v5109 = vld [vmem:[%s409 + $0x1478] sm:$0xff]
        %v5110 = vld [vmem:[%s409 + $0x1480] sm:$0xff]
        %v5111 = vld [vmem:[%s409 + $0x1488] sm:$0xff]
        %v5112 = vld [vmem:[%s409 + $0x1490] sm:$0xff]
        %v5113 = vld [vmem:[%s409 + $0x1498] sm:$0xff]
        %v5114 = vld [vmem:[%s409 + $0x14a0] sm:$0xff]
        %v5115 = vld [vmem:[%s409 + $0x14a8] sm:$0xff]
        %v5116 = vld [vmem:[%s409 + $0x14b0] sm:$0xff]
        %v5117 = vld [vmem:[%s409 + $0x14b8] sm:$0xff]
        %v5118 = vld [vmem:[%s409 + $0x14c0] sm:$0xff]
        %v5119 = vld [vmem:[%s409 + $0x14c8] sm:$0xff]
        %v5120 = vld [vmem:[%s409 + $0x14d0] sm:$0xff]
        %v5121 = vld [vmem:[%s409 + $0x14d8] sm:$0xff]
        %v5122 = vld [vmem:[%s409 + $0x14e0] sm:$0xff]
        %v5123 = vld [vmem:[%s409 + $0x14e8] sm:$0xff]
        %v5124 = vld [vmem:[%s409 + $0x14f0] sm:$0xff]
        %v5125 = vld [vmem:[%s409 + $0x14f8] sm:$0xff]
        %v5126 = vld [vmem:[%s409 + $0x1500] sm:$0xff]
        %v5127 = vld [vmem:[%s409 + $0x1508] sm:$0xff]
        %v5128 = vld [vmem:[%s409 + $0x1510] sm:$0xff]
        %v5129 = vld [vmem:[%s409 + $0x1518] sm:$0xff]
        %v5130 = vld [vmem:[%s409 + $0x1520] sm:$0xff]
        %v5131 = vld [vmem:[%s409 + $0x1528] sm:$0xff]
        %v5132 = vld [vmem:[%s409 + $0x1530] sm:$0xff]
        %v5133 = vld [vmem:[%s409 + $0x1538] sm:$0xff]
        %v5134 = vld [vmem:[%s409 + $0x1540] sm:$0xff]
        %v5135 = vld [vmem:[%s409 + $0x1548] sm:$0xff]
        %v5136 = vld [vmem:[%s409 + $0x1550] sm:$0xff]
        %v5137 = vld [vmem:[%s409 + $0x1558] sm:$0xff]
        %v5138 = vld [vmem:[%s409 + $0x1560] sm:$0xff]
        %v5139 = vld [vmem:[%s409 + $0x1568] sm:$0xff]
        %v5140 = vld [vmem:[%s409 + $0x1570] sm:$0xff]
        %v5141 = vld [vmem:[%s409 + $0x1578] sm:$0xff]
        %v5142 = vld [vmem:[%s409 + $0x1580] sm:$0xff]
        %v5143 = vld [vmem:[%s409 + $0x1588] sm:$0xff]
        %v5144 = vld [vmem:[%s409 + $0x1590] sm:$0xff]
        %v5145 = vld [vmem:[%s409 + $0x1598] sm:$0xff]
        %v5146 = vld [vmem:[%s409 + $0x15a0] sm:$0xff]
        %v5147 = vld [vmem:[%s409 + $0x15a8] sm:$0xff]
        %v5148 = vld [vmem:[%s409 + $0x15b0] sm:$0xff]
        %v5149 = vld [vmem:[%s409 + $0x15b8] sm:$0xff]
        %v5150 = vld [vmem:[%s409 + $0x15c0] sm:$0xff]
        %v5151 = vld [vmem:[%s409 + $0x15c8] sm:$0xff]
        %v5152 = vld [vmem:[%s409 + $0x15d0] sm:$0xff]
        %v5153 = vld [vmem:[%s409 + $0x15d8] sm:$0xff]
        %v5154 = vld [vmem:[%s409 + $0x15e0] sm:$0xff]
        %v5155 = vld [vmem:[%s409 + $0x15e8] sm:$0xff]
        %v5156 = vld [vmem:[%s409 + $0x15f0] sm:$0xff]
        %v5157 = vld [vmem:[%s409 + $0x15f8] sm:$0xff]
        %v5158 = vld [vmem:[%s409 + $0x1600] sm:$0xff]
        %v5159 = vld [vmem:[%s409 + $0x1608] sm:$0xff]
        %v5160 = vld [vmem:[%s409 + $0x1610] sm:$0xff]
        %v5161 = vld [vmem:[%s409 + $0x1618] sm:$0xff]
        %v5162 = vld [vmem:[%s409 + $0x1620] sm:$0xff]
        %v5163 = vld [vmem:[%s409 + $0x1628] sm:$0xff]
        %v5164 = vld [vmem:[%s409 + $0x1630] sm:$0xff]
        %v5165 = vld [vmem:[%s409 + $0x1638] sm:$0xff]
        %v5166 = vld [vmem:[%s409 + $0x1640] sm:$0xff]
        %v5167 = vld [vmem:[%s409 + $0x1648] sm:$0xff]
        %v5168 = vld [vmem:[%s409 + $0x1650] sm:$0xff]
        %v5169 = vld [vmem:[%s409 + $0x1658] sm:$0xff]
        %v5170 = vld [vmem:[%s409 + $0x1660] sm:$0xff]
        %v5171 = vld [vmem:[%s409 + $0x1668] sm:$0xff]
        %v5172 = vld [vmem:[%s409 + $0x1670] sm:$0xff]
        %v5173 = vld [vmem:[%s409 + $0x1678] sm:$0xff]
        %v5174 = vld [vmem:[%s409 + $0x1680] sm:$0xff]
        %v5175 = vld [vmem:[%s409 + $0x1688] sm:$0xff]
        %v5176 = vld [vmem:[%s409 + $0x1690] sm:$0xff]
        %v5177 = vld [vmem:[%s409 + $0x1698] sm:$0xff]
        %v5178 = vld [vmem:[%s409 + $0x16a0] sm:$0xff]
        %v5179 = vld [vmem:[%s409 + $0x16a8] sm:$0xff]
        %v5180 = vld [vmem:[%s409 + $0x16b0] sm:$0xff]
        %v5181 = vld [vmem:[%s409 + $0x16b8] sm:$0xff]
        %v5182 = vld [vmem:[%s409 + $0x16c0] sm:$0xff]
        %v5183 = vld [vmem:[%s409 + $0x16c8] sm:$0xff]
        %v5184 = vld [vmem:[%s409 + $0x16d0] sm:$0xff]
        %v5185 = vld [vmem:[%s409 + $0x16d8] sm:$0xff]
        %v5186 = vld [vmem:[%s409 + $0x16e0] sm:$0xff]
        %v5187 = vld [vmem:[%s409 + $0x16e8] sm:$0xff]
        %v5188 = vld [vmem:[%s409 + $0x16f0] sm:$0xff]
        %v5189 = vld [vmem:[%s409 + $0x16f8] sm:$0xff]
        %v5190 = vld [vmem:[%s409 + $0x1700] sm:$0xff]
        %v5191 = vld [vmem:[%s409 + $0x1708] sm:$0xff]
        %v5192 = vld [vmem:[%s409 + $0x1710] sm:$0xff]
        %v5193 = vld [vmem:[%s409 + $0x1718] sm:$0xff]
        %v5194 = vld [vmem:[%s409 + $0x1720] sm:$0xff]
        %v5195 = vld [vmem:[%s409 + $0x1728] sm:$0xff]
        %v5196 = vld [vmem:[%s409 + $0x1730] sm:$0xff]
        %v5197 = vld [vmem:[%s409 + $0x1738] sm:$0xff]
        %v5198 = vld [vmem:[%s409 + $0x1740] sm:$0xff]
        %v5199 = vld [vmem:[%s409 + $0x1748] sm:$0xff]
        %v5200 = vld [vmem:[%s409 + $0x1750] sm:$0xff]
        %v5201 = vld [vmem:[%s409 + $0x1758] sm:$0xff]
        %v5202 = vld [vmem:[%s409 + $0x1760] sm:$0xff]
        %v5203 = vld [vmem:[%s409 + $0x1768] sm:$0xff]
        %v5204 = vld [vmem:[%s409 + $0x1770] sm:$0xff]
        %v5205 = vld [vmem:[%s409 + $0x1778] sm:$0xff]
        %v5206 = vld [vmem:[%s409 + $0x1780] sm:$0xff]
        %v5207 = vld [vmem:[%s409 + $0x1788] sm:$0xff]
        %v5208 = vld [vmem:[%s409 + $0x1790] sm:$0xff]
        %v5209 = vld [vmem:[%s409 + $0x1798] sm:$0xff]
        %v5210 = vld [vmem:[%s409 + $0x17a0] sm:$0xff]
        %v5211 = vld [vmem:[%s409 + $0x17a8] sm:$0xff]
        %v5212 = vld [vmem:[%s409 + $0x17b0] sm:$0xff]
        %v5213 = vld [vmem:[%s409 + $0x17b8] sm:$0xff]
        %v5214 = vld [vmem:[%s409 + $0x17c0] sm:$0xff]
        %v5215 = vld [vmem:[%s409 + $0x17c8] sm:$0xff]
        %v5216 = vld [vmem:[%s409 + $0x17d0] sm:$0xff]
        %v5217 = vld [vmem:[%s409 + $0x17d8] sm:$0xff]
        %v5218 = vld [vmem:[%s409 + $0x17e0] sm:$0xff]
        %v5219 = vld [vmem:[%s409 + $0x17e8] sm:$0xff]
        %v5220 = vld [vmem:[%s409 + $0x17f0] sm:$0xff]
        %v5221 = vld [vmem:[%s409 + $0x17f8] sm:$0xff]
        %v5222 = vld [vmem:[%s409 + $0x1800] sm:$0xff]
        %v5223 = vld [vmem:[%s409 + $0x1808] sm:$0xff]
        %v5224 = vld [vmem:[%s409 + $0x1810] sm:$0xff]
        %v5225 = vld [vmem:[%s409 + $0x1818] sm:$0xff]
        %v5226 = vld [vmem:[%s409 + $0x1820] sm:$0xff]
        %v5227 = vld [vmem:[%s409 + $0x1828] sm:$0xff]
        %v5228 = vld [vmem:[%s409 + $0x1830] sm:$0xff]
        %v5229 = vld [vmem:[%s409 + $0x1838] sm:$0xff]
        %v5230 = vld [vmem:[%s409 + $0x1840] sm:$0xff]
        %v5231 = vld [vmem:[%s409 + $0x1848] sm:$0xff]
        %v5232 = vld [vmem:[%s409 + $0x1850] sm:$0xff]
        %v5233 = vld [vmem:[%s409 + $0x1858] sm:$0xff]
        %v5234 = vld [vmem:[%s409 + $0x1860] sm:$0xff]
        %v5235 = vld [vmem:[%s409 + $0x1868] sm:$0xff]
        %v5236 = vld [vmem:[%s409 + $0x1870] sm:$0xff]
        %v5237 = vld [vmem:[%s409 + $0x1878] sm:$0xff]
        %v5238 = vld [vmem:[%s409 + $0x1880] sm:$0xff]
        %v5239 = vld [vmem:[%s409 + $0x1888] sm:$0xff]
        %v5240 = vld [vmem:[%s409 + $0x1890] sm:$0xff]
        %v5241 = vld [vmem:[%s409 + $0x1898] sm:$0xff]
        %v5242 = vld [vmem:[%s409 + $0x18a0] sm:$0xff]
        %v5243 = vld [vmem:[%s409 + $0x18a8] sm:$0xff]
        %v5244 = vld [vmem:[%s409 + $0x18b0] sm:$0xff]
        %v5245 = vld [vmem:[%s409 + $0x18b8] sm:$0xff]
        %v5246 = vld [vmem:[%s409 + $0x18c0] sm:$0xff]
        %v5247 = vld [vmem:[%s409 + $0x18c8] sm:$0xff]
        %v5248 = vld [vmem:[%s409 + $0x18d0] sm:$0xff]
        %v5249 = vld [vmem:[%s409 + $0x18d8] sm:$0xff]
        %v5250 = vld [vmem:[%s409 + $0x18e0] sm:$0xff]
        %v5251 = vld [vmem:[%s409 + $0x18e8] sm:$0xff]
        %v5252 = vld [vmem:[%s409 + $0x18f0] sm:$0xff]
        %v5253 = vld [vmem:[%s409 + $0x18f8] sm:$0xff]
        %v5254 = vld [vmem:[%s409 + $0x1900] sm:$0xff]
        %v5255 = vld [vmem:[%s409 + $0x1908] sm:$0xff]
        %v5256 = vld [vmem:[%s409 + $0x1910] sm:$0xff]
        %v5257 = vld [vmem:[%s409 + $0x1918] sm:$0xff]
        %v5258 = vld [vmem:[%s409 + $0x1920] sm:$0xff]
        %v5259 = vld [vmem:[%s409 + $0x1928] sm:$0xff]
        %v5260 = vld [vmem:[%s409 + $0x1930] sm:$0xff]
        %v5261 = vld [vmem:[%s409 + $0x1938] sm:$0xff]
        %v5262 = vld [vmem:[%s409 + $0x1940] sm:$0xff]
        %v5263 = vld [vmem:[%s409 + $0x1948] sm:$0xff]
        %v5264 = vld [vmem:[%s409 + $0x1950] sm:$0xff]
        %v5265 = vld [vmem:[%s409 + $0x1958] sm:$0xff]
        %v5266 = vld [vmem:[%s409 + $0x1960] sm:$0xff]
        %v5267 = vld [vmem:[%s409 + $0x1968] sm:$0xff]
        %v5268 = vld [vmem:[%s409 + $0x1970] sm:$0xff]
        %v5269 = vld [vmem:[%s409 + $0x1978] sm:$0xff]
        %v5270 = vld [vmem:[%s409 + $0x1980] sm:$0xff]
        %v5271 = vld [vmem:[%s409 + $0x1988] sm:$0xff]
        %v5272 = vld [vmem:[%s409 + $0x1990] sm:$0xff]
        %v5273 = vld [vmem:[%s409 + $0x1998] sm:$0xff]
        %v5274 = vld [vmem:[%s409 + $0x19a0] sm:$0xff]
        %v5275 = vld [vmem:[%s409 + $0x19a8] sm:$0xff]
        %v5276 = vld [vmem:[%s409 + $0x19b0] sm:$0xff]
        %v5277 = vld [vmem:[%s409 + $0x19b8] sm:$0xff]
        %v5278 = vld [vmem:[%s409 + $0x19c0] sm:$0xff]
        %v5279 = vld [vmem:[%s409 + $0x19c8] sm:$0xff]
        %v5280 = vld [vmem:[%s409 + $0x19d0] sm:$0xff]
        %v5281 = vld [vmem:[%s409 + $0x19d8] sm:$0xff]
        %v5282 = vld [vmem:[%s409 + $0x19e0] sm:$0xff]
        %v5283 = vld [vmem:[%s409 + $0x19e8] sm:$0xff]
        %v5284 = vld [vmem:[%s409 + $0x19f0] sm:$0xff]
        %v5285 = vld [vmem:[%s409 + $0x19f8] sm:$0xff]
        %v5286 = vld [vmem:[%s409 + $0x1a00] sm:$0xff]
        %v5287 = vld [vmem:[%s409 + $0x1a08] sm:$0xff]
        %v5288 = vld [vmem:[%s409 + $0x1a10] sm:$0xff]
        %v5289 = vld [vmem:[%s409 + $0x1a18] sm:$0xff]
        %v5290 = vld [vmem:[%s409 + $0x1a20] sm:$0xff]
        %v5291 = vld [vmem:[%s409 + $0x1a28] sm:$0xff]
        %v5292 = vld [vmem:[%s409 + $0x1a30] sm:$0xff]
        %v5293 = vld [vmem:[%s409 + $0x1a38] sm:$0xff]
        %v5294 = vld [vmem:[%s409 + $0x1a40] sm:$0xff]
        %v5295 = vld [vmem:[%s409 + $0x1a48] sm:$0xff]
        %v5296 = vld [vmem:[%s409 + $0x1a50] sm:$0xff]
        %v5297 = vld [vmem:[%s409 + $0x1a58] sm:$0xff]
        %v5298 = vld [vmem:[%s409 + $0x1a60] sm:$0xff]
        %v5299 = vld [vmem:[%s409 + $0x1a68] sm:$0xff]
        %v5300 = vld [vmem:[%s409 + $0x1a70] sm:$0xff]
        %v5301 = vld [vmem:[%s409 + $0x1a78] sm:$0xff]
        %v5302 = vld [vmem:[%s409 + $0x1a80] sm:$0xff]
        %v5303 = vld [vmem:[%s409 + $0x1a88] sm:$0xff]
        %v5304 = vld [vmem:[%s409 + $0x1a90] sm:$0xff]
        %v5305 = vld [vmem:[%s409 + $0x1a98] sm:$0xff]
        %v5306 = vld [vmem:[%s409 + $0x1aa0] sm:$0xff]
        %v5307 = vld [vmem:[%s409 + $0x1aa8] sm:$0xff]
        %v5308 = vld [vmem:[%s409 + $0x1ab0] sm:$0xff]
        %v5309 = vld [vmem:[%s409 + $0x1ab8] sm:$0xff]
        %v5310 = vld [vmem:[%s409 + $0x1ac0] sm:$0xff]
        %v5311 = vld [vmem:[%s409 + $0x1ac8] sm:$0xff]
        %v5312 = vld [vmem:[%s409 + $0x1ad0] sm:$0xff]
        %v5313 = vld [vmem:[%s409 + $0x1ad8] sm:$0xff]
        %v5314 = vld [vmem:[%s409 + $0x1ae0] sm:$0xff]
        %v5315 = vld [vmem:[%s409 + $0x1ae8] sm:$0xff]
        %v5316 = vld [vmem:[%s409 + $0x1af0] sm:$0xff]
        %v5317 = vld [vmem:[%s409 + $0x1af8] sm:$0xff]
        %v5318 = vld [vmem:[%s409 + $0x1b00] sm:$0xff]
        %v5319 = vld [vmem:[%s409 + $0x1b08] sm:$0xff]
        %v5320 = vld [vmem:[%s409 + $0x1b10] sm:$0xff]
        %v5321 = vld [vmem:[%s409 + $0x1b18] sm:$0xff]
        %v5322 = vld [vmem:[%s409 + $0x1b20] sm:$0xff]
        %v5323 = vld [vmem:[%s409 + $0x1b28] sm:$0xff]
        %v5324 = vld [vmem:[%s409 + $0x1b30] sm:$0xff]
        %v5325 = vld [vmem:[%s409 + $0x1b38] sm:$0xff]
        %v5326 = vld [vmem:[%s409 + $0x1b40] sm:$0xff]
        %v5327 = vld [vmem:[%s409 + $0x1b48] sm:$0xff]
        %v5328 = vld [vmem:[%s409 + $0x1b50] sm:$0xff]
        %v5329 = vld [vmem:[%s409 + $0x1b58] sm:$0xff]
        %v5330 = vld [vmem:[%s409 + $0x1b60] sm:$0xff]
        %v5331 = vld [vmem:[%s409 + $0x1b68] sm:$0xff]
        %v5332 = vld [vmem:[%s409 + $0x1b70] sm:$0xff]
        %v5333 = vld [vmem:[%s409 + $0x1b78] sm:$0xff]
        %v5334 = vld [vmem:[%s409 + $0x1b80] sm:$0xff]
        %v5335 = vld [vmem:[%s409 + $0x1b88] sm:$0xff]
        %v5336 = vld [vmem:[%s409 + $0x1b90] sm:$0xff]
        %v5337 = vld [vmem:[%s409 + $0x1b98] sm:$0xff]
        %v5338 = vld [vmem:[%s409 + $0x1ba0] sm:$0xff]
        %v5339 = vld [vmem:[%s409 + $0x1ba8] sm:$0xff]
        %v5340 = vld [vmem:[%s409 + $0x1bb0] sm:$0xff]
        %v5341 = vld [vmem:[%s409 + $0x1bb8] sm:$0xff]
        %v5342 = vld [vmem:[%s409 + $0x1bc0] sm:$0xff]
        %v5343 = vld [vmem:[%s409 + $0x1bc8] sm:$0xff]
        %v5344 = vld [vmem:[%s409 + $0x1bd0] sm:$0xff]
        %v5345 = vld [vmem:[%s409 + $0x1bd8] sm:$0xff]
        %v5346 = vld [vmem:[%s409 + $0x1be0] sm:$0xff]
        %v5347 = vld [vmem:[%s409 + $0x1be8] sm:$0xff]
        %v5348 = vld [vmem:[%s409 + $0x1bf0] sm:$0xff]
        %v5349 = vld [vmem:[%s409 + $0x1bf8] sm:$0xff]
        %v5350 = vld [vmem:[%s409 + $0x1c00] sm:$0xff]
        %v5351 = vld [vmem:[%s409 + $0x1c08] sm:$0xff]
        %v5352 = vld [vmem:[%s409 + $0x1c10] sm:$0xff]
        %v5353 = vld [vmem:[%s409 + $0x1c18] sm:$0xff]
        %v5354 = vld [vmem:[%s409 + $0x1c20] sm:$0xff]
        %v5355 = vld [vmem:[%s409 + $0x1c28] sm:$0xff]
        %v5356 = vld [vmem:[%s409 + $0x1c30] sm:$0xff]
        %v5357 = vld [vmem:[%s409 + $0x1c38] sm:$0xff]
        %v5358 = vld [vmem:[%s409 + $0x1c40] sm:$0xff]
        %v5359 = vld [vmem:[%s409 + $0x1c48] sm:$0xff]
        %v5360 = vld [vmem:[%s409 + $0x1c50] sm:$0xff]
        %v5361 = vld [vmem:[%s409 + $0x1c58] sm:$0xff]
        %v5362 = vld [vmem:[%s409 + $0x1c60] sm:$0xff]
        %v5363 = vld [vmem:[%s409 + $0x1c68] sm:$0xff]
        %v5364 = vld [vmem:[%s409 + $0x1c70] sm:$0xff]
        %v5365 = vld [vmem:[%s409 + $0x1c78] sm:$0xff]
        %v5366 = vld [vmem:[%s409 + $0x1c80] sm:$0xff]
        %v5367 = vld [vmem:[%s409 + $0x1c88] sm:$0xff]
        %v5368 = vld [vmem:[%s409 + $0x1c90] sm:$0xff]
        %v5369 = vld [vmem:[%s409 + $0x1c98] sm:$0xff]
        %v5370 = vld [vmem:[%s409 + $0x1ca0] sm:$0xff]
        %v5371 = vld [vmem:[%s409 + $0x1ca8] sm:$0xff]
        %v5372 = vld [vmem:[%s409 + $0x1cb0] sm:$0xff]
        %v5373 = vld [vmem:[%s409 + $0x1cb8] sm:$0xff]
        %v5374 = vld [vmem:[%s409 + $0x1cc0] sm:$0xff]
        %v5375 = vld [vmem:[%s409 + $0x1cc8] sm:$0xff]
        %v5376 = vld [vmem:[%s409 + $0x1cd0] sm:$0xff]
        %v5377 = vld [vmem:[%s409 + $0x1cd8] sm:$0xff]
        %v5378 = vld [vmem:[%s409 + $0x1ce0] sm:$0xff]
        %v5379 = vld [vmem:[%s409 + $0x1ce8] sm:$0xff]
        %v5380 = vld [vmem:[%s409 + $0x1cf0] sm:$0xff]
        %v5381 = vld [vmem:[%s409 + $0x1cf8] sm:$0xff]
        %v5382 = vld [vmem:[%s409 + $0x1d00] sm:$0xff]
        %v5383 = vld [vmem:[%s409 + $0x1d08] sm:$0xff]
        %v5384 = vld [vmem:[%s409 + $0x1d10] sm:$0xff]
        %v5385 = vld [vmem:[%s409 + $0x1d18] sm:$0xff]
        %v5386 = vld [vmem:[%s409 + $0x1d20] sm:$0xff]
        %v5387 = vld [vmem:[%s409 + $0x1d28] sm:$0xff]
        %v5388 = vld [vmem:[%s409 + $0x1d30] sm:$0xff]
        %v5389 = vld [vmem:[%s409 + $0x1d38] sm:$0xff]
        %v5390 = vld [vmem:[%s409 + $0x1d40] sm:$0xff]
        %v5391 = vld [vmem:[%s409 + $0x1d48] sm:$0xff]
        %v5392 = vld [vmem:[%s409 + $0x1d50] sm:$0xff]
        %v5393 = vld [vmem:[%s409 + $0x1d58] sm:$0xff]
        %v5394 = vld [vmem:[%s409 + $0x1d60] sm:$0xff]
        %v5395 = vld [vmem:[%s409 + $0x1d68] sm:$0xff]
        %v5396 = vld [vmem:[%s409 + $0x1d70] sm:$0xff]
        %v5397 = vld [vmem:[%s409 + $0x1d78] sm:$0xff]
        %v5398 = vld [vmem:[%s409 + $0x1d80] sm:$0xff]
        %v5399 = vld [vmem:[%s409 + $0x1d88] sm:$0xff]
        %v5400 = vld [vmem:[%s409 + $0x1d90] sm:$0xff]
        %v5401 = vld [vmem:[%s409 + $0x1d98] sm:$0xff]
        %v5402 = vld [vmem:[%s409 + $0x1da0] sm:$0xff]
        %v5403 = vld [vmem:[%s409 + $0x1da8] sm:$0xff]
        %v5404 = vld [vmem:[%s409 + $0x1db0] sm:$0xff]
        %v5405 = vld [vmem:[%s409 + $0x1db8] sm:$0xff]
        %v5406 = vld [vmem:[%s409 + $0x1dc0] sm:$0xff]
        %v5407 = vld [vmem:[%s409 + $0x1dc8] sm:$0xff]
        %v5408 = vld [vmem:[%s409 + $0x1dd0] sm:$0xff]
        %v5409 = vld [vmem:[%s409 + $0x1dd8] sm:$0xff]
        %v5410 = vld [vmem:[%s409 + $0x1de0] sm:$0xff]
        %v5411 = vld [vmem:[%s409 + $0x1de8] sm:$0xff]
        %v5412 = vld [vmem:[%s409 + $0x1df0] sm:$0xff]
        %v5413 = vld [vmem:[%s409 + $0x1df8] sm:$0xff]
        %v5414 = vld [vmem:[%s409 + $0x1e00] sm:$0xff]
        %v5415 = vld [vmem:[%s409 + $0x1e08] sm:$0xff]
        %v5416 = vld [vmem:[%s409 + $0x1e10] sm:$0xff]
        %v5417 = vld [vmem:[%s409 + $0x1e18] sm:$0xff]
        %v5418 = vld [vmem:[%s409 + $0x1e20] sm:$0xff]
        %v5419 = vld [vmem:[%s409 + $0x1e28] sm:$0xff]
        %v5420 = vld [vmem:[%s409 + $0x1e30] sm:$0xff]
        %v5421 = vld [vmem:[%s409 + $0x1e38] sm:$0xff]
        %v5422 = vld [vmem:[%s409 + $0x1e40] sm:$0xff]
        %v5423 = vld [vmem:[%s409 + $0x1e48] sm:$0xff]
        %v5424 = vld [vmem:[%s409 + $0x1e50] sm:$0xff]
        %v5425 = vld [vmem:[%s409 + $0x1e58] sm:$0xff]
        %v5426 = vld [vmem:[%s409 + $0x1e60] sm:$0xff]
        %v5427 = vld [vmem:[%s409 + $0x1e68] sm:$0xff]
        %v5428 = vld [vmem:[%s409 + $0x1e70] sm:$0xff]
        %v5429 = vld [vmem:[%s409 + $0x1e78] sm:$0xff]
        %v5430 = vld [vmem:[%s409 + $0x1e80] sm:$0xff]
        %v5431 = vld [vmem:[%s409 + $0x1e88] sm:$0xff]
        %v5432 = vld [vmem:[%s409 + $0x1e90] sm:$0xff]
        %v5433 = vld [vmem:[%s409 + $0x1e98] sm:$0xff]
        %v5434 = vld [vmem:[%s409 + $0x1ea0] sm:$0xff]
        %v5435 = vld [vmem:[%s409 + $0x1ea8] sm:$0xff]
        %v5436 = vld [vmem:[%s409 + $0x1eb0] sm:$0xff]
        %v5437 = vld [vmem:[%s409 + $0x1eb8] sm:$0xff]
        %v5438 = vld [vmem:[%s409 + $0x1ec0] sm:$0xff]
        %v5439 = vld [vmem:[%s409 + $0x1ec8] sm:$0xff]
        %v5440 = vld [vmem:[%s409 + $0x1ed0] sm:$0xff]
        %v5441 = vld [vmem:[%s409 + $0x1ed8] sm:$0xff]
        %v5442 = vld [vmem:[%s409 + $0x1ee0] sm:$0xff]
        %v5443 = vld [vmem:[%s409 + $0x1ee8] sm:$0xff]
        %v5444 = vld [vmem:[%s409 + $0x1ef0] sm:$0xff]
        %v5445 = vld [vmem:[%s409 + $0x1ef8] sm:$0xff]
        %v5446 = vld [vmem:[%s409 + $0x1f00] sm:$0xff]
        %v5447 = vld [vmem:[%s409 + $0x1f08] sm:$0xff]
        %v5448 = vld [vmem:[%s409 + $0x1f10] sm:$0xff]
        %v5449 = vld [vmem:[%s409 + $0x1f18] sm:$0xff]
        %v5450 = vld [vmem:[%s409 + $0x1f20] sm:$0xff]
        %v5451 = vld [vmem:[%s409 + $0x1f28] sm:$0xff]
        %v5452 = vld [vmem:[%s409 + $0x1f30] sm:$0xff]
        %v5453 = vld [vmem:[%s409 + $0x1f38] sm:$0xff]
        %v5454 = vld [vmem:[%s409 + $0x1f40] sm:$0xff]
        %v5455 = vld [vmem:[%s409 + $0x1f48] sm:$0xff]
        %v5456 = vld [vmem:[%s409 + $0x1f50] sm:$0xff]
        %v5457 = vld [vmem:[%s409 + $0x1f58] sm:$0xff]
        %v5458 = vld [vmem:[%s409 + $0x1f60] sm:$0xff]
        %v5459 = vld [vmem:[%s409 + $0x1f68] sm:$0xff]
        %v5460 = vld [vmem:[%s409 + $0x1f70] sm:$0xff]
        %v5461 = vld [vmem:[%s409 + $0x1f78] sm:$0xff]
        %v5462 = vld [vmem:[%s409 + $0x1f80] sm:$0xff]
        %v5463 = vld [vmem:[%s409 + $0x1f88] sm:$0xff]
        %v5464 = vld [vmem:[%s409 + $0x1f90] sm:$0xff]
        %v5465 = vld [vmem:[%s409 + $0x1f98] sm:$0xff]
        %v5466 = vld [vmem:[%s409 + $0x1fa0] sm:$0xff]
        %v5467 = vld [vmem:[%s409 + $0x1fa8] sm:$0xff]
        %v5468 = vld [vmem:[%s409 + $0x1fb0] sm:$0xff]
        %v5469 = vld [vmem:[%s409 + $0x1fb8] sm:$0xff]
        %v5470 = vld [vmem:[%s409 + $0x1fc0] sm:$0xff]
        %v5471 = vld [vmem:[%s409 + $0x1fc8] sm:$0xff]
        %v5472 = vld [vmem:[%s409 + $0x1fd0] sm:$0xff]
        %v5473 = vld [vmem:[%s409 + $0x1fd8] sm:$0xff]
        %v5474 = vld [vmem:[%s409 + $0x1fe0] sm:$0xff]
        %v5475 = vld [vmem:[%s409 + $0x1fe8] sm:$0xff]
        %v5476 = vld [vmem:[%s409 + $0x1ff0] sm:$0xff]
        %v5477 = vld [vmem:[%s409 + $0x1ff8] sm:$0xff]
        %5478 = vmatprep.subr.mxu0 %v4455
        %5479 = vmatpush1.msra.mxu0 %v4454
        %5480 = vmatprep.subr.mxu0 %v4463
        %5481 = vmatpush1.msra.mxu0 %v4462
        %5482 = vmatprep.subr.mxu0 %v4471
        %5483 = vmatpush1.msra.mxu0 %v4470
        %5484 = vmatprep.subr.mxu0 %v4479
        %5485 = vmatpush1.msra.mxu0 %v4478
        %5486 = vmatprep.subr.mxu0 %v4487
        %5487 = vmatpush1.msra.mxu0 %v4486
        %5488 = vmatprep.subr.mxu0 %v4495
        %5489 = vmatpush1.msra.mxu0 %v4494
        %5490 = vmatprep.subr.mxu0 %v4503
        %5491 = vmatpush1.msra.mxu0 %v4502
        %5492 = vmatprep.subr.mxu0 %v4511
        %5493 = vmatpush1.msra.mxu0 %v4510
        %5494 = vmatprep.subr.mxu0 %v4519
        %5495 = vmatpush1.msra.mxu0 %v4518
        %5496 = vmatprep.subr.mxu0 %v4527
        %5497 = vmatpush1.msra.mxu0 %v4526
        %5498 = vmatprep.subr.mxu0 %v4535
        %5499 = vmatpush1.msra.mxu0 %v4534
        %5500 = vmatprep.subr.mxu0 %v4543
        %5501 = vmatpush1.msra.mxu0 %v4542
        %5502 = vmatprep.subr.mxu0 %v4551
        %5503 = vmatpush1.msra.mxu0 %v4550
        %5504 = vmatprep.subr.mxu0 %v4559
        %5505 = vmatpush1.msra.mxu0 %v4558
        %5506 = vmatprep.subr.mxu0 %v4567
        %5507 = vmatpush1.msra.mxu0 %v4566
        %5508 = vmatprep.subr.mxu0 %v4575
        %5509 = vmatpush1.msra.mxu0 %v4574
        %5510 = vmatprep.subr.mxu0 %v4583
        %5511 = vmatpush1.msra.mxu0 %v4582
        %5512 = vmatprep.subr.mxu0 %v4591
        %5513 = vmatpush1.msra.mxu0 %v4590
        %5514 = vmatprep.subr.mxu0 %v4599
        %5515 = vmatpush1.msra.mxu0 %v4598
        %5516 = vmatprep.subr.mxu0 %v4607
        %5517 = vmatpush1.msra.mxu0 %v4606
        %5518 = vmatprep.subr.mxu0 %v4615
        %5519 = vmatpush1.msra.mxu0 %v4614
        %5520 = vmatprep.subr.mxu0 %v4623
        %5521 = vmatpush1.msra.mxu0 %v4622
        %5522 = vmatprep.subr.mxu0 %v4631
        %5523 = vmatpush1.msra.mxu0 %v4630
        %5524 = vmatprep.subr.mxu0 %v4639
        %5525 = vmatpush1.msra.mxu0 %v4638
        %5526 = vmatprep.subr.mxu0 %v4647
        %5527 = vmatpush1.msra.mxu0 %v4646
        %5528 = vmatprep.subr.mxu0 %v4655
        %5529 = vmatpush1.msra.mxu0 %v4654
        %5530 = vmatprep.subr.mxu0 %v4663
        %5531 = vmatpush1.msra.mxu0 %v4662
        %5532 = vmatprep.subr.mxu0 %v4671
        %5533 = vmatpush1.msra.mxu0 %v4670
        %5534 = vmatprep.subr.mxu0 %v4679
        %5535 = vmatpush1.msra.mxu0 %v4678
        %5536 = vmatprep.subr.mxu0 %v4687
        %5537 = vmatpush1.msra.mxu0 %v4686
        %5538 = vmatprep.subr.mxu0 %v4695
        %5539 = vmatpush1.msra.mxu0 %v4694
        %5540 = vmatprep.subr.mxu0 %v4703
        %5541 = vmatpush1.msra.mxu0 %v4702
        %5542 = vmatprep.mubr.f32.mxu0 %v4343
        %5543 = vmatmul.mubr.f32.gmra.mrb[0].mxu0 %v4342
        %v5544 = vpop.f32.mrb[0].mxu0
        %v5545 = vadd.f32 0.0, %v5544
        %v5546 = vpop.f32.mrb[0].mxu0
        %v5547 = vadd.f32 0.0, %v5546
        %5548 = vmatprep.mubr.f32.mxu0 %v4351
        %5549 = vmatmul.mubr.f32.gmra.mrb[0].mxu0 %v4350
        %v5550 = vpop.f32.mrb[0].mxu0
        %v5551 = vadd.f32 0.0, %v5550
        %v5552 = vpop.f32.mrb[0].mxu0
        %v5553 = vadd.f32 0.0, %v5552
        %5554 = vmatprep.mubr.f32.mxu0 %v4359
        %5555 = vmatmul.mubr.f32.gmra.mrb[0].mxu0 %v4358
        %v5556 = vpop.f32.mrb[0].mxu0
        %v5557 = vadd.f32 0.0, %v5556
        %v5558 = vpop.f32.mrb[0].mxu0
        %v5559 = vadd.f32 0.0, %v5558
        %5560 = vmatprep.mubr.f32.mxu0 %v4367
        %5561 = vmatmul.mubr.f32.gmra.mrb[0].mxu0 %v4366
        %v5562 = vpop.f32.mrb[0].mxu0
        %v5563 = vadd.f32 0.0, %v5562
        %v5564 = vpop.f32.mrb[0].mxu0
        %v5565 = vadd.f32 0.0, %v5564
        %5566 = vmatprep.mubr.f32.mxu0 %v4375
        %5567 = vmatmul.mubr.f32.gmra.mrb[0].mxu0 %v4374
        %v5568 = vpop.f32.mrb[0].mxu0
        %v5569 = vadd.f32 0.0, %v5568
        %v5570 = vpop.f32.mrb[0].mxu0
        %v5571 = vadd.f32 0.0, %v5570
        %5572 = vmatprep.mubr.f32.mxu0 %v4383
        %5573 = vmatmul.mubr.f32.gmra.mrb[0].mxu0 %v4382
        %v5574 = vpop.f32.mrb[0].mxu0
        %v5575 = vadd.f32 0.0, %v5574
        %v5576 = vpop.f32.mrb[0].mxu0
        %v5577 = vadd.f32 0.0, %v5576
        %5578 = vmatprep.mubr.f32.mxu0 %v4391
        %5579 = vmatmul.mubr.f32.gmra.mrb[0].mxu0 %v4390
        %v5580 = vpop.f32.mrb[0].mxu0
        %v5581 = vadd.f32 0.0, %v5580
        %v5582 = vpop.f32.mrb[0].mxu0
        %v5583 = vadd.f32 0.0, %v5582
        %5584 = vdwg.mxu0
        %5585 = vmatprep.subr.mxu0 %v4711
        %5586 = vmatpush1.msra.mxu0 %v4710
        %5587 = vmatprep.subr.mxu0 %v4719
        %5588 = vmatpush1.msra.mxu0 %v4718
        %5589 = vmatprep.subr.mxu0 %v4727
        %5590 = vmatpush1.msra.mxu0 %v4726
        %5591 = vmatprep.subr.mxu0 %v4735
        %5592 = vmatpush1.msra.mxu0 %v4734
        %5593 = vmatprep.subr.mxu0 %v4743
        %5594 = vmatpush1.msra.mxu0 %v4742
        %5595 = vmatprep.subr.mxu0 %v4751
        %5596 = vmatpush1.msra.mxu0 %v4750
        %5597 = vmatprep.subr.mxu0 %v4759
        %5598 = vmatpush1.msra.mxu0 %v4758
        %5599 = vmatprep.subr.mxu0 %v4767
        %5600 = vmatpush1.msra.mxu0 %v4766
        %5601 = vmatprep.subr.mxu0 %v4775
        %5602 = vmatpush1.msra.mxu0 %v4774
        %5603 = vmatprep.subr.mxu0 %v4783
        %5604 = vmatpush1.msra.mxu0 %v4782
        %5605 = vmatprep.subr.mxu0 %v4791
        %5606 = vmatpush1.msra.mxu0 %v4790
        %5607 = vmatprep.subr.mxu0 %v4799
        %5608 = vmatpush1.msra.mxu0 %v4798
        %5609 = vmatprep.subr.mxu0 %v4807
        %5610 = vmatpush1.msra.mxu0 %v4806
        %5611 = vmatprep.subr.mxu0 %v4815
        %5612 = vmatpush1.msra.mxu0 %v4814
        %5613 = vmatprep.subr.mxu0 %v4823
        %5614 = vmatpush1.msra.mxu0 %v4822
        %5615 = vmatprep.subr.mxu0 %v4831
        %5616 = vmatpush1.msra.mxu0 %v4830
        %5617 = vmatprep.subr.mxu0 %v4839
        %5618 = vmatpush1.msra.mxu0 %v4838
        %5619 = vmatprep.subr.mxu0 %v4847
        %5620 = vmatpush1.msra.mxu0 %v4846
        %5621 = vmatprep.subr.mxu0 %v4855
        %5622 = vmatpush1.msra.mxu0 %v4854
        %5623 = vmatprep.subr.mxu0 %v4863
        %5624 = vmatpush1.msra.mxu0 %v4862
        %5625 = vmatprep.subr.mxu0 %v4871
        %5626 = vmatpush1.msra.mxu0 %v4870
        %5627 = vmatprep.subr.mxu0 %v4879
        %5628 = vmatpush1.msra.mxu0 %v4878
        %5629 = vmatprep.subr.mxu0 %v4887
        %5630 = vmatpush1.msra.mxu0 %v4886
        %5631 = vmatprep.subr.mxu0 %v4895
        %5632 = vmatpush1.msra.mxu0 %v4894
        %5633 = vmatprep.subr.mxu0 %v4903
        %5634 = vmatpush1.msra.mxu0 %v4902
        %5635 = vmatprep.subr.mxu0 %v4911
        %5636 = vmatpush1.msra.mxu0 %v4910
        %5637 = vmatprep.subr.mxu0 %v4919
        %5638 = vmatpush1.msra.mxu0 %v4918
        %5639 = vmatprep.subr.mxu0 %v4927
        %5640 = vmatpush1.msra.mxu0 %v4926
        %5641 = vmatprep.subr.mxu0 %v4935
        %5642 = vmatpush1.msra.mxu0 %v4934
        %5643 = vmatprep.subr.mxu0 %v4943
        %5644 = vmatpush1.msra.mxu0 %v4942
        %5645 = vmatprep.subr.mxu0 %v4951
        %5646 = vmatpush1.msra.mxu0 %v4950
        %5647 = vmatprep.subr.mxu0 %v4959
        %5648 = vmatpush1.msra.mxu0 %v4958
        %5649 = vmatprep.mubr.f32.mxu0 %v4345
        %5650 = vmatmul.mubr.f32.gmra.mrb[0].mxu0 %v4344
        %v5651 = vpop.f32.mrb[0].mxu0
        %v5652 = vadd.f32 %v5545, %v5651
        %v5653 = vpop.f32.mrb[0].mxu0
        %v5654 = vadd.f32 %v5547, %v5653
        %5655 = vmatprep.mubr.f32.mxu0 %v4353
        %5656 = vmatmul.mubr.f32.gmra.mrb[0].mxu0 %v4352
        %v5657 = vpop.f32.mrb[0].mxu0
        %v5658 = vadd.f32 %v5551, %v5657
        %v5659 = vpop.f32.mrb[0].mxu0
        %v5660 = vadd.f32 %v5553, %v5659
        %5661 = vmatprep.mubr.f32.mxu0 %v4361
        %5662 = vmatmul.mubr.f32.gmra.mrb[0].mxu0 %v4360
        %v5663 = vpop.f32.mrb[0].mxu0
        %v5664 = vadd.f32 %v5557, %v5663
        %v5665 = vpop.f32.mrb[0].mxu0
        %v5666 = vadd.f32 %v5559, %v5665
        %5667 = vmatprep.mubr.f32.mxu0 %v4369
        %5668 = vmatmul.mubr.f32.gmra.mrb[0].mxu0 %v4368
        %v5669 = vpop.f32.mrb[0].mxu0
        %v5670 = vadd.f32 %v5563, %v5669
        %v5671 = vpop.f32.mrb[0].mxu0
        %v5672 = vadd.f32 %v5565, %v5671
        %5673 = vmatprep.mubr.f32.mxu0 %v4377
        %5674 = vmatmul.mubr.f32.gmra.mrb[0].mxu0 %v4376
        %v5675 = vpop.f32.mrb[0].mxu0
        %v5676 = vadd.f32 %v5569, %v5675
        %v5677 = vpop.f32.mrb[0].mxu0
        %v5678 = vadd.f32 %v5571, %v5677
        %5679 = vmatprep.mubr.f32.mxu0 %v4385
        %5680 = vmatmul.mubr.f32.gmra.mrb[0].mxu0 %v4384
        %v5681 = vpop.f32.mrb[0].mxu0
        %v5682 = vadd.f32 %v5575, %v5681
        %v5683 = vpop.f32.mrb[0].mxu0
        %v5684 = vadd.f32 %v5577, %v5683
        %5685 = vmatprep.mubr.f32.mxu0 %v4393
        %5686 = vmatmul.mubr.f32.gmra.mrb[0].mxu0 %v4392
        %v5687 = vpop.f32.mrb[0].mxu0
        %v5688 = vadd.f32 %v5581, %v5687
        %v5689 = vpop.f32.mrb[0].mxu0
        %v5690 = vadd.f32 %v5583, %v5689
        %5691 = vdwg.mxu0
        %5692 = vmatprep.subr.mxu0 %v4967
        %5693 = vmatpush1.msra.mxu0 %v4966
        %5694 = vmatprep.subr.mxu0 %v4975
        %5695 = vmatpush1.msra.mxu0 %v4974
        %5696 = vmatprep.subr.mxu0 %v4983
        %5697 = vmatpush1.msra.mxu0 %v4982
        %5698 = vmatprep.subr.mxu0 %v4991
        %5699 = vmatpush1.msra.mxu0 %v4990
        %5700 = vmatprep.subr.mxu0 %v4999
        %5701 = vmatpush1.msra.mxu0 %v4998
        %5702 = vmatprep.subr.mxu0 %v5007
        %5703 = vmatpush1.msra.mxu0 %v5006
        %5704 = vmatprep.subr.mxu0 %v5015
        %5705 = vmatpush1.msra.mxu0 %v5014
        %5706 = vmatprep.subr.mxu0 %v5023
        %5707 = vmatpush1.msra.mxu0 %v5022
        %5708 = vmatprep.subr.mxu0 %v5031
        %5709 = vmatpush1.msra.mxu0 %v5030
        %5710 = vmatprep.subr.mxu0 %v5039
        %5711 = vmatpush1.msra.mxu0 %v5038
        %5712 = vmatprep.subr.mxu0 %v5047
        %5713 = vmatpush1.msra.mxu0 %v5046
        %5714 = vmatprep.subr.mxu0 %v5055
        %5715 = vmatpush1.msra.mxu0 %v5054
        %5716 = vmatprep.subr.mxu0 %v5063
        %5717 = vmatpush1.msra.mxu0 %v5062
        %5718 = vmatprep.subr.mxu0 %v5071
        %5719 = vmatpush1.msra.mxu0 %v5070
        %5720 = vmatprep.subr.mxu0 %v5079
        %5721 = vmatpush1.msra.mxu0 %v5078
        %5722 = vmatprep.subr.mxu0 %v5087
        %5723 = vmatpush1.msra.mxu0 %v5086
        %5724 = vmatprep.subr.mxu0 %v5095
        %5725 = vmatpush1.msra.mxu0 %v5094
        %5726 = vmatprep.subr.mxu0 %v5103
        %5727 = vmatpush1.msra.mxu0 %v5102
        %5728 = vmatprep.subr.mxu0 %v5111
        %5729 = vmatpush1.msra.mxu0 %v5110
        %5730 = vmatprep.subr.mxu0 %v5119
        %5731 = vmatpush1.msra.mxu0 %v5118
        %5732 = vmatprep.subr.mxu0 %v5127
        %5733 = vmatpush1.msra.mxu0 %v5126
        %5734 = vmatprep.subr.mxu0 %v5135
        %5735 = vmatpush1.msra.mxu0 %v5134
        %5736 = vmatprep.subr.mxu0 %v5143
        %5737 = vmatpush1.msra.mxu0 %v5142
        %5738 = vmatprep.subr.mxu0 %v5151
        %5739 = vmatpush1.msra.mxu0 %v5150
        %5740 = vmatprep.subr.mxu0 %v5159
        %5741 = vmatpush1.msra.mxu0 %v5158
        %5742 = vmatprep.subr.mxu0 %v5167
        %5743 = vmatpush1.msra.mxu0 %v5166
        %5744 = vmatprep.subr.mxu0 %v5175
        %5745 = vmatpush1.msra.mxu0 %v5174
        %5746 = vmatprep.subr.mxu0 %v5183
        %5747 = vmatpush1.msra.mxu0 %v5182
        %5748 = vmatprep.subr.mxu0 %v5191
        %5749 = vmatpush1.msra.mxu0 %v5190
        %5750 = vmatprep.subr.mxu0 %v5199
        %5751 = vmatpush1.msra.mxu0 %v5198
        %5752 = vmatprep.subr.mxu0 %v5207
        %5753 = vmatpush1.msra.mxu0 %v5206
        %5754 = vmatprep.subr.mxu0 %v5215
        %5755 = vmatpush1.msra.mxu0 %v5214
        %5756 = vmatprep.mubr.f32.mxu0 %v4347
        %5757 = vmatmul.mubr.f32.gmra.mrb[0].mxu0 %v4346
        %v5758 = vpop.f32.mrb[0].mxu0
        %v5759 = vadd.f32 %v5652, %v5758
        %v5760 = vpop.f32.mrb[0].mxu0
        %v5761 = vadd.f32 %v5654, %v5760
        %5762 = vmatprep.mubr.f32.mxu0 %v4355
        %5763 = vmatmul.mubr.f32.gmra.mrb[0].mxu0 %v4354
        %v5764 = vpop.f32.mrb[0].mxu0
        %v5765 = vadd.f32 %v5658, %v5764
        %v5766 = vpop.f32.mrb[0].mxu0
        %v5767 = vadd.f32 %v5660, %v5766
        %5768 = vmatprep.mubr.f32.mxu0 %v4363
        %5769 = vmatmul.mubr.f32.gmra.mrb[0].mxu0 %v4362
        %v5770 = vpop.f32.mrb[0].mxu0
        %v5771 = vadd.f32 %v5664, %v5770
        %v5772 = vpop.f32.mrb[0].mxu0
        %v5773 = vadd.f32 %v5666, %v5772
        %5774 = vmatprep.mubr.f32.mxu0 %v4371
        %5775 = vmatmul.mubr.f32.gmra.mrb[0].mxu0 %v4370
        %v5776 = vpop.f32.mrb[0].mxu0
        %v5777 = vadd.f32 %v5670, %v5776
        %v5778 = vpop.f32.mrb[0].mxu0
        %v5779 = vadd.f32 %v5672, %v5778
        %5780 = vmatprep.mubr.f32.mxu0 %v4379
        %5781 = vmatmul.mubr.f32.gmra.mrb[0].mxu0 %v4378
        %v5782 = vpop.f32.mrb[0].mxu0
        %v5783 = vadd.f32 %v5676, %v5782
        %v5784 = vpop.f32.mrb[0].mxu0
        %v5785 = vadd.f32 %v5678, %v5784
        %5786 = vmatprep.mubr.f32.mxu0 %v4387
        %5787 = vmatmul.mubr.f32.gmra.mrb[0].mxu0 %v4386
        %v5788 = vpop.f32.mrb[0].mxu0
        %v5789 = vadd.f32 %v5682, %v5788
        %v5790 = vpop.f32.mrb[0].mxu0
        %v5791 = vadd.f32 %v5684, %v5790
        %5792 = vmatprep.mubr.f32.mxu0 %v4395
        %5793 = vmatmul.mubr.f32.gmra.mrb[0].mxu0 %v4394
        %v5794 = vpop.f32.mrb[0].mxu0
        %v5795 = vadd.f32 %v5688, %v5794
        %v5796 = vpop.f32.mrb[0].mxu0
        %v5797 = vadd.f32 %v5690, %v5796
        %5798 = vdwg.mxu0
        %5799 = vmatprep.subr.mxu0 %v5223
        %5800 = vmatpush1.msra.mxu0 %v5222
        %5801 = vmatprep.subr.mxu0 %v5231
        %5802 = vmatpush1.msra.mxu0 %v5230
        %5803 = vmatprep.subr.mxu0 %v5239
        %5804 = vmatpush1.msra.mxu0 %v5238
        %5805 = vmatprep.subr.mxu0 %v5247
        %5806 = vmatpush1.msra.mxu0 %v5246
        %5807 = vmatprep.subr.mxu0 %v5255
        %5808 = vmatpush1.msra.mxu0 %v5254
        %5809 = vmatprep.subr.mxu0 %v5263
        %5810 = vmatpush1.msra.mxu0 %v5262
        %5811 = vmatprep.subr.mxu0 %v5271
        %5812 = vmatpush1.msra.mxu0 %v5270
        %5813 = vmatprep.subr.mxu0 %v5279
        %5814 = vmatpush1.msra.mxu0 %v5278
        %5815 = vmatprep.subr.mxu0 %v5287
        %5816 = vmatpush1.msra.mxu0 %v5286
        %5817 = vmatprep.subr.mxu0 %v5295
        %5818 = vmatpush1.msra.mxu0 %v5294
        %5819 = vmatprep.subr.mxu0 %v5303
        %5820 = vmatpush1.msra.mxu0 %v5302
        %5821 = vmatprep.subr.mxu0 %v5311
        %5822 = vmatpush1.msra.mxu0 %v5310
        %5823 = vmatprep.subr.mxu0 %v5319
        %5824 = vmatpush1.msra.mxu0 %v5318
        %5825 = vmatprep.subr.mxu0 %v5327
        %5826 = vmatpush1.msra.mxu0 %v5326
        %5827 = vmatprep.subr.mxu0 %v5335
        %5828 = vmatpush1.msra.mxu0 %v5334
        %5829 = vmatprep.subr.mxu0 %v5343
        %5830 = vmatpush1.msra.mxu0 %v5342
        %5831 = vmatprep.subr.mxu0 %v5351
        %5832 = vmatpush1.msra.mxu0 %v5350
        %5833 = vmatprep.subr.mxu0 %v5359
        %5834 = vmatpush1.msra.mxu0 %v5358
        %5835 = vmatprep.subr.mxu0 %v5367
        %5836 = vmatpush1.msra.mxu0 %v5366
        %5837 = vmatprep.subr.mxu0 %v5375
        %5838 = vmatpush1.msra.mxu0 %v5374
        %5839 = vmatprep.subr.mxu0 %v5383
        %5840 = vmatpush1.msra.mxu0 %v5382
        %5841 = vmatprep.subr.mxu0 %v5391
        %5842 = vmatpush1.msra.mxu0 %v5390
        %5843 = vmatprep.subr.mxu0 %v5399
        %5844 = vmatpush1.msra.mxu0 %v5398
        %5845 = vmatprep.subr.mxu0 %v5407
        %5846 = vmatpush1.msra.mxu0 %v5406
        %5847 = vmatprep.subr.mxu0 %v5415
        %5848 = vmatpush1.msra.mxu0 %v5414
        %5849 = vmatprep.subr.mxu0 %v5423
        %5850 = vmatpush1.msra.mxu0 %v5422
        %5851 = vmatprep.subr.mxu0 %v5431
        %5852 = vmatpush1.msra.mxu0 %v5430
        %5853 = vmatprep.subr.mxu0 %v5439
        %5854 = vmatpush1.msra.mxu0 %v5438
        %5855 = vmatprep.subr.mxu0 %v5447
        %5856 = vmatpush1.msra.mxu0 %v5446
        %5857 = vmatprep.subr.mxu0 %v5455
        %5858 = vmatpush1.msra.mxu0 %v5454
        %5859 = vmatprep.subr.mxu0 %v5463
        %5860 = vmatpush1.msra.mxu0 %v5462
        %5861 = vmatprep.subr.mxu0 %v5471
        %5862 = vmatpush1.msra.mxu0 %v5470
        %5863 = vmatprep.mubr.f32.mxu0 %v4349
        %5864 = vmatmul.mubr.f32.gmra.mrb[0].mxu0 %v4348
        %v5865 = vpop.f32.mrb[0].mxu0
        %v5866 = vadd.f32 %v5759, %v5865
        %v5867 = vpop.f32.mrb[0].mxu0
        %v5868 = vadd.f32 %v5761, %v5867
        %5869 = vmatprep.mubr.f32.mxu0 %v4357
        %5870 = vmatmul.mubr.f32.gmra.mrb[0].mxu0 %v4356
        %v5871 = vpop.f32.mrb[0].mxu0
        %v5872 = vadd.f32 %v5765, %v5871
        %v5873 = vpop.f32.mrb[0].mxu0
        %v5874 = vadd.f32 %v5767, %v5873
        %5875 = vmatprep.mubr.f32.mxu0 %v4365
        %5876 = vmatmul.mubr.f32.gmra.mrb[0].mxu0 %v4364
        %v5877 = vpop.f32.mrb[0].mxu0
        %v5878 = vadd.f32 %v5771, %v5877
        %v5879 = vpop.f32.mrb[0].mxu0
        %v5880 = vadd.f32 %v5773, %v5879
        %5881 = vmatprep.mubr.f32.mxu0 %v4373
        %5882 = vmatmul.mubr.f32.gmra.mrb[0].mxu0 %v4372
        %v5883 = vpop.f32.mrb[0].mxu0
        %v5884 = vadd.f32 %v5777, %v5883
        %v5885 = vpop.f32.mrb[0].mxu0
        %v5886 = vadd.f32 %v5779, %v5885
        %5887 = vmatprep.mubr.f32.mxu0 %v4381
        %5888 = vmatmul.mubr.f32.gmra.mrb[0].mxu0 %v4380
        %v5889 = vpop.f32.mrb[0].mxu0
        %v5890 = vadd.f32 %v5783, %v5889
        %v5891 = vpop.f32.mrb[0].mxu0
        %v5892 = vadd.f32 %v5785, %v5891
        %5893 = vmatprep.mubr.f32.mxu0 %v4389
        %5894 = vmatmul.mubr.f32.gmra.mrb[0].mxu0 %v4388
        %v5895 = vpop.f32.mrb[0].mxu0
        %v5896 = vadd.f32 %v5789, %v5895
        %v5897 = vpop.f32.mrb[0].mxu0
        %v5898 = vadd.f32 %v5791, %v5897
        %5899 = vmatprep.mubr.f32.mxu0 %v4397
        %5900 = vmatmul.mubr.f32.gmra.mrb[0].mxu0 %v4396
        %v5901 = vpop.f32.mrb[0].mxu0
        %v5902 = vadd.f32 %v5795, %v5901
        %v5903 = vpop.f32.mrb[0].mxu0
        %v5904 = vadd.f32 %v5797, %v5903
        %5905 = vdwg.mxu0
        %5906 = vmatprep.subr.mxu0 %v4457
        %5907 = vmatpush1.msra.mxu0 %v4456
        %5908 = vmatprep.subr.mxu0 %v4465
        %5909 = vmatpush1.msra.mxu0 %v4464
        %5910 = vmatprep.subr.mxu0 %v4473
        %5911 = vmatpush1.msra.mxu0 %v4472
        %5912 = vmatprep.subr.mxu0 %v4481
        %5913 = vmatpush1.msra.mxu0 %v4480
        %5914 = vmatprep.subr.mxu0 %v4489
        %5915 = vmatpush1.msra.mxu0 %v4488
        %5916 = vmatprep.subr.mxu0 %v4497
        %5917 = vmatpush1.msra.mxu0 %v4496
        %5918 = vmatprep.subr.mxu0 %v4505
        %5919 = vmatpush1.msra.mxu0 %v4504
        %5920 = vmatprep.subr.mxu0 %v4513
        %5921 = vmatpush1.msra.mxu0 %v4512
        %5922 = vmatprep.subr.mxu0 %v4521
        %5923 = vmatpush1.msra.mxu0 %v4520
        %5924 = vmatprep.subr.mxu0 %v4529
        %5925 = vmatpush1.msra.mxu0 %v4528
        %5926 = vmatprep.subr.mxu0 %v4537
        %5927 = vmatpush1.msra.mxu0 %v4536
        %5928 = vmatprep.subr.mxu0 %v4545
        %5929 = vmatpush1.msra.mxu0 %v4544
        %5930 = vmatprep.subr.mxu0 %v4553
        %5931 = vmatpush1.msra.mxu0 %v4552
        %5932 = vmatprep.subr.mxu0 %v4561
        %5933 = vmatpush1.msra.mxu0 %v4560
        %5934 = vmatprep.subr.mxu0 %v4569
        %5935 = vmatpush1.msra.mxu0 %v4568
        %5936 = vmatprep.subr.mxu0 %v4577
        %5937 = vmatpush1.msra.mxu0 %v4576
        %5938 = vmatprep.subr.mxu0 %v4585
        %5939 = vmatpush1.msra.mxu0 %v4584
        %5940 = vmatprep.subr.mxu0 %v4593
        %5941 = vmatpush1.msra.mxu0 %v4592
        %5942 = vmatprep.subr.mxu0 %v4601
        %5943 = vmatpush1.msra.mxu0 %v4600
        %5944 = vmatprep.subr.mxu0 %v4609
        %5945 = vmatpush1.msra.mxu0 %v4608
        %5946 = vmatprep.subr.mxu0 %v4617
        %5947 = vmatpush1.msra.mxu0 %v4616
        %5948 = vmatprep.subr.mxu0 %v4625
        %5949 = vmatpush1.msra.mxu0 %v4624
        %5950 = vmatprep.subr.mxu0 %v4633
        %5951 = vmatpush1.msra.mxu0 %v4632
        %5952 = vmatprep.subr.mxu0 %v4641
        %5953 = vmatpush1.msra.mxu0 %v4640
        %5954 = vmatprep.subr.mxu0 %v4649
        %5955 = vmatpush1.msra.mxu0 %v4648
        %5956 = vmatprep.subr.mxu0 %v4657
        %5957 = vmatpush1.msra.mxu0 %v4656
        %5958 = vmatprep.subr.mxu0 %v4665
        %5959 = vmatpush1.msra.mxu0 %v4664
        %5960 = vmatprep.subr.mxu0 %v4673
        %5961 = vmatpush1.msra.mxu0 %v4672
        %5962 = vmatprep.subr.mxu0 %v4681
        %5963 = vmatpush1.msra.mxu0 %v4680
        %5964 = vmatprep.subr.mxu0 %v4689
        %5965 = vmatpush1.msra.mxu0 %v4688
        %5966 = vmatprep.subr.mxu0 %v4697
        %5967 = vmatpush1.msra.mxu0 %v4696
        %5968 = vmatprep.subr.mxu0 %v4705
        %5969 = vmatpush1.msra.mxu0 %v4704
        %5970 = vmatprep.mubr.f32.mxu0 %v4343
        %5971 = vmatmul.mubr.f32.gmra.mrb[0].mxu0 %v4342
        %v5972 = vpop.f32.mrb[0].mxu0
        %v5973 = vadd.f32 0.0, %v5972
        %v5974 = vpop.f32.mrb[0].mxu0
        %v5975 = vadd.f32 0.0, %v5974
        %5976 = vmatprep.mubr.f32.mxu0 %v4351
        %5977 = vmatmul.mubr.f32.gmra.mrb[0].mxu0 %v4350
        %v5978 = vpop.f32.mrb[0].mxu0
        %v5979 = vadd.f32 0.0, %v5978
        %v5980 = vpop.f32.mrb[0].mxu0
        %v5981 = vadd.f32 0.0, %v5980
        %5982 = vmatprep.mubr.f32.mxu0 %v4359
        %5983 = vmatmul.mubr.f32.gmra.mrb[0].mxu0 %v4358
        %v5984 = vpop.f32.mrb[0].mxu0
        %v5985 = vadd.f32 0.0, %v5984
        %v5986 = vpop.f32.mrb[0].mxu0
        %v5987 = vadd.f32 0.0, %v5986
        %5988 = vmatprep.mubr.f32.mxu0 %v4367
        %5989 = vmatmul.mubr.f32.gmra.mrb[0].mxu0 %v4366
        %v5990 = vpop.f32.mrb[0].mxu0
        %v5991 = vadd.f32 0.0, %v5990
        %v5992 = vpop.f32.mrb[0].mxu0
        %v5993 = vadd.f32 0.0, %v5992
        %5994 = vmatprep.mubr.f32.mxu0 %v4375
        %5995 = vmatmul.mubr.f32.gmra.mrb[0].mxu0 %v4374
        %v5996 = vpop.f32.mrb[0].mxu0
        %v5997 = vadd.f32 0.0, %v5996
        %v5998 = vpop.f32.mrb[0].mxu0
        %v5999 = vadd.f32 0.0, %v5998
        %6000 = vmatprep.mubr.f32.mxu0 %v4383
        %6001 = vmatmul.mubr.f32.gmra.mrb[0].mxu0 %v4382
        %v6002 = vpop.f32.mrb[0].mxu0
        %v6003 = vadd.f32 0.0, %v6002
        %v6004 = vpop.f32.mrb[0].mxu0
        %v6005 = vadd.f32 0.0, %v6004
        %6006 = vmatprep.mubr.f32.mxu0 %v4391
        %6007 = vmatmul.mubr.f32.gmra.mrb[0].mxu0 %v4390
        %v6008 = vpop.f32.mrb[0].mxu0
        %v6009 = vadd.f32 0.0, %v6008
        %v6010 = vpop.f32.mrb[0].mxu0
        %v6011 = vadd.f32 0.0, %v6010
        %6012 = vdwg.mxu0
        %6013 = vmatprep.subr.mxu0 %v4713
        %6014 = vmatpush1.msra.mxu0 %v4712
        %6015 = vmatprep.subr.mxu0 %v4721
        %6016 = vmatpush1.msra.mxu0 %v4720
        %6017 = vmatprep.subr.mxu0 %v4729
        %6018 = vmatpush1.msra.mxu0 %v4728
        %6019 = vmatprep.subr.mxu0 %v4737
        %6020 = vmatpush1.msra.mxu0 %v4736
        %6021 = vmatprep.subr.mxu0 %v4745
        %6022 = vmatpush1.msra.mxu0 %v4744
        %6023 = vmatprep.subr.mxu0 %v4753
        %6024 = vmatpush1.msra.mxu0 %v4752
        %6025 = vmatprep.subr.mxu0 %v4761
        %6026 = vmatpush1.msra.mxu0 %v4760
        %6027 = vmatprep.subr.mxu0 %v4769
        %6028 = vmatpush1.msra.mxu0 %v4768
        %6029 = vmatprep.subr.mxu0 %v4777
        %6030 = vmatpush1.msra.mxu0 %v4776
        %6031 = vmatprep.subr.mxu0 %v4785
        %6032 = vmatpush1.msra.mxu0 %v4784
        %6033 = vmatprep.subr.mxu0 %v4793
        %6034 = vmatpush1.msra.mxu0 %v4792
        %6035 = vmatprep.subr.mxu0 %v4801
        %6036 = vmatpush1.msra.mxu0 %v4800
        %6037 = vmatprep.subr.mxu0 %v4809
        %6038 = vmatpush1.msra.mxu0 %v4808
        %6039 = vmatprep.subr.mxu0 %v4817
        %6040 = vmatpush1.msra.mxu0 %v4816
        %6041 = vmatprep.subr.mxu0 %v4825
        %6042 = vmatpush1.msra.mxu0 %v4824
        %6043 = vmatprep.subr.mxu0 %v4833
        %6044 = vmatpush1.msra.mxu0 %v4832
        %6045 = vmatprep.subr.mxu0 %v4841
        %6046 = vmatpush1.msra.mxu0 %v4840
        %6047 = vmatprep.subr.mxu0 %v4849
        %6048 = vmatpush1.msra.mxu0 %v4848
        %6049 = vmatprep.subr.mxu0 %v4857
        %6050 = vmatpush1.msra.mxu0 %v4856
        %6051 = vmatprep.subr.mxu0 %v4865
        %6052 = vmatpush1.msra.mxu0 %v4864
        %6053 = vmatprep.subr.mxu0 %v4873
        %6054 = vmatpush1.msra.mxu0 %v4872
        %6055 = vmatprep.subr.mxu0 %v4881
        %6056 = vmatpush1.msra.mxu0 %v4880
        %6057 = vmatprep.subr.mxu0 %v4889
        %6058 = vmatpush1.msra.mxu0 %v4888
        %6059 = vmatprep.subr.mxu0 %v4897
        %6060 = vmatpush1.msra.mxu0 %v4896
        %6061 = vmatprep.subr.mxu0 %v4905
        %6062 = vmatpush1.msra.mxu0 %v4904
        %6063 = vmatprep.subr.mxu0 %v4913
        %6064 = vmatpush1.msra.mxu0 %v4912
        %6065 = vmatprep.subr.mxu0 %v4921
        %6066 = vmatpush1.msra.mxu0 %v4920
        %6067 = vmatprep.subr.mxu0 %v4929
        %6068 = vmatpush1.msra.mxu0 %v4928
        %6069 = vmatprep.subr.mxu0 %v4937
        %6070 = vmatpush1.msra.mxu0 %v4936
        %6071 = vmatprep.subr.mxu0 %v4945
        %6072 = vmatpush1.msra.mxu0 %v4944
        %6073 = vmatprep.subr.mxu0 %v4953
        %6074 = vmatpush1.msra.mxu0 %v4952
        %6075 = vmatprep.subr.mxu0 %v4961
        %6076 = vmatpush1.msra.mxu0 %v4960
        %6077 = vmatprep.mubr.f32.mxu0 %v4345
        %6078 = vmatmul.mubr.f32.gmra.mrb[0].mxu0 %v4344
        %v6079 = vpop.f32.mrb[0].mxu0
        %v6080 = vadd.f32 %v5973, %v6079
        %v6081 = vpop.f32.mrb[0].mxu0
        %v6082 = vadd.f32 %v5975, %v6081
        %6083 = vmatprep.mubr.f32.mxu0 %v4353
        %6084 = vmatmul.mubr.f32.gmra.mrb[0].mxu0 %v4352
        %v6085 = vpop.f32.mrb[0].mxu0
        %v6086 = vadd.f32 %v5979, %v6085
        %v6087 = vpop.f32.mrb[0].mxu0
        %v6088 = vadd.f32 %v5981, %v6087
        %6089 = vmatprep.mubr.f32.mxu0 %v4361
        %6090 = vmatmul.mubr.f32.gmra.mrb[0].mxu0 %v4360
        %v6091 = vpop.f32.mrb[0].mxu0
        %v6092 = vadd.f32 %v5985, %v6091
        %v6093 = vpop.f32.mrb[0].mxu0
        %v6094 = vadd.f32 %v5987, %v6093
        %6095 = vmatprep.mubr.f32.mxu0 %v4369
        %6096 = vmatmul.mubr.f32.gmra.mrb[0].mxu0 %v4368
        %v6097 = vpop.f32.mrb[0].mxu0
        %v6098 = vadd.f32 %v5991, %v6097
        %v6099 = vpop.f32.mrb[0].mxu0
        %v6100 = vadd.f32 %v5993, %v6099
        %6101 = vmatprep.mubr.f32.mxu0 %v4377
        %6102 = vmatmul.mubr.f32.gmra.mrb[0].mxu0 %v4376
        %v6103 = vpop.f32.mrb[0].mxu0
        %v6104 = vadd.f32 %v5997, %v6103
        %v6105 = vpop.f32.mrb[0].mxu0
        %v6106 = vadd.f32 %v5999, %v6105
        %6107 = vmatprep.mubr.f32.mxu0 %v4385
        %6108 = vmatmul.mubr.f32.gmra.mrb[0].mxu0 %v4384
        %v6109 = vpop.f32.mrb[0].mxu0
        %v6110 = vadd.f32 %v6003, %v6109
        %v6111 = vpop.f32.mrb[0].mxu0
        %v6112 = vadd.f32 %v6005, %v6111
        %6113 = vmatprep.mubr.f32.mxu0 %v4393
        %6114 = vmatmul.mubr.f32.gmra.mrb[0].mxu0 %v4392
        %v6115 = vpop.f32.mrb[0].mxu0
        %v6116 = vadd.f32 %v6009, %v6115
        %v6117 = vpop.f32.mrb[0].mxu0
        %v6118 = vadd.f32 %v6011, %v6117
        %6119 = vdwg.mxu0
        %6120 = vmatprep.subr.mxu0 %v4969
        %6121 = vmatpush1.msra.mxu0 %v4968
        %6122 = vmatprep.subr.mxu0 %v4977
        %6123 = vmatpush1.msra.mxu0 %v4976
        %6124 = vmatprep.subr.mxu0 %v4985
        %6125 = vmatpush1.msra.mxu0 %v4984
        %6126 = vmatprep.subr.mxu0 %v4993
        %6127 = vmatpush1.msra.mxu0 %v4992
        %6128 = vmatprep.subr.mxu0 %v5001
        %6129 = vmatpush1.msra.mxu0 %v5000
        %6130 = vmatprep.subr.mxu0 %v5009
        %6131 = vmatpush1.msra.mxu0 %v5008
        %6132 = vmatprep.subr.mxu0 %v5017
        %6133 = vmatpush1.msra.mxu0 %v5016
        %6134 = vmatprep.subr.mxu0 %v5025
        %6135 = vmatpush1.msra.mxu0 %v5024
        %6136 = vmatprep.subr.mxu0 %v5033
        %6137 = vmatpush1.msra.mxu0 %v5032
        %6138 = vmatprep.subr.mxu0 %v5041
        %6139 = vmatpush1.msra.mxu0 %v5040
        %6140 = vmatprep.subr.mxu0 %v5049
        %6141 = vmatpush1.msra.mxu0 %v5048
        %6142 = vmatprep.subr.mxu0 %v5057
        %6143 = vmatpush1.msra.mxu0 %v5056
        %6144 = vmatprep.subr.mxu0 %v5065
        %6145 = vmatpush1.msra.mxu0 %v5064
        %6146 = vmatprep.subr.mxu0 %v5073
        %6147 = vmatpush1.msra.mxu0 %v5072
        %6148 = vmatprep.subr.mxu0 %v5081
        %6149 = vmatpush1.msra.mxu0 %v5080
        %6150 = vmatprep.subr.mxu0 %v5089
        %6151 = vmatpush1.msra.mxu0 %v5088
        %6152 = vmatprep.subr.mxu0 %v5097
        %6153 = vmatpush1.msra.mxu0 %v5096
        %6154 = vmatprep.subr.mxu0 %v5105
        %6155 = vmatpush1.msra.mxu0 %v5104
        %6156 = vmatprep.subr.mxu0 %v5113
        %6157 = vmatpush1.msra.mxu0 %v5112
        %6158 = vmatprep.subr.mxu0 %v5121
        %6159 = vmatpush1.msra.mxu0 %v5120
        %6160 = vmatprep.subr.mxu0 %v5129
        %6161 = vmatpush1.msra.mxu0 %v5128
        %6162 = vmatprep.subr.mxu0 %v5137
        %6163 = vmatpush1.msra.mxu0 %v5136
        %6164 = vmatprep.subr.mxu0 %v5145
        %6165 = vmatpush1.msra.mxu0 %v5144
        %6166 = vmatprep.subr.mxu0 %v5153
        %6167 = vmatpush1.msra.mxu0 %v5152
        %6168 = vmatprep.subr.mxu0 %v5161
        %6169 = vmatpush1.msra.mxu0 %v5160
        %6170 = vmatprep.subr.mxu0 %v5169
        %6171 = vmatpush1.msra.mxu0 %v5168
        %6172 = vmatprep.subr.mxu0 %v5177
        %6173 = vmatpush1.msra.mxu0 %v5176
        %6174 = vmatprep.subr.mxu0 %v5185
        %6175 = vmatpush1.msra.mxu0 %v5184
        %6176 = vmatprep.subr.mxu0 %v5193
        %6177 = vmatpush1.msra.mxu0 %v5192
        %6178 = vmatprep.subr.mxu0 %v5201
        %6179 = vmatpush1.msra.mxu0 %v5200
        %6180 = vmatprep.subr.mxu0 %v5209
        %6181 = vmatpush1.msra.mxu0 %v5208
        %6182 = vmatprep.subr.mxu0 %v5217
        %6183 = vmatpush1.msra.mxu0 %v5216
        %6184 = vmatprep.mubr.f32.mxu0 %v4347
        %6185 = vmatmul.mubr.f32.gmra.mrb[0].mxu0 %v4346
        %v6186 = vpop.f32.mrb[0].mxu0
        %v6187 = vadd.f32 %v6080, %v6186
        %v6188 = vpop.f32.mrb[0].mxu0
        %v6189 = vadd.f32 %v6082, %v6188
        %6190 = vmatprep.mubr.f32.mxu0 %v4355
        %6191 = vmatmul.mubr.f32.gmra.mrb[0].mxu0 %v4354
        %v6192 = vpop.f32.mrb[0].mxu0
        %v6193 = vadd.f32 %v6086, %v6192
        %v6194 = vpop.f32.mrb[0].mxu0
        %v6195 = vadd.f32 %v6088, %v6194
        %6196 = vmatprep.mubr.f32.mxu0 %v4363
        %6197 = vmatmul.mubr.f32.gmra.mrb[0].mxu0 %v4362
        %v6198 = vpop.f32.mrb[0].mxu0
        %v6199 = vadd.f32 %v6092, %v6198
        %v6200 = vpop.f32.mrb[0].mxu0
        %v6201 = vadd.f32 %v6094, %v6200
        %6202 = vmatprep.mubr.f32.mxu0 %v4371
        %6203 = vmatmul.mubr.f32.gmra.mrb[0].mxu0 %v4370
        %v6204 = vpop.f32.mrb[0].mxu0
        %v6205 = vadd.f32 %v6098, %v6204
        %v6206 = vpop.f32.mrb[0].mxu0
        %v6207 = vadd.f32 %v6100, %v6206
        %6208 = vmatprep.mubr.f32.mxu0 %v4379
        %6209 = vmatmul.mubr.f32.gmra.mrb[0].mxu0 %v4378
        %v6210 = vpop.f32.mrb[0].mxu0
        %v6211 = vadd.f32 %v6104, %v6210
        %v6212 = vpop.f32.mrb[0].mxu0
        %v6213 = vadd.f32 %v6106, %v6212
        %6214 = vmatprep.mubr.f32.mxu0 %v4387
        %6215 = vmatmul.mubr.f32.gmra.mrb[0].mxu0 %v4386
        %v6216 = vpop.f32.mrb[0].mxu0
        %v6217 = vadd.f32 %v6110, %v6216
        %v6218 = vpop.f32.mrb[0].mxu0
        %v6219 = vadd.f32 %v6112, %v6218
        %6220 = vmatprep.mubr.f32.mxu0 %v4395
        %6221 = vmatmul.mubr.f32.gmra.mrb[0].mxu0 %v4394
        %v6222 = vpop.f32.mrb[0].mxu0
        %v6223 = vadd.f32 %v6116, %v6222
        %v6224 = vpop.f32.mrb[0].mxu0
        %v6225 = vadd.f32 %v6118, %v6224
        %6226 = vdwg.mxu0
        %6227 = vmatprep.subr.mxu0 %v5225
        %6228 = vmatpush1.msra.mxu0 %v5224
        %6229 = vmatprep.subr.mxu0 %v5233
        %6230 = vmatpush1.msra.mxu0 %v5232
        %6231 = vmatprep.subr.mxu0 %v5241
        %6232 = vmatpush1.msra.mxu0 %v5240
        %6233 = vmatprep.subr.mxu0 %v5249
        %6234 = vmatpush1.msra.mxu0 %v5248
        %6235 = vmatprep.subr.mxu0 %v5257
        %6236 = vmatpush1.msra.mxu0 %v5256
        %6237 = vmatprep.subr.mxu0 %v5265
        %6238 = vmatpush1.msra.mxu0 %v5264
        %6239 = vmatprep.subr.mxu0 %v5273
        %6240 = vmatpush1.msra.mxu0 %v5272
        %6241 = vmatprep.subr.mxu0 %v5281
        %6242 = vmatpush1.msra.mxu0 %v5280
        %6243 = vmatprep.subr.mxu0 %v5289
        %6244 = vmatpush1.msra.mxu0 %v5288
        %6245 = vmatprep.subr.mxu0 %v5297
        %6246 = vmatpush1.msra.mxu0 %v5296
        %6247 = vmatprep.subr.mxu0 %v5305
        %6248 = vmatpush1.msra.mxu0 %v5304
        %6249 = vmatprep.subr.mxu0 %v5313
        %6250 = vmatpush1.msra.mxu0 %v5312
        %6251 = vmatprep.subr.mxu0 %v5321
        %6252 = vmatpush1.msra.mxu0 %v5320
        %6253 = vmatprep.subr.mxu0 %v5329
        %6254 = vmatpush1.msra.mxu0 %v5328
        %6255 = vmatprep.subr.mxu0 %v5337
        %6256 = vmatpush1.msra.mxu0 %v5336
        %6257 = vmatprep.subr.mxu0 %v5345
        %6258 = vmatpush1.msra.mxu0 %v5344
        %6259 = vmatprep.subr.mxu0 %v5353
        %6260 = vmatpush1.msra.mxu0 %v5352
        %6261 = vmatprep.subr.mxu0 %v5361
        %6262 = vmatpush1.msra.mxu0 %v5360
        %6263 = vmatprep.subr.mxu0 %v5369
        %6264 = vmatpush1.msra.mxu0 %v5368
        %6265 = vmatprep.subr.mxu0 %v5377
        %6266 = vmatpush1.msra.mxu0 %v5376
        %6267 = vmatprep.subr.mxu0 %v5385
        %6268 = vmatpush1.msra.mxu0 %v5384
        %6269 = vmatprep.subr.mxu0 %v5393
        %6270 = vmatpush1.msra.mxu0 %v5392
        %6271 = vmatprep.subr.mxu0 %v5401
        %6272 = vmatpush1.msra.mxu0 %v5400
        %6273 = vmatprep.subr.mxu0 %v5409
        %6274 = vmatpush1.msra.mxu0 %v5408
        %6275 = vmatprep.subr.mxu0 %v5417
        %6276 = vmatpush1.msra.mxu0 %v5416
        %6277 = vmatprep.subr.mxu0 %v5425
        %6278 = vmatpush1.msra.mxu0 %v5424
        %6279 = vmatprep.subr.mxu0 %v5433
        %6280 = vmatpush1.msra.mxu0 %v5432
        %6281 = vmatprep.subr.mxu0 %v5441
        %6282 = vmatpush1.msra.mxu0 %v5440
        %6283 = vmatprep.subr.mxu0 %v5449
        %6284 = vmatpush1.msra.mxu0 %v5448
        %6285 = vmatprep.subr.mxu0 %v5457
        %6286 = vmatpush1.msra.mxu0 %v5456
        %6287 = vmatprep.subr.mxu0 %v5465
        %6288 = vmatpush1.msra.mxu0 %v5464
        %6289 = vmatprep.subr.mxu0 %v5473
        %6290 = vmatpush1.msra.mxu0 %v5472
        %6291 = vmatprep.mubr.f32.mxu0 %v4349
        %6292 = vmatmul.mubr.f32.gmra.mrb[0].mxu0 %v4348
        %v6293 = vpop.f32.mrb[0].mxu0
        %v6294 = vadd.f32 %v6187, %v6293
        %v6295 = vpop.f32.mrb[0].mxu0
        %v6296 = vadd.f32 %v6189, %v6295
        %6297 = vmatprep.mubr.f32.mxu0 %v4357
        %6298 = vmatmul.mubr.f32.gmra.mrb[0].mxu0 %v4356
        %v6299 = vpop.f32.mrb[0].mxu0
        %v6300 = vadd.f32 %v6193, %v6299
        %v6301 = vpop.f32.mrb[0].mxu0
        %v6302 = vadd.f32 %v6195, %v6301
        %6303 = vmatprep.mubr.f32.mxu0 %v4365
        %6304 = vmatmul.mubr.f32.gmra.mrb[0].mxu0 %v4364
        %v6305 = vpop.f32.mrb[0].mxu0
        %v6306 = vadd.f32 %v6199, %v6305
        %v6307 = vpop.f32.mrb[0].mxu0
        %v6308 = vadd.f32 %v6201, %v6307
        %6309 = vmatprep.mubr.f32.mxu0 %v4373
        %6310 = vmatmul.mubr.f32.gmra.mrb[0].mxu0 %v4372
        %v6311 = vpop.f32.mrb[0].mxu0
        %v6312 = vadd.f32 %v6205, %v6311
        %v6313 = vpop.f32.mrb[0].mxu0
        %v6314 = vadd.f32 %v6207, %v6313
        %6315 = vmatprep.mubr.f32.mxu0 %v4381
        %6316 = vmatmul.mubr.f32.gmra.mrb[0].mxu0 %v4380
        %v6317 = vpop.f32.mrb[0].mxu0
        %v6318 = vadd.f32 %v6211, %v6317
        %v6319 = vpop.f32.mrb[0].mxu0
        %v6320 = vadd.f32 %v6213, %v6319
        %6321 = vmatprep.mubr.f32.mxu0 %v4389
        %6322 = vmatmul.mubr.f32.gmra.mrb[0].mxu0 %v4388
        %v6323 = vpop.f32.mrb[0].mxu0
        %v6324 = vadd.f32 %v6217, %v6323
        %v6325 = vpop.f32.mrb[0].mxu0
        %v6326 = vadd.f32 %v6219, %v6325
        %6327 = vmatprep.mubr.f32.mxu0 %v4397
        %6328 = vmatmul.mubr.f32.gmra.mrb[0].mxu0 %v4396
        %v6329 = vpop.f32.mrb[0].mxu0
        %v6330 = vadd.f32 %v6223, %v6329
        %v6331 = vpop.f32.mrb[0].mxu0
        %v6332 = vadd.f32 %v6225, %v6331
        %6333 = vdwg.mxu0
        %6334 = vmatprep.subr.mxu0 %v4459
        %6335 = vmatpush1.msra.mxu0 %v4458
        %6336 = vmatprep.subr.mxu0 %v4467
        %6337 = vmatpush1.msra.mxu0 %v4466
        %6338 = vmatprep.subr.mxu0 %v4475
        %6339 = vmatpush1.msra.mxu0 %v4474
        %6340 = vmatprep.subr.mxu0 %v4483
        %6341 = vmatpush1.msra.mxu0 %v4482
        %6342 = vmatprep.subr.mxu0 %v4491
        %6343 = vmatpush1.msra.mxu0 %v4490
        %6344 = vmatprep.subr.mxu0 %v4499
        %6345 = vmatpush1.msra.mxu0 %v4498
        %6346 = vmatprep.subr.mxu0 %v4507
        %6347 = vmatpush1.msra.mxu0 %v4506
        %6348 = vmatprep.subr.mxu0 %v4515
        %6349 = vmatpush1.msra.mxu0 %v4514
        %6350 = vmatprep.subr.mxu0 %v4523
        %6351 = vmatpush1.msra.mxu0 %v4522
        %6352 = vmatprep.subr.mxu0 %v4531
        %6353 = vmatpush1.msra.mxu0 %v4530
        %6354 = vmatprep.subr.mxu0 %v4539
        %6355 = vmatpush1.msra.mxu0 %v4538
        %6356 = vmatprep.subr.mxu0 %v4547
        %6357 = vmatpush1.msra.mxu0 %v4546
        %6358 = vmatprep.subr.mxu0 %v4555
        %6359 = vmatpush1.msra.mxu0 %v4554
        %6360 = vmatprep.subr.mxu0 %v4563
        %6361 = vmatpush1.msra.mxu0 %v4562
        %6362 = vmatprep.subr.mxu0 %v4571
        %6363 = vmatpush1.msra.mxu0 %v4570
        %6364 = vmatprep.subr.mxu0 %v4579
        %6365 = vmatpush1.msra.mxu0 %v4578
        %6366 = vmatprep.subr.mxu0 %v4587
        %6367 = vmatpush1.msra.mxu0 %v4586
        %6368 = vmatprep.subr.mxu0 %v4595
        %6369 = vmatpush1.msra.mxu0 %v4594
        %6370 = vmatprep.subr.mxu0 %v4603
        %6371 = vmatpush1.msra.mxu0 %v4602
        %6372 = vmatprep.subr.mxu0 %v4611
        %6373 = vmatpush1.msra.mxu0 %v4610
        %6374 = vmatprep.subr.mxu0 %v4619
        %6375 = vmatpush1.msra.mxu0 %v4618
        %6376 = vmatprep.subr.mxu0 %v4627
        %6377 = vmatpush1.msra.mxu0 %v4626
        %6378 = vmatprep.subr.mxu0 %v4635
        %6379 = vmatpush1.msra.mxu0 %v4634
        %6380 = vmatprep.subr.mxu0 %v4643
        %6381 = vmatpush1.msra.mxu0 %v4642
        %6382 = vmatprep.subr.mxu0 %v4651
        %6383 = vmatpush1.msra.mxu0 %v4650
        %6384 = vmatprep.subr.mxu0 %v4659
        %6385 = vmatpush1.msra.mxu0 %v4658
        %6386 = vmatprep.subr.mxu0 %v4667
        %6387 = vmatpush1.msra.mxu0 %v4666
        %6388 = vmatprep.subr.mxu0 %v4675
        %6389 = vmatpush1.msra.mxu0 %v4674
        %6390 = vmatprep.subr.mxu0 %v4683
        %6391 = vmatpush1.msra.mxu0 %v4682
        %6392 = vmatprep.subr.mxu0 %v4691
        %6393 = vmatpush1.msra.mxu0 %v4690
        %6394 = vmatprep.subr.mxu0 %v4699
        %6395 = vmatpush1.msra.mxu0 %v4698
        %6396 = vmatprep.subr.mxu0 %v4707
        %6397 = vmatpush1.msra.mxu0 %v4706
        %6398 = vmatprep.mubr.f32.mxu0 %v4343
        %6399 = vmatmul.mubr.f32.gmra.mrb[0].mxu0 %v4342
        %v6400 = vpop.f32.mrb[0].mxu0
        %v6401 = vadd.f32 0.0, %v6400
        %v6402 = vpop.f32.mrb[0].mxu0
        %v6403 = vadd.f32 0.0, %v6402
        %6404 = vmatprep.mubr.f32.mxu0 %v4351
        %6405 = vmatmul.mubr.f32.gmra.mrb[0].mxu0 %v4350
        %v6406 = vpop.f32.mrb[0].mxu0
        %v6407 = vadd.f32 0.0, %v6406
        %v6408 = vpop.f32.mrb[0].mxu0
        %v6409 = vadd.f32 0.0, %v6408
        %6410 = vmatprep.mubr.f32.mxu0 %v4359
        %6411 = vmatmul.mubr.f32.gmra.mrb[0].mxu0 %v4358
        %v6412 = vpop.f32.mrb[0].mxu0
        %v6413 = vadd.f32 0.0, %v6412
        %v6414 = vpop.f32.mrb[0].mxu0
        %v6415 = vadd.f32 0.0, %v6414
        %6416 = vmatprep.mubr.f32.mxu0 %v4367
        %6417 = vmatmul.mubr.f32.gmra.mrb[0].mxu0 %v4366
        %v6418 = vpop.f32.mrb[0].mxu0
        %v6419 = vadd.f32 0.0, %v6418
        %v6420 = vpop.f32.mrb[0].mxu0
        %v6421 = vadd.f32 0.0, %v6420
        %6422 = vmatprep.mubr.f32.mxu0 %v4375
        %6423 = vmatmul.mubr.f32.gmra.mrb[0].mxu0 %v4374
        %v6424 = vpop.f32.mrb[0].mxu0
        %v6425 = vadd.f32 0.0, %v6424
        %v6426 = vpop.f32.mrb[0].mxu0
        %v6427 = vadd.f32 0.0, %v6426
        %6428 = vmatprep.mubr.f32.mxu0 %v4383
        %6429 = vmatmul.mubr.f32.gmra.mrb[0].mxu0 %v4382
        %v6430 = vpop.f32.mrb[0].mxu0
        %v6431 = vadd.f32 0.0, %v6430
        %v6432 = vpop.f32.mrb[0].mxu0
        %v6433 = vadd.f32 0.0, %v6432
        %6434 = vmatprep.mubr.f32.mxu0 %v4391
        %6435 = vmatmul.mubr.f32.gmra.mrb[0].mxu0 %v4390
        %v6436 = vpop.f32.mrb[0].mxu0
        %v6437 = vadd.f32 0.0, %v6436
        %v6438 = vpop.f32.mrb[0].mxu0
        %v6439 = vadd.f32 0.0, %v6438
        %6440 = vdwg.mxu0
        %6441 = vmatprep.subr.mxu0 %v4715
        %6442 = vmatpush1.msra.mxu0 %v4714
        %6443 = vmatprep.subr.mxu0 %v4723
        %6444 = vmatpush1.msra.mxu0 %v4722
        %6445 = vmatprep.subr.mxu0 %v4731
        %6446 = vmatpush1.msra.mxu0 %v4730
        %6447 = vmatprep.subr.mxu0 %v4739
        %6448 = vmatpush1.msra.mxu0 %v4738
        %6449 = vmatprep.subr.mxu0 %v4747
        %6450 = vmatpush1.msra.mxu0 %v4746
        %6451 = vmatprep.subr.mxu0 %v4755
        %6452 = vmatpush1.msra.mxu0 %v4754
        %6453 = vmatprep.subr.mxu0 %v4763
        %6454 = vmatpush1.msra.mxu0 %v4762
        %6455 = vmatprep.subr.mxu0 %v4771
        %6456 = vmatpush1.msra.mxu0 %v4770
        %6457 = vmatprep.subr.mxu0 %v4779
        %6458 = vmatpush1.msra.mxu0 %v4778
        %6459 = vmatprep.subr.mxu0 %v4787
        %6460 = vmatpush1.msra.mxu0 %v4786
        %6461 = vmatprep.subr.mxu0 %v4795
        %6462 = vmatpush1.msra.mxu0 %v4794
        %6463 = vmatprep.subr.mxu0 %v4803
        %6464 = vmatpush1.msra.mxu0 %v4802
        %6465 = vmatprep.subr.mxu0 %v4811
        %6466 = vmatpush1.msra.mxu0 %v4810
        %6467 = vmatprep.subr.mxu0 %v4819
        %6468 = vmatpush1.msra.mxu0 %v4818
        %6469 = vmatprep.subr.mxu0 %v4827
        %6470 = vmatpush1.msra.mxu0 %v4826
        %6471 = vmatprep.subr.mxu0 %v4835
        %6472 = vmatpush1.msra.mxu0 %v4834
        %6473 = vmatprep.subr.mxu0 %v4843
        %6474 = vmatpush1.msra.mxu0 %v4842
        %6475 = vmatprep.subr.mxu0 %v4851
        %6476 = vmatpush1.msra.mxu0 %v4850
        %6477 = vmatprep.subr.mxu0 %v4859
        %6478 = vmatpush1.msra.mxu0 %v4858
        %6479 = vmatprep.subr.mxu0 %v4867
        %6480 = vmatpush1.msra.mxu0 %v4866
        %6481 = vmatprep.subr.mxu0 %v4875
        %6482 = vmatpush1.msra.mxu0 %v4874
        %6483 = vmatprep.subr.mxu0 %v4883
        %6484 = vmatpush1.msra.mxu0 %v4882
        %6485 = vmatprep.subr.mxu0 %v4891
        %6486 = vmatpush1.msra.mxu0 %v4890
        %6487 = vmatprep.subr.mxu0 %v4899
        %6488 = vmatpush1.msra.mxu0 %v4898
        %6489 = vmatprep.subr.mxu0 %v4907
        %6490 = vmatpush1.msra.mxu0 %v4906
        %6491 = vmatprep.subr.mxu0 %v4915
        %6492 = vmatpush1.msra.mxu0 %v4914
        %6493 = vmatprep.subr.mxu0 %v4923
        %6494 = vmatpush1.msra.mxu0 %v4922
        %6495 = vmatprep.subr.mxu0 %v4931
        %6496 = vmatpush1.msra.mxu0 %v4930
        %6497 = vmatprep.subr.mxu0 %v4939
        %6498 = vmatpush1.msra.mxu0 %v4938
        %6499 = vmatprep.subr.mxu0 %v4947
        %6500 = vmatpush1.msra.mxu0 %v4946
        %6501 = vmatprep.subr.mxu0 %v4955
        %6502 = vmatpush1.msra.mxu0 %v4954
        %6503 = vmatprep.subr.mxu0 %v4963
        %6504 = vmatpush1.msra.mxu0 %v4962
        %6505 = vmatprep.mubr.f32.mxu0 %v4345
        %6506 = vmatmul.mubr.f32.gmra.mrb[0].mxu0 %v4344
        %v6507 = vpop.f32.mrb[0].mxu0
        %v6508 = vadd.f32 %v6401, %v6507
        %v6509 = vpop.f32.mrb[0].mxu0
        %v6510 = vadd.f32 %v6403, %v6509
        %6511 = vmatprep.mubr.f32.mxu0 %v4353
        %6512 = vmatmul.mubr.f32.gmra.mrb[0].mxu0 %v4352
        %v6513 = vpop.f32.mrb[0].mxu0
        %v6514 = vadd.f32 %v6407, %v6513
        %v6515 = vpop.f32.mrb[0].mxu0
        %v6516 = vadd.f32 %v6409, %v6515
        %6517 = vmatprep.mubr.f32.mxu0 %v4361
        %6518 = vmatmul.mubr.f32.gmra.mrb[0].mxu0 %v4360
        %v6519 = vpop.f32.mrb[0].mxu0
        %v6520 = vadd.f32 %v6413, %v6519
        %v6521 = vpop.f32.mrb[0].mxu0
        %v6522 = vadd.f32 %v6415, %v6521
        %6523 = vmatprep.mubr.f32.mxu0 %v4369
        %6524 = vmatmul.mubr.f32.gmra.mrb[0].mxu0 %v4368
        %v6525 = vpop.f32.mrb[0].mxu0
        %v6526 = vadd.f32 %v6419, %v6525
        %v6527 = vpop.f32.mrb[0].mxu0
        %v6528 = vadd.f32 %v6421, %v6527
        %6529 = vmatprep.mubr.f32.mxu0 %v4377
        %6530 = vmatmul.mubr.f32.gmra.mrb[0].mxu0 %v4376
        %v6531 = vpop.f32.mrb[0].mxu0
        %v6532 = vadd.f32 %v6425, %v6531
        %v6533 = vpop.f32.mrb[0].mxu0
        %v6534 = vadd.f32 %v6427, %v6533
        %6535 = vmatprep.mubr.f32.mxu0 %v4385
        %6536 = vmatmul.mubr.f32.gmra.mrb[0].mxu0 %v4384
        %v6537 = vpop.f32.mrb[0].mxu0
        %v6538 = vadd.f32 %v6431, %v6537
        %v6539 = vpop.f32.mrb[0].mxu0
        %v6540 = vadd.f32 %v6433, %v6539
        %6541 = vmatprep.mubr.f32.mxu0 %v4393
        %6542 = vmatmul.mubr.f32.gmra.mrb[0].mxu0 %v4392
        %v6543 = vpop.f32.mrb[0].mxu0
        %v6544 = vadd.f32 %v6437, %v6543
        %v6545 = vpop.f32.mrb[0].mxu0
        %v6546 = vadd.f32 %v6439, %v6545
        %6547 = vdwg.mxu0
        %6548 = vmatprep.subr.mxu0 %v4971
        %6549 = vmatpush1.msra.mxu0 %v4970
        %6550 = vmatprep.subr.mxu0 %v4979
        %6551 = vmatpush1.msra.mxu0 %v4978
        %6552 = vmatprep.subr.mxu0 %v4987
        %6553 = vmatpush1.msra.mxu0 %v4986
        %6554 = vmatprep.subr.mxu0 %v4995
        %6555 = vmatpush1.msra.mxu0 %v4994
        %6556 = vmatprep.subr.mxu0 %v5003
        %6557 = vmatpush1.msra.mxu0 %v5002
        %6558 = vmatprep.subr.mxu0 %v5011
        %6559 = vmatpush1.msra.mxu0 %v5010
        %6560 = vmatprep.subr.mxu0 %v5019
        %6561 = vmatpush1.msra.mxu0 %v5018
        %6562 = vmatprep.subr.mxu0 %v5027
        %6563 = vmatpush1.msra.mxu0 %v5026
        %6564 = vmatprep.subr.mxu0 %v5035
        %6565 = vmatpush1.msra.mxu0 %v5034
        %6566 = vmatprep.subr.mxu0 %v5043
        %6567 = vmatpush1.msra.mxu0 %v5042
        %6568 = vmatprep.subr.mxu0 %v5051
        %6569 = vmatpush1.msra.mxu0 %v5050
        %6570 = vmatprep.subr.mxu0 %v5059
        %6571 = vmatpush1.msra.mxu0 %v5058
        %6572 = vmatprep.subr.mxu0 %v5067
        %6573 = vmatpush1.msra.mxu0 %v5066
        %6574 = vmatprep.subr.mxu0 %v5075
        %6575 = vmatpush1.msra.mxu0 %v5074
        %6576 = vmatprep.subr.mxu0 %v5083
        %6577 = vmatpush1.msra.mxu0 %v5082
        %6578 = vmatprep.subr.mxu0 %v5091
        %6579 = vmatpush1.msra.mxu0 %v5090
        %6580 = vmatprep.subr.mxu0 %v5099
        %6581 = vmatpush1.msra.mxu0 %v5098
        %6582 = vmatprep.subr.mxu0 %v5107
        %6583 = vmatpush1.msra.mxu0 %v5106
        %6584 = vmatprep.subr.mxu0 %v5115
        %6585 = vmatpush1.msra.mxu0 %v5114
        %6586 = vmatprep.subr.mxu0 %v5123
        %6587 = vmatpush1.msra.mxu0 %v5122
        %6588 = vmatprep.subr.mxu0 %v5131
        %6589 = vmatpush1.msra.mxu0 %v5130
        %6590 = vmatprep.subr.mxu0 %v5139
        %6591 = vmatpush1.msra.mxu0 %v5138
        %6592 = vmatprep.subr.mxu0 %v5147
        %6593 = vmatpush1.msra.mxu0 %v5146
        %6594 = vmatprep.subr.mxu0 %v5155
        %6595 = vmatpush1.msra.mxu0 %v5154
        %6596 = vmatprep.subr.mxu0 %v5163
        %6597 = vmatpush1.msra.mxu0 %v5162
        %6598 = vmatprep.subr.mxu0 %v5171
        %6599 = vmatpush1.msra.mxu0 %v5170
        %6600 = vmatprep.subr.mxu0 %v5179
        %6601 = vmatpush1.msra.mxu0 %v5178
        %6602 = vmatprep.subr.mxu0 %v5187
        %6603 = vmatpush1.msra.mxu0 %v5186
        %6604 = vmatprep.subr.mxu0 %v5195
        %6605 = vmatpush1.msra.mxu0 %v5194
        %6606 = vmatprep.subr.mxu0 %v5203
        %6607 = vmatpush1.msra.mxu0 %v5202
        %6608 = vmatprep.subr.mxu0 %v5211
        %6609 = vmatpush1.msra.mxu0 %v5210
        %6610 = vmatprep.subr.mxu0 %v5219
        %6611 = vmatpush1.msra.mxu0 %v5218
        %6612 = vmatprep.mubr.f32.mxu0 %v4347
        %6613 = vmatmul.mubr.f32.gmra.mrb[0].mxu0 %v4346
        %v6614 = vpop.f32.mrb[0].mxu0
        %v6615 = vadd.f32 %v6508, %v6614
        %v6616 = vpop.f32.mrb[0].mxu0
        %v6617 = vadd.f32 %v6510, %v6616
        %6618 = vmatprep.mubr.f32.mxu0 %v4355
        %6619 = vmatmul.mubr.f32.gmra.mrb[0].mxu0 %v4354
        %v6620 = vpop.f32.mrb[0].mxu0
        %v6621 = vadd.f32 %v6514, %v6620
        %v6622 = vpop.f32.mrb[0].mxu0
        %v6623 = vadd.f32 %v6516, %v6622
        %6624 = vmatprep.mubr.f32.mxu0 %v4363
        %6625 = vmatmul.mubr.f32.gmra.mrb[0].mxu0 %v4362
        %v6626 = vpop.f32.mrb[0].mxu0
        %v6627 = vadd.f32 %v6520, %v6626
        %v6628 = vpop.f32.mrb[0].mxu0
        %v6629 = vadd.f32 %v6522, %v6628
        %6630 = vmatprep.mubr.f32.mxu0 %v4371
        %6631 = vmatmul.mubr.f32.gmra.mrb[0].mxu0 %v4370
        %v6632 = vpop.f32.mrb[0].mxu0
        %v6633 = vadd.f32 %v6526, %v6632
        %v6634 = vpop.f32.mrb[0].mxu0
        %v6635 = vadd.f32 %v6528, %v6634
        %6636 = vmatprep.mubr.f32.mxu0 %v4379
        %6637 = vmatmul.mubr.f32.gmra.mrb[0].mxu0 %v4378
        %v6638 = vpop.f32.mrb[0].mxu0
        %v6639 = vadd.f32 %v6532, %v6638
        %v6640 = vpop.f32.mrb[0].mxu0
        %v6641 = vadd.f32 %v6534, %v6640
        %6642 = vmatprep.mubr.f32.mxu0 %v4387
        %6643 = vmatmul.mubr.f32.gmra.mrb[0].mxu0 %v4386
        %v6644 = vpop.f32.mrb[0].mxu0
        %v6645 = vadd.f32 %v6538, %v6644
        %v6646 = vpop.f32.mrb[0].mxu0
        %v6647 = vadd.f32 %v6540, %v6646
        %6648 = vmatprep.mubr.f32.mxu0 %v4395
        %6649 = vmatmul.mubr.f32.gmra.mrb[0].mxu0 %v4394
        %v6650 = vpop.f32.mrb[0].mxu0
        %v6651 = vadd.f32 %v6544, %v6650
        %v6652 = vpop.f32.mrb[0].mxu0
        %v6653 = vadd.f32 %v6546, %v6652
        %6654 = vdwg.mxu0
        %6655 = vmatprep.subr.mxu0 %v5227
        %6656 = vmatpush1.msra.mxu0 %v5226
        %6657 = vmatprep.subr.mxu0 %v5235
        %6658 = vmatpush1.msra.mxu0 %v5234
        %6659 = vmatprep.subr.mxu0 %v5243
        %6660 = vmatpush1.msra.mxu0 %v5242
        %6661 = vmatprep.subr.mxu0 %v5251
        %6662 = vmatpush1.msra.mxu0 %v5250
        %6663 = vmatprep.subr.mxu0 %v5259
        %6664 = vmatpush1.msra.mxu0 %v5258
        %6665 = vmatprep.subr.mxu0 %v5267
        %6666 = vmatpush1.msra.mxu0 %v5266
        %6667 = vmatprep.subr.mxu0 %v5275
        %6668 = vmatpush1.msra.mxu0 %v5274
        %6669 = vmatprep.subr.mxu0 %v5283
        %6670 = vmatpush1.msra.mxu0 %v5282
        %6671 = vmatprep.subr.mxu0 %v5291
        %6672 = vmatpush1.msra.mxu0 %v5290
        %6673 = vmatprep.subr.mxu0 %v5299
        %6674 = vmatpush1.msra.mxu0 %v5298
        %6675 = vmatprep.subr.mxu0 %v5307
        %6676 = vmatpush1.msra.mxu0 %v5306
        %6677 = vmatprep.subr.mxu0 %v5315
        %6678 = vmatpush1.msra.mxu0 %v5314
        %6679 = vmatprep.subr.mxu0 %v5323
        %6680 = vmatpush1.msra.mxu0 %v5322
        %6681 = vmatprep.subr.mxu0 %v5331
        %6682 = vmatpush1.msra.mxu0 %v5330
        %6683 = vmatprep.subr.mxu0 %v5339
        %6684 = vmatpush1.msra.mxu0 %v5338
        %6685 = vmatprep.subr.mxu0 %v5347
        %6686 = vmatpush1.msra.mxu0 %v5346
        %6687 = vmatprep.subr.mxu0 %v5355
        %6688 = vmatpush1.msra.mxu0 %v5354
        %6689 = vmatprep.subr.mxu0 %v5363
        %6690 = vmatpush1.msra.mxu0 %v5362
        %6691 = vmatprep.subr.mxu0 %v5371
        %6692 = vmatpush1.msra.mxu0 %v5370
        %6693 = vmatprep.subr.mxu0 %v5379
        %6694 = vmatpush1.msra.mxu0 %v5378
        %6695 = vmatprep.subr.mxu0 %v5387
        %6696 = vmatpush1.msra.mxu0 %v5386
        %6697 = vmatprep.subr.mxu0 %v5395
        %6698 = vmatpush1.msra.mxu0 %v5394
        %6699 = vmatprep.subr.mxu0 %v5403
        %6700 = vmatpush1.msra.mxu0 %v5402
        %6701 = vmatprep.subr.mxu0 %v5411
        %6702 = vmatpush1.msra.mxu0 %v5410
        %6703 = vmatprep.subr.mxu0 %v5419
        %6704 = vmatpush1.msra.mxu0 %v5418
        %6705 = vmatprep.subr.mxu0 %v5427
        %6706 = vmatpush1.msra.mxu0 %v5426
        %6707 = vmatprep.subr.mxu0 %v5435
        %6708 = vmatpush1.msra.mxu0 %v5434
        %6709 = vmatprep.subr.mxu0 %v5443
        %6710 = vmatpush1.msra.mxu0 %v5442
        %6711 = vmatprep.subr.mxu0 %v5451
        %6712 = vmatpush1.msra.mxu0 %v5450
        %6713 = vmatprep.subr.mxu0 %v5459
        %6714 = vmatpush1.msra.mxu0 %v5458
        %6715 = vmatprep.subr.mxu0 %v5467
        %6716 = vmatpush1.msra.mxu0 %v5466
        %6717 = vmatprep.subr.mxu0 %v5475
        %6718 = vmatpush1.msra.mxu0 %v5474
        %6719 = vmatprep.mubr.f32.mxu0 %v4349
        %6720 = vmatmul.mubr.f32.gmra.mrb[0].mxu0 %v4348
        %v6721 = vpop.f32.mrb[0].mxu0
        %v6722 = vadd.f32 %v6615, %v6721
        %v6723 = vpop.f32.mrb[0].mxu0
        %v6724 = vadd.f32 %v6617, %v6723
        %6725 = vmatprep.mubr.f32.mxu0 %v4357
        %6726 = vmatmul.mubr.f32.gmra.mrb[0].mxu0 %v4356
        %v6727 = vpop.f32.mrb[0].mxu0
        %v6728 = vadd.f32 %v6621, %v6727
        %v6729 = vpop.f32.mrb[0].mxu0
        %v6730 = vadd.f32 %v6623, %v6729
        %6731 = vmatprep.mubr.f32.mxu0 %v4365
        %6732 = vmatmul.mubr.f32.gmra.mrb[0].mxu0 %v4364
        %v6733 = vpop.f32.mrb[0].mxu0
        %v6734 = vadd.f32 %v6627, %v6733
        %v6735 = vpop.f32.mrb[0].mxu0
        %v6736 = vadd.f32 %v6629, %v6735
        %6737 = vmatprep.mubr.f32.mxu0 %v4373
        %6738 = vmatmul.mubr.f32.gmra.mrb[0].mxu0 %v4372
        %v6739 = vpop.f32.mrb[0].mxu0
        %v6740 = vadd.f32 %v6633, %v6739
        %v6741 = vpop.f32.mrb[0].mxu0
        %v6742 = vadd.f32 %v6635, %v6741
        %6743 = vmatprep.mubr.f32.mxu0 %v4381
        %6744 = vmatmul.mubr.f32.gmra.mrb[0].mxu0 %v4380
        %v6745 = vpop.f32.mrb[0].mxu0
        %v6746 = vadd.f32 %v6639, %v6745
        %v6747 = vpop.f32.mrb[0].mxu0
        %v6748 = vadd.f32 %v6641, %v6747
        %6749 = vmatprep.mubr.f32.mxu0 %v4389
        %6750 = vmatmul.mubr.f32.gmra.mrb[0].mxu0 %v4388
        %v6751 = vpop.f32.mrb[0].mxu0
        %v6752 = vadd.f32 %v6645, %v6751
        %v6753 = vpop.f32.mrb[0].mxu0
        %v6754 = vadd.f32 %v6647, %v6753
        %6755 = vmatprep.mubr.f32.mxu0 %v4397
        %6756 = vmatmul.mubr.f32.gmra.mrb[0].mxu0 %v4396
        %v6757 = vpop.f32.mrb[0].mxu0
        %v6758 = vadd.f32 %v6651, %v6757
        %v6759 = vpop.f32.mrb[0].mxu0
        %v6760 = vadd.f32 %v6653, %v6759
        %6761 = vdwg.mxu0
        %6762 = vmatprep.subr.mxu0 %v4461
        %6763 = vmatpush1.msra.mxu0 %v4460
        %6764 = vmatprep.subr.mxu0 %v4469
        %6765 = vmatpush1.msra.mxu0 %v4468
        %6766 = vmatprep.subr.mxu0 %v4477
        %6767 = vmatpush1.msra.mxu0 %v4476
        %6768 = vmatprep.subr.mxu0 %v4485
        %6769 = vmatpush1.msra.mxu0 %v4484
        %6770 = vmatprep.subr.mxu0 %v4493
        %6771 = vmatpush1.msra.mxu0 %v4492
        %6772 = vmatprep.subr.mxu0 %v4501
        %6773 = vmatpush1.msra.mxu0 %v4500
        %6774 = vmatprep.subr.mxu0 %v4509
        %6775 = vmatpush1.msra.mxu0 %v4508
        %6776 = vmatprep.subr.mxu0 %v4517
        %6777 = vmatpush1.msra.mxu0 %v4516
        %6778 = vmatprep.subr.mxu0 %v4525
        %6779 = vmatpush1.msra.mxu0 %v4524
        %6780 = vmatprep.subr.mxu0 %v4533
        %6781 = vmatpush1.msra.mxu0 %v4532
        %6782 = vmatprep.subr.mxu0 %v4541
        %6783 = vmatpush1.msra.mxu0 %v4540
        %6784 = vmatprep.subr.mxu0 %v4549
        %6785 = vmatpush1.msra.mxu0 %v4548
        %6786 = vmatprep.subr.mxu0 %v4557
        %6787 = vmatpush1.msra.mxu0 %v4556
        %6788 = vmatprep.subr.mxu0 %v4565
        %6789 = vmatpush1.msra.mxu0 %v4564
        %6790 = vmatprep.subr.mxu0 %v4573
        %6791 = vmatpush1.msra.mxu0 %v4572
        %6792 = vmatprep.subr.mxu0 %v4581
        %6793 = vmatpush1.msra.mxu0 %v4580
        %6794 = vmatprep.subr.mxu0 %v4589
        %6795 = vmatpush1.msra.mxu0 %v4588
        %6796 = vmatprep.subr.mxu0 %v4597
        %6797 = vmatpush1.msra.mxu0 %v4596
        %6798 = vmatprep.subr.mxu0 %v4605
        %6799 = vmatpush1.msra.mxu0 %v4604
        %6800 = vmatprep.subr.mxu0 %v4613
        %6801 = vmatpush1.msra.mxu0 %v4612
        %6802 = vmatprep.subr.mxu0 %v4621
        %6803 = vmatpush1.msra.mxu0 %v4620
        %6804 = vmatprep.subr.mxu0 %v4629
        %6805 = vmatpush1.msra.mxu0 %v4628
        %6806 = vmatprep.subr.mxu0 %v4637
        %6807 = vmatpush1.msra.mxu0 %v4636
        %6808 = vmatprep.subr.mxu0 %v4645
        %6809 = vmatpush1.msra.mxu0 %v4644
        %6810 = vmatprep.subr.mxu0 %v4653
        %6811 = vmatpush1.msra.mxu0 %v4652
        %6812 = vmatprep.subr.mxu0 %v4661
        %6813 = vmatpush1.msra.mxu0 %v4660
        %6814 = vmatprep.subr.mxu0 %v4669
        %6815 = vmatpush1.msra.mxu0 %v4668
        %6816 = vmatprep.subr.mxu0 %v4677
        %6817 = vmatpush1.msra.mxu0 %v4676
        %6818 = vmatprep.subr.mxu0 %v4685
        %6819 = vmatpush1.msra.mxu0 %v4684
        %6820 = vmatprep.subr.mxu0 %v4693
        %6821 = vmatpush1.msra.mxu0 %v4692
        %6822 = vmatprep.subr.mxu0 %v4701
        %6823 = vmatpush1.msra.mxu0 %v4700
        %6824 = vmatprep.subr.mxu0 %v4709
        %6825 = vmatpush1.msra.mxu0 %v4708
        %6826 = vmatprep.mubr.f32.mxu0 %v4343
        %6827 = vmatmul.mubr.f32.gmra.mrb[0].mxu0 %v4342
        %v6828 = vpop.f32.mrb[0].mxu0
        %v6829 = vadd.f32 0.0, %v6828
        %v6830 = vpop.f32.mrb[0].mxu0
        %v6831 = vadd.f32 0.0, %v6830
        %6832 = vmatprep.mubr.f32.mxu0 %v4351
        %6833 = vmatmul.mubr.f32.gmra.mrb[0].mxu0 %v4350
        %v6834 = vpop.f32.mrb[0].mxu0
        %v6835 = vadd.f32 0.0, %v6834
        %v6836 = vpop.f32.mrb[0].mxu0
        %v6837 = vadd.f32 0.0, %v6836
        %6838 = vmatprep.mubr.f32.mxu0 %v4359
        %6839 = vmatmul.mubr.f32.gmra.mrb[0].mxu0 %v4358
        %v6840 = vpop.f32.mrb[0].mxu0
        %v6841 = vadd.f32 0.0, %v6840
        %v6842 = vpop.f32.mrb[0].mxu0
        %v6843 = vadd.f32 0.0, %v6842
        %6844 = vmatprep.mubr.f32.mxu0 %v4367
        %6845 = vmatmul.mubr.f32.gmra.mrb[0].mxu0 %v4366
        %v6846 = vpop.f32.mrb[0].mxu0
        %v6847 = vadd.f32 0.0, %v6846
        %v6848 = vpop.f32.mrb[0].mxu0
        %v6849 = vadd.f32 0.0, %v6848
        %6850 = vmatprep.mubr.f32.mxu0 %v4375
        %6851 = vmatmul.mubr.f32.gmra.mrb[0].mxu0 %v4374
        %v6852 = vpop.f32.mrb[0].mxu0
        %v6853 = vadd.f32 0.0, %v6852
        %v6854 = vpop.f32.mrb[0].mxu0
        %v6855 = vadd.f32 0.0, %v6854
        %6856 = vmatprep.mubr.f32.mxu0 %v4383
        %6857 = vmatmul.mubr.f32.gmra.mrb[0].mxu0 %v4382
        %v6858 = vpop.f32.mrb[0].mxu0
        %v6859 = vadd.f32 0.0, %v6858
        %v6860 = vpop.f32.mrb[0].mxu0
        %v6861 = vadd.f32 0.0, %v6860
        %6862 = vmatprep.mubr.f32.mxu0 %v4391
        %6863 = vmatmul.mubr.f32.gmra.mrb[0].mxu0 %v4390
        %v6864 = vpop.f32.mrb[0].mxu0
        %v6865 = vadd.f32 0.0, %v6864
        %v6866 = vpop.f32.mrb[0].mxu0
        %v6867 = vadd.f32 0.0, %v6866
        %6868 = vdwg.mxu0
        %6869 = vmatprep.subr.mxu0 %v4717
        %6870 = vmatpush1.msra.mxu0 %v4716
        %6871 = vmatprep.subr.mxu0 %v4725
        %6872 = vmatpush1.msra.mxu0 %v4724
        %6873 = vmatprep.subr.mxu0 %v4733
        %6874 = vmatpush1.msra.mxu0 %v4732
        %6875 = vmatprep.subr.mxu0 %v4741
        %6876 = vmatpush1.msra.mxu0 %v4740
        %6877 = vmatprep.subr.mxu0 %v4749
        %6878 = vmatpush1.msra.mxu0 %v4748
        %6879 = vmatprep.subr.mxu0 %v4757
        %6880 = vmatpush1.msra.mxu0 %v4756
        %6881 = vmatprep.subr.mxu0 %v4765
        %6882 = vmatpush1.msra.mxu0 %v4764
        %6883 = vmatprep.subr.mxu0 %v4773
        %6884 = vmatpush1.msra.mxu0 %v4772
        %6885 = vmatprep.subr.mxu0 %v4781
        %6886 = vmatpush1.msra.mxu0 %v4780
        %6887 = vmatprep.subr.mxu0 %v4789
        %6888 = vmatpush1.msra.mxu0 %v4788
        %6889 = vmatprep.subr.mxu0 %v4797
        %6890 = vmatpush1.msra.mxu0 %v4796
        %6891 = vmatprep.subr.mxu0 %v4805
        %6892 = vmatpush1.msra.mxu0 %v4804
        %6893 = vmatprep.subr.mxu0 %v4813
        %6894 = vmatpush1.msra.mxu0 %v4812
        %6895 = vmatprep.subr.mxu0 %v4821
        %6896 = vmatpush1.msra.mxu0 %v4820
        %6897 = vmatprep.subr.mxu0 %v4829
        %6898 = vmatpush1.msra.mxu0 %v4828
        %6899 = vmatprep.subr.mxu0 %v4837
        %6900 = vmatpush1.msra.mxu0 %v4836
        %6901 = vmatprep.subr.mxu0 %v4845
        %6902 = vmatpush1.msra.mxu0 %v4844
        %6903 = vmatprep.subr.mxu0 %v4853
        %6904 = vmatpush1.msra.mxu0 %v4852
        %6905 = vmatprep.subr.mxu0 %v4861
        %6906 = vmatpush1.msra.mxu0 %v4860
        %6907 = vmatprep.subr.mxu0 %v4869
        %6908 = vmatpush1.msra.mxu0 %v4868
        %6909 = vmatprep.subr.mxu0 %v4877
        %6910 = vmatpush1.msra.mxu0 %v4876
        %6911 = vmatprep.subr.mxu0 %v4885
        %6912 = vmatpush1.msra.mxu0 %v4884
        %6913 = vmatprep.subr.mxu0 %v4893
        %6914 = vmatpush1.msra.mxu0 %v4892
        %6915 = vmatprep.subr.mxu0 %v4901
        %6916 = vmatpush1.msra.mxu0 %v4900
        %6917 = vmatprep.subr.mxu0 %v4909
        %6918 = vmatpush1.msra.mxu0 %v4908
        %6919 = vmatprep.subr.mxu0 %v4917
        %6920 = vmatpush1.msra.mxu0 %v4916
        %6921 = vmatprep.subr.mxu0 %v4925
        %6922 = vmatpush1.msra.mxu0 %v4924
        %6923 = vmatprep.subr.mxu0 %v4933
        %6924 = vmatpush1.msra.mxu0 %v4932
        %6925 = vmatprep.subr.mxu0 %v4941
        %6926 = vmatpush1.msra.mxu0 %v4940
        %6927 = vmatprep.subr.mxu0 %v4949
        %6928 = vmatpush1.msra.mxu0 %v4948
        %6929 = vmatprep.subr.mxu0 %v4957
        %6930 = vmatpush1.msra.mxu0 %v4956
        %6931 = vmatprep.subr.mxu0 %v4965
        %6932 = vmatpush1.msra.mxu0 %v4964
        %6933 = vmatprep.mubr.f32.mxu0 %v4345
        %6934 = vmatmul.mubr.f32.gmra.mrb[0].mxu0 %v4344
        %v6935 = vpop.f32.mrb[0].mxu0
        %v6936 = vadd.f32 %v6829, %v6935
        %v6937 = vpop.f32.mrb[0].mxu0
        %v6938 = vadd.f32 %v6831, %v6937
        %6939 = vmatprep.mubr.f32.mxu0 %v4353
        %6940 = vmatmul.mubr.f32.gmra.mrb[0].mxu0 %v4352
        %v6941 = vpop.f32.mrb[0].mxu0
        %v6942 = vadd.f32 %v6835, %v6941
        %v6943 = vpop.f32.mrb[0].mxu0
        %v6944 = vadd.f32 %v6837, %v6943
        %6945 = vmatprep.mubr.f32.mxu0 %v4361
        %6946 = vmatmul.mubr.f32.gmra.mrb[0].mxu0 %v4360
        %v6947 = vpop.f32.mrb[0].mxu0
        %v6948 = vadd.f32 %v6841, %v6947
        %v6949 = vpop.f32.mrb[0].mxu0
        %v6950 = vadd.f32 %v6843, %v6949
        %6951 = vmatprep.mubr.f32.mxu0 %v4369
        %6952 = vmatmul.mubr.f32.gmra.mrb[0].mxu0 %v4368
        %v6953 = vpop.f32.mrb[0].mxu0
        %v6954 = vadd.f32 %v6847, %v6953
        %v6955 = vpop.f32.mrb[0].mxu0
        %v6956 = vadd.f32 %v6849, %v6955
        %6957 = vmatprep.mubr.f32.mxu0 %v4377
        %6958 = vmatmul.mubr.f32.gmra.mrb[0].mxu0 %v4376
        %v6959 = vpop.f32.mrb[0].mxu0
        %v6960 = vadd.f32 %v6853, %v6959
        %v6961 = vpop.f32.mrb[0].mxu0
        %v6962 = vadd.f32 %v6855, %v6961
        %6963 = vmatprep.mubr.f32.mxu0 %v4385
        %6964 = vmatmul.mubr.f32.gmra.mrb[0].mxu0 %v4384
        %v6965 = vpop.f32.mrb[0].mxu0
        %v6966 = vadd.f32 %v6859, %v6965
        %v6967 = vpop.f32.mrb[0].mxu0
        %v6968 = vadd.f32 %v6861, %v6967
        %6969 = vmatprep.mubr.f32.mxu0 %v4393
        %6970 = vmatmul.mubr.f32.gmra.mrb[0].mxu0 %v4392
        %v6971 = vpop.f32.mrb[0].mxu0
        %v6972 = vadd.f32 %v6865, %v6971
        %v6973 = vpop.f32.mrb[0].mxu0
        %v6974 = vadd.f32 %v6867, %v6973
        %6975 = vdwg.mxu0
        %6976 = vmatprep.subr.mxu0 %v4973
        %6977 = vmatpush1.msra.mxu0 %v4972
        %6978 = vmatprep.subr.mxu0 %v4981
        %6979 = vmatpush1.msra.mxu0 %v4980
        %6980 = vmatprep.subr.mxu0 %v4989
        %6981 = vmatpush1.msra.mxu0 %v4988
        %6982 = vmatprep.subr.mxu0 %v4997
        %6983 = vmatpush1.msra.mxu0 %v4996
        %6984 = vmatprep.subr.mxu0 %v5005
        %6985 = vmatpush1.msra.mxu0 %v5004
        %6986 = vmatprep.subr.mxu0 %v5013
        %6987 = vmatpush1.msra.mxu0 %v5012
        %6988 = vmatprep.subr.mxu0 %v5021
        %6989 = vmatpush1.msra.mxu0 %v5020
        %6990 = vmatprep.subr.mxu0 %v5029
        %6991 = vmatpush1.msra.mxu0 %v5028
        %6992 = vmatprep.subr.mxu0 %v5037
        %6993 = vmatpush1.msra.mxu0 %v5036
        %6994 = vmatprep.subr.mxu0 %v5045
        %6995 = vmatpush1.msra.mxu0 %v5044
        %6996 = vmatprep.subr.mxu0 %v5053
        %6997 = vmatpush1.msra.mxu0 %v5052
        %6998 = vmatprep.subr.mxu0 %v5061
        %6999 = vmatpush1.msra.mxu0 %v5060
        %7000 = vmatprep.subr.mxu0 %v5069
        %7001 = vmatpush1.msra.mxu0 %v5068
        %7002 = vmatprep.subr.mxu0 %v5077
        %7003 = vmatpush1.msra.mxu0 %v5076
        %7004 = vmatprep.subr.mxu0 %v5085
        %7005 = vmatpush1.msra.mxu0 %v5084
        %7006 = vmatprep.subr.mxu0 %v5093
        %7007 = vmatpush1.msra.mxu0 %v5092
        %7008 = vmatprep.subr.mxu0 %v5101
        %7009 = vmatpush1.msra.mxu0 %v5100
        %7010 = vmatprep.subr.mxu0 %v5109
        %7011 = vmatpush1.msra.mxu0 %v5108
        %7012 = vmatprep.subr.mxu0 %v5117
        %7013 = vmatpush1.msra.mxu0 %v5116
        %7014 = vmatprep.subr.mxu0 %v5125
        %7015 = vmatpush1.msra.mxu0 %v5124
        %7016 = vmatprep.subr.mxu0 %v5133
        %7017 = vmatpush1.msra.mxu0 %v5132
        %7018 = vmatprep.subr.mxu0 %v5141
        %7019 = vmatpush1.msra.mxu0 %v5140
        %7020 = vmatprep.subr.mxu0 %v5149
        %7021 = vmatpush1.msra.mxu0 %v5148
        %7022 = vmatprep.subr.mxu0 %v5157
        %7023 = vmatpush1.msra.mxu0 %v5156
        %7024 = vmatprep.subr.mxu0 %v5165
        %7025 = vmatpush1.msra.mxu0 %v5164
        %7026 = vmatprep.subr.mxu0 %v5173
        %7027 = vmatpush1.msra.mxu0 %v5172
        %7028 = vmatprep.subr.mxu0 %v5181
        %7029 = vmatpush1.msra.mxu0 %v5180
        %7030 = vmatprep.subr.mxu0 %v5189
        %7031 = vmatpush1.msra.mxu0 %v5188
        %7032 = vmatprep.subr.mxu0 %v5197
        %7033 = vmatpush1.msra.mxu0 %v5196
        %7034 = vmatprep.subr.mxu0 %v5205
        %7035 = vmatpush1.msra.mxu0 %v5204
        %7036 = vmatprep.subr.mxu0 %v5213
        %7037 = vmatpush1.msra.mxu0 %v5212
        %7038 = vmatprep.subr.mxu0 %v5221
        %7039 = vmatpush1.msra.mxu0 %v5220
        %7040 = vmatprep.mubr.f32.mxu0 %v4347
        %7041 = vmatmul.mubr.f32.gmra.mrb[0].mxu0 %v4346
        %v7042 = vpop.f32.mrb[0].mxu0
        %v7043 = vadd.f32 %v6936, %v7042
        %v7044 = vpop.f32.mrb[0].mxu0
        %v7045 = vadd.f32 %v6938, %v7044
        %7046 = vmatprep.mubr.f32.mxu0 %v4355
        %7047 = vmatmul.mubr.f32.gmra.mrb[0].mxu0 %v4354
        %v7048 = vpop.f32.mrb[0].mxu0
        %v7049 = vadd.f32 %v6942, %v7048
        %v7050 = vpop.f32.mrb[0].mxu0
        %v7051 = vadd.f32 %v6944, %v7050
        %7052 = vmatprep.mubr.f32.mxu0 %v4363
        %7053 = vmatmul.mubr.f32.gmra.mrb[0].mxu0 %v4362
        %v7054 = vpop.f32.mrb[0].mxu0
        %v7055 = vadd.f32 %v6948, %v7054
        %v7056 = vpop.f32.mrb[0].mxu0
        %v7057 = vadd.f32 %v6950, %v7056
        %7058 = vmatprep.mubr.f32.mxu0 %v4371
        %7059 = vmatmul.mubr.f32.gmra.mrb[0].mxu0 %v4370
        %v7060 = vpop.f32.mrb[0].mxu0
        %v7061 = vadd.f32 %v6954, %v7060
        %v7062 = vpop.f32.mrb[0].mxu0
        %v7063 = vadd.f32 %v6956, %v7062
        %7064 = vmatprep.mubr.f32.mxu0 %v4379
        %7065 = vmatmul.mubr.f32.gmra.mrb[0].mxu0 %v4378
        %v7066 = vpop.f32.mrb[0].mxu0
        %v7067 = vadd.f32 %v6960, %v7066
        %v7068 = vpop.f32.mrb[0].mxu0
        %v7069 = vadd.f32 %v6962, %v7068
        %7070 = vmatprep.mubr.f32.mxu0 %v4387
        %7071 = vmatmul.mubr.f32.gmra.mrb[0].mxu0 %v4386
        %v7072 = vpop.f32.mrb[0].mxu0
        %v7073 = vadd.f32 %v6966, %v7072
        %v7074 = vpop.f32.mrb[0].mxu0
        %v7075 = vadd.f32 %v6968, %v7074
        %7076 = vmatprep.mubr.f32.mxu0 %v4395
        %7077 = vmatmul.mubr.f32.gmra.mrb[0].mxu0 %v4394
        %v7078 = vpop.f32.mrb[0].mxu0
        %v7079 = vadd.f32 %v6972, %v7078
        %v7080 = vpop.f32.mrb[0].mxu0
        %v7081 = vadd.f32 %v6974, %v7080
        %7082 = vdwg.mxu0
        %7083 = vmatprep.subr.mxu0 %v5229
        %7084 = vmatpush1.msra.mxu0 %v5228
        %7085 = vmatprep.subr.mxu0 %v5237
        %7086 = vmatpush1.msra.mxu0 %v5236
        %7087 = vmatprep.subr.mxu0 %v5245
        %7088 = vmatpush1.msra.mxu0 %v5244
        %7089 = vmatprep.subr.mxu0 %v5253
        %7090 = vmatpush1.msra.mxu0 %v5252
        %7091 = vmatprep.subr.mxu0 %v5261
        %7092 = vmatpush1.msra.mxu0 %v5260
        %7093 = vmatprep.subr.mxu0 %v5269
        %7094 = vmatpush1.msra.mxu0 %v5268
        %7095 = vmatprep.subr.mxu0 %v5277
        %7096 = vmatpush1.msra.mxu0 %v5276
        %7097 = vmatprep.subr.mxu0 %v5285
        %7098 = vmatpush1.msra.mxu0 %v5284
        %7099 = vmatprep.subr.mxu0 %v5293
        %7100 = vmatpush1.msra.mxu0 %v5292
        %7101 = vmatprep.subr.mxu0 %v5301
        %7102 = vmatpush1.msra.mxu0 %v5300
        %7103 = vmatprep.subr.mxu0 %v5309
        %7104 = vmatpush1.msra.mxu0 %v5308
        %7105 = vmatprep.subr.mxu0 %v5317
        %7106 = vmatpush1.msra.mxu0 %v5316
        %7107 = vmatprep.subr.mxu0 %v5325
        %7108 = vmatpush1.msra.mxu0 %v5324
        %7109 = vmatprep.subr.mxu0 %v5333
        %7110 = vmatpush1.msra.mxu0 %v5332
        %7111 = vmatprep.subr.mxu0 %v5341
        %7112 = vmatpush1.msra.mxu0 %v5340
        %7113 = vmatprep.subr.mxu0 %v5349
        %7114 = vmatpush1.msra.mxu0 %v5348
        %7115 = vmatprep.subr.mxu0 %v5357
        %7116 = vmatpush1.msra.mxu0 %v5356
        %7117 = vmatprep.subr.mxu0 %v5365
        %7118 = vmatpush1.msra.mxu0 %v5364
        %7119 = vmatprep.subr.mxu0 %v5373
        %7120 = vmatpush1.msra.mxu0 %v5372
        %7121 = vmatprep.subr.mxu0 %v5381
        %7122 = vmatpush1.msra.mxu0 %v5380
        %7123 = vmatprep.subr.mxu0 %v5389
        %7124 = vmatpush1.msra.mxu0 %v5388
        %7125 = vmatprep.subr.mxu0 %v5397
        %7126 = vmatpush1.msra.mxu0 %v5396
        %7127 = vmatprep.subr.mxu0 %v5405
        %7128 = vmatpush1.msra.mxu0 %v5404
        %7129 = vmatprep.subr.mxu0 %v5413
        %7130 = vmatpush1.msra.mxu0 %v5412
        %7131 = vmatprep.subr.mxu0 %v5421
        %7132 = vmatpush1.msra.mxu0 %v5420
        %7133 = vmatprep.subr.mxu0 %v5429
        %7134 = vmatpush1.msra.mxu0 %v5428
        %7135 = vmatprep.subr.mxu0 %v5437
        %7136 = vmatpush1.msra.mxu0 %v5436
        %7137 = vmatprep.subr.mxu0 %v5445
        %7138 = vmatpush1.msra.mxu0 %v5444
        %7139 = vmatprep.subr.mxu0 %v5453
        %7140 = vmatpush1.msra.mxu0 %v5452
        %7141 = vmatprep.subr.mxu0 %v5461
        %7142 = vmatpush1.msra.mxu0 %v5460
        %7143 = vmatprep.subr.mxu0 %v5469
        %7144 = vmatpush1.msra.mxu0 %v5468
        %7145 = vmatprep.subr.mxu0 %v5477
        %7146 = vmatpush1.msra.mxu0 %v5476
        %7147 = vmatprep.mubr.f32.mxu0 %v4349
        %7148 = vmatmul.mubr.f32.gmra.mrb[0].mxu0 %v4348
        %v7149 = vpop.f32.mrb[0].mxu0
        %v7150 = vadd.f32 %v7043, %v7149
        %v7151 = vpop.f32.mrb[0].mxu0
        %v7152 = vadd.f32 %v7045, %v7151
        %7153 = vmatprep.mubr.f32.mxu0 %v4357
        %7154 = vmatmul.mubr.f32.gmra.mrb[0].mxu0 %v4356
        %v7155 = vpop.f32.mrb[0].mxu0
        %v7156 = vadd.f32 %v7049, %v7155
        %v7157 = vpop.f32.mrb[0].mxu0
        %v7158 = vadd.f32 %v7051, %v7157
        %7159 = vmatprep.mubr.f32.mxu0 %v4365
        %7160 = vmatmul.mubr.f32.gmra.mrb[0].mxu0 %v4364
        %v7161 = vpop.f32.mrb[0].mxu0
        %v7162 = vadd.f32 %v7055, %v7161
        %v7163 = vpop.f32.mrb[0].mxu0
        %v7164 = vadd.f32 %v7057, %v7163
        %7165 = vmatprep.mubr.f32.mxu0 %v4373
        %7166 = vmatmul.mubr.f32.gmra.mrb[0].mxu0 %v4372
        %v7167 = vpop.f32.mrb[0].mxu0
        %v7168 = vadd.f32 %v7061, %v7167
        %v7169 = vpop.f32.mrb[0].mxu0
        %v7170 = vadd.f32 %v7063, %v7169
        %7171 = vmatprep.mubr.f32.mxu0 %v4381
        %7172 = vmatmul.mubr.f32.gmra.mrb[0].mxu0 %v4380
        %v7173 = vpop.f32.mrb[0].mxu0
        %v7174 = vadd.f32 %v7067, %v7173
        %v7175 = vpop.f32.mrb[0].mxu0
        %v7176 = vadd.f32 %v7069, %v7175
        %7177 = vmatprep.mubr.f32.mxu0 %v4389
        %7178 = vmatmul.mubr.f32.gmra.mrb[0].mxu0 %v4388
        %v7179 = vpop.f32.mrb[0].mxu0
        %v7180 = vadd.f32 %v7073, %v7179
        %v7181 = vpop.f32.mrb[0].mxu0
        %v7182 = vadd.f32 %v7075, %v7181
        %7183 = vmatprep.mubr.f32.mxu0 %v4397
        %7184 = vmatmul.mubr.f32.gmra.mrb[0].mxu0 %v4396
        %v7185 = vpop.f32.mrb[0].mxu0
        %v7186 = vadd.f32 %v7079, %v7185
        %v7187 = vpop.f32.mrb[0].mxu0
        %v7188 = vadd.f32 %v7081, %v7187
        %7189 = vdwg.mxu0
        %v7190 = vadd.f32 %v4398, %v5866
        %v7191 = vadd.f32 %v4399, %v5868
        %v7192 = vadd.f32 %v4400, %v6294
        %v7193 = vadd.f32 %v4401, %v6296
        %v7194 = vadd.f32 %v4402, %v6722
        %v7195 = vadd.f32 %v4403, %v6724
        %v7196 = vadd.f32 %v4404, %v7150
        %v7197 = vadd.f32 %v4405, %v7152
        %v7198 = vadd.f32 %v4406, %v5872
        %v7199 = vadd.f32 %v4407, %v5874
        %v7200 = vadd.f32 %v4408, %v6300
        %v7201 = vadd.f32 %v4409, %v6302
        %v7202 = vadd.f32 %v4410, %v6728
        %v7203 = vadd.f32 %v4411, %v6730
        %v7204 = vadd.f32 %v4412, %v7156
        %v7205 = vadd.f32 %v4413, %v7158
        %v7206 = vadd.f32 %v4414, %v5878
        %v7207 = vadd.f32 %v4415, %v5880
        %v7208 = vadd.f32 %v4416, %v6306
        %v7209 = vadd.f32 %v4417, %v6308
        %v7210 = vadd.f32 %v4418, %v6734
        %v7211 = vadd.f32 %v4419, %v6736
        %v7212 = vadd.f32 %v4420, %v7162
        %v7213 = vadd.f32 %v4421, %v7164
        %v7214 = vadd.f32 %v4422, %v5884
        %v7215 = vadd.f32 %v4423, %v5886
        %v7216 = vadd.f32 %v4424, %v6312
        %v7217 = vadd.f32 %v4425, %v6314
        %v7218 = vadd.f32 %v4426, %v6740
        %v7219 = vadd.f32 %v4427, %v6742
        %v7220 = vadd.f32 %v4428, %v7168
        %v7221 = vadd.f32 %v4429, %v7170
        %v7222 = vadd.f32 %v4430, %v5890
        %v7223 = vadd.f32 %v4431, %v5892
        %v7224 = vadd.f32 %v4432, %v6318
        %v7225 = vadd.f32 %v4433, %v6320
        %v7226 = vadd.f32 %v4434, %v6746
        %v7227 = vadd.f32 %v4435, %v6748
        %v7228 = vadd.f32 %v4436, %v7174
        %v7229 = vadd.f32 %v4437, %v7176
        %v7230 = vadd.f32 %v4438, %v5896
        %v7231 = vadd.f32 %v4439, %v5898
        %v7232 = vadd.f32 %v4440, %v6324
        %v7233 = vadd.f32 %v4441, %v6326
        %v7234 = vadd.f32 %v4442, %v6752
        %v7235 = vadd.f32 %v4443, %v6754
        %v7236 = vadd.f32 %v4444, %v7180
        %v7237 = vadd.f32 %v4445, %v7182
        %v7238 = vadd.f32 %v4446, %v5902
        %v7239 = vadd.f32 %v4447, %v5904
        %v7240 = vadd.f32 %v4448, %v6330
        %v7241 = vadd.f32 %v4449, %v6332
        %v7242 = vadd.f32 %v4450, %v6758
        %v7243 = vadd.f32 %v4451, %v6760
        %v7244 = vadd.f32 %v4452, %v7186
        %v7245 = vadd.f32 %v4453, %v7188
        %7246 = vst [vmem:[%s463] sm:$0xff] %v7190
        %7247 = vst [vmem:[%s463 + $0x8] sm:$0xff] %v7191
        %7248 = vst [vmem:[%s463 + $0x10] sm:$0xff] %v7192
        %7249 = vst [vmem:[%s463 + $0x18] sm:$0xff] %v7193
        %7250 = vst [vmem:[%s463 + $0x20] sm:$0xff] %v7194
        %7251 = vst [vmem:[%s463 + $0x28] sm:$0xff] %v7195
        %7252 = vst [vmem:[%s463 + $0x30] sm:$0xff] %v7196
        %7253 = vst [vmem:[%s463 + $0x38] sm:$0xff] %v7197
        %7254 = vst [vmem:[%s463 + $0x40] sm:$0xff] %v7198
        %7255 = vst [vmem:[%s463 + $0x48] sm:$0xff] %v7199
        %7256 = vst [vmem:[%s463 + $0x50] sm:$0xff] %v7200
        %7257 = vst [vmem:[%s463 + $0x58] sm:$0xff] %v7201
        %7258 = vst [vmem:[%s463 + $0x60] sm:$0xff] %v7202
        %7259 = vst [vmem:[%s463 + $0x68] sm:$0xff] %v7203
        %7260 = vst [vmem:[%s463 + $0x70] sm:$0xff] %v7204
        %7261 = vst [vmem:[%s463 + $0x78] sm:$0xff] %v7205
        %7262 = vst [vmem:[%s463 + $0x80] sm:$0xff] %v7206
        %7263 = vst [vmem:[%s463 + $0x88] sm:$0xff] %v7207
        %7264 = vst [vmem:[%s463 + $0x90] sm:$0xff] %v7208
        %7265 = vst [vmem:[%s463 + $0x98] sm:$0xff] %v7209
        %7266 = vst [vmem:[%s463 + $0xa0] sm:$0xff] %v7210
        %7267 = vst [vmem:[%s463 + $0xa8] sm:$0xff] %v7211
        %7268 = vst [vmem:[%s463 + $0xb0] sm:$0xff] %v7212
        %7269 = vst [vmem:[%s463 + $0xb8] sm:$0xff] %v7213
        %7270 = vst [vmem:[%s463 + $0xc0] sm:$0xff] %v7214
        %7271 = vst [vmem:[%s463 + $0xc8] sm:$0xff] %v7215
        %7272 = vst [vmem:[%s463 + $0xd0] sm:$0xff] %v7216
        %7273 = vst [vmem:[%s463 + $0xd8] sm:$0xff] %v7217
        %7274 = vst [vmem:[%s463 + $0xe0] sm:$0xff] %v7218
        %7275 = vst [vmem:[%s463 + $0xe8] sm:$0xff] %v7219
        %7276 = vst [vmem:[%s463 + $0xf0] sm:$0xff] %v7220
        %7277 = vst [vmem:[%s463 + $0xf8] sm:$0xff] %v7221
        %7278 = vst [vmem:[%s463 + $0x100] sm:$0xff] %v7222
        %7279 = vst [vmem:[%s463 + $0x108] sm:$0xff] %v7223
        %7280 = vst [vmem:[%s463 + $0x110] sm:$0xff] %v7224
        %7281 = vst [vmem:[%s463 + $0x118] sm:$0xff] %v7225
        %7282 = vst [vmem:[%s463 + $0x120] sm:$0xff] %v7226
        %7283 = vst [vmem:[%s463 + $0x128] sm:$0xff] %v7227
        %7284 = vst [vmem:[%s463 + $0x130] sm:$0xff] %v7228
        %7285 = vst [vmem:[%s463 + $0x138] sm:$0xff] %v7229
        %7286 = vst [vmem:[%s463 + $0x140] sm:$0xff] %v7230
        %7287 = vst [vmem:[%s463 + $0x148] sm:$0xff] %v7231
        %7288 = vst [vmem:[%s463 + $0x150] sm:$0xff] %v7232
        %7289 = vst [vmem:[%s463 + $0x158] sm:$0xff] %v7233
        %7290 = vst [vmem:[%s463 + $0x160] sm:$0xff] %v7234
        %7291 = vst [vmem:[%s463 + $0x168] sm:$0xff] %v7235
        %7292 = vst [vmem:[%s463 + $0x170] sm:$0xff] %v7236
        %7293 = vst [vmem:[%s463 + $0x178] sm:$0xff] %v7237
        %7294 = vst [vmem:[%s463 + $0x180] sm:$0x1] %v7238
        %7295 = vst [vmem:[%s463 + $0x188] sm:$0x1] %v7239
        %7296 = vst [vmem:[%s463 + $0x190] sm:$0x1] %v7240
        %7297 = vst [vmem:[%s463 + $0x198] sm:$0x1] %v7241
        %7298 = vst [vmem:[%s463 + $0x1a0] sm:$0x1] %v7242
        %7299 = vst [vmem:[%s463 + $0x1a8] sm:$0x1] %v7243
        %7300 = vst [vmem:[%s463 + $0x1b0] sm:$0x1] %v7244
        %7301 = vst [vmem:[%s463 + $0x1b8] sm:$0x1] %v7245
        %p7302 = scmp.lt.s32.totalorder %s25, 1
        %s7303 = scalar_select %p7302, %s25, 1
        %s7304 = smul.addr %s7303, 56
        %s7305 = smul.addr %s7304, 8
        %s7306 = scalar_lea.vmem %s7, %s7305
        // Predicated region
        $region81: #{tpu_custom_call.1} parent=47 // pred_check
          %p7307 = pneg %p225
        $region82: #{tpu_custom_call.1} parent=47 // pred_check_branch
          %7309 = sbr.rel (%p7307) target = $region84
        $region83: #{tpu_custom_call.1} parent=47 // pred_region
          _
        $region84: #{tpu_custom_call.1} parent=47 // pred_fallthru
          _
      $region48: #{tpu_custom_call.1} parent=5 // pred_fallthru
        _
      %p7310 = scmp.le.s32.totalorder 2, %s16
      // Predicated region
      $region85: #{tpu_custom_call.1} parent=5 // pred_check
        %p7311 = pneg %p7310
      $region86: #{tpu_custom_call.1} parent=5 // pred_check_branch
        %7313 = sbr.rel (%p7311) target = $region88
      $region87: #{tpu_custom_call.1} parent=5 // pred_region
        %s7314 = ssub.s32 %s16, 2
        // Predicated region
        $region89: #{tpu_custom_call.1} parent=87 // pred_check
          %p7315 = pneg %p231
        $region90: #{tpu_custom_call.1} parent=87 // pred_check_branch
          %7317 = sbr.rel (%p7315) target = $region92
        $region91: #{tpu_custom_call.1} parent=87 // pred_region
          %p7318 = scmp.lt.s32.totalorder %s27, 1
          %s7319 = scalar_select %p7318, %s27, 1
          %s7320 = smul.addr %s7319, 56
          %s7321 = smul.addr %s7320, 8
          %s7322 = scalar_lea.vmem %s7, %s7321
        $region92: #{tpu_custom_call.1} parent=87 // pred_fallthru
          _
      $region88: #{tpu_custom_call.1} parent=5 // pred_fallthru
        _
    $region6: #{tpu_custom_call.1} parent=1 // loop_footer
      %s20 = sadd.s32 1, %s16
    $region7: #{tpu_custom_call.1} parent=1 // loop_footer_branch
      %15 = sbr.rel target = $region3
    $region8: #{tpu_custom_call.1} parent=1 // loop_exit
      _
    %7323 = vsyncpa [#allocation4], 1
    %s7324 = scalar_lea.sflag [#allocation4], 1
    %7325 = vsyncpa %s7324, 1
    %7326 = vsyncpa [#allocation6], 1
    %7327 = vsyncpa [#allocation9], 1

</llo_original>
